<compile_context>
chip_gen: v7x
topology: tpu7x:2x2x1
jax: 0.10.0
libtpu: 0.0.40
codegen_flags: <defaults>
</compile_context>

<pallas_src>
import functools

import jax
import jax.numpy as jnp
from jax.experimental import pallas as pl
from jax.experimental.pallas import tpu as pltpu


# ----------------------------------------------------------------------------
# Fused forward kernel: bi-LSTM layers + attention + FC in one invocation.
# ----------------------------------------------------------------------------
def _make_fused_kernel(T, Bp, F, H, num_layers):
    f32 = jnp.float32

    def kernel(*refs):
        it = iter(refs)
        x_ref = next(it)                                      # (T, Bp, F)
        layer_w = [(next(it), next(it), next(it)) for _ in range(num_layers)]
        aw1_ref = next(it)                                    # (2, H, H)
        ab1_ref = next(it)                                    # (1, H)
        aw2_ref = next(it)                                    # (1, H)
        ab2_ref = next(it)                                    # (1, 1)
        fcw_ref = next(it)                                    # (2, H, C)
        fcb_ref = next(it)                                    # (1, C)
        out_ref = next(it)                                    # (Bp, C)
        gxf_ref = next(it)                                    # (T, Bp, 4H) fwd x-gates
        gxb_ref = next(it)                                    # (T, Bp, 4H) bwd x-gates
        bufs = [(next(it), next(it)), (next(it), next(it))]   # 2 x (T,Bp,H) pairs

        prev_f = prev_b = None
        for layer in range(num_layers):
            wih_ref, whh_ref, b_ref = layer_w[layer]
            cur_f, cur_b = bufs[(layer + 1) % 2]

            # ---- hoisted, time-parallel input projection (bias folded in) --
            # Flatten (T, Bp, feat) -> (T*Bp, feat): leading-dim merge only,
            # layout-preserving, so the whole thing is one 2-D MXU matmul.
            if layer == 0:
                x2 = x_ref[...].reshape(T * Bp, F)
                gx = jnp.dot(x2, wih_ref[...], preferred_element_type=f32)
            else:
                pf = prev_f[...].reshape(T * Bp, H)
                pb = prev_b[...].reshape(T * Bp, H)
                gx = (jnp.dot(pf, wih_ref[0], preferred_element_type=f32)
                      + jnp.dot(pb, wih_ref[1], preferred_element_type=f32))
            gx = gx + b_ref[...]                              # (T*Bp, 8H)
            gx = gx.reshape(T, Bp, 8 * H)
            gxf_ref[...] = gx[:, :, :4 * H]                   # forward-dir gates
            gxb_ref[...] = gx[:, :, 4 * H:]                   # backward-dir gates

            whh_f = whh_ref[0]                                # (H, 4H), hoisted
            whh_b = whh_ref[1]                                # (H, 4H), hoisted

            # ---- sequential recurrence: fwd + bwd fused in one loop --------
            def cell(gates, c):
                i_g = jax.nn.sigmoid(gates[:, 0 * H:1 * H])
                f_g = jax.nn.sigmoid(gates[:, 1 * H:2 * H])
                g_g = jnp.tanh(gates[:, 2 * H:3 * H])
                o_g = jax.nn.sigmoid(gates[:, 3 * H:4 * H])
                c_new = f_g * c + i_g * g_g
                return o_g * jnp.tanh(c_new), c_new

            def step(s, carry):
                h_f, c_f, h_b, c_b = carry
                rs = T - 1 - s
                gates_f = gxf_ref[s] + jnp.dot(h_f, whh_f,
                                               preferred_element_type=f32)
                gates_b = gxb_ref[rs] + jnp.dot(h_b, whh_b,
                                                preferred_element_type=f32)
                h_f, c_f = cell(gates_f, c_f)
                h_b, c_b = cell(gates_b, c_b)
                cur_f[s] = h_f
                cur_b[rs] = h_b
                return h_f, c_f, h_b, c_b

            z = jnp.zeros((Bp, H), f32)
            jax.lax.fori_loop(0, T, step, (z, z, z, z), unroll=True)

            prev_f, prev_b = cur_f, cur_b

        # ---- attention over time + weighted sum + classifier ---------------
        lo_f = prev_f[...]                                    # (T, Bp, H)
        lo_b = prev_b[...]                                    # (T, Bp, H)
        lof2 = lo_f.reshape(T * Bp, H)
        lob2 = lo_b.reshape(T * Bp, H)

        h1 = jnp.tanh(jnp.dot(lof2, aw1_ref[0], preferred_element_type=f32)
                      + jnp.dot(lob2, aw1_ref[1], preferred_element_type=f32)
                      + ab1_ref[...])                         # (T*Bp, H)

        # Scores via VPU multiply + lane reduce (keeps MXU free), then softmax
        # over the time axis — matches torch.softmax(attn(lstm_out), dim=1).
        scores = (jnp.sum(h1 * aw2_ref[...], axis=-1, keepdims=True)
                  + ab2_ref[...])                             # (T*Bp, 1)
        scores = scores.reshape(T, Bp, 1)

        m = jnp.max(scores, axis=0, keepdims=True)
        e = jnp.exp(scores - m)
        attn = e / jnp.sum(e, axis=0, keepdims=True)          # (T, Bp, 1)

        ctx_f = jnp.sum(attn * lo_f, axis=0)                  # (Bp, H)
        ctx_b = jnp.sum(attn * lo_b, axis=0)                  # (Bp, H)

        out_ref[...] = (jnp.dot(ctx_f, fcw_ref[0], preferred_element_type=f32)
                        + jnp.dot(ctx_b, fcw_ref[1], preferred_element_type=f32)
                        + fcb_ref[...])

    return kernel


def _fused_forward(x_tm, layer_weights, attn_fc_w, T, Bp, F, H, num_layers,
                   num_classes):
    kernel = _make_fused_kernel(T, Bp, F, H, num_layers)
    vmem = pl.BlockSpec(memory_space=pltpu.MemorySpace.VMEM)

    inputs = [x_tm]
    for wih, whh, b in layer_weights:
        inputs += [wih, whh, b]
    inputs += list(attn_fc_w)

    return pl.pallas_call(
        kernel,
        out_shape=jax.ShapeDtypeStruct((Bp, num_classes), jnp.float32),
        in_specs=[vmem] * len(inputs),
        out_specs=vmem,
        scratch_shapes=[
            pltpu.VMEM((T, Bp, 4 * H), jnp.float32),   # hoisted fwd x-gates
            pltpu.VMEM((T, Bp, 4 * H), jnp.float32),   # hoisted bwd x-gates
            pltpu.VMEM((T, Bp, H), jnp.float32),       # layer-output ping (fwd)
            pltpu.VMEM((T, Bp, H), jnp.float32),       # layer-output ping (bwd)
            pltpu.VMEM((T, Bp, H), jnp.float32),       # layer-output pong (fwd)
            pltpu.VMEM((T, Bp, H), jnp.float32),       # layer-output pong (bwd)
        ],
    )(*inputs)


# ----------------------------------------------------------------------------
# Parameter init (deterministic, PyTorch-like uniform(-1/sqrt(H), 1/sqrt(H))).
# Gate column order inside each 4H block is (i, f, g, o), like PyTorch.
# ----------------------------------------------------------------------------
def init_params(key, input_size, hidden, num_layers, num_classes):
    params = {}
    k = 1.0 / jnp.sqrt(jnp.float32(hidden))

    def unif(key, shape):
        return jax.random.uniform(key, shape, jnp.float32, -k, k)

    keys = iter(jax.random.split(key, 8 * num_layers + 8))

    for layer in range(num_layers):
        in_dim = input_size if layer == 0 else 2 * hidden
        for suffix in ("", "_rev"):
            params[f"w_ih_l{layer}{suffix}"] = unif(next(keys), (in_dim, 4 * hidden))
            params[f"w_hh_l{layer}{suffix}"] = unif(next(keys), (hidden, 4 * hidden))
            b_ih = unif(next(keys), (1, 4 * hidden))
            b_hh = unif(next(keys), (1, 4 * hidden))
            params[f"b_l{layer}{suffix}"] = b_ih + b_hh

    params["attn_w1"] = unif(next(keys), (2 * hidden, hidden))
    params["attn_b1"] = unif(next(keys), (1, hidden))
    params["attn_w2"] = unif(next(keys), (hidden, 1))
    params["attn_b2"] = unif(next(keys), (1, 1))
    params["fc_w"] = unif(next(keys), (2 * hidden, num_classes))
    params["fc_b"] = unif(next(keys), (1, num_classes))
    return params


# ----------------------------------------------------------------------------
# Full forward pass (host-side weight packing + one fused kernel).
# ----------------------------------------------------------------------------
def forward(params, x, hidden, num_layers, num_classes):
    B, T, F = x.shape
    Bp = ((max(B, 8) + 7) // 8) * 8                   # pad batch to sublane width

    x_tm = jnp.transpose(x, (1, 0, 2)).astype(jnp.float32)    # (T, B, F)
    x_tm = jnp.pad(x_tm, ((0, 0), (0, Bp - B), (0, 0)))

    layer_weights = []
    for layer in range(num_layers):
        # columns 0:4H = forward-direction gates, 4H:8H = backward-direction.
        wih = jnp.concatenate([params[f"w_ih_l{layer}"],
                               params[f"w_ih_l{layer}_rev"]], axis=1)
        if layer > 0:
            # split the 2H input rows: [0] multiplies lo_fwd, [1] multiplies lo_bwd
            wih = wih.reshape(2, hidden, 8 * hidden)
        whh = jnp.stack([params[f"w_hh_l{layer}"],
                         params[f"w_hh_l{layer}_rev"]], axis=0)
        b = jnp.concatenate([params[f"b_l{layer}"],
                             params[f"b_l{layer}_rev"]], axis=1)
        layer_weights.append((wih, whh, b))

    attn_fc_w = (
        params["attn_w1"].reshape(2, hidden, hidden),         # rows 0:H / H:2H
        params["attn_b1"],
        params["attn_w2"].reshape(1, hidden),                 # row-vector form
        params["attn_b2"],
        params["fc_w"].reshape(2, hidden, num_classes),
        params["fc_b"],
    )

    out = _fused_forward(x_tm, layer_weights, attn_fc_w,
                         T, Bp, F, hidden, num_layers, num_classes)
    return out[:B]


if __name__ == "__main__":
    INPUT_SIZE = 16
    HIDDEN = 32
    NUM_LAYERS = 2
    NUM_CLASSES = 4
    B, T = 2, 8

    key = jax.random.PRNGKey(0)
    k_params, k_x = jax.random.split(key)
    params = init_params(k_params, INPUT_SIZE, HIDDEN, NUM_LAYERS, NUM_CLASSES)
    x = jax.random.normal(k_x, (B, T, INPUT_SIZE), dtype=jnp.float32)

    fwd = jax.jit(functools.partial(forward, hidden=HIDDEN,
                                    num_layers=NUM_LAYERS,
                                    num_classes=NUM_CLASSES))
    out = fwd(params, x)
    out = jax.block_until_ready(out)

    assert out.shape == (B, NUM_CLASSES)
    assert bool(jnp.all(jnp.isfinite(out)))
    print("KERNEL_OK")
</pallas_src>

<mosaic_0001>
module attributes {stable_mosaic.version = 11 : i64} {
  func.func @kernel(%arg0: memref<8x8x16xf32, #tpu.memory_space<vmem>>, %arg1: memref<16x256xf32, #tpu.memory_space<vmem>>, %arg2: memref<2x32x128xf32, #tpu.memory_space<vmem>>, %arg3: memref<1x256xf32, #tpu.memory_space<vmem>>, %arg4: memref<2x32x256xf32, #tpu.memory_space<vmem>>, %arg5: memref<2x32x128xf32, #tpu.memory_space<vmem>>, %arg6: memref<1x256xf32, #tpu.memory_space<vmem>>, %arg7: memref<2x32x32xf32, #tpu.memory_space<vmem>>, %arg8: memref<1x32xf32, #tpu.memory_space<vmem>>, %arg9: memref<1x32xf32, #tpu.memory_space<vmem>>, %arg10: memref<1x1xf32, #tpu.memory_space<vmem>>, %arg11: memref<2x32x4xf32, #tpu.memory_space<vmem>>, %arg12: memref<1x4xf32, #tpu.memory_space<vmem>>, %arg13: memref<8x4xf32, #tpu.memory_space<vmem>>, %arg14: memref<8x8x128xf32, #tpu.memory_space<vmem>>, %arg15: memref<8x8x128xf32, #tpu.memory_space<vmem>>, %arg16: memref<8x8x32xf32, #tpu.memory_space<vmem>>, %arg17: memref<8x8x32xf32, #tpu.memory_space<vmem>>, %arg18: memref<8x8x32xf32, #tpu.memory_space<vmem>>, %arg19: memref<8x8x32xf32, #tpu.memory_space<vmem>>) attributes {dimension_semantics = [], scalar_prefetch = 0 : i64, scratch_operands = 6 : i64, tpu.core_type = #tpu.core_type<tc>} {
    %c0 = arith.constant 0 : index
    %c0_0 = arith.constant 0 : index
    %c0_1 = arith.constant 0 : index
    %0 = vector.load %arg0[%c0, %c0_0, %c0_1] : memref<8x8x16xf32, #tpu.memory_space<vmem>>, vector<8x8x16xf32>
    %1 = vector.shape_cast %0 : vector<8x8x16xf32> to vector<64x16xf32>
    %c0_2 = arith.constant 0 : index
    %c0_3 = arith.constant 0 : index
    %2 = vector.load %arg1[%c0_2, %c0_3] : memref<16x256xf32, #tpu.memory_space<vmem>>, vector<16x256xf32>
    %cst = arith.constant dense<0.000000e+00> : vector<64x256xf32>
    %3 = tpu.matmul %1, %2, %cst {dimension_numbers = #tpu.dot_dimension_numbers<[1], [0], [0], [1], [0, 0, 1, 1], [], []>} : vector<64x16xf32>, vector<16x256xf32>, vector<64x256xf32> -> vector<64x256xf32>
    %c0_4 = arith.constant 0 : index
    %c0_5 = arith.constant 0 : index
    %4 = vector.load %arg3[%c0_4, %c0_5] : memref<1x256xf32, #tpu.memory_space<vmem>>, vector<1x256xf32>
    %5 = vector.broadcast %4 : vector<1x256xf32> to vector<64x256xf32>
    %6 = arith.addf %3, %5 : vector<64x256xf32>
    %7 = vector.shape_cast %6 : vector<64x256xf32> to vector<8x8x256xf32>
    %8 = vector.extract_strided_slice %7 {offsets = [0, 0, 0], sizes = [8, 8, 128], strides = [1, 1, 1]} : vector<8x8x256xf32> to vector<8x8x128xf32>
    %c0_6 = arith.constant 0 : index
    %c0_7 = arith.constant 0 : index
    %c0_8 = arith.constant 0 : index
    %9 = vector.load %arg14[%c0_6, %c0_7, %c0_8] : memref<8x8x128xf32, #tpu.memory_space<vmem>>, vector<8x8x128xf32>
    tpu.vector_store %arg14[%c0_6, %c0_7, %c0_8], %8 {strides = array<i32>} : memref<8x8x128xf32, #tpu.memory_space<vmem>>, vector<8x8x128xf32>,
    %10 = vector.extract_strided_slice %7 {offsets = [0, 0, 128], sizes = [8, 8, 128], strides = [1, 1, 1]} : vector<8x8x256xf32> to vector<8x8x128xf32>
    %c0_9 = arith.constant 0 : index
    %c0_10 = arith.constant 0 : index
    %c0_11 = arith.constant 0 : index
    %11 = vector.load %arg15[%c0_9, %c0_10, %c0_11] : memref<8x8x128xf32, #tpu.memory_space<vmem>>, vector<8x8x128xf32>
    tpu.vector_store %arg15[%c0_9, %c0_10, %c0_11], %10 {strides = array<i32>} : memref<8x8x128xf32, #tpu.memory_space<vmem>>, vector<8x8x128xf32>,
    %c0_12 = arith.constant 0 : index
    %c0_13 = arith.constant 0 : index
    %c0_14 = arith.constant 0 : index
    %12 = vector.load %arg2[%c0_12, %c0_13, %c0_14] : memref<2x32x128xf32, #tpu.memory_space<vmem>>, vector<1x32x128xf32>
    %13 = vector.shape_cast %12 : vector<1x32x128xf32> to vector<32x128xf32>
    %c1 = arith.constant 1 : index
    %c0_15 = arith.constant 0 : index
    %c0_16 = arith.constant 0 : index
    %14 = vector.load %arg2[%c1, %c0_15, %c0_16] : memref<2x32x128xf32, #tpu.memory_space<vmem>>, vector<1x32x128xf32>
    %15 = vector.shape_cast %14 : vector<1x32x128xf32> to vector<32x128xf32>
    %cst_17 = arith.constant 0.000000e+00 : f32
    %16 = vector.broadcast %cst_17 : f32 to vector<8x32xf32>
    %c0_i32 = arith.constant 0 : i32
    %c7_i32 = arith.constant 7 : i32
    %17 = arith.subi %c7_i32, %c0_i32 : i32
    %18 = arith.index_cast %c0_i32 : i32 to index
    %c0_18 = arith.constant 0 : index
    %c0_19 = arith.constant 0 : index
    %19 = vector.load %arg14[%18, %c0_18, %c0_19] : memref<8x8x128xf32, #tpu.memory_space<vmem>>, vector<1x8x128xf32>
    %20 = vector.shape_cast %19 : vector<1x8x128xf32> to vector<8x128xf32>
    %cst_20 = arith.constant dense<0.000000e+00> : vector<8x128xf32>
    %21 = tpu.matmul %16, %13, %cst_20 {dimension_numbers = #tpu.dot_dimension_numbers<[1], [0], [0], [1], [0, 0, 1, 1], [], []>} : vector<8x32xf32>, vector<32x128xf32>, vector<8x128xf32> -> vector<8x128xf32>
    %22 = arith.addf %20, %21 : vector<8x128xf32>
    %23 = arith.index_cast %17 : i32 to index
    %c0_21 = arith.constant 0 : index
    %c0_22 = arith.constant 0 : index
    %24 = vector.load %arg15[%23, %c0_21, %c0_22] : memref<8x8x128xf32, #tpu.memory_space<vmem>>, vector<1x8x128xf32>
    %25 = vector.shape_cast %24 : vector<1x8x128xf32> to vector<8x128xf32>
    %cst_23 = arith.constant dense<0.000000e+00> : vector<8x128xf32>
    %26 = tpu.matmul %16, %15, %cst_23 {dimension_numbers = #tpu.dot_dimension_numbers<[1], [0], [0], [1], [0, 0, 1, 1], [], []>} : vector<8x32xf32>, vector<32x128xf32>, vector<8x128xf32> -> vector<8x128xf32>
    %27 = arith.addf %25, %26 : vector<8x128xf32>
    %28 = vector.extract_strided_slice %22 {offsets = [0, 0], sizes = [8, 32], strides = [1, 1]} : vector<8x128xf32> to vector<8x32xf32>
    %29 = arith.negf %28 : vector<8x32xf32>
    %30 = math.exp %29 : vector<8x32xf32>
    %cst_24 = arith.constant 1.000000e+00 : f32
    %31 = vector.broadcast %cst_24 : f32 to vector<8x32xf32>
    %32 = arith.addf %31, %30 : vector<8x32xf32>
    %33 = arith.divf %31, %32 : vector<8x32xf32>
    %34 = vector.extract_strided_slice %22 {offsets = [0, 32], sizes = [8, 32], strides = [1, 1]} : vector<8x128xf32> to vector<8x32xf32>
    %35 = arith.negf %34 : vector<8x32xf32>
    %36 = math.exp %35 : vector<8x32xf32>
    %cst_25 = arith.constant 1.000000e+00 : f32
    %37 = vector.broadcast %cst_25 : f32 to vector<8x32xf32>
    %38 = arith.addf %37, %36 : vector<8x32xf32>
    %39 = arith.divf %37, %38 : vector<8x32xf32>
    %40 = vector.extract_strided_slice %22 {offsets = [0, 64], sizes = [8, 32], strides = [1, 1]} : vector<8x128xf32> to vector<8x32xf32>
    %41 = math.tanh %40 : vector<8x32xf32>
    %42 = vector.extract_strided_slice %22 {offsets = [0, 96], sizes = [8, 32], strides = [1, 1]} : vector<8x128xf32> to vector<8x32xf32>
    %43 = arith.negf %42 : vector<8x32xf32>
    %44 = math.exp %43 : vector<8x32xf32>
    %cst_26 = arith.constant 1.000000e+00 : f32
    %45 = vector.broadcast %cst_26 : f32 to vector<8x32xf32>
    %46 = arith.addf %45, %44 : vector<8x32xf32>
    %47 = arith.divf %45, %46 : vector<8x32xf32>
    %48 = arith.mulf %39, %16 : vector<8x32xf32>
    %49 = arith.mulf %33, %41 : vector<8x32xf32>
    %50 = arith.addf %48, %49 : vector<8x32xf32>
    %51 = math.tanh %50 : vector<8x32xf32>
    %52 = arith.mulf %47, %51 : vector<8x32xf32>
    %53 = vector.extract_strided_slice %27 {offsets = [0, 0], sizes = [8, 32], strides = [1, 1]} : vector<8x128xf32> to vector<8x32xf32>
    %54 = arith.negf %53 : vector<8x32xf32>
    %55 = math.exp %54 : vector<8x32xf32>
    %cst_27 = arith.constant 1.000000e+00 : f32
    %56 = vector.broadcast %cst_27 : f32 to vector<8x32xf32>
    %57 = arith.addf %56, %55 : vector<8x32xf32>
    %58 = arith.divf %56, %57 : vector<8x32xf32>
    %59 = vector.extract_strided_slice %27 {offsets = [0, 32], sizes = [8, 32], strides = [1, 1]} : vector<8x128xf32> to vector<8x32xf32>
    %60 = arith.negf %59 : vector<8x32xf32>
    %61 = math.exp %60 : vector<8x32xf32>
    %cst_28 = arith.constant 1.000000e+00 : f32
    %62 = vector.broadcast %cst_28 : f32 to vector<8x32xf32>
    %63 = arith.addf %62, %61 : vector<8x32xf32>
    %64 = arith.divf %62, %63 : vector<8x32xf32>
    %65 = vector.extract_strided_slice %27 {offsets = [0, 64], sizes = [8, 32], strides = [1, 1]} : vector<8x128xf32> to vector<8x32xf32>
    %66 = math.tanh %65 : vector<8x32xf32>
    %67 = vector.extract_strided_slice %27 {offsets = [0, 96], sizes = [8, 32], strides = [1, 1]} : vector<8x128xf32> to vector<8x32xf32>
    %68 = arith.negf %67 : vector<8x32xf32>
    %69 = math.exp %68 : vector<8x32xf32>
    %cst_29 = arith.constant 1.000000e+00 : f32
    %70 = vector.broadcast %cst_29 : f32 to vector<8x32xf32>
    %71 = arith.addf %70, %69 : vector<8x32xf32>
    %72 = arith.divf %70, %71 : vector<8x32xf32>
    %73 = arith.mulf %64, %16 : vector<8x32xf32>
    %74 = arith.mulf %58, %66 : vector<8x32xf32>
    %75 = arith.addf %73, %74 : vector<8x32xf32>
    %76 = math.tanh %75 : vector<8x32xf32>
    %77 = arith.mulf %72, %76 : vector<8x32xf32>
    %78 = arith.index_cast %c0_i32 : i32 to index
    %c0_30 = arith.constant 0 : index
    %c0_31 = arith.constant 0 : index
    %79 = vector.load %arg18[%78, %c0_30, %c0_31] : memref<8x8x32xf32, #tpu.memory_space<vmem>>, vector<1x8x32xf32>
    %80 = vector.shape_cast %79 : vector<1x8x32xf32> to vector<8x32xf32>
    %81 = vector.shape_cast %52 : vector<8x32xf32> to vector<1x8x32xf32>
    tpu.vector_store %arg18[%78, %c0_30, %c0_31], %81 {strides = array<i32>} : memref<8x8x32xf32, #tpu.memory_space<vmem>>, vector<1x8x32xf32>,
    %82 = arith.index_cast %17 : i32 to index
    %c0_32 = arith.constant 0 : index
    %c0_33 = arith.constant 0 : index
    %83 = vector.load %arg19[%82, %c0_32, %c0_33] : memref<8x8x32xf32, #tpu.memory_space<vmem>>, vector<1x8x32xf32>
    %84 = vector.shape_cast %83 : vector<1x8x32xf32> to vector<8x32xf32>
    %85 = vector.shape_cast %77 : vector<8x32xf32> to vector<1x8x32xf32>
    tpu.vector_store %arg19[%82, %c0_32, %c0_33], %85 {strides = array<i32>} : memref<8x8x32xf32, #tpu.memory_space<vmem>>, vector<1x8x32xf32>,
    %c1_i32 = arith.constant 1 : i32
    %c7_i32_34 = arith.constant 7 : i32
    %86 = arith.subi %c7_i32_34, %c1_i32 : i32
    %87 = arith.index_cast %c1_i32 : i32 to index
    %c0_35 = arith.constant 0 : index
    %c0_36 = arith.constant 0 : index
    %88 = vector.load %arg14[%87, %c0_35, %c0_36] : memref<8x8x128xf32, #tpu.memory_space<vmem>>, vector<1x8x128xf32>
    %89 = vector.shape_cast %88 : vector<1x8x128xf32> to vector<8x128xf32>
    %cst_37 = arith.constant dense<0.000000e+00> : vector<8x128xf32>
    %90 = tpu.matmul %52, %13, %cst_37 {dimension_numbers = #tpu.dot_dimension_numbers<[1], [0], [0], [1], [0, 0, 1, 1], [], []>} : vector<8x32xf32>, vector<32x128xf32>, vector<8x128xf32> -> vector<8x128xf32>
    %91 = arith.addf %89, %90 : vector<8x128xf32>
    %92 = arith.index_cast %86 : i32 to index
    %c0_38 = arith.constant 0 : index
    %c0_39 = arith.constant 0 : index
    %93 = vector.load %arg15[%92, %c0_38, %c0_39] : memref<8x8x128xf32, #tpu.memory_space<vmem>>, vector<1x8x128xf32>
    %94 = vector.shape_cast %93 : vector<1x8x128xf32> to vector<8x128xf32>
    %cst_40 = arith.constant dense<0.000000e+00> : vector<8x128xf32>
    %95 = tpu.matmul %77, %15, %cst_40 {dimension_numbers = #tpu.dot_dimension_numbers<[1], [0], [0], [1], [0, 0, 1, 1], [], []>} : vector<8x32xf32>, vector<32x128xf32>, vector<8x128xf32> -> vector<8x128xf32>
    %96 = arith.addf %94, %95 : vector<8x128xf32>
    %97 = vector.extract_strided_slice %91 {offsets = [0, 0], sizes = [8, 32], strides = [1, 1]} : vector<8x128xf32> to vector<8x32xf32>
    %98 = arith.negf %97 : vector<8x32xf32>
    %99 = math.exp %98 : vector<8x32xf32>
    %cst_41 = arith.constant 1.000000e+00 : f32
    %100 = vector.broadcast %cst_41 : f32 to vector<8x32xf32>
    %101 = arith.addf %100, %99 : vector<8x32xf32>
    %102 = arith.divf %100, %101 : vector<8x32xf32>
    %103 = vector.extract_strided_slice %91 {offsets = [0, 32], sizes = [8, 32], strides = [1, 1]} : vector<8x128xf32> to vector<8x32xf32>
    %104 = arith.negf %103 : vector<8x32xf32>
    %105 = math.exp %104 : vector<8x32xf32>
    %cst_42 = arith.constant 1.000000e+00 : f32
    %106 = vector.broadcast %cst_42 : f32 to vector<8x32xf32>
    %107 = arith.addf %106, %105 : vector<8x32xf32>
    %108 = arith.divf %106, %107 : vector<8x32xf32>
    %109 = vector.extract_strided_slice %91 {offsets = [0, 64], sizes = [8, 32], strides = [1, 1]} : vector<8x128xf32> to vector<8x32xf32>
    %110 = math.tanh %109 : vector<8x32xf32>
    %111 = vector.extract_strided_slice %91 {offsets = [0, 96], sizes = [8, 32], strides = [1, 1]} : vector<8x128xf32> to vector<8x32xf32>
    %112 = arith.negf %111 : vector<8x32xf32>
    %113 = math.exp %112 : vector<8x32xf32>
    %cst_43 = arith.constant 1.000000e+00 : f32
    %114 = vector.broadcast %cst_43 : f32 to vector<8x32xf32>
    %115 = arith.addf %114, %113 : vector<8x32xf32>
    %116 = arith.divf %114, %115 : vector<8x32xf32>
    %117 = arith.mulf %108, %50 : vector<8x32xf32>
    %118 = arith.mulf %102, %110 : vector<8x32xf32>
    %119 = arith.addf %117, %118 : vector<8x32xf32>
    %120 = math.tanh %119 : vector<8x32xf32>
    %121 = arith.mulf %116, %120 : vector<8x32xf32>
    %122 = vector.extract_strided_slice %96 {offsets = [0, 0], sizes = [8, 32], strides = [1, 1]} : vector<8x128xf32> to vector<8x32xf32>
    %123 = arith.negf %122 : vector<8x32xf32>
    %124 = math.exp %123 : vector<8x32xf32>
    %cst_44 = arith.constant 1.000000e+00 : f32
    %125 = vector.broadcast %cst_44 : f32 to vector<8x32xf32>
    %126 = arith.addf %125, %124 : vector<8x32xf32>
    %127 = arith.divf %125, %126 : vector<8x32xf32>
    %128 = vector.extract_strided_slice %96 {offsets = [0, 32], sizes = [8, 32], strides = [1, 1]} : vector<8x128xf32> to vector<8x32xf32>
    %129 = arith.negf %128 : vector<8x32xf32>
    %130 = math.exp %129 : vector<8x32xf32>
    %cst_45 = arith.constant 1.000000e+00 : f32
    %131 = vector.broadcast %cst_45 : f32 to vector<8x32xf32>
    %132 = arith.addf %131, %130 : vector<8x32xf32>
    %133 = arith.divf %131, %132 : vector<8x32xf32>
    %134 = vector.extract_strided_slice %96 {offsets = [0, 64], sizes = [8, 32], strides = [1, 1]} : vector<8x128xf32> to vector<8x32xf32>
    %135 = math.tanh %134 : vector<8x32xf32>
    %136 = vector.extract_strided_slice %96 {offsets = [0, 96], sizes = [8, 32], strides = [1, 1]} : vector<8x128xf32> to vector<8x32xf32>
    %137 = arith.negf %136 : vector<8x32xf32>
    %138 = math.exp %137 : vector<8x32xf32>
    %cst_46 = arith.constant 1.000000e+00 : f32
    %139 = vector.broadcast %cst_46 : f32 to vector<8x32xf32>
    %140 = arith.addf %139, %138 : vector<8x32xf32>
    %141 = arith.divf %139, %140 : vector<8x32xf32>
    %142 = arith.mulf %133, %75 : vector<8x32xf32>
    %143 = arith.mulf %127, %135 : vector<8x32xf32>
    %144 = arith.addf %142, %143 : vector<8x32xf32>
    %145 = math.tanh %144 : vector<8x32xf32>
    %146 = arith.mulf %141, %145 : vector<8x32xf32>
    %147 = arith.index_cast %c1_i32 : i32 to index
    %c0_47 = arith.constant 0 : index
    %c0_48 = arith.constant 0 : index
    %148 = vector.load %arg18[%147, %c0_47, %c0_48] : memref<8x8x32xf32, #tpu.memory_space<vmem>>, vector<1x8x32xf32>
    %149 = vector.shape_cast %148 : vector<1x8x32xf32> to vector<8x32xf32>
    %150 = vector.shape_cast %121 : vector<8x32xf32> to vector<1x8x32xf32>
    tpu.vector_store %arg18[%147, %c0_47, %c0_48], %150 {strides = array<i32>} : memref<8x8x32xf32, #tpu.memory_space<vmem>>, vector<1x8x32xf32>,
    %151 = arith.index_cast %86 : i32 to index
    %c0_49 = arith.constant 0 : index
    %c0_50 = arith.constant 0 : index
    %152 = vector.load %arg19[%151, %c0_49, %c0_50] : memref<8x8x32xf32, #tpu.memory_space<vmem>>, vector<1x8x32xf32>
    %153 = vector.shape_cast %152 : vector<1x8x32xf32> to vector<8x32xf32>
    %154 = vector.shape_cast %146 : vector<8x32xf32> to vector<1x8x32xf32>
    tpu.vector_store %arg19[%151, %c0_49, %c0_50], %154 {strides = array<i32>} : memref<8x8x32xf32, #tpu.memory_space<vmem>>, vector<1x8x32xf32>,
    %c2_i32 = arith.constant 2 : i32
    %c7_i32_51 = arith.constant 7 : i32
    %155 = arith.subi %c7_i32_51, %c2_i32 : i32
    %156 = arith.index_cast %c2_i32 : i32 to index
    %c0_52 = arith.constant 0 : index
    %c0_53 = arith.constant 0 : index
    %157 = vector.load %arg14[%156, %c0_52, %c0_53] : memref<8x8x128xf32, #tpu.memory_space<vmem>>, vector<1x8x128xf32>
    %158 = vector.shape_cast %157 : vector<1x8x128xf32> to vector<8x128xf32>
    %cst_54 = arith.constant dense<0.000000e+00> : vector<8x128xf32>
    %159 = tpu.matmul %121, %13, %cst_54 {dimension_numbers = #tpu.dot_dimension_numbers<[1], [0], [0], [1], [0, 0, 1, 1], [], []>} : vector<8x32xf32>, vector<32x128xf32>, vector<8x128xf32> -> vector<8x128xf32>
    %160 = arith.addf %158, %159 : vector<8x128xf32>
    %161 = arith.index_cast %155 : i32 to index
    %c0_55 = arith.constant 0 : index
    %c0_56 = arith.constant 0 : index
    %162 = vector.load %arg15[%161, %c0_55, %c0_56] : memref<8x8x128xf32, #tpu.memory_space<vmem>>, vector<1x8x128xf32>
    %163 = vector.shape_cast %162 : vector<1x8x128xf32> to vector<8x128xf32>
    %cst_57 = arith.constant dense<0.000000e+00> : vector<8x128xf32>
    %164 = tpu.matmul %146, %15, %cst_57 {dimension_numbers = #tpu.dot_dimension_numbers<[1], [0], [0], [1], [0, 0, 1, 1], [], []>} : vector<8x32xf32>, vector<32x128xf32>, vector<8x128xf32> -> vector<8x128xf32>
    %165 = arith.addf %163, %164 : vector<8x128xf32>
    %166 = vector.extract_strided_slice %160 {offsets = [0, 0], sizes = [8, 32], strides = [1, 1]} : vector<8x128xf32> to vector<8x32xf32>
    %167 = arith.negf %166 : vector<8x32xf32>
    %168 = math.exp %167 : vector<8x32xf32>
    %cst_58 = arith.constant 1.000000e+00 : f32
    %169 = vector.broadcast %cst_58 : f32 to vector<8x32xf32>
    %170 = arith.addf %169, %168 : vector<8x32xf32>
    %171 = arith.divf %169, %170 : vector<8x32xf32>
    %172 = vector.extract_strided_slice %160 {offsets = [0, 32], sizes = [8, 32], strides = [1, 1]} : vector<8x128xf32> to vector<8x32xf32>
    %173 = arith.negf %172 : vector<8x32xf32>
    %174 = math.exp %173 : vector<8x32xf32>
    %cst_59 = arith.constant 1.000000e+00 : f32
    %175 = vector.broadcast %cst_59 : f32 to vector<8x32xf32>
    %176 = arith.addf %175, %174 : vector<8x32xf32>
    %177 = arith.divf %175, %176 : vector<8x32xf32>
    %178 = vector.extract_strided_slice %160 {offsets = [0, 64], sizes = [8, 32], strides = [1, 1]} : vector<8x128xf32> to vector<8x32xf32>
    %179 = math.tanh %178 : vector<8x32xf32>
    %180 = vector.extract_strided_slice %160 {offsets = [0, 96], sizes = [8, 32], strides = [1, 1]} : vector<8x128xf32> to vector<8x32xf32>
    %181 = arith.negf %180 : vector<8x32xf32>
    %182 = math.exp %181 : vector<8x32xf32>
    %cst_60 = arith.constant 1.000000e+00 : f32
    %183 = vector.broadcast %cst_60 : f32 to vector<8x32xf32>
    %184 = arith.addf %183, %182 : vector<8x32xf32>
    %185 = arith.divf %183, %184 : vector<8x32xf32>
    %186 = arith.mulf %177, %119 : vector<8x32xf32>
    %187 = arith.mulf %171, %179 : vector<8x32xf32>
    %188 = arith.addf %186, %187 : vector<8x32xf32>
    %189 = math.tanh %188 : vector<8x32xf32>
    %190 = arith.mulf %185, %189 : vector<8x32xf32>
    %191 = vector.extract_strided_slice %165 {offsets = [0, 0], sizes = [8, 32], strides = [1, 1]} : vector<8x128xf32> to vector<8x32xf32>
    %192 = arith.negf %191 : vector<8x32xf32>
    %193 = math.exp %192 : vector<8x32xf32>
    %cst_61 = arith.constant 1.000000e+00 : f32
    %194 = vector.broadcast %cst_61 : f32 to vector<8x32xf32>
    %195 = arith.addf %194, %193 : vector<8x32xf32>
    %196 = arith.divf %194, %195 : vector<8x32xf32>
    %197 = vector.extract_strided_slice %165 {offsets = [0, 32], sizes = [8, 32], strides = [1, 1]} : vector<8x128xf32> to vector<8x32xf32>
    %198 = arith.negf %197 : vector<8x32xf32>
    %199 = math.exp %198 : vector<8x32xf32>
    %cst_62 = arith.constant 1.000000e+00 : f32
    %200 = vector.broadcast %cst_62 : f32 to vector<8x32xf32>
    %201 = arith.addf %200, %199 : vector<8x32xf32>
    %202 = arith.divf %200, %201 : vector<8x32xf32>
    %203 = vector.extract_strided_slice %165 {offsets = [0, 64], sizes = [8, 32], strides = [1, 1]} : vector<8x128xf32> to vector<8x32xf32>
    %204 = math.tanh %203 : vector<8x32xf32>
    %205 = vector.extract_strided_slice %165 {offsets = [0, 96], sizes = [8, 32], strides = [1, 1]} : vector<8x128xf32> to vector<8x32xf32>
    %206 = arith.negf %205 : vector<8x32xf32>
    %207 = math.exp %206 : vector<8x32xf32>
    %cst_63 = arith.constant 1.000000e+00 : f32
    %208 = vector.broadcast %cst_63 : f32 to vector<8x32xf32>
    %209 = arith.addf %208, %207 : vector<8x32xf32>
    %210 = arith.divf %208, %209 : vector<8x32xf32>
    %211 = arith.mulf %202, %144 : vector<8x32xf32>
    %212 = arith.mulf %196, %204 : vector<8x32xf32>
    %213 = arith.addf %211, %212 : vector<8x32xf32>
    %214 = math.tanh %213 : vector<8x32xf32>
    %215 = arith.mulf %210, %214 : vector<8x32xf32>
    %216 = arith.index_cast %c2_i32 : i32 to index
    %c0_64 = arith.constant 0 : index
    %c0_65 = arith.constant 0 : index
    %217 = vector.load %arg18[%216, %c0_64, %c0_65] : memref<8x8x32xf32, #tpu.memory_space<vmem>>, vector<1x8x32xf32>
    %218 = vector.shape_cast %217 : vector<1x8x32xf32> to vector<8x32xf32>
    %219 = vector.shape_cast %190 : vector<8x32xf32> to vector<1x8x32xf32>
    tpu.vector_store %arg18[%216, %c0_64, %c0_65], %219 {strides = array<i32>} : memref<8x8x32xf32, #tpu.memory_space<vmem>>, vector<1x8x32xf32>,
    %220 = arith.index_cast %155 : i32 to index
    %c0_66 = arith.constant 0 : index
    %c0_67 = arith.constant 0 : index
    %221 = vector.load %arg19[%220, %c0_66, %c0_67] : memref<8x8x32xf32, #tpu.memory_space<vmem>>, vector<1x8x32xf32>
    %222 = vector.shape_cast %221 : vector<1x8x32xf32> to vector<8x32xf32>
    %223 = vector.shape_cast %215 : vector<8x32xf32> to vector<1x8x32xf32>
    tpu.vector_store %arg19[%220, %c0_66, %c0_67], %223 {strides = array<i32>} : memref<8x8x32xf32, #tpu.memory_space<vmem>>, vector<1x8x32xf32>,
    %c3_i32 = arith.constant 3 : i32
    %c7_i32_68 = arith.constant 7 : i32
    %224 = arith.subi %c7_i32_68, %c3_i32 : i32
    %225 = arith.index_cast %c3_i32 : i32 to index
    %c0_69 = arith.constant 0 : index
    %c0_70 = arith.constant 0 : index
    %226 = vector.load %arg14[%225, %c0_69, %c0_70] : memref<8x8x128xf32, #tpu.memory_space<vmem>>, vector<1x8x128xf32>
    %227 = vector.shape_cast %226 : vector<1x8x128xf32> to vector<8x128xf32>
    %cst_71 = arith.constant dense<0.000000e+00> : vector<8x128xf32>
    %228 = tpu.matmul %190, %13, %cst_71 {dimension_numbers = #tpu.dot_dimension_numbers<[1], [0], [0], [1], [0, 0, 1, 1], [], []>} : vector<8x32xf32>, vector<32x128xf32>, vector<8x128xf32> -> vector<8x128xf32>
    %229 = arith.addf %227, %228 : vector<8x128xf32>
    %230 = arith.index_cast %224 : i32 to index
    %c0_72 = arith.constant 0 : index
    %c0_73 = arith.constant 0 : index
    %231 = vector.load %arg15[%230, %c0_72, %c0_73] : memref<8x8x128xf32, #tpu.memory_space<vmem>>, vector<1x8x128xf32>
    %232 = vector.shape_cast %231 : vector<1x8x128xf32> to vector<8x128xf32>
    %cst_74 = arith.constant dense<0.000000e+00> : vector<8x128xf32>
    %233 = tpu.matmul %215, %15, %cst_74 {dimension_numbers = #tpu.dot_dimension_numbers<[1], [0], [0], [1], [0, 0, 1, 1], [], []>} : vector<8x32xf32>, vector<32x128xf32>, vector<8x128xf32> -> vector<8x128xf32>
    %234 = arith.addf %232, %233 : vector<8x128xf32>
    %235 = vector.extract_strided_slice %229 {offsets = [0, 0], sizes = [8, 32], strides = [1, 1]} : vector<8x128xf32> to vector<8x32xf32>
    %236 = arith.negf %235 : vector<8x32xf32>
    %237 = math.exp %236 : vector<8x32xf32>
    %cst_75 = arith.constant 1.000000e+00 : f32
    %238 = vector.broadcast %cst_75 : f32 to vector<8x32xf32>
    %239 = arith.addf %238, %237 : vector<8x32xf32>
    %240 = arith.divf %238, %239 : vector<8x32xf32>
    %241 = vector.extract_strided_slice %229 {offsets = [0, 32], sizes = [8, 32], strides = [1, 1]} : vector<8x128xf32> to vector<8x32xf32>
    %242 = arith.negf %241 : vector<8x32xf32>
    %243 = math.exp %242 : vector<8x32xf32>
    %cst_76 = arith.constant 1.000000e+00 : f32
    %244 = vector.broadcast %cst_76 : f32 to vector<8x32xf32>
    %245 = arith.addf %244, %243 : vector<8x32xf32>
    %246 = arith.divf %244, %245 : vector<8x32xf32>
    %247 = vector.extract_strided_slice %229 {offsets = [0, 64], sizes = [8, 32], strides = [1, 1]} : vector<8x128xf32> to vector<8x32xf32>
    %248 = math.tanh %247 : vector<8x32xf32>
    %249 = vector.extract_strided_slice %229 {offsets = [0, 96], sizes = [8, 32], strides = [1, 1]} : vector<8x128xf32> to vector<8x32xf32>
    %250 = arith.negf %249 : vector<8x32xf32>
    %251 = math.exp %250 : vector<8x32xf32>
    %cst_77 = arith.constant 1.000000e+00 : f32
    %252 = vector.broadcast %cst_77 : f32 to vector<8x32xf32>
    %253 = arith.addf %252, %251 : vector<8x32xf32>
    %254 = arith.divf %252, %253 : vector<8x32xf32>
    %255 = arith.mulf %246, %188 : vector<8x32xf32>
    %256 = arith.mulf %240, %248 : vector<8x32xf32>
    %257 = arith.addf %255, %256 : vector<8x32xf32>
    %258 = math.tanh %257 : vector<8x32xf32>
    %259 = arith.mulf %254, %258 : vector<8x32xf32>
    %260 = vector.extract_strided_slice %234 {offsets = [0, 0], sizes = [8, 32], strides = [1, 1]} : vector<8x128xf32> to vector<8x32xf32>
    %261 = arith.negf %260 : vector<8x32xf32>
    %262 = math.exp %261 : vector<8x32xf32>
    %cst_78 = arith.constant 1.000000e+00 : f32
    %263 = vector.broadcast %cst_78 : f32 to vector<8x32xf32>
    %264 = arith.addf %263, %262 : vector<8x32xf32>
    %265 = arith.divf %263, %264 : vector<8x32xf32>
    %266 = vector.extract_strided_slice %234 {offsets = [0, 32], sizes = [8, 32], strides = [1, 1]} : vector<8x128xf32> to vector<8x32xf32>
    %267 = arith.negf %266 : vector<8x32xf32>
    %268 = math.exp %267 : vector<8x32xf32>
    %cst_79 = arith.constant 1.000000e+00 : f32
    %269 = vector.broadcast %cst_79 : f32 to vector<8x32xf32>
    %270 = arith.addf %269, %268 : vector<8x32xf32>
    %271 = arith.divf %269, %270 : vector<8x32xf32>
    %272 = vector.extract_strided_slice %234 {offsets = [0, 64], sizes = [8, 32], strides = [1, 1]} : vector<8x128xf32> to vector<8x32xf32>
    %273 = math.tanh %272 : vector<8x32xf32>
    %274 = vector.extract_strided_slice %234 {offsets = [0, 96], sizes = [8, 32], strides = [1, 1]} : vector<8x128xf32> to vector<8x32xf32>
    %275 = arith.negf %274 : vector<8x32xf32>
    %276 = math.exp %275 : vector<8x32xf32>
    %cst_80 = arith.constant 1.000000e+00 : f32
    %277 = vector.broadcast %cst_80 : f32 to vector<8x32xf32>
    %278 = arith.addf %277, %276 : vector<8x32xf32>
    %279 = arith.divf %277, %278 : vector<8x32xf32>
    %280 = arith.mulf %271, %213 : vector<8x32xf32>
    %281 = arith.mulf %265, %273 : vector<8x32xf32>
    %282 = arith.addf %280, %281 : vector<8x32xf32>
    %283 = math.tanh %282 : vector<8x32xf32>
    %284 = arith.mulf %279, %283 : vector<8x32xf32>
    %285 = arith.index_cast %c3_i32 : i32 to index
    %c0_81 = arith.constant 0 : index
    %c0_82 = arith.constant 0 : index
    %286 = vector.load %arg18[%285, %c0_81, %c0_82] : memref<8x8x32xf32, #tpu.memory_space<vmem>>, vector<1x8x32xf32>
    %287 = vector.shape_cast %286 : vector<1x8x32xf32> to vector<8x32xf32>
    %288 = vector.shape_cast %259 : vector<8x32xf32> to vector<1x8x32xf32>
    tpu.vector_store %arg18[%285, %c0_81, %c0_82], %288 {strides = array<i32>} : memref<8x8x32xf32, #tpu.memory_space<vmem>>, vector<1x8x32xf32>,
    %289 = arith.index_cast %224 : i32 to index
    %c0_83 = arith.constant 0 : index
    %c0_84 = arith.constant 0 : index
    %290 = vector.load %arg19[%289, %c0_83, %c0_84] : memref<8x8x32xf32, #tpu.memory_space<vmem>>, vector<1x8x32xf32>
    %291 = vector.shape_cast %290 : vector<1x8x32xf32> to vector<8x32xf32>
    %292 = vector.shape_cast %284 : vector<8x32xf32> to vector<1x8x32xf32>
    tpu.vector_store %arg19[%289, %c0_83, %c0_84], %292 {strides = array<i32>} : memref<8x8x32xf32, #tpu.memory_space<vmem>>, vector<1x8x32xf32>,
    %c4_i32 = arith.constant 4 : i32
    %c7_i32_85 = arith.constant 7 : i32
    %293 = arith.subi %c7_i32_85, %c4_i32 : i32
    %294 = arith.index_cast %c4_i32 : i32 to index
    %c0_86 = arith.constant 0 : index
    %c0_87 = arith.constant 0 : index
    %295 = vector.load %arg14[%294, %c0_86, %c0_87] : memref<8x8x128xf32, #tpu.memory_space<vmem>>, vector<1x8x128xf32>
    %296 = vector.shape_cast %295 : vector<1x8x128xf32> to vector<8x128xf32>
    %cst_88 = arith.constant dense<0.000000e+00> : vector<8x128xf32>
    %297 = tpu.matmul %259, %13, %cst_88 {dimension_numbers = #tpu.dot_dimension_numbers<[1], [0], [0], [1], [0, 0, 1, 1], [], []>} : vector<8x32xf32>, vector<32x128xf32>, vector<8x128xf32> -> vector<8x128xf32>
    %298 = arith.addf %296, %297 : vector<8x128xf32>
    %299 = arith.index_cast %293 : i32 to index
    %c0_89 = arith.constant 0 : index
    %c0_90 = arith.constant 0 : index
    %300 = vector.load %arg15[%299, %c0_89, %c0_90] : memref<8x8x128xf32, #tpu.memory_space<vmem>>, vector<1x8x128xf32>
    %301 = vector.shape_cast %300 : vector<1x8x128xf32> to vector<8x128xf32>
    %cst_91 = arith.constant dense<0.000000e+00> : vector<8x128xf32>
    %302 = tpu.matmul %284, %15, %cst_91 {dimension_numbers = #tpu.dot_dimension_numbers<[1], [0], [0], [1], [0, 0, 1, 1], [], []>} : vector<8x32xf32>, vector<32x128xf32>, vector<8x128xf32> -> vector<8x128xf32>
    %303 = arith.addf %301, %302 : vector<8x128xf32>
    %304 = vector.extract_strided_slice %298 {offsets = [0, 0], sizes = [8, 32], strides = [1, 1]} : vector<8x128xf32> to vector<8x32xf32>
    %305 = arith.negf %304 : vector<8x32xf32>
    %306 = math.exp %305 : vector<8x32xf32>
    %cst_92 = arith.constant 1.000000e+00 : f32
    %307 = vector.broadcast %cst_92 : f32 to vector<8x32xf32>
    %308 = arith.addf %307, %306 : vector<8x32xf32>
    %309 = arith.divf %307, %308 : vector<8x32xf32>
    %310 = vector.extract_strided_slice %298 {offsets = [0, 32], sizes = [8, 32], strides = [1, 1]} : vector<8x128xf32> to vector<8x32xf32>
    %311 = arith.negf %310 : vector<8x32xf32>
    %312 = math.exp %311 : vector<8x32xf32>
    %cst_93 = arith.constant 1.000000e+00 : f32
    %313 = vector.broadcast %cst_93 : f32 to vector<8x32xf32>
    %314 = arith.addf %313, %312 : vector<8x32xf32>
    %315 = arith.divf %313, %314 : vector<8x32xf32>
    %316 = vector.extract_strided_slice %298 {offsets = [0, 64], sizes = [8, 32], strides = [1, 1]} : vector<8x128xf32> to vector<8x32xf32>
    %317 = math.tanh %316 : vector<8x32xf32>
    %318 = vector.extract_strided_slice %298 {offsets = [0, 96], sizes = [8, 32], strides = [1, 1]} : vector<8x128xf32> to vector<8x32xf32>
    %319 = arith.negf %318 : vector<8x32xf32>
    %320 = math.exp %319 : vector<8x32xf32>
    %cst_94 = arith.constant 1.000000e+00 : f32
    %321 = vector.broadcast %cst_94 : f32 to vector<8x32xf32>
    %322 = arith.addf %321, %320 : vector<8x32xf32>
    %323 = arith.divf %321, %322 : vector<8x32xf32>
    %324 = arith.mulf %315, %257 : vector<8x32xf32>
    %325 = arith.mulf %309, %317 : vector<8x32xf32>
    %326 = arith.addf %324, %325 : vector<8x32xf32>
    %327 = math.tanh %326 : vector<8x32xf32>
    %328 = arith.mulf %323, %327 : vector<8x32xf32>
    %329 = vector.extract_strided_slice %303 {offsets = [0, 0], sizes = [8, 32], strides = [1, 1]} : vector<8x128xf32> to vector<8x32xf32>
    %330 = arith.negf %329 : vector<8x32xf32>
    %331 = math.exp %330 : vector<8x32xf32>
    %cst_95 = arith.constant 1.000000e+00 : f32
    %332 = vector.broadcast %cst_95 : f32 to vector<8x32xf32>
    %333 = arith.addf %332, %331 : vector<8x32xf32>
    %334 = arith.divf %332, %333 : vector<8x32xf32>
    %335 = vector.extract_strided_slice %303 {offsets = [0, 32], sizes = [8, 32], strides = [1, 1]} : vector<8x128xf32> to vector<8x32xf32>
    %336 = arith.negf %335 : vector<8x32xf32>
    %337 = math.exp %336 : vector<8x32xf32>
    %cst_96 = arith.constant 1.000000e+00 : f32
    %338 = vector.broadcast %cst_96 : f32 to vector<8x32xf32>
    %339 = arith.addf %338, %337 : vector<8x32xf32>
    %340 = arith.divf %338, %339 : vector<8x32xf32>
    %341 = vector.extract_strided_slice %303 {offsets = [0, 64], sizes = [8, 32], strides = [1, 1]} : vector<8x128xf32> to vector<8x32xf32>
    %342 = math.tanh %341 : vector<8x32xf32>
    %343 = vector.extract_strided_slice %303 {offsets = [0, 96], sizes = [8, 32], strides = [1, 1]} : vector<8x128xf32> to vector<8x32xf32>
    %344 = arith.negf %343 : vector<8x32xf32>
    %345 = math.exp %344 : vector<8x32xf32>
    %cst_97 = arith.constant 1.000000e+00 : f32
    %346 = vector.broadcast %cst_97 : f32 to vector<8x32xf32>
    %347 = arith.addf %346, %345 : vector<8x32xf32>
    %348 = arith.divf %346, %347 : vector<8x32xf32>
    %349 = arith.mulf %340, %282 : vector<8x32xf32>
    %350 = arith.mulf %334, %342 : vector<8x32xf32>
    %351 = arith.addf %349, %350 : vector<8x32xf32>
    %352 = math.tanh %351 : vector<8x32xf32>
    %353 = arith.mulf %348, %352 : vector<8x32xf32>
    %354 = arith.index_cast %c4_i32 : i32 to index
    %c0_98 = arith.constant 0 : index
    %c0_99 = arith.constant 0 : index
    %355 = vector.load %arg18[%354, %c0_98, %c0_99] : memref<8x8x32xf32, #tpu.memory_space<vmem>>, vector<1x8x32xf32>
    %356 = vector.shape_cast %355 : vector<1x8x32xf32> to vector<8x32xf32>
    %357 = vector.shape_cast %328 : vector<8x32xf32> to vector<1x8x32xf32>
    tpu.vector_store %arg18[%354, %c0_98, %c0_99], %357 {strides = array<i32>} : memref<8x8x32xf32, #tpu.memory_space<vmem>>, vector<1x8x32xf32>,
    %358 = arith.index_cast %293 : i32 to index
    %c0_100 = arith.constant 0 : index
    %c0_101 = arith.constant 0 : index
    %359 = vector.load %arg19[%358, %c0_100, %c0_101] : memref<8x8x32xf32, #tpu.memory_space<vmem>>, vector<1x8x32xf32>
    %360 = vector.shape_cast %359 : vector<1x8x32xf32> to vector<8x32xf32>
    %361 = vector.shape_cast %353 : vector<8x32xf32> to vector<1x8x32xf32>
    tpu.vector_store %arg19[%358, %c0_100, %c0_101], %361 {strides = array<i32>} : memref<8x8x32xf32, #tpu.memory_space<vmem>>, vector<1x8x32xf32>,
    %c5_i32 = arith.constant 5 : i32
    %c7_i32_102 = arith.constant 7 : i32
    %362 = arith.subi %c7_i32_102, %c5_i32 : i32
    %363 = arith.index_cast %c5_i32 : i32 to index
    %c0_103 = arith.constant 0 : index
    %c0_104 = arith.constant 0 : index
    %364 = vector.load %arg14[%363, %c0_103, %c0_104] : memref<8x8x128xf32, #tpu.memory_space<vmem>>, vector<1x8x128xf32>
    %365 = vector.shape_cast %364 : vector<1x8x128xf32> to vector<8x128xf32>
    %cst_105 = arith.constant dense<0.000000e+00> : vector<8x128xf32>
    %366 = tpu.matmul %328, %13, %cst_105 {dimension_numbers = #tpu.dot_dimension_numbers<[1], [0], [0], [1], [0, 0, 1, 1], [], []>} : vector<8x32xf32>, vector<32x128xf32>, vector<8x128xf32> -> vector<8x128xf32>
    %367 = arith.addf %365, %366 : vector<8x128xf32>
    %368 = arith.index_cast %362 : i32 to index
    %c0_106 = arith.constant 0 : index
    %c0_107 = arith.constant 0 : index
    %369 = vector.load %arg15[%368, %c0_106, %c0_107] : memref<8x8x128xf32, #tpu.memory_space<vmem>>, vector<1x8x128xf32>
    %370 = vector.shape_cast %369 : vector<1x8x128xf32> to vector<8x128xf32>
    %cst_108 = arith.constant dense<0.000000e+00> : vector<8x128xf32>
    %371 = tpu.matmul %353, %15, %cst_108 {dimension_numbers = #tpu.dot_dimension_numbers<[1], [0], [0], [1], [0, 0, 1, 1], [], []>} : vector<8x32xf32>, vector<32x128xf32>, vector<8x128xf32> -> vector<8x128xf32>
    %372 = arith.addf %370, %371 : vector<8x128xf32>
    %373 = vector.extract_strided_slice %367 {offsets = [0, 0], sizes = [8, 32], strides = [1, 1]} : vector<8x128xf32> to vector<8x32xf32>
    %374 = arith.negf %373 : vector<8x32xf32>
    %375 = math.exp %374 : vector<8x32xf32>
    %cst_109 = arith.constant 1.000000e+00 : f32
    %376 = vector.broadcast %cst_109 : f32 to vector<8x32xf32>
    %377 = arith.addf %376, %375 : vector<8x32xf32>
    %378 = arith.divf %376, %377 : vector<8x32xf32>
    %379 = vector.extract_strided_slice %367 {offsets = [0, 32], sizes = [8, 32], strides = [1, 1]} : vector<8x128xf32> to vector<8x32xf32>
    %380 = arith.negf %379 : vector<8x32xf32>
    %381 = math.exp %380 : vector<8x32xf32>
    %cst_110 = arith.constant 1.000000e+00 : f32
    %382 = vector.broadcast %cst_110 : f32 to vector<8x32xf32>
    %383 = arith.addf %382, %381 : vector<8x32xf32>
    %384 = arith.divf %382, %383 : vector<8x32xf32>
    %385 = vector.extract_strided_slice %367 {offsets = [0, 64], sizes = [8, 32], strides = [1, 1]} : vector<8x128xf32> to vector<8x32xf32>
    %386 = math.tanh %385 : vector<8x32xf32>
    %387 = vector.extract_strided_slice %367 {offsets = [0, 96], sizes = [8, 32], strides = [1, 1]} : vector<8x128xf32> to vector<8x32xf32>
    %388 = arith.negf %387 : vector<8x32xf32>
    %389 = math.exp %388 : vector<8x32xf32>
    %cst_111 = arith.constant 1.000000e+00 : f32
    %390 = vector.broadcast %cst_111 : f32 to vector<8x32xf32>
    %391 = arith.addf %390, %389 : vector<8x32xf32>
    %392 = arith.divf %390, %391 : vector<8x32xf32>
    %393 = arith.mulf %384, %326 : vector<8x32xf32>
    %394 = arith.mulf %378, %386 : vector<8x32xf32>
    %395 = arith.addf %393, %394 : vector<8x32xf32>
    %396 = math.tanh %395 : vector<8x32xf32>
    %397 = arith.mulf %392, %396 : vector<8x32xf32>
    %398 = vector.extract_strided_slice %372 {offsets = [0, 0], sizes = [8, 32], strides = [1, 1]} : vector<8x128xf32> to vector<8x32xf32>
    %399 = arith.negf %398 : vector<8x32xf32>
    %400 = math.exp %399 : vector<8x32xf32>
    %cst_112 = arith.constant 1.000000e+00 : f32
    %401 = vector.broadcast %cst_112 : f32 to vector<8x32xf32>
    %402 = arith.addf %401, %400 : vector<8x32xf32>
    %403 = arith.divf %401, %402 : vector<8x32xf32>
    %404 = vector.extract_strided_slice %372 {offsets = [0, 32], sizes = [8, 32], strides = [1, 1]} : vector<8x128xf32> to vector<8x32xf32>
    %405 = arith.negf %404 : vector<8x32xf32>
    %406 = math.exp %405 : vector<8x32xf32>
    %cst_113 = arith.constant 1.000000e+00 : f32
    %407 = vector.broadcast %cst_113 : f32 to vector<8x32xf32>
    %408 = arith.addf %407, %406 : vector<8x32xf32>
    %409 = arith.divf %407, %408 : vector<8x32xf32>
    %410 = vector.extract_strided_slice %372 {offsets = [0, 64], sizes = [8, 32], strides = [1, 1]} : vector<8x128xf32> to vector<8x32xf32>
    %411 = math.tanh %410 : vector<8x32xf32>
    %412 = vector.extract_strided_slice %372 {offsets = [0, 96], sizes = [8, 32], strides = [1, 1]} : vector<8x128xf32> to vector<8x32xf32>
    %413 = arith.negf %412 : vector<8x32xf32>
    %414 = math.exp %413 : vector<8x32xf32>
    %cst_114 = arith.constant 1.000000e+00 : f32
    %415 = vector.broadcast %cst_114 : f32 to vector<8x32xf32>
    %416 = arith.addf %415, %414 : vector<8x32xf32>
    %417 = arith.divf %415, %416 : vector<8x32xf32>
    %418 = arith.mulf %409, %351 : vector<8x32xf32>
    %419 = arith.mulf %403, %411 : vector<8x32xf32>
    %420 = arith.addf %418, %419 : vector<8x32xf32>
    %421 = math.tanh %420 : vector<8x32xf32>
    %422 = arith.mulf %417, %421 : vector<8x32xf32>
    %423 = arith.index_cast %c5_i32 : i32 to index
    %c0_115 = arith.constant 0 : index
    %c0_116 = arith.constant 0 : index
    %424 = vector.load %arg18[%423, %c0_115, %c0_116] : memref<8x8x32xf32, #tpu.memory_space<vmem>>, vector<1x8x32xf32>
    %425 = vector.shape_cast %424 : vector<1x8x32xf32> to vector<8x32xf32>
    %426 = vector.shape_cast %397 : vector<8x32xf32> to vector<1x8x32xf32>
    tpu.vector_store %arg18[%423, %c0_115, %c0_116], %426 {strides = array<i32>} : memref<8x8x32xf32, #tpu.memory_space<vmem>>, vector<1x8x32xf32>,
    %427 = arith.index_cast %362 : i32 to index
    %c0_117 = arith.constant 0 : index
    %c0_118 = arith.constant 0 : index
    %428 = vector.load %arg19[%427, %c0_117, %c0_118] : memref<8x8x32xf32, #tpu.memory_space<vmem>>, vector<1x8x32xf32>
    %429 = vector.shape_cast %428 : vector<1x8x32xf32> to vector<8x32xf32>
    %430 = vector.shape_cast %422 : vector<8x32xf32> to vector<1x8x32xf32>
    tpu.vector_store %arg19[%427, %c0_117, %c0_118], %430 {strides = array<i32>} : memref<8x8x32xf32, #tpu.memory_space<vmem>>, vector<1x8x32xf32>,
    %c6_i32 = arith.constant 6 : i32
    %c7_i32_119 = arith.constant 7 : i32
    %431 = arith.subi %c7_i32_119, %c6_i32 : i32
    %432 = arith.index_cast %c6_i32 : i32 to index
    %c0_120 = arith.constant 0 : index
    %c0_121 = arith.constant 0 : index
    %433 = vector.load %arg14[%432, %c0_120, %c0_121] : memref<8x8x128xf32, #tpu.memory_space<vmem>>, vector<1x8x128xf32>
    %434 = vector.shape_cast %433 : vector<1x8x128xf32> to vector<8x128xf32>
    %cst_122 = arith.constant dense<0.000000e+00> : vector<8x128xf32>
    %435 = tpu.matmul %397, %13, %cst_122 {dimension_numbers = #tpu.dot_dimension_numbers<[1], [0], [0], [1], [0, 0, 1, 1], [], []>} : vector<8x32xf32>, vector<32x128xf32>, vector<8x128xf32> -> vector<8x128xf32>
    %436 = arith.addf %434, %435 : vector<8x128xf32>
    %437 = arith.index_cast %431 : i32 to index
    %c0_123 = arith.constant 0 : index
    %c0_124 = arith.constant 0 : index
    %438 = vector.load %arg15[%437, %c0_123, %c0_124] : memref<8x8x128xf32, #tpu.memory_space<vmem>>, vector<1x8x128xf32>
    %439 = vector.shape_cast %438 : vector<1x8x128xf32> to vector<8x128xf32>
    %cst_125 = arith.constant dense<0.000000e+00> : vector<8x128xf32>
    %440 = tpu.matmul %422, %15, %cst_125 {dimension_numbers = #tpu.dot_dimension_numbers<[1], [0], [0], [1], [0, 0, 1, 1], [], []>} : vector<8x32xf32>, vector<32x128xf32>, vector<8x128xf32> -> vector<8x128xf32>
    %441 = arith.addf %439, %440 : vector<8x128xf32>
    %442 = vector.extract_strided_slice %436 {offsets = [0, 0], sizes = [8, 32], strides = [1, 1]} : vector<8x128xf32> to vector<8x32xf32>
    %443 = arith.negf %442 : vector<8x32xf32>
    %444 = math.exp %443 : vector<8x32xf32>
    %cst_126 = arith.constant 1.000000e+00 : f32
    %445 = vector.broadcast %cst_126 : f32 to vector<8x32xf32>
    %446 = arith.addf %445, %444 : vector<8x32xf32>
    %447 = arith.divf %445, %446 : vector<8x32xf32>
    %448 = vector.extract_strided_slice %436 {offsets = [0, 32], sizes = [8, 32], strides = [1, 1]} : vector<8x128xf32> to vector<8x32xf32>
    %449 = arith.negf %448 : vector<8x32xf32>
    %450 = math.exp %449 : vector<8x32xf32>
    %cst_127 = arith.constant 1.000000e+00 : f32
    %451 = vector.broadcast %cst_127 : f32 to vector<8x32xf32>
    %452 = arith.addf %451, %450 : vector<8x32xf32>
    %453 = arith.divf %451, %452 : vector<8x32xf32>
    %454 = vector.extract_strided_slice %436 {offsets = [0, 64], sizes = [8, 32], strides = [1, 1]} : vector<8x128xf32> to vector<8x32xf32>
    %455 = math.tanh %454 : vector<8x32xf32>
    %456 = vector.extract_strided_slice %436 {offsets = [0, 96], sizes = [8, 32], strides = [1, 1]} : vector<8x128xf32> to vector<8x32xf32>
    %457 = arith.negf %456 : vector<8x32xf32>
    %458 = math.exp %457 : vector<8x32xf32>
    %cst_128 = arith.constant 1.000000e+00 : f32
    %459 = vector.broadcast %cst_128 : f32 to vector<8x32xf32>
    %460 = arith.addf %459, %458 : vector<8x32xf32>
    %461 = arith.divf %459, %460 : vector<8x32xf32>
    %462 = arith.mulf %453, %395 : vector<8x32xf32>
    %463 = arith.mulf %447, %455 : vector<8x32xf32>
    %464 = arith.addf %462, %463 : vector<8x32xf32>
    %465 = math.tanh %464 : vector<8x32xf32>
    %466 = arith.mulf %461, %465 : vector<8x32xf32>
    %467 = vector.extract_strided_slice %441 {offsets = [0, 0], sizes = [8, 32], strides = [1, 1]} : vector<8x128xf32> to vector<8x32xf32>
    %468 = arith.negf %467 : vector<8x32xf32>
    %469 = math.exp %468 : vector<8x32xf32>
    %cst_129 = arith.constant 1.000000e+00 : f32
    %470 = vector.broadcast %cst_129 : f32 to vector<8x32xf32>
    %471 = arith.addf %470, %469 : vector<8x32xf32>
    %472 = arith.divf %470, %471 : vector<8x32xf32>
    %473 = vector.extract_strided_slice %441 {offsets = [0, 32], sizes = [8, 32], strides = [1, 1]} : vector<8x128xf32> to vector<8x32xf32>
    %474 = arith.negf %473 : vector<8x32xf32>
    %475 = math.exp %474 : vector<8x32xf32>
    %cst_130 = arith.constant 1.000000e+00 : f32
    %476 = vector.broadcast %cst_130 : f32 to vector<8x32xf32>
    %477 = arith.addf %476, %475 : vector<8x32xf32>
    %478 = arith.divf %476, %477 : vector<8x32xf32>
    %479 = vector.extract_strided_slice %441 {offsets = [0, 64], sizes = [8, 32], strides = [1, 1]} : vector<8x128xf32> to vector<8x32xf32>
    %480 = math.tanh %479 : vector<8x32xf32>
    %481 = vector.extract_strided_slice %441 {offsets = [0, 96], sizes = [8, 32], strides = [1, 1]} : vector<8x128xf32> to vector<8x32xf32>
    %482 = arith.negf %481 : vector<8x32xf32>
    %483 = math.exp %482 : vector<8x32xf32>
    %cst_131 = arith.constant 1.000000e+00 : f32
    %484 = vector.broadcast %cst_131 : f32 to vector<8x32xf32>
    %485 = arith.addf %484, %483 : vector<8x32xf32>
    %486 = arith.divf %484, %485 : vector<8x32xf32>
    %487 = arith.mulf %478, %420 : vector<8x32xf32>
    %488 = arith.mulf %472, %480 : vector<8x32xf32>
    %489 = arith.addf %487, %488 : vector<8x32xf32>
    %490 = math.tanh %489 : vector<8x32xf32>
    %491 = arith.mulf %486, %490 : vector<8x32xf32>
    %492 = arith.index_cast %c6_i32 : i32 to index
    %c0_132 = arith.constant 0 : index
    %c0_133 = arith.constant 0 : index
    %493 = vector.load %arg18[%492, %c0_132, %c0_133] : memref<8x8x32xf32, #tpu.memory_space<vmem>>, vector<1x8x32xf32>
    %494 = vector.shape_cast %493 : vector<1x8x32xf32> to vector<8x32xf32>
    %495 = vector.shape_cast %466 : vector<8x32xf32> to vector<1x8x32xf32>
    tpu.vector_store %arg18[%492, %c0_132, %c0_133], %495 {strides = array<i32>} : memref<8x8x32xf32, #tpu.memory_space<vmem>>, vector<1x8x32xf32>,
    %496 = arith.index_cast %431 : i32 to index
    %c0_134 = arith.constant 0 : index
    %c0_135 = arith.constant 0 : index
    %497 = vector.load %arg19[%496, %c0_134, %c0_135] : memref<8x8x32xf32, #tpu.memory_space<vmem>>, vector<1x8x32xf32>
    %498 = vector.shape_cast %497 : vector<1x8x32xf32> to vector<8x32xf32>
    %499 = vector.shape_cast %491 : vector<8x32xf32> to vector<1x8x32xf32>
    tpu.vector_store %arg19[%496, %c0_134, %c0_135], %499 {strides = array<i32>} : memref<8x8x32xf32, #tpu.memory_space<vmem>>, vector<1x8x32xf32>,
    %c7_i32_136 = arith.constant 7 : i32
    %c7_i32_137 = arith.constant 7 : i32
    %500 = arith.subi %c7_i32_137, %c7_i32_136 : i32
    %501 = arith.index_cast %c7_i32_136 : i32 to index
    %c0_138 = arith.constant 0 : index
    %c0_139 = arith.constant 0 : index
    %502 = vector.load %arg14[%501, %c0_138, %c0_139] : memref<8x8x128xf32, #tpu.memory_space<vmem>>, vector<1x8x128xf32>
    %503 = vector.shape_cast %502 : vector<1x8x128xf32> to vector<8x128xf32>
    %cst_140 = arith.constant dense<0.000000e+00> : vector<8x128xf32>
    %504 = tpu.matmul %466, %13, %cst_140 {dimension_numbers = #tpu.dot_dimension_numbers<[1], [0], [0], [1], [0, 0, 1, 1], [], []>} : vector<8x32xf32>, vector<32x128xf32>, vector<8x128xf32> -> vector<8x128xf32>
    %505 = arith.addf %503, %504 : vector<8x128xf32>
    %506 = arith.index_cast %500 : i32 to index
    %c0_141 = arith.constant 0 : index
    %c0_142 = arith.constant 0 : index
    %507 = vector.load %arg15[%506, %c0_141, %c0_142] : memref<8x8x128xf32, #tpu.memory_space<vmem>>, vector<1x8x128xf32>
    %508 = vector.shape_cast %507 : vector<1x8x128xf32> to vector<8x128xf32>
    %cst_143 = arith.constant dense<0.000000e+00> : vector<8x128xf32>
    %509 = tpu.matmul %491, %15, %cst_143 {dimension_numbers = #tpu.dot_dimension_numbers<[1], [0], [0], [1], [0, 0, 1, 1], [], []>} : vector<8x32xf32>, vector<32x128xf32>, vector<8x128xf32> -> vector<8x128xf32>
    %510 = arith.addf %508, %509 : vector<8x128xf32>
    %511 = vector.extract_strided_slice %505 {offsets = [0, 0], sizes = [8, 32], strides = [1, 1]} : vector<8x128xf32> to vector<8x32xf32>
    %512 = arith.negf %511 : vector<8x32xf32>
    %513 = math.exp %512 : vector<8x32xf32>
    %cst_144 = arith.constant 1.000000e+00 : f32
    %514 = vector.broadcast %cst_144 : f32 to vector<8x32xf32>
    %515 = arith.addf %514, %513 : vector<8x32xf32>
    %516 = arith.divf %514, %515 : vector<8x32xf32>
    %517 = vector.extract_strided_slice %505 {offsets = [0, 32], sizes = [8, 32], strides = [1, 1]} : vector<8x128xf32> to vector<8x32xf32>
    %518 = arith.negf %517 : vector<8x32xf32>
    %519 = math.exp %518 : vector<8x32xf32>
    %cst_145 = arith.constant 1.000000e+00 : f32
    %520 = vector.broadcast %cst_145 : f32 to vector<8x32xf32>
    %521 = arith.addf %520, %519 : vector<8x32xf32>
    %522 = arith.divf %520, %521 : vector<8x32xf32>
    %523 = vector.extract_strided_slice %505 {offsets = [0, 64], sizes = [8, 32], strides = [1, 1]} : vector<8x128xf32> to vector<8x32xf32>
    %524 = math.tanh %523 : vector<8x32xf32>
    %525 = vector.extract_strided_slice %505 {offsets = [0, 96], sizes = [8, 32], strides = [1, 1]} : vector<8x128xf32> to vector<8x32xf32>
    %526 = arith.negf %525 : vector<8x32xf32>
    %527 = math.exp %526 : vector<8x32xf32>
    %cst_146 = arith.constant 1.000000e+00 : f32
    %528 = vector.broadcast %cst_146 : f32 to vector<8x32xf32>
    %529 = arith.addf %528, %527 : vector<8x32xf32>
    %530 = arith.divf %528, %529 : vector<8x32xf32>
    %531 = arith.mulf %522, %464 : vector<8x32xf32>
    %532 = arith.mulf %516, %524 : vector<8x32xf32>
    %533 = arith.addf %531, %532 : vector<8x32xf32>
    %534 = math.tanh %533 : vector<8x32xf32>
    %535 = arith.mulf %530, %534 : vector<8x32xf32>
    %536 = vector.extract_strided_slice %510 {offsets = [0, 0], sizes = [8, 32], strides = [1, 1]} : vector<8x128xf32> to vector<8x32xf32>
    %537 = arith.negf %536 : vector<8x32xf32>
    %538 = math.exp %537 : vector<8x32xf32>
    %cst_147 = arith.constant 1.000000e+00 : f32
    %539 = vector.broadcast %cst_147 : f32 to vector<8x32xf32>
    %540 = arith.addf %539, %538 : vector<8x32xf32>
    %541 = arith.divf %539, %540 : vector<8x32xf32>
    %542 = vector.extract_strided_slice %510 {offsets = [0, 32], sizes = [8, 32], strides = [1, 1]} : vector<8x128xf32> to vector<8x32xf32>
    %543 = arith.negf %542 : vector<8x32xf32>
    %544 = math.exp %543 : vector<8x32xf32>
    %cst_148 = arith.constant 1.000000e+00 : f32
    %545 = vector.broadcast %cst_148 : f32 to vector<8x32xf32>
    %546 = arith.addf %545, %544 : vector<8x32xf32>
    %547 = arith.divf %545, %546 : vector<8x32xf32>
    %548 = vector.extract_strided_slice %510 {offsets = [0, 64], sizes = [8, 32], strides = [1, 1]} : vector<8x128xf32> to vector<8x32xf32>
    %549 = math.tanh %548 : vector<8x32xf32>
    %550 = vector.extract_strided_slice %510 {offsets = [0, 96], sizes = [8, 32], strides = [1, 1]} : vector<8x128xf32> to vector<8x32xf32>
    %551 = arith.negf %550 : vector<8x32xf32>
    %552 = math.exp %551 : vector<8x32xf32>
    %cst_149 = arith.constant 1.000000e+00 : f32
    %553 = vector.broadcast %cst_149 : f32 to vector<8x32xf32>
    %554 = arith.addf %553, %552 : vector<8x32xf32>
    %555 = arith.divf %553, %554 : vector<8x32xf32>
    %556 = arith.mulf %547, %489 : vector<8x32xf32>
    %557 = arith.mulf %541, %549 : vector<8x32xf32>
    %558 = arith.addf %556, %557 : vector<8x32xf32>
    %559 = math.tanh %558 : vector<8x32xf32>
    %560 = arith.mulf %555, %559 : vector<8x32xf32>
    %561 = arith.index_cast %c7_i32_136 : i32 to index
    %c0_150 = arith.constant 0 : index
    %c0_151 = arith.constant 0 : index
    %562 = vector.load %arg18[%561, %c0_150, %c0_151] : memref<8x8x32xf32, #tpu.memory_space<vmem>>, vector<1x8x32xf32>
    %563 = vector.shape_cast %562 : vector<1x8x32xf32> to vector<8x32xf32>
    %564 = vector.shape_cast %535 : vector<8x32xf32> to vector<1x8x32xf32>
    tpu.vector_store %arg18[%561, %c0_150, %c0_151], %564 {strides = array<i32>} : memref<8x8x32xf32, #tpu.memory_space<vmem>>, vector<1x8x32xf32>,
    %565 = arith.index_cast %500 : i32 to index
    %c0_152 = arith.constant 0 : index
    %c0_153 = arith.constant 0 : index
    %566 = vector.load %arg19[%565, %c0_152, %c0_153] : memref<8x8x32xf32, #tpu.memory_space<vmem>>, vector<1x8x32xf32>
    %567 = vector.shape_cast %566 : vector<1x8x32xf32> to vector<8x32xf32>
    %568 = vector.shape_cast %560 : vector<8x32xf32> to vector<1x8x32xf32>
    tpu.vector_store %arg19[%565, %c0_152, %c0_153], %568 {strides = array<i32>} : memref<8x8x32xf32, #tpu.memory_space<vmem>>, vector<1x8x32xf32>,
    %c8_i32 = arith.constant 8 : i32
    %c0_154 = arith.constant 0 : index
    %c0_155 = arith.constant 0 : index
    %c0_156 = arith.constant 0 : index
    %569 = vector.load %arg18[%c0_154, %c0_155, %c0_156] : memref<8x8x32xf32, #tpu.memory_space<vmem>>, vector<8x8x32xf32>
    %570 = vector.shape_cast %569 : vector<8x8x32xf32> to vector<64x32xf32>
    %c0_157 = arith.constant 0 : index
    %c0_158 = arith.constant 0 : index
    %c0_159 = arith.constant 0 : index
    %571 = vector.load %arg19[%c0_157, %c0_158, %c0_159] : memref<8x8x32xf32, #tpu.memory_space<vmem>>, vector<8x8x32xf32>
    %572 = vector.shape_cast %571 : vector<8x8x32xf32> to vector<64x32xf32>
    %c0_160 = arith.constant 0 : index
    %c0_161 = arith.constant 0 : index
    %c0_162 = arith.constant 0 : index
    %573 = vector.load %arg4[%c0_160, %c0_161, %c0_162] : memref<2x32x256xf32, #tpu.memory_space<vmem>>, vector<1x32x256xf32>
    %574 = vector.shape_cast %573 : vector<1x32x256xf32> to vector<32x256xf32>
    %cst_163 = arith.constant dense<0.000000e+00> : vector<64x256xf32>
    %575 = tpu.matmul %570, %574, %cst_163 {dimension_numbers = #tpu.dot_dimension_numbers<[1], [0], [0], [1], [0, 0, 1, 1], [], []>} : vector<64x32xf32>, vector<32x256xf32>, vector<64x256xf32> -> vector<64x256xf32>
    %c1_164 = arith.constant 1 : index
    %c0_165 = arith.constant 0 : index
    %c0_166 = arith.constant 0 : index
    %576 = vector.load %arg4[%c1_164, %c0_165, %c0_166] : memref<2x32x256xf32, #tpu.memory_space<vmem>>, vector<1x32x256xf32>
    %577 = vector.shape_cast %576 : vector<1x32x256xf32> to vector<32x256xf32>
    %cst_167 = arith.constant dense<0.000000e+00> : vector<64x256xf32>
    %578 = tpu.matmul %572, %577, %cst_167 {dimension_numbers = #tpu.dot_dimension_numbers<[1], [0], [0], [1], [0, 0, 1, 1], [], []>} : vector<64x32xf32>, vector<32x256xf32>, vector<64x256xf32> -> vector<64x256xf32>
    %579 = arith.addf %575, %578 : vector<64x256xf32>
    %c0_168 = arith.constant 0 : index
    %c0_169 = arith.constant 0 : index
    %580 = vector.load %arg6[%c0_168, %c0_169] : memref<1x256xf32, #tpu.memory_space<vmem>>, vector<1x256xf32>
    %581 = vector.broadcast %580 : vector<1x256xf32> to vector<64x256xf32>
    %582 = arith.addf %579, %581 : vector<64x256xf32>
    %583 = vector.shape_cast %582 : vector<64x256xf32> to vector<8x8x256xf32>
    %584 = vector.extract_strided_slice %583 {offsets = [0, 0, 0], sizes = [8, 8, 128], strides = [1, 1, 1]} : vector<8x8x256xf32> to vector<8x8x128xf32>
    %c0_170 = arith.constant 0 : index
    %c0_171 = arith.constant 0 : index
    %c0_172 = arith.constant 0 : index
    %585 = vector.load %arg14[%c0_170, %c0_171, %c0_172] : memref<8x8x128xf32, #tpu.memory_space<vmem>>, vector<8x8x128xf32>
    tpu.vector_store %arg14[%c0_170, %c0_171, %c0_172], %584 {strides = array<i32>} : memref<8x8x128xf32, #tpu.memory_space<vmem>>, vector<8x8x128xf32>,
    %586 = vector.extract_strided_slice %583 {offsets = [0, 0, 128], sizes = [8, 8, 128], strides = [1, 1, 1]} : vector<8x8x256xf32> to vector<8x8x128xf32>
    %c0_173 = arith.constant 0 : index
    %c0_174 = arith.constant 0 : index
    %c0_175 = arith.constant 0 : index
    %587 = vector.load %arg15[%c0_173, %c0_174, %c0_175] : memref<8x8x128xf32, #tpu.memory_space<vmem>>, vector<8x8x128xf32>
    tpu.vector_store %arg15[%c0_173, %c0_174, %c0_175], %586 {strides = array<i32>} : memref<8x8x128xf32, #tpu.memory_space<vmem>>, vector<8x8x128xf32>,
    %c0_176 = arith.constant 0 : index
    %c0_177 = arith.constant 0 : index
    %c0_178 = arith.constant 0 : index
    %588 = vector.load %arg5[%c0_176, %c0_177, %c0_178] : memref<2x32x128xf32, #tpu.memory_space<vmem>>, vector<1x32x128xf32>
    %589 = vector.shape_cast %588 : vector<1x32x128xf32> to vector<32x128xf32>
    %c1_179 = arith.constant 1 : index
    %c0_180 = arith.constant 0 : index
    %c0_181 = arith.constant 0 : index
    %590 = vector.load %arg5[%c1_179, %c0_180, %c0_181] : memref<2x32x128xf32, #tpu.memory_space<vmem>>, vector<1x32x128xf32>
    %591 = vector.shape_cast %590 : vector<1x32x128xf32> to vector<32x128xf32>
    %cst_182 = arith.constant 0.000000e+00 : f32
    %592 = vector.broadcast %cst_182 : f32 to vector<8x32xf32>
    %c0_i32_183 = arith.constant 0 : i32
    %c7_i32_184 = arith.constant 7 : i32
    %593 = arith.subi %c7_i32_184, %c0_i32_183 : i32
    %594 = arith.index_cast %c0_i32_183 : i32 to index
    %c0_185 = arith.constant 0 : index
    %c0_186 = arith.constant 0 : index
    %595 = vector.load %arg14[%594, %c0_185, %c0_186] : memref<8x8x128xf32, #tpu.memory_space<vmem>>, vector<1x8x128xf32>
    %596 = vector.shape_cast %595 : vector<1x8x128xf32> to vector<8x128xf32>
    %cst_187 = arith.constant dense<0.000000e+00> : vector<8x128xf32>
    %597 = tpu.matmul %592, %589, %cst_187 {dimension_numbers = #tpu.dot_dimension_numbers<[1], [0], [0], [1], [0, 0, 1, 1], [], []>} : vector<8x32xf32>, vector<32x128xf32>, vector<8x128xf32> -> vector<8x128xf32>
    %598 = arith.addf %596, %597 : vector<8x128xf32>
    %599 = arith.index_cast %593 : i32 to index
    %c0_188 = arith.constant 0 : index
    %c0_189 = arith.constant 0 : index
    %600 = vector.load %arg15[%599, %c0_188, %c0_189] : memref<8x8x128xf32, #tpu.memory_space<vmem>>, vector<1x8x128xf32>
    %601 = vector.shape_cast %600 : vector<1x8x128xf32> to vector<8x128xf32>
    %cst_190 = arith.constant dense<0.000000e+00> : vector<8x128xf32>
    %602 = tpu.matmul %592, %591, %cst_190 {dimension_numbers = #tpu.dot_dimension_numbers<[1], [0], [0], [1], [0, 0, 1, 1], [], []>} : vector<8x32xf32>, vector<32x128xf32>, vector<8x128xf32> -> vector<8x128xf32>
    %603 = arith.addf %601, %602 : vector<8x128xf32>
    %604 = vector.extract_strided_slice %598 {offsets = [0, 0], sizes = [8, 32], strides = [1, 1]} : vector<8x128xf32> to vector<8x32xf32>
    %605 = arith.negf %604 : vector<8x32xf32>
    %606 = math.exp %605 : vector<8x32xf32>
    %cst_191 = arith.constant 1.000000e+00 : f32
    %607 = vector.broadcast %cst_191 : f32 to vector<8x32xf32>
    %608 = arith.addf %607, %606 : vector<8x32xf32>
    %609 = arith.divf %607, %608 : vector<8x32xf32>
    %610 = vector.extract_strided_slice %598 {offsets = [0, 32], sizes = [8, 32], strides = [1, 1]} : vector<8x128xf32> to vector<8x32xf32>
    %611 = arith.negf %610 : vector<8x32xf32>
    %612 = math.exp %611 : vector<8x32xf32>
    %cst_192 = arith.constant 1.000000e+00 : f32
    %613 = vector.broadcast %cst_192 : f32 to vector<8x32xf32>
    %614 = arith.addf %613, %612 : vector<8x32xf32>
    %615 = arith.divf %613, %614 : vector<8x32xf32>
    %616 = vector.extract_strided_slice %598 {offsets = [0, 64], sizes = [8, 32], strides = [1, 1]} : vector<8x128xf32> to vector<8x32xf32>
    %617 = math.tanh %616 : vector<8x32xf32>
    %618 = vector.extract_strided_slice %598 {offsets = [0, 96], sizes = [8, 32], strides = [1, 1]} : vector<8x128xf32> to vector<8x32xf32>
    %619 = arith.negf %618 : vector<8x32xf32>
    %620 = math.exp %619 : vector<8x32xf32>
    %cst_193 = arith.constant 1.000000e+00 : f32
    %621 = vector.broadcast %cst_193 : f32 to vector<8x32xf32>
    %622 = arith.addf %621, %620 : vector<8x32xf32>
    %623 = arith.divf %621, %622 : vector<8x32xf32>
    %624 = arith.mulf %615, %592 : vector<8x32xf32>
    %625 = arith.mulf %609, %617 : vector<8x32xf32>
    %626 = arith.addf %624, %625 : vector<8x32xf32>
    %627 = math.tanh %626 : vector<8x32xf32>
    %628 = arith.mulf %623, %627 : vector<8x32xf32>
    %629 = vector.extract_strided_slice %603 {offsets = [0, 0], sizes = [8, 32], strides = [1, 1]} : vector<8x128xf32> to vector<8x32xf32>
    %630 = arith.negf %629 : vector<8x32xf32>
    %631 = math.exp %630 : vector<8x32xf32>
    %cst_194 = arith.constant 1.000000e+00 : f32
    %632 = vector.broadcast %cst_194 : f32 to vector<8x32xf32>
    %633 = arith.addf %632, %631 : vector<8x32xf32>
    %634 = arith.divf %632, %633 : vector<8x32xf32>
    %635 = vector.extract_strided_slice %603 {offsets = [0, 32], sizes = [8, 32], strides = [1, 1]} : vector<8x128xf32> to vector<8x32xf32>
    %636 = arith.negf %635 : vector<8x32xf32>
    %637 = math.exp %636 : vector<8x32xf32>
    %cst_195 = arith.constant 1.000000e+00 : f32
    %638 = vector.broadcast %cst_195 : f32 to vector<8x32xf32>
    %639 = arith.addf %638, %637 : vector<8x32xf32>
    %640 = arith.divf %638, %639 : vector<8x32xf32>
    %641 = vector.extract_strided_slice %603 {offsets = [0, 64], sizes = [8, 32], strides = [1, 1]} : vector<8x128xf32> to vector<8x32xf32>
    %642 = math.tanh %641 : vector<8x32xf32>
    %643 = vector.extract_strided_slice %603 {offsets = [0, 96], sizes = [8, 32], strides = [1, 1]} : vector<8x128xf32> to vector<8x32xf32>
    %644 = arith.negf %643 : vector<8x32xf32>
    %645 = math.exp %644 : vector<8x32xf32>
    %cst_196 = arith.constant 1.000000e+00 : f32
    %646 = vector.broadcast %cst_196 : f32 to vector<8x32xf32>
    %647 = arith.addf %646, %645 : vector<8x32xf32>
    %648 = arith.divf %646, %647 : vector<8x32xf32>
    %649 = arith.mulf %640, %592 : vector<8x32xf32>
    %650 = arith.mulf %634, %642 : vector<8x32xf32>
    %651 = arith.addf %649, %650 : vector<8x32xf32>
    %652 = math.tanh %651 : vector<8x32xf32>
    %653 = arith.mulf %648, %652 : vector<8x32xf32>
    %654 = arith.index_cast %c0_i32_183 : i32 to index
    %c0_197 = arith.constant 0 : index
    %c0_198 = arith.constant 0 : index
    %655 = vector.load %arg16[%654, %c0_197, %c0_198] : memref<8x8x32xf32, #tpu.memory_space<vmem>>, vector<1x8x32xf32>
    %656 = vector.shape_cast %655 : vector<1x8x32xf32> to vector<8x32xf32>
    %657 = vector.shape_cast %628 : vector<8x32xf32> to vector<1x8x32xf32>
    tpu.vector_store %arg16[%654, %c0_197, %c0_198], %657 {strides = array<i32>} : memref<8x8x32xf32, #tpu.memory_space<vmem>>, vector<1x8x32xf32>,
    %658 = arith.index_cast %593 : i32 to index
    %c0_199 = arith.constant 0 : index
    %c0_200 = arith.constant 0 : index
    %659 = vector.load %arg17[%658, %c0_199, %c0_200] : memref<8x8x32xf32, #tpu.memory_space<vmem>>, vector<1x8x32xf32>
    %660 = vector.shape_cast %659 : vector<1x8x32xf32> to vector<8x32xf32>
    %661 = vector.shape_cast %653 : vector<8x32xf32> to vector<1x8x32xf32>
    tpu.vector_store %arg17[%658, %c0_199, %c0_200], %661 {strides = array<i32>} : memref<8x8x32xf32, #tpu.memory_space<vmem>>, vector<1x8x32xf32>,
    %c1_i32_201 = arith.constant 1 : i32
    %c7_i32_202 = arith.constant 7 : i32
    %662 = arith.subi %c7_i32_202, %c1_i32_201 : i32
    %663 = arith.index_cast %c1_i32_201 : i32 to index
    %c0_203 = arith.constant 0 : index
    %c0_204 = arith.constant 0 : index
    %664 = vector.load %arg14[%663, %c0_203, %c0_204] : memref<8x8x128xf32, #tpu.memory_space<vmem>>, vector<1x8x128xf32>
    %665 = vector.shape_cast %664 : vector<1x8x128xf32> to vector<8x128xf32>
    %cst_205 = arith.constant dense<0.000000e+00> : vector<8x128xf32>
    %666 = tpu.matmul %628, %589, %cst_205 {dimension_numbers = #tpu.dot_dimension_numbers<[1], [0], [0], [1], [0, 0, 1, 1], [], []>} : vector<8x32xf32>, vector<32x128xf32>, vector<8x128xf32> -> vector<8x128xf32>
    %667 = arith.addf %665, %666 : vector<8x128xf32>
    %668 = arith.index_cast %662 : i32 to index
    %c0_206 = arith.constant 0 : index
    %c0_207 = arith.constant 0 : index
    %669 = vector.load %arg15[%668, %c0_206, %c0_207] : memref<8x8x128xf32, #tpu.memory_space<vmem>>, vector<1x8x128xf32>
    %670 = vector.shape_cast %669 : vector<1x8x128xf32> to vector<8x128xf32>
    %cst_208 = arith.constant dense<0.000000e+00> : vector<8x128xf32>
    %671 = tpu.matmul %653, %591, %cst_208 {dimension_numbers = #tpu.dot_dimension_numbers<[1], [0], [0], [1], [0, 0, 1, 1], [], []>} : vector<8x32xf32>, vector<32x128xf32>, vector<8x128xf32> -> vector<8x128xf32>
    %672 = arith.addf %670, %671 : vector<8x128xf32>
    %673 = vector.extract_strided_slice %667 {offsets = [0, 0], sizes = [8, 32], strides = [1, 1]} : vector<8x128xf32> to vector<8x32xf32>
    %674 = arith.negf %673 : vector<8x32xf32>
    %675 = math.exp %674 : vector<8x32xf32>
    %cst_209 = arith.constant 1.000000e+00 : f32
    %676 = vector.broadcast %cst_209 : f32 to vector<8x32xf32>
    %677 = arith.addf %676, %675 : vector<8x32xf32>
    %678 = arith.divf %676, %677 : vector<8x32xf32>
    %679 = vector.extract_strided_slice %667 {offsets = [0, 32], sizes = [8, 32], strides = [1, 1]} : vector<8x128xf32> to vector<8x32xf32>
    %680 = arith.negf %679 : vector<8x32xf32>
    %681 = math.exp %680 : vector<8x32xf32>
    %cst_210 = arith.constant 1.000000e+00 : f32
    %682 = vector.broadcast %cst_210 : f32 to vector<8x32xf32>
    %683 = arith.addf %682, %681 : vector<8x32xf32>
    %684 = arith.divf %682, %683 : vector<8x32xf32>
    %685 = vector.extract_strided_slice %667 {offsets = [0, 64], sizes = [8, 32], strides = [1, 1]} : vector<8x128xf32> to vector<8x32xf32>
    %686 = math.tanh %685 : vector<8x32xf32>
    %687 = vector.extract_strided_slice %667 {offsets = [0, 96], sizes = [8, 32], strides = [1, 1]} : vector<8x128xf32> to vector<8x32xf32>
    %688 = arith.negf %687 : vector<8x32xf32>
    %689 = math.exp %688 : vector<8x32xf32>
    %cst_211 = arith.constant 1.000000e+00 : f32
    %690 = vector.broadcast %cst_211 : f32 to vector<8x32xf32>
    %691 = arith.addf %690, %689 : vector<8x32xf32>
    %692 = arith.divf %690, %691 : vector<8x32xf32>
    %693 = arith.mulf %684, %626 : vector<8x32xf32>
    %694 = arith.mulf %678, %686 : vector<8x32xf32>
    %695 = arith.addf %693, %694 : vector<8x32xf32>
    %696 = math.tanh %695 : vector<8x32xf32>
    %697 = arith.mulf %692, %696 : vector<8x32xf32>
    %698 = vector.extract_strided_slice %672 {offsets = [0, 0], sizes = [8, 32], strides = [1, 1]} : vector<8x128xf32> to vector<8x32xf32>
    %699 = arith.negf %698 : vector<8x32xf32>
    %700 = math.exp %699 : vector<8x32xf32>
    %cst_212 = arith.constant 1.000000e+00 : f32
    %701 = vector.broadcast %cst_212 : f32 to vector<8x32xf32>
    %702 = arith.addf %701, %700 : vector<8x32xf32>
    %703 = arith.divf %701, %702 : vector<8x32xf32>
    %704 = vector.extract_strided_slice %672 {offsets = [0, 32], sizes = [8, 32], strides = [1, 1]} : vector<8x128xf32> to vector<8x32xf32>
    %705 = arith.negf %704 : vector<8x32xf32>
    %706 = math.exp %705 : vector<8x32xf32>
    %cst_213 = arith.constant 1.000000e+00 : f32
    %707 = vector.broadcast %cst_213 : f32 to vector<8x32xf32>
    %708 = arith.addf %707, %706 : vector<8x32xf32>
    %709 = arith.divf %707, %708 : vector<8x32xf32>
    %710 = vector.extract_strided_slice %672 {offsets = [0, 64], sizes = [8, 32], strides = [1, 1]} : vector<8x128xf32> to vector<8x32xf32>
    %711 = math.tanh %710 : vector<8x32xf32>
    %712 = vector.extract_strided_slice %672 {offsets = [0, 96], sizes = [8, 32], strides = [1, 1]} : vector<8x128xf32> to vector<8x32xf32>
    %713 = arith.negf %712 : vector<8x32xf32>
    %714 = math.exp %713 : vector<8x32xf32>
    %cst_214 = arith.constant 1.000000e+00 : f32
    %715 = vector.broadcast %cst_214 : f32 to vector<8x32xf32>
    %716 = arith.addf %715, %714 : vector<8x32xf32>
    %717 = arith.divf %715, %716 : vector<8x32xf32>
    %718 = arith.mulf %709, %651 : vector<8x32xf32>
    %719 = arith.mulf %703, %711 : vector<8x32xf32>
    %720 = arith.addf %718, %719 : vector<8x32xf32>
    %721 = math.tanh %720 : vector<8x32xf32>
    %722 = arith.mulf %717, %721 : vector<8x32xf32>
    %723 = arith.index_cast %c1_i32_201 : i32 to index
    %c0_215 = arith.constant 0 : index
    %c0_216 = arith.constant 0 : index
    %724 = vector.load %arg16[%723, %c0_215, %c0_216] : memref<8x8x32xf32, #tpu.memory_space<vmem>>, vector<1x8x32xf32>
    %725 = vector.shape_cast %724 : vector<1x8x32xf32> to vector<8x32xf32>
    %726 = vector.shape_cast %697 : vector<8x32xf32> to vector<1x8x32xf32>
    tpu.vector_store %arg16[%723, %c0_215, %c0_216], %726 {strides = array<i32>} : memref<8x8x32xf32, #tpu.memory_space<vmem>>, vector<1x8x32xf32>,
    %727 = arith.index_cast %662 : i32 to index
    %c0_217 = arith.constant 0 : index
    %c0_218 = arith.constant 0 : index
    %728 = vector.load %arg17[%727, %c0_217, %c0_218] : memref<8x8x32xf32, #tpu.memory_space<vmem>>, vector<1x8x32xf32>
    %729 = vector.shape_cast %728 : vector<1x8x32xf32> to vector<8x32xf32>
    %730 = vector.shape_cast %722 : vector<8x32xf32> to vector<1x8x32xf32>
    tpu.vector_store %arg17[%727, %c0_217, %c0_218], %730 {strides = array<i32>} : memref<8x8x32xf32, #tpu.memory_space<vmem>>, vector<1x8x32xf32>,
    %c2_i32_219 = arith.constant 2 : i32
    %c7_i32_220 = arith.constant 7 : i32
    %731 = arith.subi %c7_i32_220, %c2_i32_219 : i32
    %732 = arith.index_cast %c2_i32_219 : i32 to index
    %c0_221 = arith.constant 0 : index
    %c0_222 = arith.constant 0 : index
    %733 = vector.load %arg14[%732, %c0_221, %c0_222] : memref<8x8x128xf32, #tpu.memory_space<vmem>>, vector<1x8x128xf32>
    %734 = vector.shape_cast %733 : vector<1x8x128xf32> to vector<8x128xf32>
    %cst_223 = arith.constant dense<0.000000e+00> : vector<8x128xf32>
    %735 = tpu.matmul %697, %589, %cst_223 {dimension_numbers = #tpu.dot_dimension_numbers<[1], [0], [0], [1], [0, 0, 1, 1], [], []>} : vector<8x32xf32>, vector<32x128xf32>, vector<8x128xf32> -> vector<8x128xf32>
    %736 = arith.addf %734, %735 : vector<8x128xf32>
    %737 = arith.index_cast %731 : i32 to index
    %c0_224 = arith.constant 0 : index
    %c0_225 = arith.constant 0 : index
    %738 = vector.load %arg15[%737, %c0_224, %c0_225] : memref<8x8x128xf32, #tpu.memory_space<vmem>>, vector<1x8x128xf32>
    %739 = vector.shape_cast %738 : vector<1x8x128xf32> to vector<8x128xf32>
    %cst_226 = arith.constant dense<0.000000e+00> : vector<8x128xf32>
    %740 = tpu.matmul %722, %591, %cst_226 {dimension_numbers = #tpu.dot_dimension_numbers<[1], [0], [0], [1], [0, 0, 1, 1], [], []>} : vector<8x32xf32>, vector<32x128xf32>, vector<8x128xf32> -> vector<8x128xf32>
    %741 = arith.addf %739, %740 : vector<8x128xf32>
    %742 = vector.extract_strided_slice %736 {offsets = [0, 0], sizes = [8, 32], strides = [1, 1]} : vector<8x128xf32> to vector<8x32xf32>
    %743 = arith.negf %742 : vector<8x32xf32>
    %744 = math.exp %743 : vector<8x32xf32>
    %cst_227 = arith.constant 1.000000e+00 : f32
    %745 = vector.broadcast %cst_227 : f32 to vector<8x32xf32>
    %746 = arith.addf %745, %744 : vector<8x32xf32>
    %747 = arith.divf %745, %746 : vector<8x32xf32>
    %748 = vector.extract_strided_slice %736 {offsets = [0, 32], sizes = [8, 32], strides = [1, 1]} : vector<8x128xf32> to vector<8x32xf32>
    %749 = arith.negf %748 : vector<8x32xf32>
    %750 = math.exp %749 : vector<8x32xf32>
    %cst_228 = arith.constant 1.000000e+00 : f32
    %751 = vector.broadcast %cst_228 : f32 to vector<8x32xf32>
    %752 = arith.addf %751, %750 : vector<8x32xf32>
    %753 = arith.divf %751, %752 : vector<8x32xf32>
    %754 = vector.extract_strided_slice %736 {offsets = [0, 64], sizes = [8, 32], strides = [1, 1]} : vector<8x128xf32> to vector<8x32xf32>
    %755 = math.tanh %754 : vector<8x32xf32>
    %756 = vector.extract_strided_slice %736 {offsets = [0, 96], sizes = [8, 32], strides = [1, 1]} : vector<8x128xf32> to vector<8x32xf32>
    %757 = arith.negf %756 : vector<8x32xf32>
    %758 = math.exp %757 : vector<8x32xf32>
    %cst_229 = arith.constant 1.000000e+00 : f32
    %759 = vector.broadcast %cst_229 : f32 to vector<8x32xf32>
    %760 = arith.addf %759, %758 : vector<8x32xf32>
    %761 = arith.divf %759, %760 : vector<8x32xf32>
    %762 = arith.mulf %753, %695 : vector<8x32xf32>
    %763 = arith.mulf %747, %755 : vector<8x32xf32>
    %764 = arith.addf %762, %763 : vector<8x32xf32>
    %765 = math.tanh %764 : vector<8x32xf32>
    %766 = arith.mulf %761, %765 : vector<8x32xf32>
    %767 = vector.extract_strided_slice %741 {offsets = [0, 0], sizes = [8, 32], strides = [1, 1]} : vector<8x128xf32> to vector<8x32xf32>
    %768 = arith.negf %767 : vector<8x32xf32>
    %769 = math.exp %768 : vector<8x32xf32>
    %cst_230 = arith.constant 1.000000e+00 : f32
    %770 = vector.broadcast %cst_230 : f32 to vector<8x32xf32>
    %771 = arith.addf %770, %769 : vector<8x32xf32>
    %772 = arith.divf %770, %771 : vector<8x32xf32>
    %773 = vector.extract_strided_slice %741 {offsets = [0, 32], sizes = [8, 32], strides = [1, 1]} : vector<8x128xf32> to vector<8x32xf32>
    %774 = arith.negf %773 : vector<8x32xf32>
    %775 = math.exp %774 : vector<8x32xf32>
    %cst_231 = arith.constant 1.000000e+00 : f32
    %776 = vector.broadcast %cst_231 : f32 to vector<8x32xf32>
    %777 = arith.addf %776, %775 : vector<8x32xf32>
    %778 = arith.divf %776, %777 : vector<8x32xf32>
    %779 = vector.extract_strided_slice %741 {offsets = [0, 64], sizes = [8, 32], strides = [1, 1]} : vector<8x128xf32> to vector<8x32xf32>
    %780 = math.tanh %779 : vector<8x32xf32>
    %781 = vector.extract_strided_slice %741 {offsets = [0, 96], sizes = [8, 32], strides = [1, 1]} : vector<8x128xf32> to vector<8x32xf32>
    %782 = arith.negf %781 : vector<8x32xf32>
    %783 = math.exp %782 : vector<8x32xf32>
    %cst_232 = arith.constant 1.000000e+00 : f32
    %784 = vector.broadcast %cst_232 : f32 to vector<8x32xf32>
    %785 = arith.addf %784, %783 : vector<8x32xf32>
    %786 = arith.divf %784, %785 : vector<8x32xf32>
    %787 = arith.mulf %778, %720 : vector<8x32xf32>
    %788 = arith.mulf %772, %780 : vector<8x32xf32>
    %789 = arith.addf %787, %788 : vector<8x32xf32>
    %790 = math.tanh %789 : vector<8x32xf32>
    %791 = arith.mulf %786, %790 : vector<8x32xf32>
    %792 = arith.index_cast %c2_i32_219 : i32 to index
    %c0_233 = arith.constant 0 : index
    %c0_234 = arith.constant 0 : index
    %793 = vector.load %arg16[%792, %c0_233, %c0_234] : memref<8x8x32xf32, #tpu.memory_space<vmem>>, vector<1x8x32xf32>
    %794 = vector.shape_cast %793 : vector<1x8x32xf32> to vector<8x32xf32>
    %795 = vector.shape_cast %766 : vector<8x32xf32> to vector<1x8x32xf32>
    tpu.vector_store %arg16[%792, %c0_233, %c0_234], %795 {strides = array<i32>} : memref<8x8x32xf32, #tpu.memory_space<vmem>>, vector<1x8x32xf32>,
    %796 = arith.index_cast %731 : i32 to index
    %c0_235 = arith.constant 0 : index
    %c0_236 = arith.constant 0 : index
    %797 = vector.load %arg17[%796, %c0_235, %c0_236] : memref<8x8x32xf32, #tpu.memory_space<vmem>>, vector<1x8x32xf32>
    %798 = vector.shape_cast %797 : vector<1x8x32xf32> to vector<8x32xf32>
    %799 = vector.shape_cast %791 : vector<8x32xf32> to vector<1x8x32xf32>
    tpu.vector_store %arg17[%796, %c0_235, %c0_236], %799 {strides = array<i32>} : memref<8x8x32xf32, #tpu.memory_space<vmem>>, vector<1x8x32xf32>,
    %c3_i32_237 = arith.constant 3 : i32
    %c7_i32_238 = arith.constant 7 : i32
    %800 = arith.subi %c7_i32_238, %c3_i32_237 : i32
    %801 = arith.index_cast %c3_i32_237 : i32 to index
    %c0_239 = arith.constant 0 : index
    %c0_240 = arith.constant 0 : index
    %802 = vector.load %arg14[%801, %c0_239, %c0_240] : memref<8x8x128xf32, #tpu.memory_space<vmem>>, vector<1x8x128xf32>
    %803 = vector.shape_cast %802 : vector<1x8x128xf32> to vector<8x128xf32>
    %cst_241 = arith.constant dense<0.000000e+00> : vector<8x128xf32>
    %804 = tpu.matmul %766, %589, %cst_241 {dimension_numbers = #tpu.dot_dimension_numbers<[1], [0], [0], [1], [0, 0, 1, 1], [], []>} : vector<8x32xf32>, vector<32x128xf32>, vector<8x128xf32> -> vector<8x128xf32>
    %805 = arith.addf %803, %804 : vector<8x128xf32>
    %806 = arith.index_cast %800 : i32 to index
    %c0_242 = arith.constant 0 : index
    %c0_243 = arith.constant 0 : index
    %807 = vector.load %arg15[%806, %c0_242, %c0_243] : memref<8x8x128xf32, #tpu.memory_space<vmem>>, vector<1x8x128xf32>
    %808 = vector.shape_cast %807 : vector<1x8x128xf32> to vector<8x128xf32>
    %cst_244 = arith.constant dense<0.000000e+00> : vector<8x128xf32>
    %809 = tpu.matmul %791, %591, %cst_244 {dimension_numbers = #tpu.dot_dimension_numbers<[1], [0], [0], [1], [0, 0, 1, 1], [], []>} : vector<8x32xf32>, vector<32x128xf32>, vector<8x128xf32> -> vector<8x128xf32>
    %810 = arith.addf %808, %809 : vector<8x128xf32>
    %811 = vector.extract_strided_slice %805 {offsets = [0, 0], sizes = [8, 32], strides = [1, 1]} : vector<8x128xf32> to vector<8x32xf32>
    %812 = arith.negf %811 : vector<8x32xf32>
    %813 = math.exp %812 : vector<8x32xf32>
    %cst_245 = arith.constant 1.000000e+00 : f32
    %814 = vector.broadcast %cst_245 : f32 to vector<8x32xf32>
    %815 = arith.addf %814, %813 : vector<8x32xf32>
    %816 = arith.divf %814, %815 : vector<8x32xf32>
    %817 = vector.extract_strided_slice %805 {offsets = [0, 32], sizes = [8, 32], strides = [1, 1]} : vector<8x128xf32> to vector<8x32xf32>
    %818 = arith.negf %817 : vector<8x32xf32>
    %819 = math.exp %818 : vector<8x32xf32>
    %cst_246 = arith.constant 1.000000e+00 : f32
    %820 = vector.broadcast %cst_246 : f32 to vector<8x32xf32>
    %821 = arith.addf %820, %819 : vector<8x32xf32>
    %822 = arith.divf %820, %821 : vector<8x32xf32>
    %823 = vector.extract_strided_slice %805 {offsets = [0, 64], sizes = [8, 32], strides = [1, 1]} : vector<8x128xf32> to vector<8x32xf32>
    %824 = math.tanh %823 : vector<8x32xf32>
    %825 = vector.extract_strided_slice %805 {offsets = [0, 96], sizes = [8, 32], strides = [1, 1]} : vector<8x128xf32> to vector<8x32xf32>
    %826 = arith.negf %825 : vector<8x32xf32>
    %827 = math.exp %826 : vector<8x32xf32>
    %cst_247 = arith.constant 1.000000e+00 : f32
    %828 = vector.broadcast %cst_247 : f32 to vector<8x32xf32>
    %829 = arith.addf %828, %827 : vector<8x32xf32>
    %830 = arith.divf %828, %829 : vector<8x32xf32>
    %831 = arith.mulf %822, %764 : vector<8x32xf32>
    %832 = arith.mulf %816, %824 : vector<8x32xf32>
    %833 = arith.addf %831, %832 : vector<8x32xf32>
    %834 = math.tanh %833 : vector<8x32xf32>
    %835 = arith.mulf %830, %834 : vector<8x32xf32>
    %836 = vector.extract_strided_slice %810 {offsets = [0, 0], sizes = [8, 32], strides = [1, 1]} : vector<8x128xf32> to vector<8x32xf32>
    %837 = arith.negf %836 : vector<8x32xf32>
    %838 = math.exp %837 : vector<8x32xf32>
    %cst_248 = arith.constant 1.000000e+00 : f32
    %839 = vector.broadcast %cst_248 : f32 to vector<8x32xf32>
    %840 = arith.addf %839, %838 : vector<8x32xf32>
    %841 = arith.divf %839, %840 : vector<8x32xf32>
    %842 = vector.extract_strided_slice %810 {offsets = [0, 32], sizes = [8, 32], strides = [1, 1]} : vector<8x128xf32> to vector<8x32xf32>
    %843 = arith.negf %842 : vector<8x32xf32>
    %844 = math.exp %843 : vector<8x32xf32>
    %cst_249 = arith.constant 1.000000e+00 : f32
    %845 = vector.broadcast %cst_249 : f32 to vector<8x32xf32>
    %846 = arith.addf %845, %844 : vector<8x32xf32>
    %847 = arith.divf %845, %846 : vector<8x32xf32>
    %848 = vector.extract_strided_slice %810 {offsets = [0, 64], sizes = [8, 32], strides = [1, 1]} : vector<8x128xf32> to vector<8x32xf32>
    %849 = math.tanh %848 : vector<8x32xf32>
    %850 = vector.extract_strided_slice %810 {offsets = [0, 96], sizes = [8, 32], strides = [1, 1]} : vector<8x128xf32> to vector<8x32xf32>
    %851 = arith.negf %850 : vector<8x32xf32>
    %852 = math.exp %851 : vector<8x32xf32>
    %cst_250 = arith.constant 1.000000e+00 : f32
    %853 = vector.broadcast %cst_250 : f32 to vector<8x32xf32>
    %854 = arith.addf %853, %852 : vector<8x32xf32>
    %855 = arith.divf %853, %854 : vector<8x32xf32>
    %856 = arith.mulf %847, %789 : vector<8x32xf32>
    %857 = arith.mulf %841, %849 : vector<8x32xf32>
    %858 = arith.addf %856, %857 : vector<8x32xf32>
    %859 = math.tanh %858 : vector<8x32xf32>
    %860 = arith.mulf %855, %859 : vector<8x32xf32>
    %861 = arith.index_cast %c3_i32_237 : i32 to index
    %c0_251 = arith.constant 0 : index
    %c0_252 = arith.constant 0 : index
    %862 = vector.load %arg16[%861, %c0_251, %c0_252] : memref<8x8x32xf32, #tpu.memory_space<vmem>>, vector<1x8x32xf32>
    %863 = vector.shape_cast %862 : vector<1x8x32xf32> to vector<8x32xf32>
    %864 = vector.shape_cast %835 : vector<8x32xf32> to vector<1x8x32xf32>
    tpu.vector_store %arg16[%861, %c0_251, %c0_252], %864 {strides = array<i32>} : memref<8x8x32xf32, #tpu.memory_space<vmem>>, vector<1x8x32xf32>,
    %865 = arith.index_cast %800 : i32 to index
    %c0_253 = arith.constant 0 : index
    %c0_254 = arith.constant 0 : index
    %866 = vector.load %arg17[%865, %c0_253, %c0_254] : memref<8x8x32xf32, #tpu.memory_space<vmem>>, vector<1x8x32xf32>
    %867 = vector.shape_cast %866 : vector<1x8x32xf32> to vector<8x32xf32>
    %868 = vector.shape_cast %860 : vector<8x32xf32> to vector<1x8x32xf32>
    tpu.vector_store %arg17[%865, %c0_253, %c0_254], %868 {strides = array<i32>} : memref<8x8x32xf32, #tpu.memory_space<vmem>>, vector<1x8x32xf32>,
    %c4_i32_255 = arith.constant 4 : i32
    %c7_i32_256 = arith.constant 7 : i32
    %869 = arith.subi %c7_i32_256, %c4_i32_255 : i32
    %870 = arith.index_cast %c4_i32_255 : i32 to index
    %c0_257 = arith.constant 0 : index
    %c0_258 = arith.constant 0 : index
    %871 = vector.load %arg14[%870, %c0_257, %c0_258] : memref<8x8x128xf32, #tpu.memory_space<vmem>>, vector<1x8x128xf32>
    %872 = vector.shape_cast %871 : vector<1x8x128xf32> to vector<8x128xf32>
    %cst_259 = arith.constant dense<0.000000e+00> : vector<8x128xf32>
    %873 = tpu.matmul %835, %589, %cst_259 {dimension_numbers = #tpu.dot_dimension_numbers<[1], [0], [0], [1], [0, 0, 1, 1], [], []>} : vector<8x32xf32>, vector<32x128xf32>, vector<8x128xf32> -> vector<8x128xf32>
    %874 = arith.addf %872, %873 : vector<8x128xf32>
    %875 = arith.index_cast %869 : i32 to index
    %c0_260 = arith.constant 0 : index
    %c0_261 = arith.constant 0 : index
    %876 = vector.load %arg15[%875, %c0_260, %c0_261] : memref<8x8x128xf32, #tpu.memory_space<vmem>>, vector<1x8x128xf32>
    %877 = vector.shape_cast %876 : vector<1x8x128xf32> to vector<8x128xf32>
    %cst_262 = arith.constant dense<0.000000e+00> : vector<8x128xf32>
    %878 = tpu.matmul %860, %591, %cst_262 {dimension_numbers = #tpu.dot_dimension_numbers<[1], [0], [0], [1], [0, 0, 1, 1], [], []>} : vector<8x32xf32>, vector<32x128xf32>, vector<8x128xf32> -> vector<8x128xf32>
    %879 = arith.addf %877, %878 : vector<8x128xf32>
    %880 = vector.extract_strided_slice %874 {offsets = [0, 0], sizes = [8, 32], strides = [1, 1]} : vector<8x128xf32> to vector<8x32xf32>
    %881 = arith.negf %880 : vector<8x32xf32>
    %882 = math.exp %881 : vector<8x32xf32>
    %cst_263 = arith.constant 1.000000e+00 : f32
    %883 = vector.broadcast %cst_263 : f32 to vector<8x32xf32>
    %884 = arith.addf %883, %882 : vector<8x32xf32>
    %885 = arith.divf %883, %884 : vector<8x32xf32>
    %886 = vector.extract_strided_slice %874 {offsets = [0, 32], sizes = [8, 32], strides = [1, 1]} : vector<8x128xf32> to vector<8x32xf32>
    %887 = arith.negf %886 : vector<8x32xf32>
    %888 = math.exp %887 : vector<8x32xf32>
    %cst_264 = arith.constant 1.000000e+00 : f32
    %889 = vector.broadcast %cst_264 : f32 to vector<8x32xf32>
    %890 = arith.addf %889, %888 : vector<8x32xf32>
    %891 = arith.divf %889, %890 : vector<8x32xf32>
    %892 = vector.extract_strided_slice %874 {offsets = [0, 64], sizes = [8, 32], strides = [1, 1]} : vector<8x128xf32> to vector<8x32xf32>
    %893 = math.tanh %892 : vector<8x32xf32>
    %894 = vector.extract_strided_slice %874 {offsets = [0, 96], sizes = [8, 32], strides = [1, 1]} : vector<8x128xf32> to vector<8x32xf32>
    %895 = arith.negf %894 : vector<8x32xf32>
    %896 = math.exp %895 : vector<8x32xf32>
    %cst_265 = arith.constant 1.000000e+00 : f32
    %897 = vector.broadcast %cst_265 : f32 to vector<8x32xf32>
    %898 = arith.addf %897, %896 : vector<8x32xf32>
    %899 = arith.divf %897, %898 : vector<8x32xf32>
    %900 = arith.mulf %891, %833 : vector<8x32xf32>
    %901 = arith.mulf %885, %893 : vector<8x32xf32>
    %902 = arith.addf %900, %901 : vector<8x32xf32>
    %903 = math.tanh %902 : vector<8x32xf32>
    %904 = arith.mulf %899, %903 : vector<8x32xf32>
    %905 = vector.extract_strided_slice %879 {offsets = [0, 0], sizes = [8, 32], strides = [1, 1]} : vector<8x128xf32> to vector<8x32xf32>
    %906 = arith.negf %905 : vector<8x32xf32>
    %907 = math.exp %906 : vector<8x32xf32>
    %cst_266 = arith.constant 1.000000e+00 : f32
    %908 = vector.broadcast %cst_266 : f32 to vector<8x32xf32>
    %909 = arith.addf %908, %907 : vector<8x32xf32>
    %910 = arith.divf %908, %909 : vector<8x32xf32>
    %911 = vector.extract_strided_slice %879 {offsets = [0, 32], sizes = [8, 32], strides = [1, 1]} : vector<8x128xf32> to vector<8x32xf32>
    %912 = arith.negf %911 : vector<8x32xf32>
    %913 = math.exp %912 : vector<8x32xf32>
    %cst_267 = arith.constant 1.000000e+00 : f32
    %914 = vector.broadcast %cst_267 : f32 to vector<8x32xf32>
    %915 = arith.addf %914, %913 : vector<8x32xf32>
    %916 = arith.divf %914, %915 : vector<8x32xf32>
    %917 = vector.extract_strided_slice %879 {offsets = [0, 64], sizes = [8, 32], strides = [1, 1]} : vector<8x128xf32> to vector<8x32xf32>
    %918 = math.tanh %917 : vector<8x32xf32>
    %919 = vector.extract_strided_slice %879 {offsets = [0, 96], sizes = [8, 32], strides = [1, 1]} : vector<8x128xf32> to vector<8x32xf32>
    %920 = arith.negf %919 : vector<8x32xf32>
    %921 = math.exp %920 : vector<8x32xf32>
    %cst_268 = arith.constant 1.000000e+00 : f32
    %922 = vector.broadcast %cst_268 : f32 to vector<8x32xf32>
    %923 = arith.addf %922, %921 : vector<8x32xf32>
    %924 = arith.divf %922, %923 : vector<8x32xf32>
    %925 = arith.mulf %916, %858 : vector<8x32xf32>
    %926 = arith.mulf %910, %918 : vector<8x32xf32>
    %927 = arith.addf %925, %926 : vector<8x32xf32>
    %928 = math.tanh %927 : vector<8x32xf32>
    %929 = arith.mulf %924, %928 : vector<8x32xf32>
    %930 = arith.index_cast %c4_i32_255 : i32 to index
    %c0_269 = arith.constant 0 : index
    %c0_270 = arith.constant 0 : index
    %931 = vector.load %arg16[%930, %c0_269, %c0_270] : memref<8x8x32xf32, #tpu.memory_space<vmem>>, vector<1x8x32xf32>
    %932 = vector.shape_cast %931 : vector<1x8x32xf32> to vector<8x32xf32>
    %933 = vector.shape_cast %904 : vector<8x32xf32> to vector<1x8x32xf32>
    tpu.vector_store %arg16[%930, %c0_269, %c0_270], %933 {strides = array<i32>} : memref<8x8x32xf32, #tpu.memory_space<vmem>>, vector<1x8x32xf32>,
    %934 = arith.index_cast %869 : i32 to index
    %c0_271 = arith.constant 0 : index
    %c0_272 = arith.constant 0 : index
    %935 = vector.load %arg17[%934, %c0_271, %c0_272] : memref<8x8x32xf32, #tpu.memory_space<vmem>>, vector<1x8x32xf32>
    %936 = vector.shape_cast %935 : vector<1x8x32xf32> to vector<8x32xf32>
    %937 = vector.shape_cast %929 : vector<8x32xf32> to vector<1x8x32xf32>
    tpu.vector_store %arg17[%934, %c0_271, %c0_272], %937 {strides = array<i32>} : memref<8x8x32xf32, #tpu.memory_space<vmem>>, vector<1x8x32xf32>,
    %c5_i32_273 = arith.constant 5 : i32
    %c7_i32_274 = arith.constant 7 : i32
    %938 = arith.subi %c7_i32_274, %c5_i32_273 : i32
    %939 = arith.index_cast %c5_i32_273 : i32 to index
    %c0_275 = arith.constant 0 : index
    %c0_276 = arith.constant 0 : index
    %940 = vector.load %arg14[%939, %c0_275, %c0_276] : memref<8x8x128xf32, #tpu.memory_space<vmem>>, vector<1x8x128xf32>
    %941 = vector.shape_cast %940 : vector<1x8x128xf32> to vector<8x128xf32>
    %cst_277 = arith.constant dense<0.000000e+00> : vector<8x128xf32>
    %942 = tpu.matmul %904, %589, %cst_277 {dimension_numbers = #tpu.dot_dimension_numbers<[1], [0], [0], [1], [0, 0, 1, 1], [], []>} : vector<8x32xf32>, vector<32x128xf32>, vector<8x128xf32> -> vector<8x128xf32>
    %943 = arith.addf %941, %942 : vector<8x128xf32>
    %944 = arith.index_cast %938 : i32 to index
    %c0_278 = arith.constant 0 : index
    %c0_279 = arith.constant 0 : index
    %945 = vector.load %arg15[%944, %c0_278, %c0_279] : memref<8x8x128xf32, #tpu.memory_space<vmem>>, vector<1x8x128xf32>
    %946 = vector.shape_cast %945 : vector<1x8x128xf32> to vector<8x128xf32>
    %cst_280 = arith.constant dense<0.000000e+00> : vector<8x128xf32>
    %947 = tpu.matmul %929, %591, %cst_280 {dimension_numbers = #tpu.dot_dimension_numbers<[1], [0], [0], [1], [0, 0, 1, 1], [], []>} : vector<8x32xf32>, vector<32x128xf32>, vector<8x128xf32> -> vector<8x128xf32>
    %948 = arith.addf %946, %947 : vector<8x128xf32>
    %949 = vector.extract_strided_slice %943 {offsets = [0, 0], sizes = [8, 32], strides = [1, 1]} : vector<8x128xf32> to vector<8x32xf32>
    %950 = arith.negf %949 : vector<8x32xf32>
    %951 = math.exp %950 : vector<8x32xf32>
    %cst_281 = arith.constant 1.000000e+00 : f32
    %952 = vector.broadcast %cst_281 : f32 to vector<8x32xf32>
    %953 = arith.addf %952, %951 : vector<8x32xf32>
    %954 = arith.divf %952, %953 : vector<8x32xf32>
    %955 = vector.extract_strided_slice %943 {offsets = [0, 32], sizes = [8, 32], strides = [1, 1]} : vector<8x128xf32> to vector<8x32xf32>
    %956 = arith.negf %955 : vector<8x32xf32>
    %957 = math.exp %956 : vector<8x32xf32>
    %cst_282 = arith.constant 1.000000e+00 : f32
    %958 = vector.broadcast %cst_282 : f32 to vector<8x32xf32>
    %959 = arith.addf %958, %957 : vector<8x32xf32>
    %960 = arith.divf %958, %959 : vector<8x32xf32>
    %961 = vector.extract_strided_slice %943 {offsets = [0, 64], sizes = [8, 32], strides = [1, 1]} : vector<8x128xf32> to vector<8x32xf32>
    %962 = math.tanh %961 : vector<8x32xf32>
    %963 = vector.extract_strided_slice %943 {offsets = [0, 96], sizes = [8, 32], strides = [1, 1]} : vector<8x128xf32> to vector<8x32xf32>
    %964 = arith.negf %963 : vector<8x32xf32>
    %965 = math.exp %964 : vector<8x32xf32>
    %cst_283 = arith.constant 1.000000e+00 : f32
    %966 = vector.broadcast %cst_283 : f32 to vector<8x32xf32>
    %967 = arith.addf %966, %965 : vector<8x32xf32>
    %968 = arith.divf %966, %967 : vector<8x32xf32>
    %969 = arith.mulf %960, %902 : vector<8x32xf32>
    %970 = arith.mulf %954, %962 : vector<8x32xf32>
    %971 = arith.addf %969, %970 : vector<8x32xf32>
    %972 = math.tanh %971 : vector<8x32xf32>
    %973 = arith.mulf %968, %972 : vector<8x32xf32>
    %974 = vector.extract_strided_slice %948 {offsets = [0, 0], sizes = [8, 32], strides = [1, 1]} : vector<8x128xf32> to vector<8x32xf32>
    %975 = arith.negf %974 : vector<8x32xf32>
    %976 = math.exp %975 : vector<8x32xf32>
    %cst_284 = arith.constant 1.000000e+00 : f32
    %977 = vector.broadcast %cst_284 : f32 to vector<8x32xf32>
    %978 = arith.addf %977, %976 : vector<8x32xf32>
    %979 = arith.divf %977, %978 : vector<8x32xf32>
    %980 = vector.extract_strided_slice %948 {offsets = [0, 32], sizes = [8, 32], strides = [1, 1]} : vector<8x128xf32> to vector<8x32xf32>
    %981 = arith.negf %980 : vector<8x32xf32>
    %982 = math.exp %981 : vector<8x32xf32>
    %cst_285 = arith.constant 1.000000e+00 : f32
    %983 = vector.broadcast %cst_285 : f32 to vector<8x32xf32>
    %984 = arith.addf %983, %982 : vector<8x32xf32>
    %985 = arith.divf %983, %984 : vector<8x32xf32>
    %986 = vector.extract_strided_slice %948 {offsets = [0, 64], sizes = [8, 32], strides = [1, 1]} : vector<8x128xf32> to vector<8x32xf32>
    %987 = math.tanh %986 : vector<8x32xf32>
    %988 = vector.extract_strided_slice %948 {offsets = [0, 96], sizes = [8, 32], strides = [1, 1]} : vector<8x128xf32> to vector<8x32xf32>
    %989 = arith.negf %988 : vector<8x32xf32>
    %990 = math.exp %989 : vector<8x32xf32>
    %cst_286 = arith.constant 1.000000e+00 : f32
    %991 = vector.broadcast %cst_286 : f32 to vector<8x32xf32>
    %992 = arith.addf %991, %990 : vector<8x32xf32>
    %993 = arith.divf %991, %992 : vector<8x32xf32>
    %994 = arith.mulf %985, %927 : vector<8x32xf32>
    %995 = arith.mulf %979, %987 : vector<8x32xf32>
    %996 = arith.addf %994, %995 : vector<8x32xf32>
    %997 = math.tanh %996 : vector<8x32xf32>
    %998 = arith.mulf %993, %997 : vector<8x32xf32>
    %999 = arith.index_cast %c5_i32_273 : i32 to index
    %c0_287 = arith.constant 0 : index
    %c0_288 = arith.constant 0 : index
    %1000 = vector.load %arg16[%999, %c0_287, %c0_288] : memref<8x8x32xf32, #tpu.memory_space<vmem>>, vector<1x8x32xf32>
    %1001 = vector.shape_cast %1000 : vector<1x8x32xf32> to vector<8x32xf32>
    %1002 = vector.shape_cast %973 : vector<8x32xf32> to vector<1x8x32xf32>
    tpu.vector_store %arg16[%999, %c0_287, %c0_288], %1002 {strides = array<i32>} : memref<8x8x32xf32, #tpu.memory_space<vmem>>, vector<1x8x32xf32>,
    %1003 = arith.index_cast %938 : i32 to index
    %c0_289 = arith.constant 0 : index
    %c0_290 = arith.constant 0 : index
    %1004 = vector.load %arg17[%1003, %c0_289, %c0_290] : memref<8x8x32xf32, #tpu.memory_space<vmem>>, vector<1x8x32xf32>
    %1005 = vector.shape_cast %1004 : vector<1x8x32xf32> to vector<8x32xf32>
    %1006 = vector.shape_cast %998 : vector<8x32xf32> to vector<1x8x32xf32>
    tpu.vector_store %arg17[%1003, %c0_289, %c0_290], %1006 {strides = array<i32>} : memref<8x8x32xf32, #tpu.memory_space<vmem>>, vector<1x8x32xf32>,
    %c6_i32_291 = arith.constant 6 : i32
    %c7_i32_292 = arith.constant 7 : i32
    %1007 = arith.subi %c7_i32_292, %c6_i32_291 : i32
    %1008 = arith.index_cast %c6_i32_291 : i32 to index
    %c0_293 = arith.constant 0 : index
    %c0_294 = arith.constant 0 : index
    %1009 = vector.load %arg14[%1008, %c0_293, %c0_294] : memref<8x8x128xf32, #tpu.memory_space<vmem>>, vector<1x8x128xf32>
    %1010 = vector.shape_cast %1009 : vector<1x8x128xf32> to vector<8x128xf32>
    %cst_295 = arith.constant dense<0.000000e+00> : vector<8x128xf32>
    %1011 = tpu.matmul %973, %589, %cst_295 {dimension_numbers = #tpu.dot_dimension_numbers<[1], [0], [0], [1], [0, 0, 1, 1], [], []>} : vector<8x32xf32>, vector<32x128xf32>, vector<8x128xf32> -> vector<8x128xf32>
    %1012 = arith.addf %1010, %1011 : vector<8x128xf32>
    %1013 = arith.index_cast %1007 : i32 to index
    %c0_296 = arith.constant 0 : index
    %c0_297 = arith.constant 0 : index
    %1014 = vector.load %arg15[%1013, %c0_296, %c0_297] : memref<8x8x128xf32, #tpu.memory_space<vmem>>, vector<1x8x128xf32>
    %1015 = vector.shape_cast %1014 : vector<1x8x128xf32> to vector<8x128xf32>
    %cst_298 = arith.constant dense<0.000000e+00> : vector<8x128xf32>
    %1016 = tpu.matmul %998, %591, %cst_298 {dimension_numbers = #tpu.dot_dimension_numbers<[1], [0], [0], [1], [0, 0, 1, 1], [], []>} : vector<8x32xf32>, vector<32x128xf32>, vector<8x128xf32> -> vector<8x128xf32>
    %1017 = arith.addf %1015, %1016 : vector<8x128xf32>
    %1018 = vector.extract_strided_slice %1012 {offsets = [0, 0], sizes = [8, 32], strides = [1, 1]} : vector<8x128xf32> to vector<8x32xf32>
    %1019 = arith.negf %1018 : vector<8x32xf32>
    %1020 = math.exp %1019 : vector<8x32xf32>
    %cst_299 = arith.constant 1.000000e+00 : f32
    %1021 = vector.broadcast %cst_299 : f32 to vector<8x32xf32>
    %1022 = arith.addf %1021, %1020 : vector<8x32xf32>
    %1023 = arith.divf %1021, %1022 : vector<8x32xf32>
    %1024 = vector.extract_strided_slice %1012 {offsets = [0, 32], sizes = [8, 32], strides = [1, 1]} : vector<8x128xf32> to vector<8x32xf32>
    %1025 = arith.negf %1024 : vector<8x32xf32>
    %1026 = math.exp %1025 : vector<8x32xf32>
    %cst_300 = arith.constant 1.000000e+00 : f32
    %1027 = vector.broadcast %cst_300 : f32 to vector<8x32xf32>
    %1028 = arith.addf %1027, %1026 : vector<8x32xf32>
    %1029 = arith.divf %1027, %1028 : vector<8x32xf32>
    %1030 = vector.extract_strided_slice %1012 {offsets = [0, 64], sizes = [8, 32], strides = [1, 1]} : vector<8x128xf32> to vector<8x32xf32>
    %1031 = math.tanh %1030 : vector<8x32xf32>
    %1032 = vector.extract_strided_slice %1012 {offsets = [0, 96], sizes = [8, 32], strides = [1, 1]} : vector<8x128xf32> to vector<8x32xf32>
    %1033 = arith.negf %1032 : vector<8x32xf32>
    %1034 = math.exp %1033 : vector<8x32xf32>
    %cst_301 = arith.constant 1.000000e+00 : f32
    %1035 = vector.broadcast %cst_301 : f32 to vector<8x32xf32>
    %1036 = arith.addf %1035, %1034 : vector<8x32xf32>
    %1037 = arith.divf %1035, %1036 : vector<8x32xf32>
    %1038 = arith.mulf %1029, %971 : vector<8x32xf32>
    %1039 = arith.mulf %1023, %1031 : vector<8x32xf32>
    %1040 = arith.addf %1038, %1039 : vector<8x32xf32>
    %1041 = math.tanh %1040 : vector<8x32xf32>
    %1042 = arith.mulf %1037, %1041 : vector<8x32xf32>
    %1043 = vector.extract_strided_slice %1017 {offsets = [0, 0], sizes = [8, 32], strides = [1, 1]} : vector<8x128xf32> to vector<8x32xf32>
    %1044 = arith.negf %1043 : vector<8x32xf32>
    %1045 = math.exp %1044 : vector<8x32xf32>
    %cst_302 = arith.constant 1.000000e+00 : f32
    %1046 = vector.broadcast %cst_302 : f32 to vector<8x32xf32>
    %1047 = arith.addf %1046, %1045 : vector<8x32xf32>
    %1048 = arith.divf %1046, %1047 : vector<8x32xf32>
    %1049 = vector.extract_strided_slice %1017 {offsets = [0, 32], sizes = [8, 32], strides = [1, 1]} : vector<8x128xf32> to vector<8x32xf32>
    %1050 = arith.negf %1049 : vector<8x32xf32>
    %1051 = math.exp %1050 : vector<8x32xf32>
    %cst_303 = arith.constant 1.000000e+00 : f32
    %1052 = vector.broadcast %cst_303 : f32 to vector<8x32xf32>
    %1053 = arith.addf %1052, %1051 : vector<8x32xf32>
    %1054 = arith.divf %1052, %1053 : vector<8x32xf32>
    %1055 = vector.extract_strided_slice %1017 {offsets = [0, 64], sizes = [8, 32], strides = [1, 1]} : vector<8x128xf32> to vector<8x32xf32>
    %1056 = math.tanh %1055 : vector<8x32xf32>
    %1057 = vector.extract_strided_slice %1017 {offsets = [0, 96], sizes = [8, 32], strides = [1, 1]} : vector<8x128xf32> to vector<8x32xf32>
    %1058 = arith.negf %1057 : vector<8x32xf32>
    %1059 = math.exp %1058 : vector<8x32xf32>
    %cst_304 = arith.constant 1.000000e+00 : f32
    %1060 = vector.broadcast %cst_304 : f32 to vector<8x32xf32>
    %1061 = arith.addf %1060, %1059 : vector<8x32xf32>
    %1062 = arith.divf %1060, %1061 : vector<8x32xf32>
    %1063 = arith.mulf %1054, %996 : vector<8x32xf32>
    %1064 = arith.mulf %1048, %1056 : vector<8x32xf32>
    %1065 = arith.addf %1063, %1064 : vector<8x32xf32>
    %1066 = math.tanh %1065 : vector<8x32xf32>
    %1067 = arith.mulf %1062, %1066 : vector<8x32xf32>
    %1068 = arith.index_cast %c6_i32_291 : i32 to index
    %c0_305 = arith.constant 0 : index
    %c0_306 = arith.constant 0 : index
    %1069 = vector.load %arg16[%1068, %c0_305, %c0_306] : memref<8x8x32xf32, #tpu.memory_space<vmem>>, vector<1x8x32xf32>
    %1070 = vector.shape_cast %1069 : vector<1x8x32xf32> to vector<8x32xf32>
    %1071 = vector.shape_cast %1042 : vector<8x32xf32> to vector<1x8x32xf32>
    tpu.vector_store %arg16[%1068, %c0_305, %c0_306], %1071 {strides = array<i32>} : memref<8x8x32xf32, #tpu.memory_space<vmem>>, vector<1x8x32xf32>,
    %1072 = arith.index_cast %1007 : i32 to index
    %c0_307 = arith.constant 0 : index
    %c0_308 = arith.constant 0 : index
    %1073 = vector.load %arg17[%1072, %c0_307, %c0_308] : memref<8x8x32xf32, #tpu.memory_space<vmem>>, vector<1x8x32xf32>
    %1074 = vector.shape_cast %1073 : vector<1x8x32xf32> to vector<8x32xf32>
    %1075 = vector.shape_cast %1067 : vector<8x32xf32> to vector<1x8x32xf32>
    tpu.vector_store %arg17[%1072, %c0_307, %c0_308], %1075 {strides = array<i32>} : memref<8x8x32xf32, #tpu.memory_space<vmem>>, vector<1x8x32xf32>,
    %c7_i32_309 = arith.constant 7 : i32
    %c7_i32_310 = arith.constant 7 : i32
    %1076 = arith.subi %c7_i32_310, %c7_i32_309 : i32
    %1077 = arith.index_cast %c7_i32_309 : i32 to index
    %c0_311 = arith.constant 0 : index
    %c0_312 = arith.constant 0 : index
    %1078 = vector.load %arg14[%1077, %c0_311, %c0_312] : memref<8x8x128xf32, #tpu.memory_space<vmem>>, vector<1x8x128xf32>
    %1079 = vector.shape_cast %1078 : vector<1x8x128xf32> to vector<8x128xf32>
    %cst_313 = arith.constant dense<0.000000e+00> : vector<8x128xf32>
    %1080 = tpu.matmul %1042, %589, %cst_313 {dimension_numbers = #tpu.dot_dimension_numbers<[1], [0], [0], [1], [0, 0, 1, 1], [], []>} : vector<8x32xf32>, vector<32x128xf32>, vector<8x128xf32> -> vector<8x128xf32>
    %1081 = arith.addf %1079, %1080 : vector<8x128xf32>
    %1082 = arith.index_cast %1076 : i32 to index
    %c0_314 = arith.constant 0 : index
    %c0_315 = arith.constant 0 : index
    %1083 = vector.load %arg15[%1082, %c0_314, %c0_315] : memref<8x8x128xf32, #tpu.memory_space<vmem>>, vector<1x8x128xf32>
    %1084 = vector.shape_cast %1083 : vector<1x8x128xf32> to vector<8x128xf32>
    %cst_316 = arith.constant dense<0.000000e+00> : vector<8x128xf32>
    %1085 = tpu.matmul %1067, %591, %cst_316 {dimension_numbers = #tpu.dot_dimension_numbers<[1], [0], [0], [1], [0, 0, 1, 1], [], []>} : vector<8x32xf32>, vector<32x128xf32>, vector<8x128xf32> -> vector<8x128xf32>
    %1086 = arith.addf %1084, %1085 : vector<8x128xf32>
    %1087 = vector.extract_strided_slice %1081 {offsets = [0, 0], sizes = [8, 32], strides = [1, 1]} : vector<8x128xf32> to vector<8x32xf32>
    %1088 = arith.negf %1087 : vector<8x32xf32>
    %1089 = math.exp %1088 : vector<8x32xf32>
    %cst_317 = arith.constant 1.000000e+00 : f32
    %1090 = vector.broadcast %cst_317 : f32 to vector<8x32xf32>
    %1091 = arith.addf %1090, %1089 : vector<8x32xf32>
    %1092 = arith.divf %1090, %1091 : vector<8x32xf32>
    %1093 = vector.extract_strided_slice %1081 {offsets = [0, 32], sizes = [8, 32], strides = [1, 1]} : vector<8x128xf32> to vector<8x32xf32>
    %1094 = arith.negf %1093 : vector<8x32xf32>
    %1095 = math.exp %1094 : vector<8x32xf32>
    %cst_318 = arith.constant 1.000000e+00 : f32
    %1096 = vector.broadcast %cst_318 : f32 to vector<8x32xf32>
    %1097 = arith.addf %1096, %1095 : vector<8x32xf32>
    %1098 = arith.divf %1096, %1097 : vector<8x32xf32>
    %1099 = vector.extract_strided_slice %1081 {offsets = [0, 64], sizes = [8, 32], strides = [1, 1]} : vector<8x128xf32> to vector<8x32xf32>
    %1100 = math.tanh %1099 : vector<8x32xf32>
    %1101 = vector.extract_strided_slice %1081 {offsets = [0, 96], sizes = [8, 32], strides = [1, 1]} : vector<8x128xf32> to vector<8x32xf32>
    %1102 = arith.negf %1101 : vector<8x32xf32>
    %1103 = math.exp %1102 : vector<8x32xf32>
    %cst_319 = arith.constant 1.000000e+00 : f32
    %1104 = vector.broadcast %cst_319 : f32 to vector<8x32xf32>
    %1105 = arith.addf %1104, %1103 : vector<8x32xf32>
    %1106 = arith.divf %1104, %1105 : vector<8x32xf32>
    %1107 = arith.mulf %1098, %1040 : vector<8x32xf32>
    %1108 = arith.mulf %1092, %1100 : vector<8x32xf32>
    %1109 = arith.addf %1107, %1108 : vector<8x32xf32>
    %1110 = math.tanh %1109 : vector<8x32xf32>
    %1111 = arith.mulf %1106, %1110 : vector<8x32xf32>
    %1112 = vector.extract_strided_slice %1086 {offsets = [0, 0], sizes = [8, 32], strides = [1, 1]} : vector<8x128xf32> to vector<8x32xf32>
    %1113 = arith.negf %1112 : vector<8x32xf32>
    %1114 = math.exp %1113 : vector<8x32xf32>
    %cst_320 = arith.constant 1.000000e+00 : f32
    %1115 = vector.broadcast %cst_320 : f32 to vector<8x32xf32>
    %1116 = arith.addf %1115, %1114 : vector<8x32xf32>
    %1117 = arith.divf %1115, %1116 : vector<8x32xf32>
    %1118 = vector.extract_strided_slice %1086 {offsets = [0, 32], sizes = [8, 32], strides = [1, 1]} : vector<8x128xf32> to vector<8x32xf32>
    %1119 = arith.negf %1118 : vector<8x32xf32>
    %1120 = math.exp %1119 : vector<8x32xf32>
    %cst_321 = arith.constant 1.000000e+00 : f32
    %1121 = vector.broadcast %cst_321 : f32 to vector<8x32xf32>
    %1122 = arith.addf %1121, %1120 : vector<8x32xf32>
    %1123 = arith.divf %1121, %1122 : vector<8x32xf32>
    %1124 = vector.extract_strided_slice %1086 {offsets = [0, 64], sizes = [8, 32], strides = [1, 1]} : vector<8x128xf32> to vector<8x32xf32>
    %1125 = math.tanh %1124 : vector<8x32xf32>
    %1126 = vector.extract_strided_slice %1086 {offsets = [0, 96], sizes = [8, 32], strides = [1, 1]} : vector<8x128xf32> to vector<8x32xf32>
    %1127 = arith.negf %1126 : vector<8x32xf32>
    %1128 = math.exp %1127 : vector<8x32xf32>
    %cst_322 = arith.constant 1.000000e+00 : f32
    %1129 = vector.broadcast %cst_322 : f32 to vector<8x32xf32>
    %1130 = arith.addf %1129, %1128 : vector<8x32xf32>
    %1131 = arith.divf %1129, %1130 : vector<8x32xf32>
    %1132 = arith.mulf %1123, %1065 : vector<8x32xf32>
    %1133 = arith.mulf %1117, %1125 : vector<8x32xf32>
    %1134 = arith.addf %1132, %1133 : vector<8x32xf32>
    %1135 = math.tanh %1134 : vector<8x32xf32>
    %1136 = arith.mulf %1131, %1135 : vector<8x32xf32>
    %1137 = arith.index_cast %c7_i32_309 : i32 to index
    %c0_323 = arith.constant 0 : index
    %c0_324 = arith.constant 0 : index
    %1138 = vector.load %arg16[%1137, %c0_323, %c0_324] : memref<8x8x32xf32, #tpu.memory_space<vmem>>, vector<1x8x32xf32>
    %1139 = vector.shape_cast %1138 : vector<1x8x32xf32> to vector<8x32xf32>
    %1140 = vector.shape_cast %1111 : vector<8x32xf32> to vector<1x8x32xf32>
    tpu.vector_store %arg16[%1137, %c0_323, %c0_324], %1140 {strides = array<i32>} : memref<8x8x32xf32, #tpu.memory_space<vmem>>, vector<1x8x32xf32>,
    %1141 = arith.index_cast %1076 : i32 to index
    %c0_325 = arith.constant 0 : index
    %c0_326 = arith.constant 0 : index
    %1142 = vector.load %arg17[%1141, %c0_325, %c0_326] : memref<8x8x32xf32, #tpu.memory_space<vmem>>, vector<1x8x32xf32>
    %1143 = vector.shape_cast %1142 : vector<1x8x32xf32> to vector<8x32xf32>
    %1144 = vector.shape_cast %1136 : vector<8x32xf32> to vector<1x8x32xf32>
    tpu.vector_store %arg17[%1141, %c0_325, %c0_326], %1144 {strides = array<i32>} : memref<8x8x32xf32, #tpu.memory_space<vmem>>, vector<1x8x32xf32>,
    %c8_i32_327 = arith.constant 8 : i32
    %c0_328 = arith.constant 0 : index
    %c0_329 = arith.constant 0 : index
    %c0_330 = arith.constant 0 : index
    %1145 = vector.load %arg16[%c0_328, %c0_329, %c0_330] : memref<8x8x32xf32, #tpu.memory_space<vmem>>, vector<8x8x32xf32>
    %c0_331 = arith.constant 0 : index
    %c0_332 = arith.constant 0 : index
    %c0_333 = arith.constant 0 : index
    %1146 = vector.load %arg17[%c0_331, %c0_332, %c0_333] : memref<8x8x32xf32, #tpu.memory_space<vmem>>, vector<8x8x32xf32>
    %1147 = vector.shape_cast %1145 : vector<8x8x32xf32> to vector<64x32xf32>
    %1148 = vector.shape_cast %1146 : vector<8x8x32xf32> to vector<64x32xf32>
    %c0_334 = arith.constant 0 : index
    %c0_335 = arith.constant 0 : index
    %c0_336 = arith.constant 0 : index
    %1149 = vector.load %arg7[%c0_334, %c0_335, %c0_336] : memref<2x32x32xf32, #tpu.memory_space<vmem>>, vector<1x32x32xf32>
    %1150 = vector.shape_cast %1149 : vector<1x32x32xf32> to vector<32x32xf32>
    %cst_337 = arith.constant dense<0.000000e+00> : vector<64x32xf32>
    %1151 = tpu.matmul %1147, %1150, %cst_337 {dimension_numbers = #tpu.dot_dimension_numbers<[1], [0], [0], [1], [0, 0, 1, 1], [], []>} : vector<64x32xf32>, vector<32x32xf32>, vector<64x32xf32> -> vector<64x32xf32>
    %c1_338 = arith.constant 1 : index
    %c0_339 = arith.constant 0 : index
    %c0_340 = arith.constant 0 : index
    %1152 = vector.load %arg7[%c1_338, %c0_339, %c0_340] : memref<2x32x32xf32, #tpu.memory_space<vmem>>, vector<1x32x32xf32>
    %1153 = vector.shape_cast %1152 : vector<1x32x32xf32> to vector<32x32xf32>
    %cst_341 = arith.constant dense<0.000000e+00> : vector<64x32xf32>
    %1154 = tpu.matmul %1148, %1153, %cst_341 {dimension_numbers = #tpu.dot_dimension_numbers<[1], [0], [0], [1], [0, 0, 1, 1], [], []>} : vector<64x32xf32>, vector<32x32xf32>, vector<64x32xf32> -> vector<64x32xf32>
    %1155 = arith.addf %1151, %1154 : vector<64x32xf32>
    %c0_342 = arith.constant 0 : index
    %c0_343 = arith.constant 0 : index
    %1156 = vector.load %arg8[%c0_342, %c0_343] : memref<1x32xf32, #tpu.memory_space<vmem>>, vector<1x32xf32>
    %1157 = vector.broadcast %1156 : vector<1x32xf32> to vector<64x32xf32>
    %1158 = arith.addf %1155, %1157 : vector<64x32xf32>
    %1159 = math.tanh %1158 : vector<64x32xf32>
    %c0_344 = arith.constant 0 : index
    %c0_345 = arith.constant 0 : index
    %1160 = vector.load %arg9[%c0_344, %c0_345] : memref<1x32xf32, #tpu.memory_space<vmem>>, vector<1x32xf32>
    %1161 = vector.broadcast %1160 : vector<1x32xf32> to vector<64x32xf32>
    %1162 = arith.mulf %1159, %1161 : vector<64x32xf32>
    %cst_346 = arith.constant dense<0.000000e+00> : vector<64xf32>
    %1163 = vector.multi_reduction <add>, %1162, %cst_346 [1] : vector<64x32xf32> to vector<64xf32>
    %1164 = vector.shape_cast %1163 : vector<64xf32> to vector<64x1xf32>
    %c0_347 = arith.constant 0 : index
    %c0_348 = arith.constant 0 : index
    %1165 = vector.load %arg10[%c0_347, %c0_348] : memref<1x1xf32, #tpu.memory_space<vmem>>, vector<1x1xf32>
    %1166 = vector.broadcast %1165 : vector<1x1xf32> to vector<64x1xf32>
    %1167 = arith.addf %1164, %1166 : vector<64x1xf32>
    %1168 = vector.shape_cast %1167 : vector<64x1xf32> to vector<8x8x1xf32>
    %cst_349 = arith.constant dense<0xFF800000> : vector<8x1xf32>
    %1169 = vector.multi_reduction <maximumf>, %1168, %cst_349 [0] : vector<8x8x1xf32> to vector<8x1xf32>
    %1170 = vector.shape_cast %1169 : vector<8x1xf32> to vector<1x8x1xf32>
    %1171 = vector.broadcast %1170 : vector<1x8x1xf32> to vector<8x8x1xf32>
    %1172 = arith.subf %1168, %1171 : vector<8x8x1xf32>
    %1173 = math.exp %1172 : vector<8x8x1xf32>
    %cst_350 = arith.constant dense<0.000000e+00> : vector<8x1xf32>
    %1174 = vector.multi_reduction <add>, %1173, %cst_350 [0] : vector<8x8x1xf32> to vector<8x1xf32>
    %1175 = vector.shape_cast %1174 : vector<8x1xf32> to vector<1x8x1xf32>
    %1176 = vector.broadcast %1175 : vector<1x8x1xf32> to vector<8x8x1xf32>
    %1177 = arith.divf %1173, %1176 : vector<8x8x1xf32>
    %1178 = vector.broadcast %1177 : vector<8x8x1xf32> to vector<8x8x32xf32>
    %1179 = arith.mulf %1178, %1145 : vector<8x8x32xf32>
    %cst_351 = arith.constant dense<0.000000e+00> : vector<8x32xf32>
    %1180 = vector.multi_reduction <add>, %1179, %cst_351 [0] : vector<8x8x32xf32> to vector<8x32xf32>
    %1181 = vector.broadcast %1177 : vector<8x8x1xf32> to vector<8x8x32xf32>
    %1182 = arith.mulf %1181, %1146 : vector<8x8x32xf32>
    %cst_352 = arith.constant dense<0.000000e+00> : vector<8x32xf32>
    %1183 = vector.multi_reduction <add>, %1182, %cst_352 [0] : vector<8x8x32xf32> to vector<8x32xf32>
    %c0_353 = arith.constant 0 : index
    %c0_354 = arith.constant 0 : index
    %c0_355 = arith.constant 0 : index
    %1184 = vector.load %arg11[%c0_353, %c0_354, %c0_355] : memref<2x32x4xf32, #tpu.memory_space<vmem>>, vector<1x32x4xf32>
    %1185 = vector.shape_cast %1184 : vector<1x32x4xf32> to vector<32x4xf32>
    %cst_356 = arith.constant dense<0.000000e+00> : vector<8x4xf32>
    %1186 = tpu.matmul %1180, %1185, %cst_356 {dimension_numbers = #tpu.dot_dimension_numbers<[1], [0], [0], [1], [0, 0, 1, 1], [], []>} : vector<8x32xf32>, vector<32x4xf32>, vector<8x4xf32> -> vector<8x4xf32>
    %c1_357 = arith.constant 1 : index
    %c0_358 = arith.constant 0 : index
    %c0_359 = arith.constant 0 : index
    %1187 = vector.load %arg11[%c1_357, %c0_358, %c0_359] : memref<2x32x4xf32, #tpu.memory_space<vmem>>, vector<1x32x4xf32>
    %1188 = vector.shape_cast %1187 : vector<1x32x4xf32> to vector<32x4xf32>
    %cst_360 = arith.constant dense<0.000000e+00> : vector<8x4xf32>
    %1189 = tpu.matmul %1183, %1188, %cst_360 {dimension_numbers = #tpu.dot_dimension_numbers<[1], [0], [0], [1], [0, 0, 1, 1], [], []>} : vector<8x32xf32>, vector<32x4xf32>, vector<8x4xf32> -> vector<8x4xf32>
    %1190 = arith.addf %1186, %1189 : vector<8x4xf32>
    %c0_361 = arith.constant 0 : index
    %c0_362 = arith.constant 0 : index
    %1191 = vector.load %arg12[%c0_361, %c0_362] : memref<1x4xf32, #tpu.memory_space<vmem>>, vector<1x4xf32>
    %1192 = vector.broadcast %1191 : vector<1x4xf32> to vector<8x4xf32>
    %1193 = arith.addf %1190, %1192 : vector<8x4xf32>
    %c0_363 = arith.constant 0 : index
    %c0_364 = arith.constant 0 : index
    %1194 = vector.load %arg13[%c0_363, %c0_364] : memref<8x4xf32, #tpu.memory_space<vmem>>, vector<8x4xf32>
    tpu.vector_store %arg13[%c0_363, %c0_364], %1193 {strides = array<i32>} : memref<8x4xf32, #tpu.memory_space<vmem>>, vector<8x4xf32>,
    return
  }
}

</mosaic_0001>

<llo_original>
// kernel: forward.1
$region0: #{forward.1}
  #allocation0 [shape = 'u32[]', space=smem, size = 0x4, offset = 0x4, fixed_abs, tag = 'smem constant byte address 0x4 - core index']
  #allocation1 [shape = 'u32[144,128]{1,0:T(1,128)}', space=vmem, size = 0x12000, scoped, tag = 'internal scratch']
  #allocation2 [shape = 'f32[8,8,128]{2,1,0:T(8,128)}', space=vmem, size = 0x8000, scoped, tag = 'scratch operand']
  #allocation3 [shape = 'f32[8,8,128]{2,1,0:T(8,128)}', space=vmem, size = 0x8000, scoped, tag = 'scratch operand']
  #allocation4 [shape = 'f32[8,8,32]{2,1,0:T(8,128)}', space=vmem, size = 0x8000, scoped, tag = 'scratch operand']
  #allocation5 [shape = 'f32[8,8,32]{2,1,0:T(8,128)}', space=vmem, size = 0x8000, scoped, tag = 'scratch operand']
  #allocation6 [shape = 'f32[8,8,32]{2,1,0:T(8,128)}', space=vmem, size = 0x8000, scoped, tag = 'scratch operand']
  #allocation7 [shape = 'f32[8,8,32]{2,1,0:T(8,128)}', space=vmem, size = 0x8000, scoped, tag = 'scratch operand']
  #allocation8 [shape = 'f32[1,1]{1,0:T(1,128)S(1)}', space=vmem, size = 0x200, scoped, tag = 'scoped memory for forward.1']
  %s0 = inlined_call_operand.vmem [shape: f32[8,8,16], index: 0, kind: input, shape index: {}]
  %s1 = inlined_call_operand.vmem [shape: f32[16,256], index: 1, kind: input, shape index: {}]
  %s2 = inlined_call_operand.vmem [shape: f32[2,32,128], index: 2, kind: input, shape index: {}]
  %s3 = inlined_call_operand.vmem [shape: f32[1,256], index: 3, kind: input, shape index: {}]
  %s4 = inlined_call_operand.vmem [shape: f32[2,32,256], index: 4, kind: input, shape index: {}]
  %s5 = inlined_call_operand.vmem [shape: f32[2,32,128], index: 5, kind: input, shape index: {}]
  %s6 = inlined_call_operand.vmem [shape: f32[1,256], index: 6, kind: input, shape index: {}]
  %s7 = inlined_call_operand.vmem [shape: f32[2,32,32], index: 7, kind: input, shape index: {}]
  %s8 = inlined_call_operand.vmem [shape: f32[1,32], index: 8, kind: input, shape index: {}]
  %s9 = inlined_call_operand.vmem [shape: f32[1,32], index: 9, kind: input, shape index: {}]
  %s10 = inlined_call_operand.<no memory space> [shape: f32[1,1], index: 10, kind: input, shape index: {}]
  %s11 = inlined_call_operand.vmem [shape: f32[2,32,4], index: 11, kind: input, shape index: {}]
  %s12 = inlined_call_operand.vmem [shape: f32[1,4], index: 12, kind: input, shape index: {}]
  %s13 = inlined_call_operand.vmem [shape: f32[8,4], index: 13, kind: output, shape index: {}]
  %s14 = sld [smem:[#allocation0]]
  $region62: #{forward.1} parent=0
    _
  %s16 = ssub.s32 1, %s14
  %s17 = scalar_select 0, %s16, %s14
  %v18 = vstv %s10
  %19 = vst [vmem:[#allocation8] sm:$0x1] %v18
  // Predicated region
  $region2: #{forward.1} parent=0 // pred_check
    _
  $region3: #{forward.1} parent=0 // pred_check_branch
    %21 = sbr.rel (0) target = $region5
  $region4: #{forward.1} parent=0 // pred_region
    _
  $region5: #{forward.1} parent=0 // pred_fallthru
    _
  // Predicated region
  $region6: #{forward.1} parent=0 // pred_check
    _
  $region7: #{forward.1} parent=0 // pred_check_branch
    %23 = sbr.rel (0) target = $region9
  $region8: #{forward.1} parent=0 // pred_region
    _
  $region9: #{forward.1} parent=0 // pred_fallthru
    _
  // Predicated region
  $region10: #{forward.1} parent=0 // pred_check
    _
  $region11: #{forward.1} parent=0 // pred_check_branch
    %25 = sbr.rel (0) target = $region13
  $region12: #{forward.1} parent=0 // pred_region
    _
  $region13: #{forward.1} parent=0 // pred_fallthru
    _
  // Predicated region
  $region14: #{forward.1} parent=0 // pred_check
    _
  $region15: #{forward.1} parent=0 // pred_check_branch
    %27 = sbr.rel (0) target = $region17
  $region16: #{forward.1} parent=0 // pred_region
    _
  $region17: #{forward.1} parent=0 // pred_fallthru
    _
  // Predicated region
  $region18: #{forward.1} parent=0 // pred_check
    _
  $region19: #{forward.1} parent=0 // pred_check_branch
    %29 = sbr.rel (0) target = $region21
  $region20: #{forward.1} parent=0 // pred_region
    _
  $region21: #{forward.1} parent=0 // pred_fallthru
    _
  // Predicated region
  $region22: #{forward.1} parent=0 // pred_check
    _
  $region23: #{forward.1} parent=0 // pred_check_branch
    %31 = sbr.rel (0) target = $region25
  $region24: #{forward.1} parent=0 // pred_region
    _
  $region25: #{forward.1} parent=0 // pred_fallthru
    _
  // Predicated region
  $region26: #{forward.1} parent=0 // pred_check
    _
  $region27: #{forward.1} parent=0 // pred_check_branch
    %33 = sbr.rel (0) target = $region29
  $region28: #{forward.1} parent=0 // pred_region
    _
  $region29: #{forward.1} parent=0 // pred_fallthru
    _
  // Predicated region
  $region30: #{forward.1} parent=0 // pred_check
    _
  $region31: #{forward.1} parent=0 // pred_check_branch
    %35 = sbr.rel (0) target = $region33
  $region32: #{forward.1} parent=0 // pred_region
    _
  $region33: #{forward.1} parent=0 // pred_fallthru
    _
  // Predicated region
  $region34: #{forward.1} parent=0 // pred_check
    _
  $region35: #{forward.1} parent=0 // pred_check_branch
    %37 = sbr.rel (0) target = $region37
  $region36: #{forward.1} parent=0 // pred_region
    _
  $region37: #{forward.1} parent=0 // pred_fallthru
    _
  // Predicated region
  $region38: #{forward.1} parent=0 // pred_check
    _
  $region39: #{forward.1} parent=0 // pred_check_branch
    %39 = sbr.rel (0) target = $region41
  $region40: #{forward.1} parent=0 // pred_region
    _
  $region41: #{forward.1} parent=0 // pred_fallthru
    _
  // Predicated region
  $region42: #{forward.1} parent=0 // pred_check
    _
  $region43: #{forward.1} parent=0 // pred_check_branch
    %41 = sbr.rel (0) target = $region45
  $region44: #{forward.1} parent=0 // pred_region
    _
  $region45: #{forward.1} parent=0 // pred_fallthru
    _
  // Predicated region
  $region46: #{forward.1} parent=0 // pred_check
    _
  $region47: #{forward.1} parent=0 // pred_check_branch
    %43 = sbr.rel (0) target = $region49
  $region48: #{forward.1} parent=0 // pred_region
    _
  $region49: #{forward.1} parent=0 // pred_fallthru
    _
  // Predicated region
  $region50: #{forward.1} parent=0 // pred_check
    _
  $region51: #{forward.1} parent=0 // pred_check_branch
    %45 = sbr.rel (0) target = $region53
  $region52: #{forward.1} parent=0 // pred_region
    _
  $region53: #{forward.1} parent=0 // pred_fallthru
    _
  %v46 = vld [vmem:[%s0] sm:$0xff]
  %v47 = vld [vmem:[%s0 + $0x8] sm:$0xff]
  %v48 = vld [vmem:[%s0 + $0x10] sm:$0xff]
  %v49 = vld [vmem:[%s0 + $0x18] sm:$0xff]
  %v50 = vld [vmem:[%s0 + $0x20] sm:$0xff]
  %v51 = vld [vmem:[%s0 + $0x28] sm:$0xff]
  %v52 = vld [vmem:[%s0 + $0x30] sm:$0xff]
  %v53 = vld [vmem:[%s0 + $0x38] sm:$0xff]
  %v54 = vld [vmem:[%s1] sm:$0xff]
  %v55 = vld [vmem:[%s1 + $0x8] sm:$0xff]
  %v56 = vld [vmem:[%s1 + $0x10] sm:$0xff]
  %v57 = vld [vmem:[%s1 + $0x18] sm:$0xff]
  %v58 = vld [vmem:[%s3] sm:$0x3]
  %v60 = vlaneseq
  %v61 = vshrl.u32 %v60, 7
  %v62 = vsub.s32 0, %v61
  %v63 = vrot.slane %v58, %v62
  %v64 = vlaneseq
  %v65 = vshrl.u32 %v64, 7
  %v66 = vsub.s32 1, %v65
  %v67 = vrot.slane %v58, %v66
  %vm70 = vcmask 130048
  %v72 = vsel %vm70, %v46, 0
  %v75 = vsel %vm70, %v47, 0
  %v78 = vsel %vm70, %v48, 0
  %v81 = vsel %vm70, %v49, 0
  %v84 = vsel %vm70, %v50, 0
  %v87 = vsel %vm70, %v51, 0
  %v90 = vsel %vm70, %v52, 0
  %v93 = vsel %vm70, %v53, 0
  %95 = vmatprep.subr.mxu0 %v55
  %96 = vmatpush1.msra.mxu0 %v54
  %97 = vmatprep.subr.mxu0 %v57
  %98 = vmatpush1.msra.mxu0 %v56
  %99 = vmatprep.subr.mxu0 0.0
  %100 = vmatpush1.msra.mxu0 0.0
  %101 = vmatprep.subr.mxu0 0.0
  %102 = vmatpush1.msra.mxu0 0.0
  %103 = vmatprep.subr.mxu0 0.0
  %104 = vmatpush1.msra.mxu0 0.0
  %105 = vmatprep.subr.mxu0 0.0
  %106 = vmatpush1.msra.mxu0 0.0
  %107 = vmatprep.subr.mxu0 0.0
  %108 = vmatpush1.msra.mxu0 0.0
  %109 = vmatprep.subr.mxu0 0.0
  %110 = vmatpush1.msra.mxu0 0.0
  %111 = vmatprep.subr.mxu0 0.0
  %112 = vmatpush1.msra.mxu0 0.0
  %113 = vmatprep.subr.mxu0 0.0
  %114 = vmatpush1.msra.mxu0 0.0
  %115 = vmatprep.subr.mxu0 0.0
  %116 = vmatpush1.msra.mxu0 0.0
  %117 = vmatprep.subr.mxu0 0.0
  %118 = vmatpush1.msra.mxu0 0.0
  %119 = vmatprep.subr.mxu0 0.0
  %120 = vmatpush1.msra.mxu0 0.0
  %121 = vmatprep.subr.mxu0 0.0
  %122 = vmatpush1.msra.mxu0 0.0
  %123 = vmatprep.subr.mxu0 0.0
  %124 = vmatpush1.msra.mxu0 0.0
  %125 = vmatprep.subr.mxu0 0.0
  %126 = vmatpush1.msra.mxu0 0.0
  %127 = vmatprep.subr.mxu0 0.0
  %128 = vmatpush1.msra.mxu0 0.0
  %129 = vmatprep.subr.mxu0 0.0
  %130 = vmatpush1.msra.mxu0 0.0
  %131 = vmatprep.subr.mxu0 0.0
  %132 = vmatpush1.msra.mxu0 0.0
  %133 = vmatprep.subr.mxu0 0.0
  %134 = vmatpush1.msra.mxu0 0.0
  %135 = vmatprep.subr.mxu0 0.0
  %136 = vmatpush1.msra.mxu0 0.0
  %137 = vmatprep.subr.mxu0 0.0
  %138 = vmatpush1.msra.mxu0 0.0
  %139 = vmatprep.subr.mxu0 0.0
  %140 = vmatpush1.msra.mxu0 0.0
  %141 = vmatprep.subr.mxu0 0.0
  %142 = vmatpush1.msra.mxu0 0.0
  %143 = vmatprep.subr.mxu0 0.0
  %144 = vmatpush1.msra.mxu0 0.0
  %145 = vmatprep.subr.mxu0 0.0
  %146 = vmatpush1.msra.mxu0 0.0
  %147 = vmatprep.subr.mxu0 0.0
  %148 = vmatpush1.msra.mxu0 0.0
  %149 = vmatprep.subr.mxu0 0.0
  %150 = vmatpush1.msra.mxu0 0.0
  %151 = vmatprep.subr.mxu0 0.0
  %152 = vmatpush1.msra.mxu0 0.0
  %153 = vmatprep.subr.mxu0 0.0
  %154 = vmatpush1.msra.mxu0 0.0
  %155 = vmatprep.subr.mxu0 0.0
  %156 = vmatpush1.msra.mxu0 0.0
  %157 = vmatprep.subr.mxu0 0.0
  %158 = vmatpush1.msra.mxu0 0.0
  %159 = vmatprep.mubr.f32.mxu0 0.0
  %160 = vmatmul.mubr.f32.gmra.mrb[0].mxu0 %v72
  %v161 = vpop.f32.mrb[0].mxu0
  %v162 = vadd.f32 %v63, %v161
  %v163 = vpop.f32.mrb[0].mxu0
  %v164 = vadd.f32 %v67, %v163
  %165 = vmatprep.mubr.f32.mxu0 0.0
  %166 = vmatmul.mubr.f32.gmra.mrb[0].mxu0 %v75
  %v167 = vpop.f32.mrb[0].mxu0
  %v168 = vadd.f32 %v63, %v167
  %v169 = vpop.f32.mrb[0].mxu0
  %v170 = vadd.f32 %v67, %v169
  %171 = vmatprep.mubr.f32.mxu0 0.0
  %172 = vmatmul.mubr.f32.gmra.mrb[0].mxu0 %v78
  %v173 = vpop.f32.mrb[0].mxu0
  %v174 = vadd.f32 %v63, %v173
  %v175 = vpop.f32.mrb[0].mxu0
  %v176 = vadd.f32 %v67, %v175
  %177 = vmatprep.mubr.f32.mxu0 0.0
  %178 = vmatmul.mubr.f32.gmra.mrb[0].mxu0 %v81
  %v179 = vpop.f32.mrb[0].mxu0
  %v180 = vadd.f32 %v63, %v179
  %v181 = vpop.f32.mrb[0].mxu0
  %v182 = vadd.f32 %v67, %v181
  %183 = vmatprep.mubr.f32.mxu0 0.0
  %184 = vmatmul.mubr.f32.gmra.mrb[0].mxu0 %v84
  %v185 = vpop.f32.mrb[0].mxu0
  %v186 = vadd.f32 %v63, %v185
  %v187 = vpop.f32.mrb[0].mxu0
  %v188 = vadd.f32 %v67, %v187
  %189 = vmatprep.mubr.f32.mxu0 0.0
  %190 = vmatmul.mubr.f32.gmra.mrb[0].mxu0 %v87
  %v191 = vpop.f32.mrb[0].mxu0
  %v192 = vadd.f32 %v63, %v191
  %v193 = vpop.f32.mrb[0].mxu0
  %v194 = vadd.f32 %v67, %v193
  %195 = vmatprep.mubr.f32.mxu0 0.0
  %196 = vmatmul.mubr.f32.gmra.mrb[0].mxu0 %v90
  %v197 = vpop.f32.mrb[0].mxu0
  %v198 = vadd.f32 %v63, %v197
  %v199 = vpop.f32.mrb[0].mxu0
  %v200 = vadd.f32 %v67, %v199
  %201 = vmatprep.mubr.f32.mxu0 0.0
  %202 = vmatmul.mubr.f32.gmra.mrb[0].mxu0 %v93
  %v203 = vpop.f32.mrb[0].mxu0
  %v204 = vadd.f32 %v63, %v203
  %v205 = vpop.f32.mrb[0].mxu0
  %v206 = vadd.f32 %v67, %v205
  %207 = vdwg.mxu0
  %208 = vst [vmem:[#allocation2] sm:$0xff] %v162
  %209 = vst [vmem:[#allocation2 + $0x8] sm:$0xff] %v168
  %210 = vst [vmem:[#allocation2 + $0x10] sm:$0xff] %v174
  %211 = vst [vmem:[#allocation2 + $0x18] sm:$0xff] %v180
  %212 = vst [vmem:[#allocation2 + $0x20] sm:$0xff] %v186
  %213 = vst [vmem:[#allocation2 + $0x28] sm:$0xff] %v192
  %214 = vst [vmem:[#allocation2 + $0x30] sm:$0xff] %v198
  %215 = vst [vmem:[#allocation2 + $0x38] sm:$0xff] %v204
  %216 = vst [vmem:[#allocation3] sm:$0xff] %v164
  %217 = vst [vmem:[#allocation3 + $0x8] sm:$0xff] %v170
  %218 = vst [vmem:[#allocation3 + $0x10] sm:$0xff] %v176
  %219 = vst [vmem:[#allocation3 + $0x18] sm:$0xff] %v182
  %220 = vst [vmem:[#allocation3 + $0x20] sm:$0xff] %v188
  %221 = vst [vmem:[#allocation3 + $0x28] sm:$0xff] %v194
  %222 = vst [vmem:[#allocation3 + $0x30] sm:$0xff] %v200
  %223 = vst [vmem:[#allocation3 + $0x38] sm:$0xff] %v206
  %v224 = vld [vmem:[%s2] sm:$0xff]
  %v225 = vld [vmem:[%s2 + $0x8] sm:$0xff]
  %v226 = vld [vmem:[%s2 + $0x10] sm:$0xff]
  %v227 = vld [vmem:[%s2 + $0x18] sm:$0xff]
  %s228 = scalar_lea.vmem %s2, 32
  %v229 = vld [vmem:[%s228] sm:$0xff]
  %v230 = vld [vmem:[%s228 + $0x8] sm:$0xff]
  %v231 = vld [vmem:[%s228 + $0x10] sm:$0xff]
  %v232 = vld [vmem:[%s228 + $0x18] sm:$0xff]
  %v233 = vld [vmem:[#allocation2] sm:$0xff]
  %vm234 = vcmask 261120
  %v236 = vsel %vm234, 0.0, 0
  %238 = vmatprep.subr.mxu0 0.0
  %239 = vmatpush1.msra.mxu0 %v224
  %240 = vmatprep.subr.mxu0 0.0
  %241 = vmatpush1.msra.mxu0 %v225
  %242 = vmatprep.subr.mxu0 0.0
  %243 = vmatpush1.msra.mxu0 %v226
  %244 = vmatprep.subr.mxu0 0.0
  %245 = vmatpush1.msra.mxu0 %v227
  %246 = vmatprep.subr.mxu0 0.0
  %247 = vmatpush1.msra.mxu0 0.0
  %248 = vmatprep.subr.mxu0 0.0
  %249 = vmatpush1.msra.mxu0 0.0
  %250 = vmatprep.subr.mxu0 0.0
  %251 = vmatpush1.msra.mxu0 0.0
  %252 = vmatprep.subr.mxu0 0.0
  %253 = vmatpush1.msra.mxu0 0.0
  %254 = vmatprep.subr.mxu0 0.0
  %255 = vmatpush1.msra.mxu0 0.0
  %256 = vmatprep.subr.mxu0 0.0
  %257 = vmatpush1.msra.mxu0 0.0
  %258 = vmatprep.subr.mxu0 0.0
  %259 = vmatpush1.msra.mxu0 0.0
  %260 = vmatprep.subr.mxu0 0.0
  %261 = vmatpush1.msra.mxu0 0.0
  %262 = vmatprep.subr.mxu0 0.0
  %263 = vmatpush1.msra.mxu0 0.0
  %264 = vmatprep.subr.mxu0 0.0
  %265 = vmatpush1.msra.mxu0 0.0
  %266 = vmatprep.subr.mxu0 0.0
  %267 = vmatpush1.msra.mxu0 0.0
  %268 = vmatprep.subr.mxu0 0.0
  %269 = vmatpush1.msra.mxu0 0.0
  %270 = vmatprep.subr.mxu0 0.0
  %271 = vmatpush1.msra.mxu0 0.0
  %272 = vmatprep.subr.mxu0 0.0
  %273 = vmatpush1.msra.mxu0 0.0
  %274 = vmatprep.subr.mxu0 0.0
  %275 = vmatpush1.msra.mxu0 0.0
  %276 = vmatprep.subr.mxu0 0.0
  %277 = vmatpush1.msra.mxu0 0.0
  %278 = vmatprep.subr.mxu0 0.0
  %279 = vmatpush1.msra.mxu0 0.0
  %280 = vmatprep.subr.mxu0 0.0
  %281 = vmatpush1.msra.mxu0 0.0
  %282 = vmatprep.subr.mxu0 0.0
  %283 = vmatpush1.msra.mxu0 0.0
  %284 = vmatprep.subr.mxu0 0.0
  %285 = vmatpush1.msra.mxu0 0.0
  %286 = vmatprep.subr.mxu0 0.0
  %287 = vmatpush1.msra.mxu0 0.0
  %288 = vmatprep.subr.mxu0 0.0
  %289 = vmatpush1.msra.mxu0 0.0
  %290 = vmatprep.subr.mxu0 0.0
  %291 = vmatpush1.msra.mxu0 0.0
  %292 = vmatprep.subr.mxu0 0.0
  %293 = vmatpush1.msra.mxu0 0.0
  %294 = vmatprep.subr.mxu0 0.0
  %295 = vmatpush1.msra.mxu0 0.0
  %296 = vmatprep.subr.mxu0 0.0
  %297 = vmatpush1.msra.mxu0 0.0
  %298 = vmatprep.subr.mxu0 0.0
  %299 = vmatpush1.msra.mxu0 0.0
  %300 = vmatprep.subr.mxu0 0.0
  %301 = vmatpush1.msra.mxu0 0.0
  %302 = vmatprep.mubr.f32.mxu0 0.0
  %303 = vmatmul.mubr.f32.gmra.mrb[0].mxu0 %v236
  %v304 = vpop.f32.mrb[0].mxu0
  %v305 = vadd.f32 0.0, %v304
  %v306 = vpop.f32.mrb[0].mxu0
  %307 = vdwg.mxu0
  %v308 = vadd.f32 %v233, %v305
  %s309 = scalar_lea.vmem [#allocation3], 56
  %v310 = vld [vmem:[%s309] sm:$0xff]
  %311 = vmatprep.subr.mxu0 0.0
  %312 = vmatpush1.msra.mxu0 %v229
  %313 = vmatprep.subr.mxu0 0.0
  %314 = vmatpush1.msra.mxu0 %v230
  %315 = vmatprep.subr.mxu0 0.0
  %316 = vmatpush1.msra.mxu0 %v231
  %317 = vmatprep.subr.mxu0 0.0
  %318 = vmatpush1.msra.mxu0 %v232
  %319 = vmatprep.subr.mxu0 0.0
  %320 = vmatpush1.msra.mxu0 0.0
  %321 = vmatprep.subr.mxu0 0.0
  %322 = vmatpush1.msra.mxu0 0.0
  %323 = vmatprep.subr.mxu0 0.0
  %324 = vmatpush1.msra.mxu0 0.0
  %325 = vmatprep.subr.mxu0 0.0
  %326 = vmatpush1.msra.mxu0 0.0
  %327 = vmatprep.subr.mxu0 0.0
  %328 = vmatpush1.msra.mxu0 0.0
  %329 = vmatprep.subr.mxu0 0.0
  %330 = vmatpush1.msra.mxu0 0.0
  %331 = vmatprep.subr.mxu0 0.0
  %332 = vmatpush1.msra.mxu0 0.0
  %333 = vmatprep.subr.mxu0 0.0
  %334 = vmatpush1.msra.mxu0 0.0
  %335 = vmatprep.subr.mxu0 0.0
  %336 = vmatpush1.msra.mxu0 0.0
  %337 = vmatprep.subr.mxu0 0.0
  %338 = vmatpush1.msra.mxu0 0.0
  %339 = vmatprep.subr.mxu0 0.0
  %340 = vmatpush1.msra.mxu0 0.0
  %341 = vmatprep.subr.mxu0 0.0
  %342 = vmatpush1.msra.mxu0 0.0
  %343 = vmatprep.subr.mxu0 0.0
  %344 = vmatpush1.msra.mxu0 0.0
  %345 = vmatprep.subr.mxu0 0.0
  %346 = vmatpush1.msra.mxu0 0.0
  %347 = vmatprep.subr.mxu0 0.0
  %348 = vmatpush1.msra.mxu0 0.0
  %349 = vmatprep.subr.mxu0 0.0
  %350 = vmatpush1.msra.mxu0 0.0
  %351 = vmatprep.subr.mxu0 0.0
  %352 = vmatpush1.msra.mxu0 0.0
  %353 = vmatprep.subr.mxu0 0.0
  %354 = vmatpush1.msra.mxu0 0.0
  %355 = vmatprep.subr.mxu0 0.0
  %356 = vmatpush1.msra.mxu0 0.0
  %357 = vmatprep.subr.mxu0 0.0
  %358 = vmatpush1.msra.mxu0 0.0
  %359 = vmatprep.subr.mxu0 0.0
  %360 = vmatpush1.msra.mxu0 0.0
  %361 = vmatprep.subr.mxu0 0.0
  %362 = vmatpush1.msra.mxu0 0.0
  %363 = vmatprep.subr.mxu0 0.0
  %364 = vmatpush1.msra.mxu0 0.0
  %365 = vmatprep.subr.mxu0 0.0
  %366 = vmatpush1.msra.mxu0 0.0
  %367 = vmatprep.subr.mxu0 0.0
  %368 = vmatpush1.msra.mxu0 0.0
  %369 = vmatprep.subr.mxu0 0.0
  %370 = vmatpush1.msra.mxu0 0.0
  %371 = vmatprep.subr.mxu0 0.0
  %372 = vmatpush1.msra.mxu0 0.0
  %373 = vmatprep.subr.mxu0 0.0
  %374 = vmatpush1.msra.mxu0 0.0
  %375 = vmatprep.mubr.f32.mxu0 0.0
  %376 = vmatmul.mubr.f32.gmra.mrb[0].mxu0 %v236
  %v377 = vpop.f32.mrb[0].mxu0
  %v378 = vadd.f32 0.0, %v377
  %v379 = vpop.f32.mrb[0].mxu0
  %380 = vdwg.mxu0
  %v381 = vadd.f32 %v310, %v378
  %v382 = vxor.u32 %v308, 2147483648
  %v383 = vmul.f32 %v382, 1.442695
  %v384 = vpow.pop %v383
  %v385 = vadd.f32 %v384, 1.0
  %v386 = vrcp.pop %v385
  %v387 = vmul.f32 1.0, %v386
  %v388 = vtanh.pop %v308
  %v389 = vmul.f32 %v387, 0.0
  %391 = vrot.lane.b32.xlu0 %v388, 64
  %v392 = vpop.permute.xlu0 %391
  %v394 = vmul.f32 %v387, %v392
  %396 = vrot.lane.b32.xlu0 %v394, 32
  %v397 = vpop.permute.xlu0 %396
  %v399 = vadd.f32 %v389, %v397
  %v400 = vtanh.pop %v399
  %402 = vrot.lane.b32.xlu0 %v400, 64
  %v403 = vpop.permute.xlu0 %402
  %v405 = vmul.f32 %v387, %v403
  %v406 = vxor.u32 %v381, 2147483648
  %v407 = vmul.f32 %v406, 1.442695
  %v408 = vpow.pop %v407
  %v409 = vadd.f32 %v408, 1.0
  %v410 = vrcp.pop %v409
  %v411 = vmul.f32 1.0, %v410
  %v412 = vtanh.pop %v381
  %v413 = vmul.f32 %v411, 0.0
  %415 = vrot.lane.b32.xlu0 %v412, 64
  %v416 = vpop.permute.xlu0 %415
  %v418 = vmul.f32 %v411, %v416
  %420 = vrot.lane.b32.xlu0 %v418, 32
  %v421 = vpop.permute.xlu0 %420
  %v423 = vadd.f32 %v413, %v421
  %v424 = vtanh.pop %v423
  %426 = vrot.lane.b32.xlu0 %v424, 64
  %v427 = vpop.permute.xlu0 %426
  %v429 = vmul.f32 %v411, %v427
  %431 = vrot.lane.b32.xlu0 %v405, 32
  %v432 = vpop.permute.xlu0 %431
  %434 = vst.msk [vmem:[#allocation6] sm:$0xff] %vm234, %v432
  %436 = vrot.lane.b32.xlu0 %v429, 32
  %v437 = vpop.permute.xlu0 %436
  %s439 = scalar_lea.vmem [#allocation7], 56
  %440 = vst.msk [vmem:[%s439] sm:$0xff] %vm234, %v437
  %s441 = scalar_lea.vmem [#allocation2], 8
  %v442 = vld [vmem:[%s441] sm:$0xff]
  %v443 = vsel %vm234, %v432, 0
  %445 = vmatprep.subr.mxu0 0.0
  %446 = vmatpush1.msra.mxu0 %v224
  %447 = vmatprep.subr.mxu0 0.0
  %448 = vmatpush1.msra.mxu0 %v225
  %449 = vmatprep.subr.mxu0 0.0
  %450 = vmatpush1.msra.mxu0 %v226
  %451 = vmatprep.subr.mxu0 0.0
  %452 = vmatpush1.msra.mxu0 %v227
  %453 = vmatprep.subr.mxu0 0.0
  %454 = vmatpush1.msra.mxu0 0.0
  %455 = vmatprep.subr.mxu0 0.0
  %456 = vmatpush1.msra.mxu0 0.0
  %457 = vmatprep.subr.mxu0 0.0
  %458 = vmatpush1.msra.mxu0 0.0
  %459 = vmatprep.subr.mxu0 0.0
  %460 = vmatpush1.msra.mxu0 0.0
  %461 = vmatprep.subr.mxu0 0.0
  %462 = vmatpush1.msra.mxu0 0.0
  %463 = vmatprep.subr.mxu0 0.0
  %464 = vmatpush1.msra.mxu0 0.0
  %465 = vmatprep.subr.mxu0 0.0
  %466 = vmatpush1.msra.mxu0 0.0
  %467 = vmatprep.subr.mxu0 0.0
  %468 = vmatpush1.msra.mxu0 0.0
  %469 = vmatprep.subr.mxu0 0.0
  %470 = vmatpush1.msra.mxu0 0.0
  %471 = vmatprep.subr.mxu0 0.0
  %472 = vmatpush1.msra.mxu0 0.0
  %473 = vmatprep.subr.mxu0 0.0
  %474 = vmatpush1.msra.mxu0 0.0
  %475 = vmatprep.subr.mxu0 0.0
  %476 = vmatpush1.msra.mxu0 0.0
  %477 = vmatprep.subr.mxu0 0.0
  %478 = vmatpush1.msra.mxu0 0.0
  %479 = vmatprep.subr.mxu0 0.0
  %480 = vmatpush1.msra.mxu0 0.0
  %481 = vmatprep.subr.mxu0 0.0
  %482 = vmatpush1.msra.mxu0 0.0
  %483 = vmatprep.subr.mxu0 0.0
  %484 = vmatpush1.msra.mxu0 0.0
  %485 = vmatprep.subr.mxu0 0.0
  %486 = vmatpush1.msra.mxu0 0.0
  %487 = vmatprep.subr.mxu0 0.0
  %488 = vmatpush1.msra.mxu0 0.0
  %489 = vmatprep.subr.mxu0 0.0
  %490 = vmatpush1.msra.mxu0 0.0
  %491 = vmatprep.subr.mxu0 0.0
  %492 = vmatpush1.msra.mxu0 0.0
  %493 = vmatprep.subr.mxu0 0.0
  %494 = vmatpush1.msra.mxu0 0.0
  %495 = vmatprep.subr.mxu0 0.0
  %496 = vmatpush1.msra.mxu0 0.0
  %497 = vmatprep.subr.mxu0 0.0
  %498 = vmatpush1.msra.mxu0 0.0
  %499 = vmatprep.subr.mxu0 0.0
  %500 = vmatpush1.msra.mxu0 0.0
  %501 = vmatprep.subr.mxu0 0.0
  %502 = vmatpush1.msra.mxu0 0.0
  %503 = vmatprep.subr.mxu0 0.0
  %504 = vmatpush1.msra.mxu0 0.0
  %505 = vmatprep.subr.mxu0 0.0
  %506 = vmatpush1.msra.mxu0 0.0
  %507 = vmatprep.subr.mxu0 0.0
  %508 = vmatpush1.msra.mxu0 0.0
  %509 = vmatprep.mubr.f32.mxu0 0.0
  %510 = vmatmul.mubr.f32.gmra.mrb[0].mxu0 %v443
  %v511 = vpop.f32.mrb[0].mxu0
  %v512 = vadd.f32 0.0, %v511
  %v513 = vpop.f32.mrb[0].mxu0
  %514 = vdwg.mxu0
  %v515 = vadd.f32 %v442, %v512
  %s516 = scalar_lea.vmem [#allocation3], 48
  %v517 = vld [vmem:[%s516] sm:$0xff]
  %v518 = vsel %vm234, %v437, 0
  %520 = vmatprep.subr.mxu0 0.0
  %521 = vmatpush1.msra.mxu0 %v229
  %522 = vmatprep.subr.mxu0 0.0
  %523 = vmatpush1.msra.mxu0 %v230
  %524 = vmatprep.subr.mxu0 0.0
  %525 = vmatpush1.msra.mxu0 %v231
  %526 = vmatprep.subr.mxu0 0.0
  %527 = vmatpush1.msra.mxu0 %v232
  %528 = vmatprep.subr.mxu0 0.0
  %529 = vmatpush1.msra.mxu0 0.0
  %530 = vmatprep.subr.mxu0 0.0
  %531 = vmatpush1.msra.mxu0 0.0
  %532 = vmatprep.subr.mxu0 0.0
  %533 = vmatpush1.msra.mxu0 0.0
  %534 = vmatprep.subr.mxu0 0.0
  %535 = vmatpush1.msra.mxu0 0.0
  %536 = vmatprep.subr.mxu0 0.0
  %537 = vmatpush1.msra.mxu0 0.0
  %538 = vmatprep.subr.mxu0 0.0
  %539 = vmatpush1.msra.mxu0 0.0
  %540 = vmatprep.subr.mxu0 0.0
  %541 = vmatpush1.msra.mxu0 0.0
  %542 = vmatprep.subr.mxu0 0.0
  %543 = vmatpush1.msra.mxu0 0.0
  %544 = vmatprep.subr.mxu0 0.0
  %545 = vmatpush1.msra.mxu0 0.0
  %546 = vmatprep.subr.mxu0 0.0
  %547 = vmatpush1.msra.mxu0 0.0
  %548 = vmatprep.subr.mxu0 0.0
  %549 = vmatpush1.msra.mxu0 0.0
  %550 = vmatprep.subr.mxu0 0.0
  %551 = vmatpush1.msra.mxu0 0.0
  %552 = vmatprep.subr.mxu0 0.0
  %553 = vmatpush1.msra.mxu0 0.0
  %554 = vmatprep.subr.mxu0 0.0
  %555 = vmatpush1.msra.mxu0 0.0
  %556 = vmatprep.subr.mxu0 0.0
  %557 = vmatpush1.msra.mxu0 0.0
  %558 = vmatprep.subr.mxu0 0.0
  %559 = vmatpush1.msra.mxu0 0.0
  %560 = vmatprep.subr.mxu0 0.0
  %561 = vmatpush1.msra.mxu0 0.0
  %562 = vmatprep.subr.mxu0 0.0
  %563 = vmatpush1.msra.mxu0 0.0
  %564 = vmatprep.subr.mxu0 0.0
  %565 = vmatpush1.msra.mxu0 0.0
  %566 = vmatprep.subr.mxu0 0.0
  %567 = vmatpush1.msra.mxu0 0.0
  %568 = vmatprep.subr.mxu0 0.0
  %569 = vmatpush1.msra.mxu0 0.0
  %570 = vmatprep.subr.mxu0 0.0
  %571 = vmatpush1.msra.mxu0 0.0
  %572 = vmatprep.subr.mxu0 0.0
  %573 = vmatpush1.msra.mxu0 0.0
  %574 = vmatprep.subr.mxu0 0.0
  %575 = vmatpush1.msra.mxu0 0.0
  %576 = vmatprep.subr.mxu0 0.0
  %577 = vmatpush1.msra.mxu0 0.0
  %578 = vmatprep.subr.mxu0 0.0
  %579 = vmatpush1.msra.mxu0 0.0
  %580 = vmatprep.subr.mxu0 0.0
  %581 = vmatpush1.msra.mxu0 0.0
  %582 = vmatprep.subr.mxu0 0.0
  %583 = vmatpush1.msra.mxu0 0.0
  %584 = vmatprep.mubr.f32.mxu0 0.0
  %585 = vmatmul.mubr.f32.gmra.mrb[0].mxu0 %v518
  %v586 = vpop.f32.mrb[0].mxu0
  %v587 = vadd.f32 0.0, %v586
  %v588 = vpop.f32.mrb[0].mxu0
  %589 = vdwg.mxu0
  %v590 = vadd.f32 %v517, %v587
  %v591 = vxor.u32 %v515, 2147483648
  %v592 = vmul.f32 %v591, 1.442695
  %v593 = vpow.pop %v592
  %v594 = vadd.f32 %v593, 1.0
  %v595 = vrcp.pop %v594
  %v596 = vmul.f32 1.0, %v595
  %v597 = vtanh.pop %v515
  %v598 = vmul.f32 %v596, %v399
  %600 = vrot.lane.b32.xlu0 %v597, 64
  %v601 = vpop.permute.xlu0 %600
  %v603 = vmul.f32 %v596, %v601
  %605 = vrot.lane.b32.xlu0 %v603, 32
  %v606 = vpop.permute.xlu0 %605
  %v608 = vadd.f32 %v598, %v606
  %v609 = vtanh.pop %v608
  %611 = vrot.lane.b32.xlu0 %v609, 64
  %v612 = vpop.permute.xlu0 %611
  %v614 = vmul.f32 %v596, %v612
  %v615 = vxor.u32 %v590, 2147483648
  %v616 = vmul.f32 %v615, 1.442695
  %v617 = vpow.pop %v616
  %v618 = vadd.f32 %v617, 1.0
  %v619 = vrcp.pop %v618
  %v620 = vmul.f32 1.0, %v619
  %v621 = vtanh.pop %v590
  %v622 = vmul.f32 %v620, %v423
  %624 = vrot.lane.b32.xlu0 %v621, 64
  %v625 = vpop.permute.xlu0 %624
  %v627 = vmul.f32 %v620, %v625
  %629 = vrot.lane.b32.xlu0 %v627, 32
  %v630 = vpop.permute.xlu0 %629
  %v632 = vadd.f32 %v622, %v630
  %v633 = vtanh.pop %v632
  %635 = vrot.lane.b32.xlu0 %v633, 64
  %v636 = vpop.permute.xlu0 %635
  %v638 = vmul.f32 %v620, %v636
  %640 = vrot.lane.b32.xlu0 %v614, 32
  %v641 = vpop.permute.xlu0 %640
  %s643 = scalar_lea.vmem [#allocation6], 8
  %644 = vst.msk [vmem:[%s643] sm:$0xff] %vm234, %v641
  %646 = vrot.lane.b32.xlu0 %v638, 32
  %v647 = vpop.permute.xlu0 %646
  %s649 = scalar_lea.vmem [#allocation7], 48
  %650 = vst.msk [vmem:[%s649] sm:$0xff] %vm234, %v647
  %s651 = scalar_lea.vmem [#allocation2], 16
  %v652 = vld [vmem:[%s651] sm:$0xff]
  %v653 = vsel %vm234, %v641, 0
  %655 = vmatprep.subr.mxu0 0.0
  %656 = vmatpush1.msra.mxu0 %v224
  %657 = vmatprep.subr.mxu0 0.0
  %658 = vmatpush1.msra.mxu0 %v225
  %659 = vmatprep.subr.mxu0 0.0
  %660 = vmatpush1.msra.mxu0 %v226
  %661 = vmatprep.subr.mxu0 0.0
  %662 = vmatpush1.msra.mxu0 %v227
  %663 = vmatprep.subr.mxu0 0.0
  %664 = vmatpush1.msra.mxu0 0.0
  %665 = vmatprep.subr.mxu0 0.0
  %666 = vmatpush1.msra.mxu0 0.0
  %667 = vmatprep.subr.mxu0 0.0
  %668 = vmatpush1.msra.mxu0 0.0
  %669 = vmatprep.subr.mxu0 0.0
  %670 = vmatpush1.msra.mxu0 0.0
  %671 = vmatprep.subr.mxu0 0.0
  %672 = vmatpush1.msra.mxu0 0.0
  %673 = vmatprep.subr.mxu0 0.0
  %674 = vmatpush1.msra.mxu0 0.0
  %675 = vmatprep.subr.mxu0 0.0
  %676 = vmatpush1.msra.mxu0 0.0
  %677 = vmatprep.subr.mxu0 0.0
  %678 = vmatpush1.msra.mxu0 0.0
  %679 = vmatprep.subr.mxu0 0.0
  %680 = vmatpush1.msra.mxu0 0.0
  %681 = vmatprep.subr.mxu0 0.0
  %682 = vmatpush1.msra.mxu0 0.0
  %683 = vmatprep.subr.mxu0 0.0
  %684 = vmatpush1.msra.mxu0 0.0
  %685 = vmatprep.subr.mxu0 0.0
  %686 = vmatpush1.msra.mxu0 0.0
  %687 = vmatprep.subr.mxu0 0.0
  %688 = vmatpush1.msra.mxu0 0.0
  %689 = vmatprep.subr.mxu0 0.0
  %690 = vmatpush1.msra.mxu0 0.0
  %691 = vmatprep.subr.mxu0 0.0
  %692 = vmatpush1.msra.mxu0 0.0
  %693 = vmatprep.subr.mxu0 0.0
  %694 = vmatpush1.msra.mxu0 0.0
  %695 = vmatprep.subr.mxu0 0.0
  %696 = vmatpush1.msra.mxu0 0.0
  %697 = vmatprep.subr.mxu0 0.0
  %698 = vmatpush1.msra.mxu0 0.0
  %699 = vmatprep.subr.mxu0 0.0
  %700 = vmatpush1.msra.mxu0 0.0
  %701 = vmatprep.subr.mxu0 0.0
  %702 = vmatpush1.msra.mxu0 0.0
  %703 = vmatprep.subr.mxu0 0.0
  %704 = vmatpush1.msra.mxu0 0.0
  %705 = vmatprep.subr.mxu0 0.0
  %706 = vmatpush1.msra.mxu0 0.0
  %707 = vmatprep.subr.mxu0 0.0
  %708 = vmatpush1.msra.mxu0 0.0
  %709 = vmatprep.subr.mxu0 0.0
  %710 = vmatpush1.msra.mxu0 0.0
  %711 = vmatprep.subr.mxu0 0.0
  %712 = vmatpush1.msra.mxu0 0.0
  %713 = vmatprep.subr.mxu0 0.0
  %714 = vmatpush1.msra.mxu0 0.0
  %715 = vmatprep.subr.mxu0 0.0
  %716 = vmatpush1.msra.mxu0 0.0
  %717 = vmatprep.subr.mxu0 0.0
  %718 = vmatpush1.msra.mxu0 0.0
  %719 = vmatprep.mubr.f32.mxu0 0.0
  %720 = vmatmul.mubr.f32.gmra.mrb[0].mxu0 %v653
  %v721 = vpop.f32.mrb[0].mxu0
  %v722 = vadd.f32 0.0, %v721
  %v723 = vpop.f32.mrb[0].mxu0
  %724 = vdwg.mxu0
  %v725 = vadd.f32 %v652, %v722
  %s726 = scalar_lea.vmem [#allocation3], 40
  %v727 = vld [vmem:[%s726] sm:$0xff]
  %v728 = vsel %vm234, %v647, 0
  %730 = vmatprep.subr.mxu0 0.0
  %731 = vmatpush1.msra.mxu0 %v229
  %732 = vmatprep.subr.mxu0 0.0
  %733 = vmatpush1.msra.mxu0 %v230
  %734 = vmatprep.subr.mxu0 0.0
  %735 = vmatpush1.msra.mxu0 %v231
  %736 = vmatprep.subr.mxu0 0.0
  %737 = vmatpush1.msra.mxu0 %v232
  %738 = vmatprep.subr.mxu0 0.0
  %739 = vmatpush1.msra.mxu0 0.0
  %740 = vmatprep.subr.mxu0 0.0
  %741 = vmatpush1.msra.mxu0 0.0
  %742 = vmatprep.subr.mxu0 0.0
  %743 = vmatpush1.msra.mxu0 0.0
  %744 = vmatprep.subr.mxu0 0.0
  %745 = vmatpush1.msra.mxu0 0.0
  %746 = vmatprep.subr.mxu0 0.0
  %747 = vmatpush1.msra.mxu0 0.0
  %748 = vmatprep.subr.mxu0 0.0
  %749 = vmatpush1.msra.mxu0 0.0
  %750 = vmatprep.subr.mxu0 0.0
  %751 = vmatpush1.msra.mxu0 0.0
  %752 = vmatprep.subr.mxu0 0.0
  %753 = vmatpush1.msra.mxu0 0.0
  %754 = vmatprep.subr.mxu0 0.0
  %755 = vmatpush1.msra.mxu0 0.0
  %756 = vmatprep.subr.mxu0 0.0
  %757 = vmatpush1.msra.mxu0 0.0
  %758 = vmatprep.subr.mxu0 0.0
  %759 = vmatpush1.msra.mxu0 0.0
  %760 = vmatprep.subr.mxu0 0.0
  %761 = vmatpush1.msra.mxu0 0.0
  %762 = vmatprep.subr.mxu0 0.0
  %763 = vmatpush1.msra.mxu0 0.0
  %764 = vmatprep.subr.mxu0 0.0
  %765 = vmatpush1.msra.mxu0 0.0
  %766 = vmatprep.subr.mxu0 0.0
  %767 = vmatpush1.msra.mxu0 0.0
  %768 = vmatprep.subr.mxu0 0.0
  %769 = vmatpush1.msra.mxu0 0.0
  %770 = vmatprep.subr.mxu0 0.0
  %771 = vmatpush1.msra.mxu0 0.0
  %772 = vmatprep.subr.mxu0 0.0
  %773 = vmatpush1.msra.mxu0 0.0
  %774 = vmatprep.subr.mxu0 0.0
  %775 = vmatpush1.msra.mxu0 0.0
  %776 = vmatprep.subr.mxu0 0.0
  %777 = vmatpush1.msra.mxu0 0.0
  %778 = vmatprep.subr.mxu0 0.0
  %779 = vmatpush1.msra.mxu0 0.0
  %780 = vmatprep.subr.mxu0 0.0
  %781 = vmatpush1.msra.mxu0 0.0
  %782 = vmatprep.subr.mxu0 0.0
  %783 = vmatpush1.msra.mxu0 0.0
  %784 = vmatprep.subr.mxu0 0.0
  %785 = vmatpush1.msra.mxu0 0.0
  %786 = vmatprep.subr.mxu0 0.0
  %787 = vmatpush1.msra.mxu0 0.0
  %788 = vmatprep.subr.mxu0 0.0
  %789 = vmatpush1.msra.mxu0 0.0
  %790 = vmatprep.subr.mxu0 0.0
  %791 = vmatpush1.msra.mxu0 0.0
  %792 = vmatprep.subr.mxu0 0.0
  %793 = vmatpush1.msra.mxu0 0.0
  %794 = vmatprep.mubr.f32.mxu0 0.0
  %795 = vmatmul.mubr.f32.gmra.mrb[0].mxu0 %v728
  %v796 = vpop.f32.mrb[0].mxu0
  %v797 = vadd.f32 0.0, %v796
  %v798 = vpop.f32.mrb[0].mxu0
  %799 = vdwg.mxu0
  %v800 = vadd.f32 %v727, %v797
  %v801 = vxor.u32 %v725, 2147483648
  %v802 = vmul.f32 %v801, 1.442695
  %v803 = vpow.pop %v802
  %v804 = vadd.f32 %v803, 1.0
  %v805 = vrcp.pop %v804
  %v806 = vmul.f32 1.0, %v805
  %v807 = vtanh.pop %v725
  %v808 = vmul.f32 %v806, %v608
  %810 = vrot.lane.b32.xlu0 %v807, 64
  %v811 = vpop.permute.xlu0 %810
  %v813 = vmul.f32 %v806, %v811
  %815 = vrot.lane.b32.xlu0 %v813, 32
  %v816 = vpop.permute.xlu0 %815
  %v818 = vadd.f32 %v808, %v816
  %v819 = vtanh.pop %v818
  %821 = vrot.lane.b32.xlu0 %v819, 64
  %v822 = vpop.permute.xlu0 %821
  %v824 = vmul.f32 %v806, %v822
  %v825 = vxor.u32 %v800, 2147483648
  %v826 = vmul.f32 %v825, 1.442695
  %v827 = vpow.pop %v826
  %v828 = vadd.f32 %v827, 1.0
  %v829 = vrcp.pop %v828
  %v830 = vmul.f32 1.0, %v829
  %v831 = vtanh.pop %v800
  %v832 = vmul.f32 %v830, %v632
  %834 = vrot.lane.b32.xlu0 %v831, 64
  %v835 = vpop.permute.xlu0 %834
  %v837 = vmul.f32 %v830, %v835
  %839 = vrot.lane.b32.xlu0 %v837, 32
  %v840 = vpop.permute.xlu0 %839
  %v842 = vadd.f32 %v832, %v840
  %v843 = vtanh.pop %v842
  %845 = vrot.lane.b32.xlu0 %v843, 64
  %v846 = vpop.permute.xlu0 %845
  %v848 = vmul.f32 %v830, %v846
  %850 = vrot.lane.b32.xlu0 %v824, 32
  %v851 = vpop.permute.xlu0 %850
  %s853 = scalar_lea.vmem [#allocation6], 16
  %854 = vst.msk [vmem:[%s853] sm:$0xff] %vm234, %v851
  %856 = vrot.lane.b32.xlu0 %v848, 32
  %v857 = vpop.permute.xlu0 %856
  %s859 = scalar_lea.vmem [#allocation7], 40
  %860 = vst.msk [vmem:[%s859] sm:$0xff] %vm234, %v857
  %s861 = scalar_lea.vmem [#allocation2], 24
  %v862 = vld [vmem:[%s861] sm:$0xff]
  %v863 = vsel %vm234, %v851, 0
  %865 = vmatprep.subr.mxu0 0.0
  %866 = vmatpush1.msra.mxu0 %v224
  %867 = vmatprep.subr.mxu0 0.0
  %868 = vmatpush1.msra.mxu0 %v225
  %869 = vmatprep.subr.mxu0 0.0
  %870 = vmatpush1.msra.mxu0 %v226
  %871 = vmatprep.subr.mxu0 0.0
  %872 = vmatpush1.msra.mxu0 %v227
  %873 = vmatprep.subr.mxu0 0.0
  %874 = vmatpush1.msra.mxu0 0.0
  %875 = vmatprep.subr.mxu0 0.0
  %876 = vmatpush1.msra.mxu0 0.0
  %877 = vmatprep.subr.mxu0 0.0
  %878 = vmatpush1.msra.mxu0 0.0
  %879 = vmatprep.subr.mxu0 0.0
  %880 = vmatpush1.msra.mxu0 0.0
  %881 = vmatprep.subr.mxu0 0.0
  %882 = vmatpush1.msra.mxu0 0.0
  %883 = vmatprep.subr.mxu0 0.0
  %884 = vmatpush1.msra.mxu0 0.0
  %885 = vmatprep.subr.mxu0 0.0
  %886 = vmatpush1.msra.mxu0 0.0
  %887 = vmatprep.subr.mxu0 0.0
  %888 = vmatpush1.msra.mxu0 0.0
  %889 = vmatprep.subr.mxu0 0.0
  %890 = vmatpush1.msra.mxu0 0.0
  %891 = vmatprep.subr.mxu0 0.0
  %892 = vmatpush1.msra.mxu0 0.0
  %893 = vmatprep.subr.mxu0 0.0
  %894 = vmatpush1.msra.mxu0 0.0
  %895 = vmatprep.subr.mxu0 0.0
  %896 = vmatpush1.msra.mxu0 0.0
  %897 = vmatprep.subr.mxu0 0.0
  %898 = vmatpush1.msra.mxu0 0.0
  %899 = vmatprep.subr.mxu0 0.0
  %900 = vmatpush1.msra.mxu0 0.0
  %901 = vmatprep.subr.mxu0 0.0
  %902 = vmatpush1.msra.mxu0 0.0
  %903 = vmatprep.subr.mxu0 0.0
  %904 = vmatpush1.msra.mxu0 0.0
  %905 = vmatprep.subr.mxu0 0.0
  %906 = vmatpush1.msra.mxu0 0.0
  %907 = vmatprep.subr.mxu0 0.0
  %908 = vmatpush1.msra.mxu0 0.0
  %909 = vmatprep.subr.mxu0 0.0
  %910 = vmatpush1.msra.mxu0 0.0
  %911 = vmatprep.subr.mxu0 0.0
  %912 = vmatpush1.msra.mxu0 0.0
  %913 = vmatprep.subr.mxu0 0.0
  %914 = vmatpush1.msra.mxu0 0.0
  %915 = vmatprep.subr.mxu0 0.0
  %916 = vmatpush1.msra.mxu0 0.0
  %917 = vmatprep.subr.mxu0 0.0
  %918 = vmatpush1.msra.mxu0 0.0
  %919 = vmatprep.subr.mxu0 0.0
  %920 = vmatpush1.msra.mxu0 0.0
  %921 = vmatprep.subr.mxu0 0.0
  %922 = vmatpush1.msra.mxu0 0.0
  %923 = vmatprep.subr.mxu0 0.0
  %924 = vmatpush1.msra.mxu0 0.0
  %925 = vmatprep.subr.mxu0 0.0
  %926 = vmatpush1.msra.mxu0 0.0
  %927 = vmatprep.subr.mxu0 0.0
  %928 = vmatpush1.msra.mxu0 0.0
  %929 = vmatprep.mubr.f32.mxu0 0.0
  %930 = vmatmul.mubr.f32.gmra.mrb[0].mxu0 %v863
  %v931 = vpop.f32.mrb[0].mxu0
  %v932 = vadd.f32 0.0, %v931
  %v933 = vpop.f32.mrb[0].mxu0
  %934 = vdwg.mxu0
  %v935 = vadd.f32 %v862, %v932
  %s936 = scalar_lea.vmem [#allocation3], 32
  %v937 = vld [vmem:[%s936] sm:$0xff]
  %v938 = vsel %vm234, %v857, 0
  %940 = vmatprep.subr.mxu0 0.0
  %941 = vmatpush1.msra.mxu0 %v229
  %942 = vmatprep.subr.mxu0 0.0
  %943 = vmatpush1.msra.mxu0 %v230
  %944 = vmatprep.subr.mxu0 0.0
  %945 = vmatpush1.msra.mxu0 %v231
  %946 = vmatprep.subr.mxu0 0.0
  %947 = vmatpush1.msra.mxu0 %v232
  %948 = vmatprep.subr.mxu0 0.0
  %949 = vmatpush1.msra.mxu0 0.0
  %950 = vmatprep.subr.mxu0 0.0
  %951 = vmatpush1.msra.mxu0 0.0
  %952 = vmatprep.subr.mxu0 0.0
  %953 = vmatpush1.msra.mxu0 0.0
  %954 = vmatprep.subr.mxu0 0.0
  %955 = vmatpush1.msra.mxu0 0.0
  %956 = vmatprep.subr.mxu0 0.0
  %957 = vmatpush1.msra.mxu0 0.0
  %958 = vmatprep.subr.mxu0 0.0
  %959 = vmatpush1.msra.mxu0 0.0
  %960 = vmatprep.subr.mxu0 0.0
  %961 = vmatpush1.msra.mxu0 0.0
  %962 = vmatprep.subr.mxu0 0.0
  %963 = vmatpush1.msra.mxu0 0.0
  %964 = vmatprep.subr.mxu0 0.0
  %965 = vmatpush1.msra.mxu0 0.0
  %966 = vmatprep.subr.mxu0 0.0
  %967 = vmatpush1.msra.mxu0 0.0
  %968 = vmatprep.subr.mxu0 0.0
  %969 = vmatpush1.msra.mxu0 0.0
  %970 = vmatprep.subr.mxu0 0.0
  %971 = vmatpush1.msra.mxu0 0.0
  %972 = vmatprep.subr.mxu0 0.0
  %973 = vmatpush1.msra.mxu0 0.0
  %974 = vmatprep.subr.mxu0 0.0
  %975 = vmatpush1.msra.mxu0 0.0
  %976 = vmatprep.subr.mxu0 0.0
  %977 = vmatpush1.msra.mxu0 0.0
  %978 = vmatprep.subr.mxu0 0.0
  %979 = vmatpush1.msra.mxu0 0.0
  %980 = vmatprep.subr.mxu0 0.0
  %981 = vmatpush1.msra.mxu0 0.0
  %982 = vmatprep.subr.mxu0 0.0
  %983 = vmatpush1.msra.mxu0 0.0
  %984 = vmatprep.subr.mxu0 0.0
  %985 = vmatpush1.msra.mxu0 0.0
  %986 = vmatprep.subr.mxu0 0.0
  %987 = vmatpush1.msra.mxu0 0.0
  %988 = vmatprep.subr.mxu0 0.0
  %989 = vmatpush1.msra.mxu0 0.0
  %990 = vmatprep.subr.mxu0 0.0
  %991 = vmatpush1.msra.mxu0 0.0
  %992 = vmatprep.subr.mxu0 0.0
  %993 = vmatpush1.msra.mxu0 0.0
  %994 = vmatprep.subr.mxu0 0.0
  %995 = vmatpush1.msra.mxu0 0.0
  %996 = vmatprep.subr.mxu0 0.0
  %997 = vmatpush1.msra.mxu0 0.0
  %998 = vmatprep.subr.mxu0 0.0
  %999 = vmatpush1.msra.mxu0 0.0
  %1000 = vmatprep.subr.mxu0 0.0
  %1001 = vmatpush1.msra.mxu0 0.0
  %1002 = vmatprep.subr.mxu0 0.0
  %1003 = vmatpush1.msra.mxu0 0.0
  %1004 = vmatprep.mubr.f32.mxu0 0.0
  %1005 = vmatmul.mubr.f32.gmra.mrb[0].mxu0 %v938
  %v1006 = vpop.f32.mrb[0].mxu0
  %v1007 = vadd.f32 0.0, %v1006
  %v1008 = vpop.f32.mrb[0].mxu0
  %1009 = vdwg.mxu0
  %v1010 = vadd.f32 %v937, %v1007
  %v1011 = vxor.u32 %v935, 2147483648
  %v1012 = vmul.f32 %v1011, 1.442695
  %v1013 = vpow.pop %v1012
  %v1014 = vadd.f32 %v1013, 1.0
  %v1015 = vrcp.pop %v1014
  %v1016 = vmul.f32 1.0, %v1015
  %v1017 = vtanh.pop %v935
  %v1018 = vmul.f32 %v1016, %v818
  %1020 = vrot.lane.b32.xlu0 %v1017, 64
  %v1021 = vpop.permute.xlu0 %1020
  %v1023 = vmul.f32 %v1016, %v1021
  %1025 = vrot.lane.b32.xlu0 %v1023, 32
  %v1026 = vpop.permute.xlu0 %1025
  %v1028 = vadd.f32 %v1018, %v1026
  %v1029 = vtanh.pop %v1028
  %1031 = vrot.lane.b32.xlu0 %v1029, 64
  %v1032 = vpop.permute.xlu0 %1031
  %v1034 = vmul.f32 %v1016, %v1032
  %v1035 = vxor.u32 %v1010, 2147483648
  %v1036 = vmul.f32 %v1035, 1.442695
  %v1037 = vpow.pop %v1036
  %v1038 = vadd.f32 %v1037, 1.0
  %v1039 = vrcp.pop %v1038
  %v1040 = vmul.f32 1.0, %v1039
  %v1041 = vtanh.pop %v1010
  %v1042 = vmul.f32 %v1040, %v842
  %1044 = vrot.lane.b32.xlu0 %v1041, 64
  %v1045 = vpop.permute.xlu0 %1044
  %v1047 = vmul.f32 %v1040, %v1045
  %1049 = vrot.lane.b32.xlu0 %v1047, 32
  %v1050 = vpop.permute.xlu0 %1049
  %v1052 = vadd.f32 %v1042, %v1050
  %v1053 = vtanh.pop %v1052
  %1055 = vrot.lane.b32.xlu0 %v1053, 64
  %v1056 = vpop.permute.xlu0 %1055
  %v1058 = vmul.f32 %v1040, %v1056
  %1060 = vrot.lane.b32.xlu0 %v1034, 32
  %v1061 = vpop.permute.xlu0 %1060
  %s1063 = scalar_lea.vmem [#allocation6], 24
  %1064 = vst.msk [vmem:[%s1063] sm:$0xff] %vm234, %v1061
  %1066 = vrot.lane.b32.xlu0 %v1058, 32
  %v1067 = vpop.permute.xlu0 %1066
  %s1069 = scalar_lea.vmem [#allocation7], 32
  %1070 = vst.msk [vmem:[%s1069] sm:$0xff] %vm234, %v1067
  %s1071 = scalar_lea.vmem [#allocation2], 32
  %v1072 = vld [vmem:[%s1071] sm:$0xff]
  %v1073 = vsel %vm234, %v1061, 0
  %1075 = vmatprep.subr.mxu0 0.0
  %1076 = vmatpush1.msra.mxu0 %v224
  %1077 = vmatprep.subr.mxu0 0.0
  %1078 = vmatpush1.msra.mxu0 %v225
  %1079 = vmatprep.subr.mxu0 0.0
  %1080 = vmatpush1.msra.mxu0 %v226
  %1081 = vmatprep.subr.mxu0 0.0
  %1082 = vmatpush1.msra.mxu0 %v227
  %1083 = vmatprep.subr.mxu0 0.0
  %1084 = vmatpush1.msra.mxu0 0.0
  %1085 = vmatprep.subr.mxu0 0.0
  %1086 = vmatpush1.msra.mxu0 0.0
  %1087 = vmatprep.subr.mxu0 0.0
  %1088 = vmatpush1.msra.mxu0 0.0
  %1089 = vmatprep.subr.mxu0 0.0
  %1090 = vmatpush1.msra.mxu0 0.0
  %1091 = vmatprep.subr.mxu0 0.0
  %1092 = vmatpush1.msra.mxu0 0.0
  %1093 = vmatprep.subr.mxu0 0.0
  %1094 = vmatpush1.msra.mxu0 0.0
  %1095 = vmatprep.subr.mxu0 0.0
  %1096 = vmatpush1.msra.mxu0 0.0
  %1097 = vmatprep.subr.mxu0 0.0
  %1098 = vmatpush1.msra.mxu0 0.0
  %1099 = vmatprep.subr.mxu0 0.0
  %1100 = vmatpush1.msra.mxu0 0.0
  %1101 = vmatprep.subr.mxu0 0.0
  %1102 = vmatpush1.msra.mxu0 0.0
  %1103 = vmatprep.subr.mxu0 0.0
  %1104 = vmatpush1.msra.mxu0 0.0
  %1105 = vmatprep.subr.mxu0 0.0
  %1106 = vmatpush1.msra.mxu0 0.0
  %1107 = vmatprep.subr.mxu0 0.0
  %1108 = vmatpush1.msra.mxu0 0.0
  %1109 = vmatprep.subr.mxu0 0.0
  %1110 = vmatpush1.msra.mxu0 0.0
  %1111 = vmatprep.subr.mxu0 0.0
  %1112 = vmatpush1.msra.mxu0 0.0
  %1113 = vmatprep.subr.mxu0 0.0
  %1114 = vmatpush1.msra.mxu0 0.0
  %1115 = vmatprep.subr.mxu0 0.0
  %1116 = vmatpush1.msra.mxu0 0.0
  %1117 = vmatprep.subr.mxu0 0.0
  %1118 = vmatpush1.msra.mxu0 0.0
  %1119 = vmatprep.subr.mxu0 0.0
  %1120 = vmatpush1.msra.mxu0 0.0
  %1121 = vmatprep.subr.mxu0 0.0
  %1122 = vmatpush1.msra.mxu0 0.0
  %1123 = vmatprep.subr.mxu0 0.0
  %1124 = vmatpush1.msra.mxu0 0.0
  %1125 = vmatprep.subr.mxu0 0.0
  %1126 = vmatpush1.msra.mxu0 0.0
  %1127 = vmatprep.subr.mxu0 0.0
  %1128 = vmatpush1.msra.mxu0 0.0
  %1129 = vmatprep.subr.mxu0 0.0
  %1130 = vmatpush1.msra.mxu0 0.0
  %1131 = vmatprep.subr.mxu0 0.0
  %1132 = vmatpush1.msra.mxu0 0.0
  %1133 = vmatprep.subr.mxu0 0.0
  %1134 = vmatpush1.msra.mxu0 0.0
  %1135 = vmatprep.subr.mxu0 0.0
  %1136 = vmatpush1.msra.mxu0 0.0
  %1137 = vmatprep.subr.mxu0 0.0
  %1138 = vmatpush1.msra.mxu0 0.0
  %1139 = vmatprep.mubr.f32.mxu0 0.0
  %1140 = vmatmul.mubr.f32.gmra.mrb[0].mxu0 %v1073
  %v1141 = vpop.f32.mrb[0].mxu0
  %v1142 = vadd.f32 0.0, %v1141
  %v1143 = vpop.f32.mrb[0].mxu0
  %1144 = vdwg.mxu0
  %v1145 = vadd.f32 %v1072, %v1142
  %s1146 = scalar_lea.vmem [#allocation3], 24
  %v1147 = vld [vmem:[%s1146] sm:$0xff]
  %v1148 = vsel %vm234, %v1067, 0
  %1150 = vmatprep.subr.mxu0 0.0
  %1151 = vmatpush1.msra.mxu0 %v229
  %1152 = vmatprep.subr.mxu0 0.0
  %1153 = vmatpush1.msra.mxu0 %v230
  %1154 = vmatprep.subr.mxu0 0.0
  %1155 = vmatpush1.msra.mxu0 %v231
  %1156 = vmatprep.subr.mxu0 0.0
  %1157 = vmatpush1.msra.mxu0 %v232
  %1158 = vmatprep.subr.mxu0 0.0
  %1159 = vmatpush1.msra.mxu0 0.0
  %1160 = vmatprep.subr.mxu0 0.0
  %1161 = vmatpush1.msra.mxu0 0.0
  %1162 = vmatprep.subr.mxu0 0.0
  %1163 = vmatpush1.msra.mxu0 0.0
  %1164 = vmatprep.subr.mxu0 0.0
  %1165 = vmatpush1.msra.mxu0 0.0
  %1166 = vmatprep.subr.mxu0 0.0
  %1167 = vmatpush1.msra.mxu0 0.0
  %1168 = vmatprep.subr.mxu0 0.0
  %1169 = vmatpush1.msra.mxu0 0.0
  %1170 = vmatprep.subr.mxu0 0.0
  %1171 = vmatpush1.msra.mxu0 0.0
  %1172 = vmatprep.subr.mxu0 0.0
  %1173 = vmatpush1.msra.mxu0 0.0
  %1174 = vmatprep.subr.mxu0 0.0
  %1175 = vmatpush1.msra.mxu0 0.0
  %1176 = vmatprep.subr.mxu0 0.0
  %1177 = vmatpush1.msra.mxu0 0.0
  %1178 = vmatprep.subr.mxu0 0.0
  %1179 = vmatpush1.msra.mxu0 0.0
  %1180 = vmatprep.subr.mxu0 0.0
  %1181 = vmatpush1.msra.mxu0 0.0
  %1182 = vmatprep.subr.mxu0 0.0
  %1183 = vmatpush1.msra.mxu0 0.0
  %1184 = vmatprep.subr.mxu0 0.0
  %1185 = vmatpush1.msra.mxu0 0.0
  %1186 = vmatprep.subr.mxu0 0.0
  %1187 = vmatpush1.msra.mxu0 0.0
  %1188 = vmatprep.subr.mxu0 0.0
  %1189 = vmatpush1.msra.mxu0 0.0
  %1190 = vmatprep.subr.mxu0 0.0
  %1191 = vmatpush1.msra.mxu0 0.0
  %1192 = vmatprep.subr.mxu0 0.0
  %1193 = vmatpush1.msra.mxu0 0.0
  %1194 = vmatprep.subr.mxu0 0.0
  %1195 = vmatpush1.msra.mxu0 0.0
  %1196 = vmatprep.subr.mxu0 0.0
  %1197 = vmatpush1.msra.mxu0 0.0
  %1198 = vmatprep.subr.mxu0 0.0
  %1199 = vmatpush1.msra.mxu0 0.0
  %1200 = vmatprep.subr.mxu0 0.0
  %1201 = vmatpush1.msra.mxu0 0.0
  %1202 = vmatprep.subr.mxu0 0.0
  %1203 = vmatpush1.msra.mxu0 0.0
  %1204 = vmatprep.subr.mxu0 0.0
  %1205 = vmatpush1.msra.mxu0 0.0
  %1206 = vmatprep.subr.mxu0 0.0
  %1207 = vmatpush1.msra.mxu0 0.0
  %1208 = vmatprep.subr.mxu0 0.0
  %1209 = vmatpush1.msra.mxu0 0.0
  %1210 = vmatprep.subr.mxu0 0.0
  %1211 = vmatpush1.msra.mxu0 0.0
  %1212 = vmatprep.subr.mxu0 0.0
  %1213 = vmatpush1.msra.mxu0 0.0
  %1214 = vmatprep.mubr.f32.mxu0 0.0
  %1215 = vmatmul.mubr.f32.gmra.mrb[0].mxu0 %v1148
  %v1216 = vpop.f32.mrb[0].mxu0
  %v1217 = vadd.f32 0.0, %v1216
  %v1218 = vpop.f32.mrb[0].mxu0
  %1219 = vdwg.mxu0
  %v1220 = vadd.f32 %v1147, %v1217
  %v1221 = vxor.u32 %v1145, 2147483648
  %v1222 = vmul.f32 %v1221, 1.442695
  %v1223 = vpow.pop %v1222
  %v1224 = vadd.f32 %v1223, 1.0
  %v1225 = vrcp.pop %v1224
  %v1226 = vmul.f32 1.0, %v1225
  %v1227 = vtanh.pop %v1145
  %v1228 = vmul.f32 %v1226, %v1028
  %1230 = vrot.lane.b32.xlu0 %v1227, 64
  %v1231 = vpop.permute.xlu0 %1230
  %v1233 = vmul.f32 %v1226, %v1231
  %1235 = vrot.lane.b32.xlu0 %v1233, 32
  %v1236 = vpop.permute.xlu0 %1235
  %v1238 = vadd.f32 %v1228, %v1236
  %v1239 = vtanh.pop %v1238
  %1241 = vrot.lane.b32.xlu0 %v1239, 64
  %v1242 = vpop.permute.xlu0 %1241
  %v1244 = vmul.f32 %v1226, %v1242
  %v1245 = vxor.u32 %v1220, 2147483648
  %v1246 = vmul.f32 %v1245, 1.442695
  %v1247 = vpow.pop %v1246
  %v1248 = vadd.f32 %v1247, 1.0
  %v1249 = vrcp.pop %v1248
  %v1250 = vmul.f32 1.0, %v1249
  %v1251 = vtanh.pop %v1220
  %v1252 = vmul.f32 %v1250, %v1052
  %1254 = vrot.lane.b32.xlu0 %v1251, 64
  %v1255 = vpop.permute.xlu0 %1254
  %v1257 = vmul.f32 %v1250, %v1255
  %1259 = vrot.lane.b32.xlu0 %v1257, 32
  %v1260 = vpop.permute.xlu0 %1259
  %v1262 = vadd.f32 %v1252, %v1260
  %v1263 = vtanh.pop %v1262
  %1265 = vrot.lane.b32.xlu0 %v1263, 64
  %v1266 = vpop.permute.xlu0 %1265
  %v1268 = vmul.f32 %v1250, %v1266
  %1270 = vrot.lane.b32.xlu0 %v1244, 32
  %v1271 = vpop.permute.xlu0 %1270
  %s1273 = scalar_lea.vmem [#allocation6], 32
  %1274 = vst.msk [vmem:[%s1273] sm:$0xff] %vm234, %v1271
  %1276 = vrot.lane.b32.xlu0 %v1268, 32
  %v1277 = vpop.permute.xlu0 %1276
  %s1279 = scalar_lea.vmem [#allocation7], 24
  %1280 = vst.msk [vmem:[%s1279] sm:$0xff] %vm234, %v1277
  %s1281 = scalar_lea.vmem [#allocation2], 40
  %v1282 = vld [vmem:[%s1281] sm:$0xff]
  %v1283 = vsel %vm234, %v1271, 0
  %1285 = vmatprep.subr.mxu0 0.0
  %1286 = vmatpush1.msra.mxu0 %v224
  %1287 = vmatprep.subr.mxu0 0.0
  %1288 = vmatpush1.msra.mxu0 %v225
  %1289 = vmatprep.subr.mxu0 0.0
  %1290 = vmatpush1.msra.mxu0 %v226
  %1291 = vmatprep.subr.mxu0 0.0
  %1292 = vmatpush1.msra.mxu0 %v227
  %1293 = vmatprep.subr.mxu0 0.0
  %1294 = vmatpush1.msra.mxu0 0.0
  %1295 = vmatprep.subr.mxu0 0.0
  %1296 = vmatpush1.msra.mxu0 0.0
  %1297 = vmatprep.subr.mxu0 0.0
  %1298 = vmatpush1.msra.mxu0 0.0
  %1299 = vmatprep.subr.mxu0 0.0
  %1300 = vmatpush1.msra.mxu0 0.0
  %1301 = vmatprep.subr.mxu0 0.0
  %1302 = vmatpush1.msra.mxu0 0.0
  %1303 = vmatprep.subr.mxu0 0.0
  %1304 = vmatpush1.msra.mxu0 0.0
  %1305 = vmatprep.subr.mxu0 0.0
  %1306 = vmatpush1.msra.mxu0 0.0
  %1307 = vmatprep.subr.mxu0 0.0
  %1308 = vmatpush1.msra.mxu0 0.0
  %1309 = vmatprep.subr.mxu0 0.0
  %1310 = vmatpush1.msra.mxu0 0.0
  %1311 = vmatprep.subr.mxu0 0.0
  %1312 = vmatpush1.msra.mxu0 0.0
  %1313 = vmatprep.subr.mxu0 0.0
  %1314 = vmatpush1.msra.mxu0 0.0
  %1315 = vmatprep.subr.mxu0 0.0
  %1316 = vmatpush1.msra.mxu0 0.0
  %1317 = vmatprep.subr.mxu0 0.0
  %1318 = vmatpush1.msra.mxu0 0.0
  %1319 = vmatprep.subr.mxu0 0.0
  %1320 = vmatpush1.msra.mxu0 0.0
  %1321 = vmatprep.subr.mxu0 0.0
  %1322 = vmatpush1.msra.mxu0 0.0
  %1323 = vmatprep.subr.mxu0 0.0
  %1324 = vmatpush1.msra.mxu0 0.0
  %1325 = vmatprep.subr.mxu0 0.0
  %1326 = vmatpush1.msra.mxu0 0.0
  %1327 = vmatprep.subr.mxu0 0.0
  %1328 = vmatpush1.msra.mxu0 0.0
  %1329 = vmatprep.subr.mxu0 0.0
  %1330 = vmatpush1.msra.mxu0 0.0
  %1331 = vmatprep.subr.mxu0 0.0
  %1332 = vmatpush1.msra.mxu0 0.0
  %1333 = vmatprep.subr.mxu0 0.0
  %1334 = vmatpush1.msra.mxu0 0.0
  %1335 = vmatprep.subr.mxu0 0.0
  %1336 = vmatpush1.msra.mxu0 0.0
  %1337 = vmatprep.subr.mxu0 0.0
  %1338 = vmatpush1.msra.mxu0 0.0
  %1339 = vmatprep.subr.mxu0 0.0
  %1340 = vmatpush1.msra.mxu0 0.0
  %1341 = vmatprep.subr.mxu0 0.0
  %1342 = vmatpush1.msra.mxu0 0.0
  %1343 = vmatprep.subr.mxu0 0.0
  %1344 = vmatpush1.msra.mxu0 0.0
  %1345 = vmatprep.subr.mxu0 0.0
  %1346 = vmatpush1.msra.mxu0 0.0
  %1347 = vmatprep.subr.mxu0 0.0
  %1348 = vmatpush1.msra.mxu0 0.0
  %1349 = vmatprep.mubr.f32.mxu0 0.0
  %1350 = vmatmul.mubr.f32.gmra.mrb[0].mxu0 %v1283
  %v1351 = vpop.f32.mrb[0].mxu0
  %v1352 = vadd.f32 0.0, %v1351
  %v1353 = vpop.f32.mrb[0].mxu0
  %1354 = vdwg.mxu0
  %v1355 = vadd.f32 %v1282, %v1352
  %s1356 = scalar_lea.vmem [#allocation3], 16
  %v1357 = vld [vmem:[%s1356] sm:$0xff]
  %v1358 = vsel %vm234, %v1277, 0
  %1360 = vmatprep.subr.mxu0 0.0
  %1361 = vmatpush1.msra.mxu0 %v229
  %1362 = vmatprep.subr.mxu0 0.0
  %1363 = vmatpush1.msra.mxu0 %v230
  %1364 = vmatprep.subr.mxu0 0.0
  %1365 = vmatpush1.msra.mxu0 %v231
  %1366 = vmatprep.subr.mxu0 0.0
  %1367 = vmatpush1.msra.mxu0 %v232
  %1368 = vmatprep.subr.mxu0 0.0
  %1369 = vmatpush1.msra.mxu0 0.0
  %1370 = vmatprep.subr.mxu0 0.0
  %1371 = vmatpush1.msra.mxu0 0.0
  %1372 = vmatprep.subr.mxu0 0.0
  %1373 = vmatpush1.msra.mxu0 0.0
  %1374 = vmatprep.subr.mxu0 0.0
  %1375 = vmatpush1.msra.mxu0 0.0
  %1376 = vmatprep.subr.mxu0 0.0
  %1377 = vmatpush1.msra.mxu0 0.0
  %1378 = vmatprep.subr.mxu0 0.0
  %1379 = vmatpush1.msra.mxu0 0.0
  %1380 = vmatprep.subr.mxu0 0.0
  %1381 = vmatpush1.msra.mxu0 0.0
  %1382 = vmatprep.subr.mxu0 0.0
  %1383 = vmatpush1.msra.mxu0 0.0
  %1384 = vmatprep.subr.mxu0 0.0
  %1385 = vmatpush1.msra.mxu0 0.0
  %1386 = vmatprep.subr.mxu0 0.0
  %1387 = vmatpush1.msra.mxu0 0.0
  %1388 = vmatprep.subr.mxu0 0.0
  %1389 = vmatpush1.msra.mxu0 0.0
  %1390 = vmatprep.subr.mxu0 0.0
  %1391 = vmatpush1.msra.mxu0 0.0
  %1392 = vmatprep.subr.mxu0 0.0
  %1393 = vmatpush1.msra.mxu0 0.0
  %1394 = vmatprep.subr.mxu0 0.0
  %1395 = vmatpush1.msra.mxu0 0.0
  %1396 = vmatprep.subr.mxu0 0.0
  %1397 = vmatpush1.msra.mxu0 0.0
  %1398 = vmatprep.subr.mxu0 0.0
  %1399 = vmatpush1.msra.mxu0 0.0
  %1400 = vmatprep.subr.mxu0 0.0
  %1401 = vmatpush1.msra.mxu0 0.0
  %1402 = vmatprep.subr.mxu0 0.0
  %1403 = vmatpush1.msra.mxu0 0.0
  %1404 = vmatprep.subr.mxu0 0.0
  %1405 = vmatpush1.msra.mxu0 0.0
  %1406 = vmatprep.subr.mxu0 0.0
  %1407 = vmatpush1.msra.mxu0 0.0
  %1408 = vmatprep.subr.mxu0 0.0
  %1409 = vmatpush1.msra.mxu0 0.0
  %1410 = vmatprep.subr.mxu0 0.0
  %1411 = vmatpush1.msra.mxu0 0.0
  %1412 = vmatprep.subr.mxu0 0.0
  %1413 = vmatpush1.msra.mxu0 0.0
  %1414 = vmatprep.subr.mxu0 0.0
  %1415 = vmatpush1.msra.mxu0 0.0
  %1416 = vmatprep.subr.mxu0 0.0
  %1417 = vmatpush1.msra.mxu0 0.0
  %1418 = vmatprep.subr.mxu0 0.0
  %1419 = vmatpush1.msra.mxu0 0.0
  %1420 = vmatprep.subr.mxu0 0.0
  %1421 = vmatpush1.msra.mxu0 0.0
  %1422 = vmatprep.subr.mxu0 0.0
  %1423 = vmatpush1.msra.mxu0 0.0
  %1424 = vmatprep.mubr.f32.mxu0 0.0
  %1425 = vmatmul.mubr.f32.gmra.mrb[0].mxu0 %v1358
  %v1426 = vpop.f32.mrb[0].mxu0
  %v1427 = vadd.f32 0.0, %v1426
  %v1428 = vpop.f32.mrb[0].mxu0
  %1429 = vdwg.mxu0
  %v1430 = vadd.f32 %v1357, %v1427
  %v1431 = vxor.u32 %v1355, 2147483648
  %v1432 = vmul.f32 %v1431, 1.442695
  %v1433 = vpow.pop %v1432
  %v1434 = vadd.f32 %v1433, 1.0
  %v1435 = vrcp.pop %v1434
  %v1436 = vmul.f32 1.0, %v1435
  %v1437 = vtanh.pop %v1355
  %v1438 = vmul.f32 %v1436, %v1238
  %1440 = vrot.lane.b32.xlu0 %v1437, 64
  %v1441 = vpop.permute.xlu0 %1440
  %v1443 = vmul.f32 %v1436, %v1441
  %1445 = vrot.lane.b32.xlu0 %v1443, 32
  %v1446 = vpop.permute.xlu0 %1445
  %v1448 = vadd.f32 %v1438, %v1446
  %v1449 = vtanh.pop %v1448
  %1451 = vrot.lane.b32.xlu0 %v1449, 64
  %v1452 = vpop.permute.xlu0 %1451
  %v1454 = vmul.f32 %v1436, %v1452
  %v1455 = vxor.u32 %v1430, 2147483648
  %v1456 = vmul.f32 %v1455, 1.442695
  %v1457 = vpow.pop %v1456
  %v1458 = vadd.f32 %v1457, 1.0
  %v1459 = vrcp.pop %v1458
  %v1460 = vmul.f32 1.0, %v1459
  %v1461 = vtanh.pop %v1430
  %v1462 = vmul.f32 %v1460, %v1262
  %1464 = vrot.lane.b32.xlu0 %v1461, 64
  %v1465 = vpop.permute.xlu0 %1464
  %v1467 = vmul.f32 %v1460, %v1465
  %1469 = vrot.lane.b32.xlu0 %v1467, 32
  %v1470 = vpop.permute.xlu0 %1469
  %v1472 = vadd.f32 %v1462, %v1470
  %v1473 = vtanh.pop %v1472
  %1475 = vrot.lane.b32.xlu0 %v1473, 64
  %v1476 = vpop.permute.xlu0 %1475
  %v1478 = vmul.f32 %v1460, %v1476
  %1480 = vrot.lane.b32.xlu0 %v1454, 32
  %v1481 = vpop.permute.xlu0 %1480
  %s1483 = scalar_lea.vmem [#allocation6], 40
  %1484 = vst.msk [vmem:[%s1483] sm:$0xff] %vm234, %v1481
  %1486 = vrot.lane.b32.xlu0 %v1478, 32
  %v1487 = vpop.permute.xlu0 %1486
  %s1489 = scalar_lea.vmem [#allocation7], 16
  %1490 = vst.msk [vmem:[%s1489] sm:$0xff] %vm234, %v1487
  %s1491 = scalar_lea.vmem [#allocation2], 48
  %v1492 = vld [vmem:[%s1491] sm:$0xff]
  %v1493 = vsel %vm234, %v1481, 0
  %1495 = vmatprep.subr.mxu0 0.0
  %1496 = vmatpush1.msra.mxu0 %v224
  %1497 = vmatprep.subr.mxu0 0.0
  %1498 = vmatpush1.msra.mxu0 %v225
  %1499 = vmatprep.subr.mxu0 0.0
  %1500 = vmatpush1.msra.mxu0 %v226
  %1501 = vmatprep.subr.mxu0 0.0
  %1502 = vmatpush1.msra.mxu0 %v227
  %1503 = vmatprep.subr.mxu0 0.0
  %1504 = vmatpush1.msra.mxu0 0.0
  %1505 = vmatprep.subr.mxu0 0.0
  %1506 = vmatpush1.msra.mxu0 0.0
  %1507 = vmatprep.subr.mxu0 0.0
  %1508 = vmatpush1.msra.mxu0 0.0
  %1509 = vmatprep.subr.mxu0 0.0
  %1510 = vmatpush1.msra.mxu0 0.0
  %1511 = vmatprep.subr.mxu0 0.0
  %1512 = vmatpush1.msra.mxu0 0.0
  %1513 = vmatprep.subr.mxu0 0.0
  %1514 = vmatpush1.msra.mxu0 0.0
  %1515 = vmatprep.subr.mxu0 0.0
  %1516 = vmatpush1.msra.mxu0 0.0
  %1517 = vmatprep.subr.mxu0 0.0
  %1518 = vmatpush1.msra.mxu0 0.0
  %1519 = vmatprep.subr.mxu0 0.0
  %1520 = vmatpush1.msra.mxu0 0.0
  %1521 = vmatprep.subr.mxu0 0.0
  %1522 = vmatpush1.msra.mxu0 0.0
  %1523 = vmatprep.subr.mxu0 0.0
  %1524 = vmatpush1.msra.mxu0 0.0
  %1525 = vmatprep.subr.mxu0 0.0
  %1526 = vmatpush1.msra.mxu0 0.0
  %1527 = vmatprep.subr.mxu0 0.0
  %1528 = vmatpush1.msra.mxu0 0.0
  %1529 = vmatprep.subr.mxu0 0.0
  %1530 = vmatpush1.msra.mxu0 0.0
  %1531 = vmatprep.subr.mxu0 0.0
  %1532 = vmatpush1.msra.mxu0 0.0
  %1533 = vmatprep.subr.mxu0 0.0
  %1534 = vmatpush1.msra.mxu0 0.0
  %1535 = vmatprep.subr.mxu0 0.0
  %1536 = vmatpush1.msra.mxu0 0.0
  %1537 = vmatprep.subr.mxu0 0.0
  %1538 = vmatpush1.msra.mxu0 0.0
  %1539 = vmatprep.subr.mxu0 0.0
  %1540 = vmatpush1.msra.mxu0 0.0
  %1541 = vmatprep.subr.mxu0 0.0
  %1542 = vmatpush1.msra.mxu0 0.0
  %1543 = vmatprep.subr.mxu0 0.0
  %1544 = vmatpush1.msra.mxu0 0.0
  %1545 = vmatprep.subr.mxu0 0.0
  %1546 = vmatpush1.msra.mxu0 0.0
  %1547 = vmatprep.subr.mxu0 0.0
  %1548 = vmatpush1.msra.mxu0 0.0
  %1549 = vmatprep.subr.mxu0 0.0
  %1550 = vmatpush1.msra.mxu0 0.0
  %1551 = vmatprep.subr.mxu0 0.0
  %1552 = vmatpush1.msra.mxu0 0.0
  %1553 = vmatprep.subr.mxu0 0.0
  %1554 = vmatpush1.msra.mxu0 0.0
  %1555 = vmatprep.subr.mxu0 0.0
  %1556 = vmatpush1.msra.mxu0 0.0
  %1557 = vmatprep.subr.mxu0 0.0
  %1558 = vmatpush1.msra.mxu0 0.0
  %1559 = vmatprep.mubr.f32.mxu0 0.0
  %1560 = vmatmul.mubr.f32.gmra.mrb[0].mxu0 %v1493
  %v1561 = vpop.f32.mrb[0].mxu0
  %v1562 = vadd.f32 0.0, %v1561
  %v1563 = vpop.f32.mrb[0].mxu0
  %1564 = vdwg.mxu0
  %v1565 = vadd.f32 %v1492, %v1562
  %s1566 = scalar_lea.vmem [#allocation3], 8
  %v1567 = vld [vmem:[%s1566] sm:$0xff]
  %v1568 = vsel %vm234, %v1487, 0
  %1570 = vmatprep.subr.mxu0 0.0
  %1571 = vmatpush1.msra.mxu0 %v229
  %1572 = vmatprep.subr.mxu0 0.0
  %1573 = vmatpush1.msra.mxu0 %v230
  %1574 = vmatprep.subr.mxu0 0.0
  %1575 = vmatpush1.msra.mxu0 %v231
  %1576 = vmatprep.subr.mxu0 0.0
  %1577 = vmatpush1.msra.mxu0 %v232
  %1578 = vmatprep.subr.mxu0 0.0
  %1579 = vmatpush1.msra.mxu0 0.0
  %1580 = vmatprep.subr.mxu0 0.0
  %1581 = vmatpush1.msra.mxu0 0.0
  %1582 = vmatprep.subr.mxu0 0.0
  %1583 = vmatpush1.msra.mxu0 0.0
  %1584 = vmatprep.subr.mxu0 0.0
  %1585 = vmatpush1.msra.mxu0 0.0
  %1586 = vmatprep.subr.mxu0 0.0
  %1587 = vmatpush1.msra.mxu0 0.0
  %1588 = vmatprep.subr.mxu0 0.0
  %1589 = vmatpush1.msra.mxu0 0.0
  %1590 = vmatprep.subr.mxu0 0.0
  %1591 = vmatpush1.msra.mxu0 0.0
  %1592 = vmatprep.subr.mxu0 0.0
  %1593 = vmatpush1.msra.mxu0 0.0
  %1594 = vmatprep.subr.mxu0 0.0
  %1595 = vmatpush1.msra.mxu0 0.0
  %1596 = vmatprep.subr.mxu0 0.0
  %1597 = vmatpush1.msra.mxu0 0.0
  %1598 = vmatprep.subr.mxu0 0.0
  %1599 = vmatpush1.msra.mxu0 0.0
  %1600 = vmatprep.subr.mxu0 0.0
  %1601 = vmatpush1.msra.mxu0 0.0
  %1602 = vmatprep.subr.mxu0 0.0
  %1603 = vmatpush1.msra.mxu0 0.0
  %1604 = vmatprep.subr.mxu0 0.0
  %1605 = vmatpush1.msra.mxu0 0.0
  %1606 = vmatprep.subr.mxu0 0.0
  %1607 = vmatpush1.msra.mxu0 0.0
  %1608 = vmatprep.subr.mxu0 0.0
  %1609 = vmatpush1.msra.mxu0 0.0
  %1610 = vmatprep.subr.mxu0 0.0
  %1611 = vmatpush1.msra.mxu0 0.0
  %1612 = vmatprep.subr.mxu0 0.0
  %1613 = vmatpush1.msra.mxu0 0.0
  %1614 = vmatprep.subr.mxu0 0.0
  %1615 = vmatpush1.msra.mxu0 0.0
  %1616 = vmatprep.subr.mxu0 0.0
  %1617 = vmatpush1.msra.mxu0 0.0
  %1618 = vmatprep.subr.mxu0 0.0
  %1619 = vmatpush1.msra.mxu0 0.0
  %1620 = vmatprep.subr.mxu0 0.0
  %1621 = vmatpush1.msra.mxu0 0.0
  %1622 = vmatprep.subr.mxu0 0.0
  %1623 = vmatpush1.msra.mxu0 0.0
  %1624 = vmatprep.subr.mxu0 0.0
  %1625 = vmatpush1.msra.mxu0 0.0
  %1626 = vmatprep.subr.mxu0 0.0
  %1627 = vmatpush1.msra.mxu0 0.0
  %1628 = vmatprep.subr.mxu0 0.0
  %1629 = vmatpush1.msra.mxu0 0.0
  %1630 = vmatprep.subr.mxu0 0.0
  %1631 = vmatpush1.msra.mxu0 0.0
  %1632 = vmatprep.subr.mxu0 0.0
  %1633 = vmatpush1.msra.mxu0 0.0
  %1634 = vmatprep.mubr.f32.mxu0 0.0
  %1635 = vmatmul.mubr.f32.gmra.mrb[0].mxu0 %v1568
  %v1636 = vpop.f32.mrb[0].mxu0
  %v1637 = vadd.f32 0.0, %v1636
  %v1638 = vpop.f32.mrb[0].mxu0
  %1639 = vdwg.mxu0
  %v1640 = vadd.f32 %v1567, %v1637
  %v1641 = vxor.u32 %v1565, 2147483648
  %v1642 = vmul.f32 %v1641, 1.442695
  %v1643 = vpow.pop %v1642
  %v1644 = vadd.f32 %v1643, 1.0
  %v1645 = vrcp.pop %v1644
  %v1646 = vmul.f32 1.0, %v1645
  %v1647 = vtanh.pop %v1565
  %v1648 = vmul.f32 %v1646, %v1448
  %1650 = vrot.lane.b32.xlu0 %v1647, 64
  %v1651 = vpop.permute.xlu0 %1650
  %v1653 = vmul.f32 %v1646, %v1651
  %1655 = vrot.lane.b32.xlu0 %v1653, 32
  %v1656 = vpop.permute.xlu0 %1655
  %v1658 = vadd.f32 %v1648, %v1656
  %v1659 = vtanh.pop %v1658
  %1661 = vrot.lane.b32.xlu0 %v1659, 64
  %v1662 = vpop.permute.xlu0 %1661
  %v1664 = vmul.f32 %v1646, %v1662
  %v1665 = vxor.u32 %v1640, 2147483648
  %v1666 = vmul.f32 %v1665, 1.442695
  %v1667 = vpow.pop %v1666
  %v1668 = vadd.f32 %v1667, 1.0
  %v1669 = vrcp.pop %v1668
  %v1670 = vmul.f32 1.0, %v1669
  %v1671 = vtanh.pop %v1640
  %v1672 = vmul.f32 %v1670, %v1472
  %1674 = vrot.lane.b32.xlu0 %v1671, 64
  %v1675 = vpop.permute.xlu0 %1674
  %v1677 = vmul.f32 %v1670, %v1675
  %1679 = vrot.lane.b32.xlu0 %v1677, 32
  %v1680 = vpop.permute.xlu0 %1679
  %v1682 = vadd.f32 %v1672, %v1680
  %v1683 = vtanh.pop %v1682
  %1685 = vrot.lane.b32.xlu0 %v1683, 64
  %v1686 = vpop.permute.xlu0 %1685
  %v1688 = vmul.f32 %v1670, %v1686
  %1690 = vrot.lane.b32.xlu0 %v1664, 32
  %v1691 = vpop.permute.xlu0 %1690
  %s1693 = scalar_lea.vmem [#allocation6], 48
  %1694 = vst.msk [vmem:[%s1693] sm:$0xff] %vm234, %v1691
  %1696 = vrot.lane.b32.xlu0 %v1688, 32
  %v1697 = vpop.permute.xlu0 %1696
  %s1699 = scalar_lea.vmem [#allocation7], 8
  %1700 = vst.msk [vmem:[%s1699] sm:$0xff] %vm234, %v1697
  %s1701 = scalar_lea.vmem [#allocation2], 56
  %v1702 = vld [vmem:[%s1701] sm:$0xff]
  %v1703 = vsel %vm234, %v1691, 0
  %1705 = vmatprep.subr.mxu0 0.0
  %1706 = vmatpush1.msra.mxu0 %v224
  %1707 = vmatprep.subr.mxu0 0.0
  %1708 = vmatpush1.msra.mxu0 %v225
  %1709 = vmatprep.subr.mxu0 0.0
  %1710 = vmatpush1.msra.mxu0 %v226
  %1711 = vmatprep.subr.mxu0 0.0
  %1712 = vmatpush1.msra.mxu0 %v227
  %1713 = vmatprep.subr.mxu0 0.0
  %1714 = vmatpush1.msra.mxu0 0.0
  %1715 = vmatprep.subr.mxu0 0.0
  %1716 = vmatpush1.msra.mxu0 0.0
  %1717 = vmatprep.subr.mxu0 0.0
  %1718 = vmatpush1.msra.mxu0 0.0
  %1719 = vmatprep.subr.mxu0 0.0
  %1720 = vmatpush1.msra.mxu0 0.0
  %1721 = vmatprep.subr.mxu0 0.0
  %1722 = vmatpush1.msra.mxu0 0.0
  %1723 = vmatprep.subr.mxu0 0.0
  %1724 = vmatpush1.msra.mxu0 0.0
  %1725 = vmatprep.subr.mxu0 0.0
  %1726 = vmatpush1.msra.mxu0 0.0
  %1727 = vmatprep.subr.mxu0 0.0
  %1728 = vmatpush1.msra.mxu0 0.0
  %1729 = vmatprep.subr.mxu0 0.0
  %1730 = vmatpush1.msra.mxu0 0.0
  %1731 = vmatprep.subr.mxu0 0.0
  %1732 = vmatpush1.msra.mxu0 0.0
  %1733 = vmatprep.subr.mxu0 0.0
  %1734 = vmatpush1.msra.mxu0 0.0
  %1735 = vmatprep.subr.mxu0 0.0
  %1736 = vmatpush1.msra.mxu0 0.0
  %1737 = vmatprep.subr.mxu0 0.0
  %1738 = vmatpush1.msra.mxu0 0.0
  %1739 = vmatprep.subr.mxu0 0.0
  %1740 = vmatpush1.msra.mxu0 0.0
  %1741 = vmatprep.subr.mxu0 0.0
  %1742 = vmatpush1.msra.mxu0 0.0
  %1743 = vmatprep.subr.mxu0 0.0
  %1744 = vmatpush1.msra.mxu0 0.0
  %1745 = vmatprep.subr.mxu0 0.0
  %1746 = vmatpush1.msra.mxu0 0.0
  %1747 = vmatprep.subr.mxu0 0.0
  %1748 = vmatpush1.msra.mxu0 0.0
  %1749 = vmatprep.subr.mxu0 0.0
  %1750 = vmatpush1.msra.mxu0 0.0
  %1751 = vmatprep.subr.mxu0 0.0
  %1752 = vmatpush1.msra.mxu0 0.0
  %1753 = vmatprep.subr.mxu0 0.0
  %1754 = vmatpush1.msra.mxu0 0.0
  %1755 = vmatprep.subr.mxu0 0.0
  %1756 = vmatpush1.msra.mxu0 0.0
  %1757 = vmatprep.subr.mxu0 0.0
  %1758 = vmatpush1.msra.mxu0 0.0
  %1759 = vmatprep.subr.mxu0 0.0
  %1760 = vmatpush1.msra.mxu0 0.0
  %1761 = vmatprep.subr.mxu0 0.0
  %1762 = vmatpush1.msra.mxu0 0.0
  %1763 = vmatprep.subr.mxu0 0.0
  %1764 = vmatpush1.msra.mxu0 0.0
  %1765 = vmatprep.subr.mxu0 0.0
  %1766 = vmatpush1.msra.mxu0 0.0
  %1767 = vmatprep.subr.mxu0 0.0
  %1768 = vmatpush1.msra.mxu0 0.0
  %1769 = vmatprep.mubr.f32.mxu0 0.0
  %1770 = vmatmul.mubr.f32.gmra.mrb[0].mxu0 %v1703
  %v1771 = vpop.f32.mrb[0].mxu0
  %v1772 = vadd.f32 0.0, %v1771
  %v1773 = vpop.f32.mrb[0].mxu0
  %1774 = vdwg.mxu0
  %v1775 = vadd.f32 %v1702, %v1772
  %v1776 = vld [vmem:[#allocation3] sm:$0xff]
  %v1777 = vsel %vm234, %v1697, 0
  %1779 = vmatprep.subr.mxu0 0.0
  %1780 = vmatpush1.msra.mxu0 %v229
  %1781 = vmatprep.subr.mxu0 0.0
  %1782 = vmatpush1.msra.mxu0 %v230
  %1783 = vmatprep.subr.mxu0 0.0
  %1784 = vmatpush1.msra.mxu0 %v231
  %1785 = vmatprep.subr.mxu0 0.0
  %1786 = vmatpush1.msra.mxu0 %v232
  %1787 = vmatprep.subr.mxu0 0.0
  %1788 = vmatpush1.msra.mxu0 0.0
  %1789 = vmatprep.subr.mxu0 0.0
  %1790 = vmatpush1.msra.mxu0 0.0
  %1791 = vmatprep.subr.mxu0 0.0
  %1792 = vmatpush1.msra.mxu0 0.0
  %1793 = vmatprep.subr.mxu0 0.0
  %1794 = vmatpush1.msra.mxu0 0.0
  %1795 = vmatprep.subr.mxu0 0.0
  %1796 = vmatpush1.msra.mxu0 0.0
  %1797 = vmatprep.subr.mxu0 0.0
  %1798 = vmatpush1.msra.mxu0 0.0
  %1799 = vmatprep.subr.mxu0 0.0
  %1800 = vmatpush1.msra.mxu0 0.0
  %1801 = vmatprep.subr.mxu0 0.0
  %1802 = vmatpush1.msra.mxu0 0.0
  %1803 = vmatprep.subr.mxu0 0.0
  %1804 = vmatpush1.msra.mxu0 0.0
  %1805 = vmatprep.subr.mxu0 0.0
  %1806 = vmatpush1.msra.mxu0 0.0
  %1807 = vmatprep.subr.mxu0 0.0
  %1808 = vmatpush1.msra.mxu0 0.0
  %1809 = vmatprep.subr.mxu0 0.0
  %1810 = vmatpush1.msra.mxu0 0.0
  %1811 = vmatprep.subr.mxu0 0.0
  %1812 = vmatpush1.msra.mxu0 0.0
  %1813 = vmatprep.subr.mxu0 0.0
  %1814 = vmatpush1.msra.mxu0 0.0
  %1815 = vmatprep.subr.mxu0 0.0
  %1816 = vmatpush1.msra.mxu0 0.0
  %1817 = vmatprep.subr.mxu0 0.0
  %1818 = vmatpush1.msra.mxu0 0.0
  %1819 = vmatprep.subr.mxu0 0.0
  %1820 = vmatpush1.msra.mxu0 0.0
  %1821 = vmatprep.subr.mxu0 0.0
  %1822 = vmatpush1.msra.mxu0 0.0
  %1823 = vmatprep.subr.mxu0 0.0
  %1824 = vmatpush1.msra.mxu0 0.0
  %1825 = vmatprep.subr.mxu0 0.0
  %1826 = vmatpush1.msra.mxu0 0.0
  %1827 = vmatprep.subr.mxu0 0.0
  %1828 = vmatpush1.msra.mxu0 0.0
  %1829 = vmatprep.subr.mxu0 0.0
  %1830 = vmatpush1.msra.mxu0 0.0
  %1831 = vmatprep.subr.mxu0 0.0
  %1832 = vmatpush1.msra.mxu0 0.0
  %1833 = vmatprep.subr.mxu0 0.0
  %1834 = vmatpush1.msra.mxu0 0.0
  %1835 = vmatprep.subr.mxu0 0.0
  %1836 = vmatpush1.msra.mxu0 0.0
  %1837 = vmatprep.subr.mxu0 0.0
  %1838 = vmatpush1.msra.mxu0 0.0
  %1839 = vmatprep.subr.mxu0 0.0
  %1840 = vmatpush1.msra.mxu0 0.0
  %1841 = vmatprep.subr.mxu0 0.0
  %1842 = vmatpush1.msra.mxu0 0.0
  %1843 = vmatprep.mubr.f32.mxu0 0.0
  %1844 = vmatmul.mubr.f32.gmra.mrb[0].mxu0 %v1777
  %v1845 = vpop.f32.mrb[0].mxu0
  %v1846 = vadd.f32 0.0, %v1845
  %v1847 = vpop.f32.mrb[0].mxu0
  %1848 = vdwg.mxu0
  %v1849 = vadd.f32 %v1776, %v1846
  %v1850 = vxor.u32 %v1775, 2147483648
  %v1851 = vmul.f32 %v1850, 1.442695
  %v1852 = vpow.pop %v1851
  %v1853 = vadd.f32 %v1852, 1.0
  %v1854 = vrcp.pop %v1853
  %v1855 = vmul.f32 1.0, %v1854
  %v1856 = vtanh.pop %v1775
  %v1857 = vmul.f32 %v1855, %v1658
  %1859 = vrot.lane.b32.xlu0 %v1856, 64
  %v1860 = vpop.permute.xlu0 %1859
  %v1862 = vmul.f32 %v1855, %v1860
  %1864 = vrot.lane.b32.xlu0 %v1862, 32
  %v1865 = vpop.permute.xlu0 %1864
  %v1867 = vadd.f32 %v1857, %v1865
  %v1868 = vtanh.pop %v1867
  %1870 = vrot.lane.b32.xlu0 %v1868, 64
  %v1871 = vpop.permute.xlu0 %1870
  %v1873 = vmul.f32 %v1855, %v1871
  %v1874 = vxor.u32 %v1849, 2147483648
  %v1875 = vmul.f32 %v1874, 1.442695
  %v1876 = vpow.pop %v1875
  %v1877 = vadd.f32 %v1876, 1.0
  %v1878 = vrcp.pop %v1877
  %v1879 = vmul.f32 1.0, %v1878
  %v1880 = vtanh.pop %v1849
  %v1881 = vmul.f32 %v1879, %v1682
  %1883 = vrot.lane.b32.xlu0 %v1880, 64
  %v1884 = vpop.permute.xlu0 %1883
  %v1886 = vmul.f32 %v1879, %v1884
  %1888 = vrot.lane.b32.xlu0 %v1886, 32
  %v1889 = vpop.permute.xlu0 %1888
  %v1891 = vadd.f32 %v1881, %v1889
  %v1892 = vtanh.pop %v1891
  %1894 = vrot.lane.b32.xlu0 %v1892, 64
  %v1895 = vpop.permute.xlu0 %1894
  %v1897 = vmul.f32 %v1879, %v1895
  %1899 = vrot.lane.b32.xlu0 %v1873, 32
  %v1900 = vpop.permute.xlu0 %1899
  %s1902 = scalar_lea.vmem [#allocation6], 56
  %1903 = vst.msk [vmem:[%s1902] sm:$0xff] %vm234, %v1900
  %1905 = vrot.lane.b32.xlu0 %v1897, 32
  %v1906 = vpop.permute.xlu0 %1905
  %1908 = vst.msk [vmem:[#allocation7] sm:$0xff] %vm234, %v1906
  %v1909 = vld [vmem:[#allocation6] sm:$0xff]
  %v1910 = vld [vmem:[#allocation6 + $0x8] sm:$0xff]
  %v1911 = vld [vmem:[#allocation6 + $0x10] sm:$0xff]
  %v1912 = vld [vmem:[#allocation6 + $0x18] sm:$0xff]
  %v1913 = vld [vmem:[#allocation6 + $0x20] sm:$0xff]
  %v1914 = vld [vmem:[#allocation6 + $0x28] sm:$0xff]
  %v1915 = vld [vmem:[#allocation6 + $0x30] sm:$0xff]
  %v1916 = vld [vmem:[#allocation6 + $0x38] sm:$0xff]
  %v1917 = vld [vmem:[#allocation7] sm:$0xff]
  %v1918 = vld [vmem:[#allocation7 + $0x8] sm:$0xff]
  %v1919 = vld [vmem:[#allocation7 + $0x10] sm:$0xff]
  %v1920 = vld [vmem:[#allocation7 + $0x18] sm:$0xff]
  %v1921 = vld [vmem:[#allocation7 + $0x20] sm:$0xff]
  %v1922 = vld [vmem:[#allocation7 + $0x28] sm:$0xff]
  %v1923 = vld [vmem:[#allocation7 + $0x30] sm:$0xff]
  %v1924 = vld [vmem:[#allocation7 + $0x38] sm:$0xff]
  %v1925 = vld [vmem:[%s4] sm:$0xff]
  %v1926 = vld [vmem:[%s4 + $0x8] sm:$0xff]
  %v1927 = vld [vmem:[%s4 + $0x10] sm:$0xff]
  %v1928 = vld [vmem:[%s4 + $0x18] sm:$0xff]
  %v1929 = vld [vmem:[%s4 + $0x20] sm:$0xff]
  %v1930 = vld [vmem:[%s4 + $0x28] sm:$0xff]
  %v1931 = vld [vmem:[%s4 + $0x30] sm:$0xff]
  %v1932 = vld [vmem:[%s4 + $0x38] sm:$0xff]
  %s1933 = scalar_lea.vmem %s4, 64
  %v1934 = vld [vmem:[%s1933] sm:$0xff]
  %v1935 = vld [vmem:[%s1933 + $0x8] sm:$0xff]
  %v1936 = vld [vmem:[%s1933 + $0x10] sm:$0xff]
  %v1937 = vld [vmem:[%s1933 + $0x18] sm:$0xff]
  %v1938 = vld [vmem:[%s1933 + $0x20] sm:$0xff]
  %v1939 = vld [vmem:[%s1933 + $0x28] sm:$0xff]
  %v1940 = vld [vmem:[%s1933 + $0x30] sm:$0xff]
  %v1941 = vld [vmem:[%s1933 + $0x38] sm:$0xff]
  %v1943 = vsel %vm234, %v1917, 0
  %v1946 = vsel %vm234, %v1918, 0
  %v1949 = vsel %vm234, %v1919, 0
  %v1952 = vsel %vm234, %v1920, 0
  %v1955 = vsel %vm234, %v1921, 0
  %v1958 = vsel %vm234, %v1922, 0
  %v1961 = vsel %vm234, %v1923, 0
  %v1964 = vsel %vm234, %v1924, 0
  %1966 = vmatprep.subr.mxu0 %v1935
  %1967 = vmatpush1.msra.mxu0 %v1934
  %1968 = vmatprep.subr.mxu0 %v1937
  %1969 = vmatpush1.msra.mxu0 %v1936
  %1970 = vmatprep.subr.mxu0 %v1939
  %1971 = vmatpush1.msra.mxu0 %v1938
  %1972 = vmatprep.subr.mxu0 %v1941
  %1973 = vmatpush1.msra.mxu0 %v1940
  %1974 = vmatprep.subr.mxu0 0.0
  %1975 = vmatpush1.msra.mxu0 0.0
  %1976 = vmatprep.subr.mxu0 0.0
  %1977 = vmatpush1.msra.mxu0 0.0
  %1978 = vmatprep.subr.mxu0 0.0
  %1979 = vmatpush1.msra.mxu0 0.0
  %1980 = vmatprep.subr.mxu0 0.0
  %1981 = vmatpush1.msra.mxu0 0.0
  %1982 = vmatprep.subr.mxu0 0.0
  %1983 = vmatpush1.msra.mxu0 0.0
  %1984 = vmatprep.subr.mxu0 0.0
  %1985 = vmatpush1.msra.mxu0 0.0
  %1986 = vmatprep.subr.mxu0 0.0
  %1987 = vmatpush1.msra.mxu0 0.0
  %1988 = vmatprep.subr.mxu0 0.0
  %1989 = vmatpush1.msra.mxu0 0.0
  %1990 = vmatprep.subr.mxu0 0.0
  %1991 = vmatpush1.msra.mxu0 0.0
  %1992 = vmatprep.subr.mxu0 0.0
  %1993 = vmatpush1.msra.mxu0 0.0
  %1994 = vmatprep.subr.mxu0 0.0
  %1995 = vmatpush1.msra.mxu0 0.0
  %1996 = vmatprep.subr.mxu0 0.0
  %1997 = vmatpush1.msra.mxu0 0.0
  %1998 = vmatprep.subr.mxu0 0.0
  %1999 = vmatpush1.msra.mxu0 0.0
  %2000 = vmatprep.subr.mxu0 0.0
  %2001 = vmatpush1.msra.mxu0 0.0
  %2002 = vmatprep.subr.mxu0 0.0
  %2003 = vmatpush1.msra.mxu0 0.0
  %2004 = vmatprep.subr.mxu0 0.0
  %2005 = vmatpush1.msra.mxu0 0.0
  %2006 = vmatprep.subr.mxu0 0.0
  %2007 = vmatpush1.msra.mxu0 0.0
  %2008 = vmatprep.subr.mxu0 0.0
  %2009 = vmatpush1.msra.mxu0 0.0
  %2010 = vmatprep.subr.mxu0 0.0
  %2011 = vmatpush1.msra.mxu0 0.0
  %2012 = vmatprep.subr.mxu0 0.0
  %2013 = vmatpush1.msra.mxu0 0.0
  %2014 = vmatprep.subr.mxu0 0.0
  %2015 = vmatpush1.msra.mxu0 0.0
  %2016 = vmatprep.subr.mxu0 0.0
  %2017 = vmatpush1.msra.mxu0 0.0
  %2018 = vmatprep.subr.mxu0 0.0
  %2019 = vmatpush1.msra.mxu0 0.0
  %2020 = vmatprep.subr.mxu0 0.0
  %2021 = vmatpush1.msra.mxu0 0.0
  %2022 = vmatprep.subr.mxu0 0.0
  %2023 = vmatpush1.msra.mxu0 0.0
  %2024 = vmatprep.subr.mxu0 0.0
  %2025 = vmatpush1.msra.mxu0 0.0
  %2026 = vmatprep.subr.mxu0 0.0
  %2027 = vmatpush1.msra.mxu0 0.0
  %2028 = vmatprep.subr.mxu0 0.0
  %2029 = vmatpush1.msra.mxu0 0.0
  %2030 = vmatprep.mubr.f32.mxu0 0.0
  %2031 = vmatmul.mubr.f32.gmra.mrb[0].mxu0 %v1943
  %v2032 = vpop.f32.mrb[0].mxu0
  %v2033 = vadd.f32 0.0, %v2032
  %v2034 = vpop.f32.mrb[0].mxu0
  %v2035 = vadd.f32 0.0, %v2034
  %2036 = vmatprep.mubr.f32.mxu0 0.0
  %2037 = vmatmul.mubr.f32.gmra.mrb[0].mxu0 %v1946
  %v2038 = vpop.f32.mrb[0].mxu0
  %v2039 = vadd.f32 0.0, %v2038
  %v2040 = vpop.f32.mrb[0].mxu0
  %v2041 = vadd.f32 0.0, %v2040
  %2042 = vmatprep.mubr.f32.mxu0 0.0
  %2043 = vmatmul.mubr.f32.gmra.mrb[0].mxu0 %v1949
  %v2044 = vpop.f32.mrb[0].mxu0
  %v2045 = vadd.f32 0.0, %v2044
  %v2046 = vpop.f32.mrb[0].mxu0
  %v2047 = vadd.f32 0.0, %v2046
  %2048 = vmatprep.mubr.f32.mxu0 0.0
  %2049 = vmatmul.mubr.f32.gmra.mrb[0].mxu0 %v1952
  %v2050 = vpop.f32.mrb[0].mxu0
  %v2051 = vadd.f32 0.0, %v2050
  %v2052 = vpop.f32.mrb[0].mxu0
  %v2053 = vadd.f32 0.0, %v2052
  %2054 = vmatprep.mubr.f32.mxu0 0.0
  %2055 = vmatmul.mubr.f32.gmra.mrb[0].mxu0 %v1955
  %v2056 = vpop.f32.mrb[0].mxu0
  %v2057 = vadd.f32 0.0, %v2056
  %v2058 = vpop.f32.mrb[0].mxu0
  %v2059 = vadd.f32 0.0, %v2058
  %2060 = vmatprep.mubr.f32.mxu0 0.0
  %2061 = vmatmul.mubr.f32.gmra.mrb[0].mxu0 %v1958
  %v2062 = vpop.f32.mrb[0].mxu0
  %v2063 = vadd.f32 0.0, %v2062
  %v2064 = vpop.f32.mrb[0].mxu0
  %v2065 = vadd.f32 0.0, %v2064
  %2066 = vmatprep.mubr.f32.mxu0 0.0
  %2067 = vmatmul.mubr.f32.gmra.mrb[0].mxu0 %v1961
  %v2068 = vpop.f32.mrb[0].mxu0
  %v2069 = vadd.f32 0.0, %v2068
  %v2070 = vpop.f32.mrb[0].mxu0
  %v2071 = vadd.f32 0.0, %v2070
  %2072 = vmatprep.mubr.f32.mxu0 0.0
  %2073 = vmatmul.mubr.f32.gmra.mrb[0].mxu0 %v1964
  %v2074 = vpop.f32.mrb[0].mxu0
  %v2075 = vadd.f32 0.0, %v2074
  %v2076 = vpop.f32.mrb[0].mxu0
  %v2077 = vadd.f32 0.0, %v2076
  %2078 = vdwg.mxu0
  %v2080 = vsel %vm234, %v1909, 0
  %v2083 = vsel %vm234, %v1910, 0
  %v2086 = vsel %vm234, %v1911, 0
  %v2089 = vsel %vm234, %v1912, 0
  %v2092 = vsel %vm234, %v1913, 0
  %v2095 = vsel %vm234, %v1914, 0
  %v2098 = vsel %vm234, %v1915, 0
  %v2101 = vsel %vm234, %v1916, 0
  %2103 = vmatprep.subr.mxu0 %v1926
  %2104 = vmatpush1.msra.mxu0 %v1925
  %2105 = vmatprep.subr.mxu0 %v1928
  %2106 = vmatpush1.msra.mxu0 %v1927
  %2107 = vmatprep.subr.mxu0 %v1930
  %2108 = vmatpush1.msra.mxu0 %v1929
  %2109 = vmatprep.subr.mxu0 %v1932
  %2110 = vmatpush1.msra.mxu0 %v1931
  %2111 = vmatprep.subr.mxu0 0.0
  %2112 = vmatpush1.msra.mxu0 0.0
  %2113 = vmatprep.subr.mxu0 0.0
  %2114 = vmatpush1.msra.mxu0 0.0
  %2115 = vmatprep.subr.mxu0 0.0
  %2116 = vmatpush1.msra.mxu0 0.0
  %2117 = vmatprep.subr.mxu0 0.0
  %2118 = vmatpush1.msra.mxu0 0.0
  %2119 = vmatprep.subr.mxu0 0.0
  %2120 = vmatpush1.msra.mxu0 0.0
  %2121 = vmatprep.subr.mxu0 0.0
  %2122 = vmatpush1.msra.mxu0 0.0
  %2123 = vmatprep.subr.mxu0 0.0
  %2124 = vmatpush1.msra.mxu0 0.0
  %2125 = vmatprep.subr.mxu0 0.0
  %2126 = vmatpush1.msra.mxu0 0.0
  %2127 = vmatprep.subr.mxu0 0.0
  %2128 = vmatpush1.msra.mxu0 0.0
  %2129 = vmatprep.subr.mxu0 0.0
  %2130 = vmatpush1.msra.mxu0 0.0
  %2131 = vmatprep.subr.mxu0 0.0
  %2132 = vmatpush1.msra.mxu0 0.0
  %2133 = vmatprep.subr.mxu0 0.0
  %2134 = vmatpush1.msra.mxu0 0.0
  %2135 = vmatprep.subr.mxu0 0.0
  %2136 = vmatpush1.msra.mxu0 0.0
  %2137 = vmatprep.subr.mxu0 0.0
  %2138 = vmatpush1.msra.mxu0 0.0
  %2139 = vmatprep.subr.mxu0 0.0
  %2140 = vmatpush1.msra.mxu0 0.0
  %2141 = vmatprep.subr.mxu0 0.0
  %2142 = vmatpush1.msra.mxu0 0.0
  %2143 = vmatprep.subr.mxu0 0.0
  %2144 = vmatpush1.msra.mxu0 0.0
  %2145 = vmatprep.subr.mxu0 0.0
  %2146 = vmatpush1.msra.mxu0 0.0
  %2147 = vmatprep.subr.mxu0 0.0
  %2148 = vmatpush1.msra.mxu0 0.0
  %2149 = vmatprep.subr.mxu0 0.0
  %2150 = vmatpush1.msra.mxu0 0.0
  %2151 = vmatprep.subr.mxu0 0.0
  %2152 = vmatpush1.msra.mxu0 0.0
  %2153 = vmatprep.subr.mxu0 0.0
  %2154 = vmatpush1.msra.mxu0 0.0
  %2155 = vmatprep.subr.mxu0 0.0
  %2156 = vmatpush1.msra.mxu0 0.0
  %2157 = vmatprep.subr.mxu0 0.0
  %2158 = vmatpush1.msra.mxu0 0.0
  %2159 = vmatprep.subr.mxu0 0.0
  %2160 = vmatpush1.msra.mxu0 0.0
  %2161 = vmatprep.subr.mxu0 0.0
  %2162 = vmatpush1.msra.mxu0 0.0
  %2163 = vmatprep.subr.mxu0 0.0
  %2164 = vmatpush1.msra.mxu0 0.0
  %2165 = vmatprep.subr.mxu0 0.0
  %2166 = vmatpush1.msra.mxu0 0.0
  %2167 = vmatprep.mubr.f32.mxu0 0.0
  %2168 = vmatmul.mubr.f32.gmra.mrb[0].mxu0 %v2080
  %v2169 = vpop.f32.mrb[0].mxu0
  %v2170 = vadd.f32 %v2033, %v2169
  %v2171 = vpop.f32.mrb[0].mxu0
  %v2172 = vadd.f32 %v2035, %v2171
  %2173 = vmatprep.mubr.f32.mxu0 0.0
  %2174 = vmatmul.mubr.f32.gmra.mrb[0].mxu0 %v2083
  %v2175 = vpop.f32.mrb[0].mxu0
  %v2176 = vadd.f32 %v2039, %v2175
  %v2177 = vpop.f32.mrb[0].mxu0
  %v2178 = vadd.f32 %v2041, %v2177
  %2179 = vmatprep.mubr.f32.mxu0 0.0
  %2180 = vmatmul.mubr.f32.gmra.mrb[0].mxu0 %v2086
  %v2181 = vpop.f32.mrb[0].mxu0
  %v2182 = vadd.f32 %v2045, %v2181
  %v2183 = vpop.f32.mrb[0].mxu0
  %v2184 = vadd.f32 %v2047, %v2183
  %2185 = vmatprep.mubr.f32.mxu0 0.0
  %2186 = vmatmul.mubr.f32.gmra.mrb[0].mxu0 %v2089
  %v2187 = vpop.f32.mrb[0].mxu0
  %v2188 = vadd.f32 %v2051, %v2187
  %v2189 = vpop.f32.mrb[0].mxu0
  %v2190 = vadd.f32 %v2053, %v2189
  %2191 = vmatprep.mubr.f32.mxu0 0.0
  %2192 = vmatmul.mubr.f32.gmra.mrb[0].mxu0 %v2092
  %v2193 = vpop.f32.mrb[0].mxu0
  %v2194 = vadd.f32 %v2057, %v2193
  %v2195 = vpop.f32.mrb[0].mxu0
  %v2196 = vadd.f32 %v2059, %v2195
  %2197 = vmatprep.mubr.f32.mxu0 0.0
  %2198 = vmatmul.mubr.f32.gmra.mrb[0].mxu0 %v2095
  %v2199 = vpop.f32.mrb[0].mxu0
  %v2200 = vadd.f32 %v2063, %v2199
  %v2201 = vpop.f32.mrb[0].mxu0
  %v2202 = vadd.f32 %v2065, %v2201
  %2203 = vmatprep.mubr.f32.mxu0 0.0
  %2204 = vmatmul.mubr.f32.gmra.mrb[0].mxu0 %v2098
  %v2205 = vpop.f32.mrb[0].mxu0
  %v2206 = vadd.f32 %v2069, %v2205
  %v2207 = vpop.f32.mrb[0].mxu0
  %v2208 = vadd.f32 %v2071, %v2207
  %2209 = vmatprep.mubr.f32.mxu0 0.0
  %2210 = vmatmul.mubr.f32.gmra.mrb[0].mxu0 %v2101
  %v2211 = vpop.f32.mrb[0].mxu0
  %v2212 = vadd.f32 %v2075, %v2211
  %v2213 = vpop.f32.mrb[0].mxu0
  %v2214 = vadd.f32 %v2077, %v2213
  %2215 = vdwg.mxu0
  %v2216 = vld [vmem:[%s6] sm:$0x3]
  %v2218 = vlaneseq
  %v2219 = vshrl.u32 %v2218, 7
  %v2220 = vsub.s32 0, %v2219
  %v2221 = vrot.slane %v2216, %v2220
  %v2222 = vlaneseq
  %v2223 = vshrl.u32 %v2222, 7
  %v2224 = vsub.s32 1, %v2223
  %v2225 = vrot.slane %v2216, %v2224
  %v2228 = vadd.f32 %v2170, %v2221
  %v2229 = vadd.f32 %v2172, %v2225
  %v2230 = vadd.f32 %v2176, %v2221
  %v2231 = vadd.f32 %v2178, %v2225
  %v2232 = vadd.f32 %v2182, %v2221
  %v2233 = vadd.f32 %v2184, %v2225
  %v2234 = vadd.f32 %v2188, %v2221
  %v2235 = vadd.f32 %v2190, %v2225
  %v2236 = vadd.f32 %v2194, %v2221
  %v2237 = vadd.f32 %v2196, %v2225
  %v2238 = vadd.f32 %v2200, %v2221
  %v2239 = vadd.f32 %v2202, %v2225
  %v2240 = vadd.f32 %v2206, %v2221
  %v2241 = vadd.f32 %v2208, %v2225
  %v2242 = vadd.f32 %v2212, %v2221
  %v2243 = vadd.f32 %v2214, %v2225
  %2244 = vst [vmem:[#allocation2] sm:$0xff] %v2228
  %2245 = vst [vmem:[#allocation2 + $0x8] sm:$0xff] %v2230
  %2246 = vst [vmem:[#allocation2 + $0x10] sm:$0xff] %v2232
  %2247 = vst [vmem:[#allocation2 + $0x18] sm:$0xff] %v2234
  %2248 = vst [vmem:[#allocation2 + $0x20] sm:$0xff] %v2236
  %2249 = vst [vmem:[#allocation2 + $0x28] sm:$0xff] %v2238
  %2250 = vst [vmem:[#allocation2 + $0x30] sm:$0xff] %v2240
  %2251 = vst [vmem:[#allocation2 + $0x38] sm:$0xff] %v2242
  %2252 = vst [vmem:[#allocation3] sm:$0xff] %v2229
  %2253 = vst [vmem:[#allocation3 + $0x8] sm:$0xff] %v2231
  %2254 = vst [vmem:[#allocation3 + $0x10] sm:$0xff] %v2233
  %2255 = vst [vmem:[#allocation3 + $0x18] sm:$0xff] %v2235
  %2256 = vst [vmem:[#allocation3 + $0x20] sm:$0xff] %v2237
  %2257 = vst [vmem:[#allocation3 + $0x28] sm:$0xff] %v2239
  %2258 = vst [vmem:[#allocation3 + $0x30] sm:$0xff] %v2241
  %2259 = vst [vmem:[#allocation3 + $0x38] sm:$0xff] %v2243
  %v2260 = vld [vmem:[%s5] sm:$0xff]
  %v2261 = vld [vmem:[%s5 + $0x8] sm:$0xff]
  %v2262 = vld [vmem:[%s5 + $0x10] sm:$0xff]
  %v2263 = vld [vmem:[%s5 + $0x18] sm:$0xff]
  %s2264 = scalar_lea.vmem %s5, 32
  %v2265 = vld [vmem:[%s2264] sm:$0xff]
  %v2266 = vld [vmem:[%s2264 + $0x8] sm:$0xff]
  %v2267 = vld [vmem:[%s2264 + $0x10] sm:$0xff]
  %v2268 = vld [vmem:[%s2264 + $0x18] sm:$0xff]
  %v2269 = vld [vmem:[#allocation2] sm:$0xff]
  %2270 = vmatprep.subr.mxu0 0.0
  %2271 = vmatpush1.msra.mxu0 %v2260
  %2272 = vmatprep.subr.mxu0 0.0
  %2273 = vmatpush1.msra.mxu0 %v2261
  %2274 = vmatprep.subr.mxu0 0.0
  %2275 = vmatpush1.msra.mxu0 %v2262
  %2276 = vmatprep.subr.mxu0 0.0
  %2277 = vmatpush1.msra.mxu0 %v2263
  %2278 = vmatprep.subr.mxu0 0.0
  %2279 = vmatpush1.msra.mxu0 0.0
  %2280 = vmatprep.subr.mxu0 0.0
  %2281 = vmatpush1.msra.mxu0 0.0
  %2282 = vmatprep.subr.mxu0 0.0
  %2283 = vmatpush1.msra.mxu0 0.0
  %2284 = vmatprep.subr.mxu0 0.0
  %2285 = vmatpush1.msra.mxu0 0.0
  %2286 = vmatprep.subr.mxu0 0.0
  %2287 = vmatpush1.msra.mxu0 0.0
  %2288 = vmatprep.subr.mxu0 0.0
  %2289 = vmatpush1.msra.mxu0 0.0
  %2290 = vmatprep.subr.mxu0 0.0
  %2291 = vmatpush1.msra.mxu0 0.0
  %2292 = vmatprep.subr.mxu0 0.0
  %2293 = vmatpush1.msra.mxu0 0.0
  %2294 = vmatprep.subr.mxu0 0.0
  %2295 = vmatpush1.msra.mxu0 0.0
  %2296 = vmatprep.subr.mxu0 0.0
  %2297 = vmatpush1.msra.mxu0 0.0
  %2298 = vmatprep.subr.mxu0 0.0
  %2299 = vmatpush1.msra.mxu0 0.0
  %2300 = vmatprep.subr.mxu0 0.0
  %2301 = vmatpush1.msra.mxu0 0.0
  %2302 = vmatprep.subr.mxu0 0.0
  %2303 = vmatpush1.msra.mxu0 0.0
  %2304 = vmatprep.subr.mxu0 0.0
  %2305 = vmatpush1.msra.mxu0 0.0
  %2306 = vmatprep.subr.mxu0 0.0
  %2307 = vmatpush1.msra.mxu0 0.0
  %2308 = vmatprep.subr.mxu0 0.0
  %2309 = vmatpush1.msra.mxu0 0.0
  %2310 = vmatprep.subr.mxu0 0.0
  %2311 = vmatpush1.msra.mxu0 0.0
  %2312 = vmatprep.subr.mxu0 0.0
  %2313 = vmatpush1.msra.mxu0 0.0
  %2314 = vmatprep.subr.mxu0 0.0
  %2315 = vmatpush1.msra.mxu0 0.0
  %2316 = vmatprep.subr.mxu0 0.0
  %2317 = vmatpush1.msra.mxu0 0.0
  %2318 = vmatprep.subr.mxu0 0.0
  %2319 = vmatpush1.msra.mxu0 0.0
  %2320 = vmatprep.subr.mxu0 0.0
  %2321 = vmatpush1.msra.mxu0 0.0
  %2322 = vmatprep.subr.mxu0 0.0
  %2323 = vmatpush1.msra.mxu0 0.0
  %2324 = vmatprep.subr.mxu0 0.0
  %2325 = vmatpush1.msra.mxu0 0.0
  %2326 = vmatprep.subr.mxu0 0.0
  %2327 = vmatpush1.msra.mxu0 0.0
  %2328 = vmatprep.subr.mxu0 0.0
  %2329 = vmatpush1.msra.mxu0 0.0
  %2330 = vmatprep.subr.mxu0 0.0
  %2331 = vmatpush1.msra.mxu0 0.0
  %2332 = vmatprep.subr.mxu0 0.0
  %2333 = vmatpush1.msra.mxu0 0.0
  %2334 = vmatprep.mubr.f32.mxu0 0.0
  %2335 = vmatmul.mubr.f32.gmra.mrb[0].mxu0 %v236
  %v2336 = vpop.f32.mrb[0].mxu0
  %v2337 = vadd.f32 0.0, %v2336
  %v2338 = vpop.f32.mrb[0].mxu0
  %2339 = vdwg.mxu0
  %v2340 = vadd.f32 %v2269, %v2337
  %v2341 = vld [vmem:[%s309] sm:$0xff]
  %2342 = vmatprep.subr.mxu0 0.0
  %2343 = vmatpush1.msra.mxu0 %v2265
  %2344 = vmatprep.subr.mxu0 0.0
  %2345 = vmatpush1.msra.mxu0 %v2266
  %2346 = vmatprep.subr.mxu0 0.0
  %2347 = vmatpush1.msra.mxu0 %v2267
  %2348 = vmatprep.subr.mxu0 0.0
  %2349 = vmatpush1.msra.mxu0 %v2268
  %2350 = vmatprep.subr.mxu0 0.0
  %2351 = vmatpush1.msra.mxu0 0.0
  %2352 = vmatprep.subr.mxu0 0.0
  %2353 = vmatpush1.msra.mxu0 0.0
  %2354 = vmatprep.subr.mxu0 0.0
  %2355 = vmatpush1.msra.mxu0 0.0
  %2356 = vmatprep.subr.mxu0 0.0
  %2357 = vmatpush1.msra.mxu0 0.0
  %2358 = vmatprep.subr.mxu0 0.0
  %2359 = vmatpush1.msra.mxu0 0.0
  %2360 = vmatprep.subr.mxu0 0.0
  %2361 = vmatpush1.msra.mxu0 0.0
  %2362 = vmatprep.subr.mxu0 0.0
  %2363 = vmatpush1.msra.mxu0 0.0
  %2364 = vmatprep.subr.mxu0 0.0
  %2365 = vmatpush1.msra.mxu0 0.0
  %2366 = vmatprep.subr.mxu0 0.0
  %2367 = vmatpush1.msra.mxu0 0.0
  %2368 = vmatprep.subr.mxu0 0.0
  %2369 = vmatpush1.msra.mxu0 0.0
  %2370 = vmatprep.subr.mxu0 0.0
  %2371 = vmatpush1.msra.mxu0 0.0
  %2372 = vmatprep.subr.mxu0 0.0
  %2373 = vmatpush1.msra.mxu0 0.0
  %2374 = vmatprep.subr.mxu0 0.0
  %2375 = vmatpush1.msra.mxu0 0.0
  %2376 = vmatprep.subr.mxu0 0.0
  %2377 = vmatpush1.msra.mxu0 0.0
  %2378 = vmatprep.subr.mxu0 0.0
  %2379 = vmatpush1.msra.mxu0 0.0
  %2380 = vmatprep.subr.mxu0 0.0
  %2381 = vmatpush1.msra.mxu0 0.0
  %2382 = vmatprep.subr.mxu0 0.0
  %2383 = vmatpush1.msra.mxu0 0.0
  %2384 = vmatprep.subr.mxu0 0.0
  %2385 = vmatpush1.msra.mxu0 0.0
  %2386 = vmatprep.subr.mxu0 0.0
  %2387 = vmatpush1.msra.mxu0 0.0
  %2388 = vmatprep.subr.mxu0 0.0
  %2389 = vmatpush1.msra.mxu0 0.0
  %2390 = vmatprep.subr.mxu0 0.0
  %2391 = vmatpush1.msra.mxu0 0.0
  %2392 = vmatprep.subr.mxu0 0.0
  %2393 = vmatpush1.msra.mxu0 0.0
  %2394 = vmatprep.subr.mxu0 0.0
  %2395 = vmatpush1.msra.mxu0 0.0
  %2396 = vmatprep.subr.mxu0 0.0
  %2397 = vmatpush1.msra.mxu0 0.0
  %2398 = vmatprep.subr.mxu0 0.0
  %2399 = vmatpush1.msra.mxu0 0.0
  %2400 = vmatprep.subr.mxu0 0.0
  %2401 = vmatpush1.msra.mxu0 0.0
  %2402 = vmatprep.subr.mxu0 0.0
  %2403 = vmatpush1.msra.mxu0 0.0
  %2404 = vmatprep.subr.mxu0 0.0
  %2405 = vmatpush1.msra.mxu0 0.0
  %2406 = vmatprep.mubr.f32.mxu0 0.0
  %2407 = vmatmul.mubr.f32.gmra.mrb[0].mxu0 %v236
  %v2408 = vpop.f32.mrb[0].mxu0
  %v2409 = vadd.f32 0.0, %v2408
  %v2410 = vpop.f32.mrb[0].mxu0
  %2411 = vdwg.mxu0
  %v2412 = vadd.f32 %v2341, %v2409
  %v2413 = vxor.u32 %v2340, 2147483648
  %v2414 = vmul.f32 %v2413, 1.442695
  %v2415 = vpow.pop %v2414
  %v2416 = vadd.f32 %v2415, 1.0
  %v2417 = vrcp.pop %v2416
  %v2418 = vmul.f32 1.0, %v2417
  %v2419 = vtanh.pop %v2340
  %v2420 = vmul.f32 %v2418, 0.0
  %2422 = vrot.lane.b32.xlu0 %v2419, 64
  %v2423 = vpop.permute.xlu0 %2422
  %v2425 = vmul.f32 %v2418, %v2423
  %2427 = vrot.lane.b32.xlu0 %v2425, 32
  %v2428 = vpop.permute.xlu0 %2427
  %v2430 = vadd.f32 %v2420, %v2428
  %v2431 = vtanh.pop %v2430
  %2433 = vrot.lane.b32.xlu0 %v2431, 64
  %v2434 = vpop.permute.xlu0 %2433
  %v2436 = vmul.f32 %v2418, %v2434
  %v2437 = vxor.u32 %v2412, 2147483648
  %v2438 = vmul.f32 %v2437, 1.442695
  %v2439 = vpow.pop %v2438
  %v2440 = vadd.f32 %v2439, 1.0
  %v2441 = vrcp.pop %v2440
  %v2442 = vmul.f32 1.0, %v2441
  %v2443 = vtanh.pop %v2412
  %v2444 = vmul.f32 %v2442, 0.0
  %2446 = vrot.lane.b32.xlu0 %v2443, 64
  %v2447 = vpop.permute.xlu0 %2446
  %v2449 = vmul.f32 %v2442, %v2447
  %2451 = vrot.lane.b32.xlu0 %v2449, 32
  %v2452 = vpop.permute.xlu0 %2451
  %v2454 = vadd.f32 %v2444, %v2452
  %v2455 = vtanh.pop %v2454
  %2457 = vrot.lane.b32.xlu0 %v2455, 64
  %v2458 = vpop.permute.xlu0 %2457
  %v2460 = vmul.f32 %v2442, %v2458
  %2462 = vrot.lane.b32.xlu0 %v2436, 32
  %v2463 = vpop.permute.xlu0 %2462
  %2465 = vst.msk [vmem:[#allocation4] sm:$0xff] %vm234, %v2463
  %2467 = vrot.lane.b32.xlu0 %v2460, 32
  %v2468 = vpop.permute.xlu0 %2467
  %s2470 = scalar_lea.vmem [#allocation5], 56
  %2471 = vst.msk [vmem:[%s2470] sm:$0xff] %vm234, %v2468
  %v2472 = vld [vmem:[%s441] sm:$0xff]
  %v2473 = vsel %vm234, %v2463, 0
  %2475 = vmatprep.subr.mxu0 0.0
  %2476 = vmatpush1.msra.mxu0 %v2260
  %2477 = vmatprep.subr.mxu0 0.0
  %2478 = vmatpush1.msra.mxu0 %v2261
  %2479 = vmatprep.subr.mxu0 0.0
  %2480 = vmatpush1.msra.mxu0 %v2262
  %2481 = vmatprep.subr.mxu0 0.0
  %2482 = vmatpush1.msra.mxu0 %v2263
  %2483 = vmatprep.subr.mxu0 0.0
  %2484 = vmatpush1.msra.mxu0 0.0
  %2485 = vmatprep.subr.mxu0 0.0
  %2486 = vmatpush1.msra.mxu0 0.0
  %2487 = vmatprep.subr.mxu0 0.0
  %2488 = vmatpush1.msra.mxu0 0.0
  %2489 = vmatprep.subr.mxu0 0.0
  %2490 = vmatpush1.msra.mxu0 0.0
  %2491 = vmatprep.subr.mxu0 0.0
  %2492 = vmatpush1.msra.mxu0 0.0
  %2493 = vmatprep.subr.mxu0 0.0
  %2494 = vmatpush1.msra.mxu0 0.0
  %2495 = vmatprep.subr.mxu0 0.0
  %2496 = vmatpush1.msra.mxu0 0.0
  %2497 = vmatprep.subr.mxu0 0.0
  %2498 = vmatpush1.msra.mxu0 0.0
  %2499 = vmatprep.subr.mxu0 0.0
  %2500 = vmatpush1.msra.mxu0 0.0
  %2501 = vmatprep.subr.mxu0 0.0
  %2502 = vmatpush1.msra.mxu0 0.0
  %2503 = vmatprep.subr.mxu0 0.0
  %2504 = vmatpush1.msra.mxu0 0.0
  %2505 = vmatprep.subr.mxu0 0.0
  %2506 = vmatpush1.msra.mxu0 0.0
  %2507 = vmatprep.subr.mxu0 0.0
  %2508 = vmatpush1.msra.mxu0 0.0
  %2509 = vmatprep.subr.mxu0 0.0
  %2510 = vmatpush1.msra.mxu0 0.0
  %2511 = vmatprep.subr.mxu0 0.0
  %2512 = vmatpush1.msra.mxu0 0.0
  %2513 = vmatprep.subr.mxu0 0.0
  %2514 = vmatpush1.msra.mxu0 0.0
  %2515 = vmatprep.subr.mxu0 0.0
  %2516 = vmatpush1.msra.mxu0 0.0
  %2517 = vmatprep.subr.mxu0 0.0
  %2518 = vmatpush1.msra.mxu0 0.0
  %2519 = vmatprep.subr.mxu0 0.0
  %2520 = vmatpush1.msra.mxu0 0.0
  %2521 = vmatprep.subr.mxu0 0.0
  %2522 = vmatpush1.msra.mxu0 0.0
  %2523 = vmatprep.subr.mxu0 0.0
  %2524 = vmatpush1.msra.mxu0 0.0
  %2525 = vmatprep.subr.mxu0 0.0
  %2526 = vmatpush1.msra.mxu0 0.0
  %2527 = vmatprep.subr.mxu0 0.0
  %2528 = vmatpush1.msra.mxu0 0.0
  %2529 = vmatprep.subr.mxu0 0.0
  %2530 = vmatpush1.msra.mxu0 0.0
  %2531 = vmatprep.subr.mxu0 0.0
  %2532 = vmatpush1.msra.mxu0 0.0
  %2533 = vmatprep.subr.mxu0 0.0
  %2534 = vmatpush1.msra.mxu0 0.0
  %2535 = vmatprep.subr.mxu0 0.0
  %2536 = vmatpush1.msra.mxu0 0.0
  %2537 = vmatprep.subr.mxu0 0.0
  %2538 = vmatpush1.msra.mxu0 0.0
  %2539 = vmatprep.mubr.f32.mxu0 0.0
  %2540 = vmatmul.mubr.f32.gmra.mrb[0].mxu0 %v2473
  %v2541 = vpop.f32.mrb[0].mxu0
  %v2542 = vadd.f32 0.0, %v2541
  %v2543 = vpop.f32.mrb[0].mxu0
  %2544 = vdwg.mxu0
  %v2545 = vadd.f32 %v2472, %v2542
  %v2546 = vld [vmem:[%s516] sm:$0xff]
  %v2547 = vsel %vm234, %v2468, 0
  %2549 = vmatprep.subr.mxu0 0.0
  %2550 = vmatpush1.msra.mxu0 %v2265
  %2551 = vmatprep.subr.mxu0 0.0
  %2552 = vmatpush1.msra.mxu0 %v2266
  %2553 = vmatprep.subr.mxu0 0.0
  %2554 = vmatpush1.msra.mxu0 %v2267
  %2555 = vmatprep.subr.mxu0 0.0
  %2556 = vmatpush1.msra.mxu0 %v2268
  %2557 = vmatprep.subr.mxu0 0.0
  %2558 = vmatpush1.msra.mxu0 0.0
  %2559 = vmatprep.subr.mxu0 0.0
  %2560 = vmatpush1.msra.mxu0 0.0
  %2561 = vmatprep.subr.mxu0 0.0
  %2562 = vmatpush1.msra.mxu0 0.0
  %2563 = vmatprep.subr.mxu0 0.0
  %2564 = vmatpush1.msra.mxu0 0.0
  %2565 = vmatprep.subr.mxu0 0.0
  %2566 = vmatpush1.msra.mxu0 0.0
  %2567 = vmatprep.subr.mxu0 0.0
  %2568 = vmatpush1.msra.mxu0 0.0
  %2569 = vmatprep.subr.mxu0 0.0
  %2570 = vmatpush1.msra.mxu0 0.0
  %2571 = vmatprep.subr.mxu0 0.0
  %2572 = vmatpush1.msra.mxu0 0.0
  %2573 = vmatprep.subr.mxu0 0.0
  %2574 = vmatpush1.msra.mxu0 0.0
  %2575 = vmatprep.subr.mxu0 0.0
  %2576 = vmatpush1.msra.mxu0 0.0
  %2577 = vmatprep.subr.mxu0 0.0
  %2578 = vmatpush1.msra.mxu0 0.0
  %2579 = vmatprep.subr.mxu0 0.0
  %2580 = vmatpush1.msra.mxu0 0.0
  %2581 = vmatprep.subr.mxu0 0.0
  %2582 = vmatpush1.msra.mxu0 0.0
  %2583 = vmatprep.subr.mxu0 0.0
  %2584 = vmatpush1.msra.mxu0 0.0
  %2585 = vmatprep.subr.mxu0 0.0
  %2586 = vmatpush1.msra.mxu0 0.0
  %2587 = vmatprep.subr.mxu0 0.0
  %2588 = vmatpush1.msra.mxu0 0.0
  %2589 = vmatprep.subr.mxu0 0.0
  %2590 = vmatpush1.msra.mxu0 0.0
  %2591 = vmatprep.subr.mxu0 0.0
  %2592 = vmatpush1.msra.mxu0 0.0
  %2593 = vmatprep.subr.mxu0 0.0
  %2594 = vmatpush1.msra.mxu0 0.0
  %2595 = vmatprep.subr.mxu0 0.0
  %2596 = vmatpush1.msra.mxu0 0.0
  %2597 = vmatprep.subr.mxu0 0.0
  %2598 = vmatpush1.msra.mxu0 0.0
  %2599 = vmatprep.subr.mxu0 0.0
  %2600 = vmatpush1.msra.mxu0 0.0
  %2601 = vmatprep.subr.mxu0 0.0
  %2602 = vmatpush1.msra.mxu0 0.0
  %2603 = vmatprep.subr.mxu0 0.0
  %2604 = vmatpush1.msra.mxu0 0.0
  %2605 = vmatprep.subr.mxu0 0.0
  %2606 = vmatpush1.msra.mxu0 0.0
  %2607 = vmatprep.subr.mxu0 0.0
  %2608 = vmatpush1.msra.mxu0 0.0
  %2609 = vmatprep.subr.mxu0 0.0
  %2610 = vmatpush1.msra.mxu0 0.0
  %2611 = vmatprep.subr.mxu0 0.0
  %2612 = vmatpush1.msra.mxu0 0.0
  %2613 = vmatprep.mubr.f32.mxu0 0.0
  %2614 = vmatmul.mubr.f32.gmra.mrb[0].mxu0 %v2547
  %v2615 = vpop.f32.mrb[0].mxu0
  %v2616 = vadd.f32 0.0, %v2615
  %v2617 = vpop.f32.mrb[0].mxu0
  %2618 = vdwg.mxu0
  %v2619 = vadd.f32 %v2546, %v2616
  %v2620 = vxor.u32 %v2545, 2147483648
  %v2621 = vmul.f32 %v2620, 1.442695
  %v2622 = vpow.pop %v2621
  %v2623 = vadd.f32 %v2622, 1.0
  %v2624 = vrcp.pop %v2623
  %v2625 = vmul.f32 1.0, %v2624
  %v2626 = vtanh.pop %v2545
  %v2627 = vmul.f32 %v2625, %v2430
  %2629 = vrot.lane.b32.xlu0 %v2626, 64
  %v2630 = vpop.permute.xlu0 %2629
  %v2632 = vmul.f32 %v2625, %v2630
  %2634 = vrot.lane.b32.xlu0 %v2632, 32
  %v2635 = vpop.permute.xlu0 %2634
  %v2637 = vadd.f32 %v2627, %v2635
  %v2638 = vtanh.pop %v2637
  %2640 = vrot.lane.b32.xlu0 %v2638, 64
  %v2641 = vpop.permute.xlu0 %2640
  %v2643 = vmul.f32 %v2625, %v2641
  %v2644 = vxor.u32 %v2619, 2147483648
  %v2645 = vmul.f32 %v2644, 1.442695
  %v2646 = vpow.pop %v2645
  %v2647 = vadd.f32 %v2646, 1.0
  %v2648 = vrcp.pop %v2647
  %v2649 = vmul.f32 1.0, %v2648
  %v2650 = vtanh.pop %v2619
  %v2651 = vmul.f32 %v2649, %v2454
  %2653 = vrot.lane.b32.xlu0 %v2650, 64
  %v2654 = vpop.permute.xlu0 %2653
  %v2656 = vmul.f32 %v2649, %v2654
  %2658 = vrot.lane.b32.xlu0 %v2656, 32
  %v2659 = vpop.permute.xlu0 %2658
  %v2661 = vadd.f32 %v2651, %v2659
  %v2662 = vtanh.pop %v2661
  %2664 = vrot.lane.b32.xlu0 %v2662, 64
  %v2665 = vpop.permute.xlu0 %2664
  %v2667 = vmul.f32 %v2649, %v2665
  %2669 = vrot.lane.b32.xlu0 %v2643, 32
  %v2670 = vpop.permute.xlu0 %2669
  %s2672 = scalar_lea.vmem [#allocation4], 8
  %2673 = vst.msk [vmem:[%s2672] sm:$0xff] %vm234, %v2670
  %2675 = vrot.lane.b32.xlu0 %v2667, 32
  %v2676 = vpop.permute.xlu0 %2675
  %s2678 = scalar_lea.vmem [#allocation5], 48
  %2679 = vst.msk [vmem:[%s2678] sm:$0xff] %vm234, %v2676
  %v2680 = vld [vmem:[%s651] sm:$0xff]
  %v2681 = vsel %vm234, %v2670, 0
  %2683 = vmatprep.subr.mxu0 0.0
  %2684 = vmatpush1.msra.mxu0 %v2260
  %2685 = vmatprep.subr.mxu0 0.0
  %2686 = vmatpush1.msra.mxu0 %v2261
  %2687 = vmatprep.subr.mxu0 0.0
  %2688 = vmatpush1.msra.mxu0 %v2262
  %2689 = vmatprep.subr.mxu0 0.0
  %2690 = vmatpush1.msra.mxu0 %v2263
  %2691 = vmatprep.subr.mxu0 0.0
  %2692 = vmatpush1.msra.mxu0 0.0
  %2693 = vmatprep.subr.mxu0 0.0
  %2694 = vmatpush1.msra.mxu0 0.0
  %2695 = vmatprep.subr.mxu0 0.0
  %2696 = vmatpush1.msra.mxu0 0.0
  %2697 = vmatprep.subr.mxu0 0.0
  %2698 = vmatpush1.msra.mxu0 0.0
  %2699 = vmatprep.subr.mxu0 0.0
  %2700 = vmatpush1.msra.mxu0 0.0
  %2701 = vmatprep.subr.mxu0 0.0
  %2702 = vmatpush1.msra.mxu0 0.0
  %2703 = vmatprep.subr.mxu0 0.0
  %2704 = vmatpush1.msra.mxu0 0.0
  %2705 = vmatprep.subr.mxu0 0.0
  %2706 = vmatpush1.msra.mxu0 0.0
  %2707 = vmatprep.subr.mxu0 0.0
  %2708 = vmatpush1.msra.mxu0 0.0
  %2709 = vmatprep.subr.mxu0 0.0
  %2710 = vmatpush1.msra.mxu0 0.0
  %2711 = vmatprep.subr.mxu0 0.0
  %2712 = vmatpush1.msra.mxu0 0.0
  %2713 = vmatprep.subr.mxu0 0.0
  %2714 = vmatpush1.msra.mxu0 0.0
  %2715 = vmatprep.subr.mxu0 0.0
  %2716 = vmatpush1.msra.mxu0 0.0
  %2717 = vmatprep.subr.mxu0 0.0
  %2718 = vmatpush1.msra.mxu0 0.0
  %2719 = vmatprep.subr.mxu0 0.0
  %2720 = vmatpush1.msra.mxu0 0.0
  %2721 = vmatprep.subr.mxu0 0.0
  %2722 = vmatpush1.msra.mxu0 0.0
  %2723 = vmatprep.subr.mxu0 0.0
  %2724 = vmatpush1.msra.mxu0 0.0
  %2725 = vmatprep.subr.mxu0 0.0
  %2726 = vmatpush1.msra.mxu0 0.0
  %2727 = vmatprep.subr.mxu0 0.0
  %2728 = vmatpush1.msra.mxu0 0.0
  %2729 = vmatprep.subr.mxu0 0.0
  %2730 = vmatpush1.msra.mxu0 0.0
  %2731 = vmatprep.subr.mxu0 0.0
  %2732 = vmatpush1.msra.mxu0 0.0
  %2733 = vmatprep.subr.mxu0 0.0
  %2734 = vmatpush1.msra.mxu0 0.0
  %2735 = vmatprep.subr.mxu0 0.0
  %2736 = vmatpush1.msra.mxu0 0.0
  %2737 = vmatprep.subr.mxu0 0.0
  %2738 = vmatpush1.msra.mxu0 0.0
  %2739 = vmatprep.subr.mxu0 0.0
  %2740 = vmatpush1.msra.mxu0 0.0
  %2741 = vmatprep.subr.mxu0 0.0
  %2742 = vmatpush1.msra.mxu0 0.0
  %2743 = vmatprep.subr.mxu0 0.0
  %2744 = vmatpush1.msra.mxu0 0.0
  %2745 = vmatprep.subr.mxu0 0.0
  %2746 = vmatpush1.msra.mxu0 0.0
  %2747 = vmatprep.mubr.f32.mxu0 0.0
  %2748 = vmatmul.mubr.f32.gmra.mrb[0].mxu0 %v2681
  %v2749 = vpop.f32.mrb[0].mxu0
  %v2750 = vadd.f32 0.0, %v2749
  %v2751 = vpop.f32.mrb[0].mxu0
  %2752 = vdwg.mxu0
  %v2753 = vadd.f32 %v2680, %v2750
  %v2754 = vld [vmem:[%s726] sm:$0xff]
  %v2755 = vsel %vm234, %v2676, 0
  %2757 = vmatprep.subr.mxu0 0.0
  %2758 = vmatpush1.msra.mxu0 %v2265
  %2759 = vmatprep.subr.mxu0 0.0
  %2760 = vmatpush1.msra.mxu0 %v2266
  %2761 = vmatprep.subr.mxu0 0.0
  %2762 = vmatpush1.msra.mxu0 %v2267
  %2763 = vmatprep.subr.mxu0 0.0
  %2764 = vmatpush1.msra.mxu0 %v2268
  %2765 = vmatprep.subr.mxu0 0.0
  %2766 = vmatpush1.msra.mxu0 0.0
  %2767 = vmatprep.subr.mxu0 0.0
  %2768 = vmatpush1.msra.mxu0 0.0
  %2769 = vmatprep.subr.mxu0 0.0
  %2770 = vmatpush1.msra.mxu0 0.0
  %2771 = vmatprep.subr.mxu0 0.0
  %2772 = vmatpush1.msra.mxu0 0.0
  %2773 = vmatprep.subr.mxu0 0.0
  %2774 = vmatpush1.msra.mxu0 0.0
  %2775 = vmatprep.subr.mxu0 0.0
  %2776 = vmatpush1.msra.mxu0 0.0
  %2777 = vmatprep.subr.mxu0 0.0
  %2778 = vmatpush1.msra.mxu0 0.0
  %2779 = vmatprep.subr.mxu0 0.0
  %2780 = vmatpush1.msra.mxu0 0.0
  %2781 = vmatprep.subr.mxu0 0.0
  %2782 = vmatpush1.msra.mxu0 0.0
  %2783 = vmatprep.subr.mxu0 0.0
  %2784 = vmatpush1.msra.mxu0 0.0
  %2785 = vmatprep.subr.mxu0 0.0
  %2786 = vmatpush1.msra.mxu0 0.0
  %2787 = vmatprep.subr.mxu0 0.0
  %2788 = vmatpush1.msra.mxu0 0.0
  %2789 = vmatprep.subr.mxu0 0.0
  %2790 = vmatpush1.msra.mxu0 0.0
  %2791 = vmatprep.subr.mxu0 0.0
  %2792 = vmatpush1.msra.mxu0 0.0
  %2793 = vmatprep.subr.mxu0 0.0
  %2794 = vmatpush1.msra.mxu0 0.0
  %2795 = vmatprep.subr.mxu0 0.0
  %2796 = vmatpush1.msra.mxu0 0.0
  %2797 = vmatprep.subr.mxu0 0.0
  %2798 = vmatpush1.msra.mxu0 0.0
  %2799 = vmatprep.subr.mxu0 0.0
  %2800 = vmatpush1.msra.mxu0 0.0
  %2801 = vmatprep.subr.mxu0 0.0
  %2802 = vmatpush1.msra.mxu0 0.0
  %2803 = vmatprep.subr.mxu0 0.0
  %2804 = vmatpush1.msra.mxu0 0.0
  %2805 = vmatprep.subr.mxu0 0.0
  %2806 = vmatpush1.msra.mxu0 0.0
  %2807 = vmatprep.subr.mxu0 0.0
  %2808 = vmatpush1.msra.mxu0 0.0
  %2809 = vmatprep.subr.mxu0 0.0
  %2810 = vmatpush1.msra.mxu0 0.0
  %2811 = vmatprep.subr.mxu0 0.0
  %2812 = vmatpush1.msra.mxu0 0.0
  %2813 = vmatprep.subr.mxu0 0.0
  %2814 = vmatpush1.msra.mxu0 0.0
  %2815 = vmatprep.subr.mxu0 0.0
  %2816 = vmatpush1.msra.mxu0 0.0
  %2817 = vmatprep.subr.mxu0 0.0
  %2818 = vmatpush1.msra.mxu0 0.0
  %2819 = vmatprep.subr.mxu0 0.0
  %2820 = vmatpush1.msra.mxu0 0.0
  %2821 = vmatprep.mubr.f32.mxu0 0.0
  %2822 = vmatmul.mubr.f32.gmra.mrb[0].mxu0 %v2755
  %v2823 = vpop.f32.mrb[0].mxu0
  %v2824 = vadd.f32 0.0, %v2823
  %v2825 = vpop.f32.mrb[0].mxu0
  %2826 = vdwg.mxu0
  %v2827 = vadd.f32 %v2754, %v2824
  %v2828 = vxor.u32 %v2753, 2147483648
  %v2829 = vmul.f32 %v2828, 1.442695
  %v2830 = vpow.pop %v2829
  %v2831 = vadd.f32 %v2830, 1.0
  %v2832 = vrcp.pop %v2831
  %v2833 = vmul.f32 1.0, %v2832
  %v2834 = vtanh.pop %v2753
  %v2835 = vmul.f32 %v2833, %v2637
  %2837 = vrot.lane.b32.xlu0 %v2834, 64
  %v2838 = vpop.permute.xlu0 %2837
  %v2840 = vmul.f32 %v2833, %v2838
  %2842 = vrot.lane.b32.xlu0 %v2840, 32
  %v2843 = vpop.permute.xlu0 %2842
  %v2845 = vadd.f32 %v2835, %v2843
  %v2846 = vtanh.pop %v2845
  %2848 = vrot.lane.b32.xlu0 %v2846, 64
  %v2849 = vpop.permute.xlu0 %2848
  %v2851 = vmul.f32 %v2833, %v2849
  %v2852 = vxor.u32 %v2827, 2147483648
  %v2853 = vmul.f32 %v2852, 1.442695
  %v2854 = vpow.pop %v2853
  %v2855 = vadd.f32 %v2854, 1.0
  %v2856 = vrcp.pop %v2855
  %v2857 = vmul.f32 1.0, %v2856
  %v2858 = vtanh.pop %v2827
  %v2859 = vmul.f32 %v2857, %v2661
  %2861 = vrot.lane.b32.xlu0 %v2858, 64
  %v2862 = vpop.permute.xlu0 %2861
  %v2864 = vmul.f32 %v2857, %v2862
  %2866 = vrot.lane.b32.xlu0 %v2864, 32
  %v2867 = vpop.permute.xlu0 %2866
  %v2869 = vadd.f32 %v2859, %v2867
  %v2870 = vtanh.pop %v2869
  %2872 = vrot.lane.b32.xlu0 %v2870, 64
  %v2873 = vpop.permute.xlu0 %2872
  %v2875 = vmul.f32 %v2857, %v2873
  %2877 = vrot.lane.b32.xlu0 %v2851, 32
  %v2878 = vpop.permute.xlu0 %2877
  %s2880 = scalar_lea.vmem [#allocation4], 16
  %2881 = vst.msk [vmem:[%s2880] sm:$0xff] %vm234, %v2878
  %2883 = vrot.lane.b32.xlu0 %v2875, 32
  %v2884 = vpop.permute.xlu0 %2883
  %s2886 = scalar_lea.vmem [#allocation5], 40
  %2887 = vst.msk [vmem:[%s2886] sm:$0xff] %vm234, %v2884
  %v2888 = vld [vmem:[%s861] sm:$0xff]
  %v2889 = vsel %vm234, %v2878, 0
  %2891 = vmatprep.subr.mxu0 0.0
  %2892 = vmatpush1.msra.mxu0 %v2260
  %2893 = vmatprep.subr.mxu0 0.0
  %2894 = vmatpush1.msra.mxu0 %v2261
  %2895 = vmatprep.subr.mxu0 0.0
  %2896 = vmatpush1.msra.mxu0 %v2262
  %2897 = vmatprep.subr.mxu0 0.0
  %2898 = vmatpush1.msra.mxu0 %v2263
  %2899 = vmatprep.subr.mxu0 0.0
  %2900 = vmatpush1.msra.mxu0 0.0
  %2901 = vmatprep.subr.mxu0 0.0
  %2902 = vmatpush1.msra.mxu0 0.0
  %2903 = vmatprep.subr.mxu0 0.0
  %2904 = vmatpush1.msra.mxu0 0.0
  %2905 = vmatprep.subr.mxu0 0.0
  %2906 = vmatpush1.msra.mxu0 0.0
  %2907 = vmatprep.subr.mxu0 0.0
  %2908 = vmatpush1.msra.mxu0 0.0
  %2909 = vmatprep.subr.mxu0 0.0
  %2910 = vmatpush1.msra.mxu0 0.0
  %2911 = vmatprep.subr.mxu0 0.0
  %2912 = vmatpush1.msra.mxu0 0.0
  %2913 = vmatprep.subr.mxu0 0.0
  %2914 = vmatpush1.msra.mxu0 0.0
  %2915 = vmatprep.subr.mxu0 0.0
  %2916 = vmatpush1.msra.mxu0 0.0
  %2917 = vmatprep.subr.mxu0 0.0
  %2918 = vmatpush1.msra.mxu0 0.0
  %2919 = vmatprep.subr.mxu0 0.0
  %2920 = vmatpush1.msra.mxu0 0.0
  %2921 = vmatprep.subr.mxu0 0.0
  %2922 = vmatpush1.msra.mxu0 0.0
  %2923 = vmatprep.subr.mxu0 0.0
  %2924 = vmatpush1.msra.mxu0 0.0
  %2925 = vmatprep.subr.mxu0 0.0
  %2926 = vmatpush1.msra.mxu0 0.0
  %2927 = vmatprep.subr.mxu0 0.0
  %2928 = vmatpush1.msra.mxu0 0.0
  %2929 = vmatprep.subr.mxu0 0.0
  %2930 = vmatpush1.msra.mxu0 0.0
  %2931 = vmatprep.subr.mxu0 0.0
  %2932 = vmatpush1.msra.mxu0 0.0
  %2933 = vmatprep.subr.mxu0 0.0
  %2934 = vmatpush1.msra.mxu0 0.0
  %2935 = vmatprep.subr.mxu0 0.0
  %2936 = vmatpush1.msra.mxu0 0.0
  %2937 = vmatprep.subr.mxu0 0.0
  %2938 = vmatpush1.msra.mxu0 0.0
  %2939 = vmatprep.subr.mxu0 0.0
  %2940 = vmatpush1.msra.mxu0 0.0
  %2941 = vmatprep.subr.mxu0 0.0
  %2942 = vmatpush1.msra.mxu0 0.0
  %2943 = vmatprep.subr.mxu0 0.0
  %2944 = vmatpush1.msra.mxu0 0.0
  %2945 = vmatprep.subr.mxu0 0.0
  %2946 = vmatpush1.msra.mxu0 0.0
  %2947 = vmatprep.subr.mxu0 0.0
  %2948 = vmatpush1.msra.mxu0 0.0
  %2949 = vmatprep.subr.mxu0 0.0
  %2950 = vmatpush1.msra.mxu0 0.0
  %2951 = vmatprep.subr.mxu0 0.0
  %2952 = vmatpush1.msra.mxu0 0.0
  %2953 = vmatprep.subr.mxu0 0.0
  %2954 = vmatpush1.msra.mxu0 0.0
  %2955 = vmatprep.mubr.f32.mxu0 0.0
  %2956 = vmatmul.mubr.f32.gmra.mrb[0].mxu0 %v2889
  %v2957 = vpop.f32.mrb[0].mxu0
  %v2958 = vadd.f32 0.0, %v2957
  %v2959 = vpop.f32.mrb[0].mxu0
  %2960 = vdwg.mxu0
  %v2961 = vadd.f32 %v2888, %v2958
  %v2962 = vld [vmem:[%s936] sm:$0xff]
  %v2963 = vsel %vm234, %v2884, 0
  %2965 = vmatprep.subr.mxu0 0.0
  %2966 = vmatpush1.msra.mxu0 %v2265
  %2967 = vmatprep.subr.mxu0 0.0
  %2968 = vmatpush1.msra.mxu0 %v2266
  %2969 = vmatprep.subr.mxu0 0.0
  %2970 = vmatpush1.msra.mxu0 %v2267
  %2971 = vmatprep.subr.mxu0 0.0
  %2972 = vmatpush1.msra.mxu0 %v2268
  %2973 = vmatprep.subr.mxu0 0.0
  %2974 = vmatpush1.msra.mxu0 0.0
  %2975 = vmatprep.subr.mxu0 0.0
  %2976 = vmatpush1.msra.mxu0 0.0
  %2977 = vmatprep.subr.mxu0 0.0
  %2978 = vmatpush1.msra.mxu0 0.0
  %2979 = vmatprep.subr.mxu0 0.0
  %2980 = vmatpush1.msra.mxu0 0.0
  %2981 = vmatprep.subr.mxu0 0.0
  %2982 = vmatpush1.msra.mxu0 0.0
  %2983 = vmatprep.subr.mxu0 0.0
  %2984 = vmatpush1.msra.mxu0 0.0
  %2985 = vmatprep.subr.mxu0 0.0
  %2986 = vmatpush1.msra.mxu0 0.0
  %2987 = vmatprep.subr.mxu0 0.0
  %2988 = vmatpush1.msra.mxu0 0.0
  %2989 = vmatprep.subr.mxu0 0.0
  %2990 = vmatpush1.msra.mxu0 0.0
  %2991 = vmatprep.subr.mxu0 0.0
  %2992 = vmatpush1.msra.mxu0 0.0
  %2993 = vmatprep.subr.mxu0 0.0
  %2994 = vmatpush1.msra.mxu0 0.0
  %2995 = vmatprep.subr.mxu0 0.0
  %2996 = vmatpush1.msra.mxu0 0.0
  %2997 = vmatprep.subr.mxu0 0.0
  %2998 = vmatpush1.msra.mxu0 0.0
  %2999 = vmatprep.subr.mxu0 0.0
  %3000 = vmatpush1.msra.mxu0 0.0
  %3001 = vmatprep.subr.mxu0 0.0
  %3002 = vmatpush1.msra.mxu0 0.0
  %3003 = vmatprep.subr.mxu0 0.0
  %3004 = vmatpush1.msra.mxu0 0.0
  %3005 = vmatprep.subr.mxu0 0.0
  %3006 = vmatpush1.msra.mxu0 0.0
  %3007 = vmatprep.subr.mxu0 0.0
  %3008 = vmatpush1.msra.mxu0 0.0
  %3009 = vmatprep.subr.mxu0 0.0
  %3010 = vmatpush1.msra.mxu0 0.0
  %3011 = vmatprep.subr.mxu0 0.0
  %3012 = vmatpush1.msra.mxu0 0.0
  %3013 = vmatprep.subr.mxu0 0.0
  %3014 = vmatpush1.msra.mxu0 0.0
  %3015 = vmatprep.subr.mxu0 0.0
  %3016 = vmatpush1.msra.mxu0 0.0
  %3017 = vmatprep.subr.mxu0 0.0
  %3018 = vmatpush1.msra.mxu0 0.0
  %3019 = vmatprep.subr.mxu0 0.0
  %3020 = vmatpush1.msra.mxu0 0.0
  %3021 = vmatprep.subr.mxu0 0.0
  %3022 = vmatpush1.msra.mxu0 0.0
  %3023 = vmatprep.subr.mxu0 0.0
  %3024 = vmatpush1.msra.mxu0 0.0
  %3025 = vmatprep.subr.mxu0 0.0
  %3026 = vmatpush1.msra.mxu0 0.0
  %3027 = vmatprep.subr.mxu0 0.0
  %3028 = vmatpush1.msra.mxu0 0.0
  %3029 = vmatprep.mubr.f32.mxu0 0.0
  %3030 = vmatmul.mubr.f32.gmra.mrb[0].mxu0 %v2963
  %v3031 = vpop.f32.mrb[0].mxu0
  %v3032 = vadd.f32 0.0, %v3031
  %v3033 = vpop.f32.mrb[0].mxu0
  %3034 = vdwg.mxu0
  %v3035 = vadd.f32 %v2962, %v3032
  %v3036 = vxor.u32 %v2961, 2147483648
  %v3037 = vmul.f32 %v3036, 1.442695
  %v3038 = vpow.pop %v3037
  %v3039 = vadd.f32 %v3038, 1.0
  %v3040 = vrcp.pop %v3039
  %v3041 = vmul.f32 1.0, %v3040
  %v3042 = vtanh.pop %v2961
  %v3043 = vmul.f32 %v3041, %v2845
  %3045 = vrot.lane.b32.xlu0 %v3042, 64
  %v3046 = vpop.permute.xlu0 %3045
  %v3048 = vmul.f32 %v3041, %v3046
  %3050 = vrot.lane.b32.xlu0 %v3048, 32
  %v3051 = vpop.permute.xlu0 %3050
  %v3053 = vadd.f32 %v3043, %v3051
  %v3054 = vtanh.pop %v3053
  %3056 = vrot.lane.b32.xlu0 %v3054, 64
  %v3057 = vpop.permute.xlu0 %3056
  %v3059 = vmul.f32 %v3041, %v3057
  %v3060 = vxor.u32 %v3035, 2147483648
  %v3061 = vmul.f32 %v3060, 1.442695
  %v3062 = vpow.pop %v3061
  %v3063 = vadd.f32 %v3062, 1.0
  %v3064 = vrcp.pop %v3063
  %v3065 = vmul.f32 1.0, %v3064
  %v3066 = vtanh.pop %v3035
  %v3067 = vmul.f32 %v3065, %v2869
  %3069 = vrot.lane.b32.xlu0 %v3066, 64
  %v3070 = vpop.permute.xlu0 %3069
  %v3072 = vmul.f32 %v3065, %v3070
  %3074 = vrot.lane.b32.xlu0 %v3072, 32
  %v3075 = vpop.permute.xlu0 %3074
  %v3077 = vadd.f32 %v3067, %v3075
  %v3078 = vtanh.pop %v3077
  %3080 = vrot.lane.b32.xlu0 %v3078, 64
  %v3081 = vpop.permute.xlu0 %3080
  %v3083 = vmul.f32 %v3065, %v3081
  %3085 = vrot.lane.b32.xlu0 %v3059, 32
  %v3086 = vpop.permute.xlu0 %3085
  %s3088 = scalar_lea.vmem [#allocation4], 24
  %3089 = vst.msk [vmem:[%s3088] sm:$0xff] %vm234, %v3086
  %3091 = vrot.lane.b32.xlu0 %v3083, 32
  %v3092 = vpop.permute.xlu0 %3091
  %s3094 = scalar_lea.vmem [#allocation5], 32
  %3095 = vst.msk [vmem:[%s3094] sm:$0xff] %vm234, %v3092
  %v3096 = vld [vmem:[%s1071] sm:$0xff]
  %v3097 = vsel %vm234, %v3086, 0
  %3099 = vmatprep.subr.mxu0 0.0
  %3100 = vmatpush1.msra.mxu0 %v2260
  %3101 = vmatprep.subr.mxu0 0.0
  %3102 = vmatpush1.msra.mxu0 %v2261
  %3103 = vmatprep.subr.mxu0 0.0
  %3104 = vmatpush1.msra.mxu0 %v2262
  %3105 = vmatprep.subr.mxu0 0.0
  %3106 = vmatpush1.msra.mxu0 %v2263
  %3107 = vmatprep.subr.mxu0 0.0
  %3108 = vmatpush1.msra.mxu0 0.0
  %3109 = vmatprep.subr.mxu0 0.0
  %3110 = vmatpush1.msra.mxu0 0.0
  %3111 = vmatprep.subr.mxu0 0.0
  %3112 = vmatpush1.msra.mxu0 0.0
  %3113 = vmatprep.subr.mxu0 0.0
  %3114 = vmatpush1.msra.mxu0 0.0
  %3115 = vmatprep.subr.mxu0 0.0
  %3116 = vmatpush1.msra.mxu0 0.0
  %3117 = vmatprep.subr.mxu0 0.0
  %3118 = vmatpush1.msra.mxu0 0.0
  %3119 = vmatprep.subr.mxu0 0.0
  %3120 = vmatpush1.msra.mxu0 0.0
  %3121 = vmatprep.subr.mxu0 0.0
  %3122 = vmatpush1.msra.mxu0 0.0
  %3123 = vmatprep.subr.mxu0 0.0
  %3124 = vmatpush1.msra.mxu0 0.0
  %3125 = vmatprep.subr.mxu0 0.0
  %3126 = vmatpush1.msra.mxu0 0.0
  %3127 = vmatprep.subr.mxu0 0.0
  %3128 = vmatpush1.msra.mxu0 0.0
  %3129 = vmatprep.subr.mxu0 0.0
  %3130 = vmatpush1.msra.mxu0 0.0
  %3131 = vmatprep.subr.mxu0 0.0
  %3132 = vmatpush1.msra.mxu0 0.0
  %3133 = vmatprep.subr.mxu0 0.0
  %3134 = vmatpush1.msra.mxu0 0.0
  %3135 = vmatprep.subr.mxu0 0.0
  %3136 = vmatpush1.msra.mxu0 0.0
  %3137 = vmatprep.subr.mxu0 0.0
  %3138 = vmatpush1.msra.mxu0 0.0
  %3139 = vmatprep.subr.mxu0 0.0
  %3140 = vmatpush1.msra.mxu0 0.0
  %3141 = vmatprep.subr.mxu0 0.0
  %3142 = vmatpush1.msra.mxu0 0.0
  %3143 = vmatprep.subr.mxu0 0.0
  %3144 = vmatpush1.msra.mxu0 0.0
  %3145 = vmatprep.subr.mxu0 0.0
  %3146 = vmatpush1.msra.mxu0 0.0
  %3147 = vmatprep.subr.mxu0 0.0
  %3148 = vmatpush1.msra.mxu0 0.0
  %3149 = vmatprep.subr.mxu0 0.0
  %3150 = vmatpush1.msra.mxu0 0.0
  %3151 = vmatprep.subr.mxu0 0.0
  %3152 = vmatpush1.msra.mxu0 0.0
  %3153 = vmatprep.subr.mxu0 0.0
  %3154 = vmatpush1.msra.mxu0 0.0
  %3155 = vmatprep.subr.mxu0 0.0
  %3156 = vmatpush1.msra.mxu0 0.0
  %3157 = vmatprep.subr.mxu0 0.0
  %3158 = vmatpush1.msra.mxu0 0.0
  %3159 = vmatprep.subr.mxu0 0.0
  %3160 = vmatpush1.msra.mxu0 0.0
  %3161 = vmatprep.subr.mxu0 0.0
  %3162 = vmatpush1.msra.mxu0 0.0
  %3163 = vmatprep.mubr.f32.mxu0 0.0
  %3164 = vmatmul.mubr.f32.gmra.mrb[0].mxu0 %v3097
  %v3165 = vpop.f32.mrb[0].mxu0
  %v3166 = vadd.f32 0.0, %v3165
  %v3167 = vpop.f32.mrb[0].mxu0
  %3168 = vdwg.mxu0
  %v3169 = vadd.f32 %v3096, %v3166
  %v3170 = vld [vmem:[%s1146] sm:$0xff]
  %v3171 = vsel %vm234, %v3092, 0
  %3173 = vmatprep.subr.mxu0 0.0
  %3174 = vmatpush1.msra.mxu0 %v2265
  %3175 = vmatprep.subr.mxu0 0.0
  %3176 = vmatpush1.msra.mxu0 %v2266
  %3177 = vmatprep.subr.mxu0 0.0
  %3178 = vmatpush1.msra.mxu0 %v2267
  %3179 = vmatprep.subr.mxu0 0.0
  %3180 = vmatpush1.msra.mxu0 %v2268
  %3181 = vmatprep.subr.mxu0 0.0
  %3182 = vmatpush1.msra.mxu0 0.0
  %3183 = vmatprep.subr.mxu0 0.0
  %3184 = vmatpush1.msra.mxu0 0.0
  %3185 = vmatprep.subr.mxu0 0.0
  %3186 = vmatpush1.msra.mxu0 0.0
  %3187 = vmatprep.subr.mxu0 0.0
  %3188 = vmatpush1.msra.mxu0 0.0
  %3189 = vmatprep.subr.mxu0 0.0
  %3190 = vmatpush1.msra.mxu0 0.0
  %3191 = vmatprep.subr.mxu0 0.0
  %3192 = vmatpush1.msra.mxu0 0.0
  %3193 = vmatprep.subr.mxu0 0.0
  %3194 = vmatpush1.msra.mxu0 0.0
  %3195 = vmatprep.subr.mxu0 0.0
  %3196 = vmatpush1.msra.mxu0 0.0
  %3197 = vmatprep.subr.mxu0 0.0
  %3198 = vmatpush1.msra.mxu0 0.0
  %3199 = vmatprep.subr.mxu0 0.0
  %3200 = vmatpush1.msra.mxu0 0.0
  %3201 = vmatprep.subr.mxu0 0.0
  %3202 = vmatpush1.msra.mxu0 0.0
  %3203 = vmatprep.subr.mxu0 0.0
  %3204 = vmatpush1.msra.mxu0 0.0
  %3205 = vmatprep.subr.mxu0 0.0
  %3206 = vmatpush1.msra.mxu0 0.0
  %3207 = vmatprep.subr.mxu0 0.0
  %3208 = vmatpush1.msra.mxu0 0.0
  %3209 = vmatprep.subr.mxu0 0.0
  %3210 = vmatpush1.msra.mxu0 0.0
  %3211 = vmatprep.subr.mxu0 0.0
  %3212 = vmatpush1.msra.mxu0 0.0
  %3213 = vmatprep.subr.mxu0 0.0
  %3214 = vmatpush1.msra.mxu0 0.0
  %3215 = vmatprep.subr.mxu0 0.0
  %3216 = vmatpush1.msra.mxu0 0.0
  %3217 = vmatprep.subr.mxu0 0.0
  %3218 = vmatpush1.msra.mxu0 0.0
  %3219 = vmatprep.subr.mxu0 0.0
  %3220 = vmatpush1.msra.mxu0 0.0
  %3221 = vmatprep.subr.mxu0 0.0
  %3222 = vmatpush1.msra.mxu0 0.0
  %3223 = vmatprep.subr.mxu0 0.0
  %3224 = vmatpush1.msra.mxu0 0.0
  %3225 = vmatprep.subr.mxu0 0.0
  %3226 = vmatpush1.msra.mxu0 0.0
  %3227 = vmatprep.subr.mxu0 0.0
  %3228 = vmatpush1.msra.mxu0 0.0
  %3229 = vmatprep.subr.mxu0 0.0
  %3230 = vmatpush1.msra.mxu0 0.0
  %3231 = vmatprep.subr.mxu0 0.0
  %3232 = vmatpush1.msra.mxu0 0.0
  %3233 = vmatprep.subr.mxu0 0.0
  %3234 = vmatpush1.msra.mxu0 0.0
  %3235 = vmatprep.subr.mxu0 0.0
  %3236 = vmatpush1.msra.mxu0 0.0
  %3237 = vmatprep.mubr.f32.mxu0 0.0
  %3238 = vmatmul.mubr.f32.gmra.mrb[0].mxu0 %v3171
  %v3239 = vpop.f32.mrb[0].mxu0
  %v3240 = vadd.f32 0.0, %v3239
  %v3241 = vpop.f32.mrb[0].mxu0
  %3242 = vdwg.mxu0
  %v3243 = vadd.f32 %v3170, %v3240
  %v3244 = vxor.u32 %v3169, 2147483648
  %v3245 = vmul.f32 %v3244, 1.442695
  %v3246 = vpow.pop %v3245
  %v3247 = vadd.f32 %v3246, 1.0
  %v3248 = vrcp.pop %v3247
  %v3249 = vmul.f32 1.0, %v3248
  %v3250 = vtanh.pop %v3169
  %v3251 = vmul.f32 %v3249, %v3053
  %3253 = vrot.lane.b32.xlu0 %v3250, 64
  %v3254 = vpop.permute.xlu0 %3253
  %v3256 = vmul.f32 %v3249, %v3254
  %3258 = vrot.lane.b32.xlu0 %v3256, 32
  %v3259 = vpop.permute.xlu0 %3258
  %v3261 = vadd.f32 %v3251, %v3259
  %v3262 = vtanh.pop %v3261
  %3264 = vrot.lane.b32.xlu0 %v3262, 64
  %v3265 = vpop.permute.xlu0 %3264
  %v3267 = vmul.f32 %v3249, %v3265
  %v3268 = vxor.u32 %v3243, 2147483648
  %v3269 = vmul.f32 %v3268, 1.442695
  %v3270 = vpow.pop %v3269
  %v3271 = vadd.f32 %v3270, 1.0
  %v3272 = vrcp.pop %v3271
  %v3273 = vmul.f32 1.0, %v3272
  %v3274 = vtanh.pop %v3243
  %v3275 = vmul.f32 %v3273, %v3077
  %3277 = vrot.lane.b32.xlu0 %v3274, 64
  %v3278 = vpop.permute.xlu0 %3277
  %v3280 = vmul.f32 %v3273, %v3278
  %3282 = vrot.lane.b32.xlu0 %v3280, 32
  %v3283 = vpop.permute.xlu0 %3282
  %v3285 = vadd.f32 %v3275, %v3283
  %v3286 = vtanh.pop %v3285
  %3288 = vrot.lane.b32.xlu0 %v3286, 64
  %v3289 = vpop.permute.xlu0 %3288
  %v3291 = vmul.f32 %v3273, %v3289
  %3293 = vrot.lane.b32.xlu0 %v3267, 32
  %v3294 = vpop.permute.xlu0 %3293
  %s3296 = scalar_lea.vmem [#allocation4], 32
  %3297 = vst.msk [vmem:[%s3296] sm:$0xff] %vm234, %v3294
  %3299 = vrot.lane.b32.xlu0 %v3291, 32
  %v3300 = vpop.permute.xlu0 %3299
  %s3302 = scalar_lea.vmem [#allocation5], 24
  %3303 = vst.msk [vmem:[%s3302] sm:$0xff] %vm234, %v3300
  %v3304 = vld [vmem:[%s1281] sm:$0xff]
  %v3305 = vsel %vm234, %v3294, 0
  %3307 = vmatprep.subr.mxu0 0.0
  %3308 = vmatpush1.msra.mxu0 %v2260
  %3309 = vmatprep.subr.mxu0 0.0
  %3310 = vmatpush1.msra.mxu0 %v2261
  %3311 = vmatprep.subr.mxu0 0.0
  %3312 = vmatpush1.msra.mxu0 %v2262
  %3313 = vmatprep.subr.mxu0 0.0
  %3314 = vmatpush1.msra.mxu0 %v2263
  %3315 = vmatprep.subr.mxu0 0.0
  %3316 = vmatpush1.msra.mxu0 0.0
  %3317 = vmatprep.subr.mxu0 0.0
  %3318 = vmatpush1.msra.mxu0 0.0
  %3319 = vmatprep.subr.mxu0 0.0
  %3320 = vmatpush1.msra.mxu0 0.0
  %3321 = vmatprep.subr.mxu0 0.0
  %3322 = vmatpush1.msra.mxu0 0.0
  %3323 = vmatprep.subr.mxu0 0.0
  %3324 = vmatpush1.msra.mxu0 0.0
  %3325 = vmatprep.subr.mxu0 0.0
  %3326 = vmatpush1.msra.mxu0 0.0
  %3327 = vmatprep.subr.mxu0 0.0
  %3328 = vmatpush1.msra.mxu0 0.0
  %3329 = vmatprep.subr.mxu0 0.0
  %3330 = vmatpush1.msra.mxu0 0.0
  %3331 = vmatprep.subr.mxu0 0.0
  %3332 = vmatpush1.msra.mxu0 0.0
  %3333 = vmatprep.subr.mxu0 0.0
  %3334 = vmatpush1.msra.mxu0 0.0
  %3335 = vmatprep.subr.mxu0 0.0
  %3336 = vmatpush1.msra.mxu0 0.0
  %3337 = vmatprep.subr.mxu0 0.0
  %3338 = vmatpush1.msra.mxu0 0.0
  %3339 = vmatprep.subr.mxu0 0.0
  %3340 = vmatpush1.msra.mxu0 0.0
  %3341 = vmatprep.subr.mxu0 0.0
  %3342 = vmatpush1.msra.mxu0 0.0
  %3343 = vmatprep.subr.mxu0 0.0
  %3344 = vmatpush1.msra.mxu0 0.0
  %3345 = vmatprep.subr.mxu0 0.0
  %3346 = vmatpush1.msra.mxu0 0.0
  %3347 = vmatprep.subr.mxu0 0.0
  %3348 = vmatpush1.msra.mxu0 0.0
  %3349 = vmatprep.subr.mxu0 0.0
  %3350 = vmatpush1.msra.mxu0 0.0
  %3351 = vmatprep.subr.mxu0 0.0
  %3352 = vmatpush1.msra.mxu0 0.0
  %3353 = vmatprep.subr.mxu0 0.0
  %3354 = vmatpush1.msra.mxu0 0.0
  %3355 = vmatprep.subr.mxu0 0.0
  %3356 = vmatpush1.msra.mxu0 0.0
  %3357 = vmatprep.subr.mxu0 0.0
  %3358 = vmatpush1.msra.mxu0 0.0
  %3359 = vmatprep.subr.mxu0 0.0
  %3360 = vmatpush1.msra.mxu0 0.0
  %3361 = vmatprep.subr.mxu0 0.0
  %3362 = vmatpush1.msra.mxu0 0.0
  %3363 = vmatprep.subr.mxu0 0.0
  %3364 = vmatpush1.msra.mxu0 0.0
  %3365 = vmatprep.subr.mxu0 0.0
  %3366 = vmatpush1.msra.mxu0 0.0
  %3367 = vmatprep.subr.mxu0 0.0
  %3368 = vmatpush1.msra.mxu0 0.0
  %3369 = vmatprep.subr.mxu0 0.0
  %3370 = vmatpush1.msra.mxu0 0.0
  %3371 = vmatprep.mubr.f32.mxu0 0.0
  %3372 = vmatmul.mubr.f32.gmra.mrb[0].mxu0 %v3305
  %v3373 = vpop.f32.mrb[0].mxu0
  %v3374 = vadd.f32 0.0, %v3373
  %v3375 = vpop.f32.mrb[0].mxu0
  %3376 = vdwg.mxu0
  %v3377 = vadd.f32 %v3304, %v3374
  %v3378 = vld [vmem:[%s1356] sm:$0xff]
  %v3379 = vsel %vm234, %v3300, 0
  %3381 = vmatprep.subr.mxu0 0.0
  %3382 = vmatpush1.msra.mxu0 %v2265
  %3383 = vmatprep.subr.mxu0 0.0
  %3384 = vmatpush1.msra.mxu0 %v2266
  %3385 = vmatprep.subr.mxu0 0.0
  %3386 = vmatpush1.msra.mxu0 %v2267
  %3387 = vmatprep.subr.mxu0 0.0
  %3388 = vmatpush1.msra.mxu0 %v2268
  %3389 = vmatprep.subr.mxu0 0.0
  %3390 = vmatpush1.msra.mxu0 0.0
  %3391 = vmatprep.subr.mxu0 0.0
  %3392 = vmatpush1.msra.mxu0 0.0
  %3393 = vmatprep.subr.mxu0 0.0
  %3394 = vmatpush1.msra.mxu0 0.0
  %3395 = vmatprep.subr.mxu0 0.0
  %3396 = vmatpush1.msra.mxu0 0.0
  %3397 = vmatprep.subr.mxu0 0.0
  %3398 = vmatpush1.msra.mxu0 0.0
  %3399 = vmatprep.subr.mxu0 0.0
  %3400 = vmatpush1.msra.mxu0 0.0
  %3401 = vmatprep.subr.mxu0 0.0
  %3402 = vmatpush1.msra.mxu0 0.0
  %3403 = vmatprep.subr.mxu0 0.0
  %3404 = vmatpush1.msra.mxu0 0.0
  %3405 = vmatprep.subr.mxu0 0.0
  %3406 = vmatpush1.msra.mxu0 0.0
  %3407 = vmatprep.subr.mxu0 0.0
  %3408 = vmatpush1.msra.mxu0 0.0
  %3409 = vmatprep.subr.mxu0 0.0
  %3410 = vmatpush1.msra.mxu0 0.0
  %3411 = vmatprep.subr.mxu0 0.0
  %3412 = vmatpush1.msra.mxu0 0.0
  %3413 = vmatprep.subr.mxu0 0.0
  %3414 = vmatpush1.msra.mxu0 0.0
  %3415 = vmatprep.subr.mxu0 0.0
  %3416 = vmatpush1.msra.mxu0 0.0
  %3417 = vmatprep.subr.mxu0 0.0
  %3418 = vmatpush1.msra.mxu0 0.0
  %3419 = vmatprep.subr.mxu0 0.0
  %3420 = vmatpush1.msra.mxu0 0.0
  %3421 = vmatprep.subr.mxu0 0.0
  %3422 = vmatpush1.msra.mxu0 0.0
  %3423 = vmatprep.subr.mxu0 0.0
  %3424 = vmatpush1.msra.mxu0 0.0
  %3425 = vmatprep.subr.mxu0 0.0
  %3426 = vmatpush1.msra.mxu0 0.0
  %3427 = vmatprep.subr.mxu0 0.0
  %3428 = vmatpush1.msra.mxu0 0.0
  %3429 = vmatprep.subr.mxu0 0.0
  %3430 = vmatpush1.msra.mxu0 0.0
  %3431 = vmatprep.subr.mxu0 0.0
  %3432 = vmatpush1.msra.mxu0 0.0
  %3433 = vmatprep.subr.mxu0 0.0
  %3434 = vmatpush1.msra.mxu0 0.0
  %3435 = vmatprep.subr.mxu0 0.0
  %3436 = vmatpush1.msra.mxu0 0.0
  %3437 = vmatprep.subr.mxu0 0.0
  %3438 = vmatpush1.msra.mxu0 0.0
  %3439 = vmatprep.subr.mxu0 0.0
  %3440 = vmatpush1.msra.mxu0 0.0
  %3441 = vmatprep.subr.mxu0 0.0
  %3442 = vmatpush1.msra.mxu0 0.0
  %3443 = vmatprep.subr.mxu0 0.0
  %3444 = vmatpush1.msra.mxu0 0.0
  %3445 = vmatprep.mubr.f32.mxu0 0.0
  %3446 = vmatmul.mubr.f32.gmra.mrb[0].mxu0 %v3379
  %v3447 = vpop.f32.mrb[0].mxu0
  %v3448 = vadd.f32 0.0, %v3447
  %v3449 = vpop.f32.mrb[0].mxu0
  %3450 = vdwg.mxu0
  %v3451 = vadd.f32 %v3378, %v3448
  %v3452 = vxor.u32 %v3377, 2147483648
  %v3453 = vmul.f32 %v3452, 1.442695
  %v3454 = vpow.pop %v3453
  %v3455 = vadd.f32 %v3454, 1.0
  %v3456 = vrcp.pop %v3455
  %v3457 = vmul.f32 1.0, %v3456
  %v3458 = vtanh.pop %v3377
  %v3459 = vmul.f32 %v3457, %v3261
  %3461 = vrot.lane.b32.xlu0 %v3458, 64
  %v3462 = vpop.permute.xlu0 %3461
  %v3464 = vmul.f32 %v3457, %v3462
  %3466 = vrot.lane.b32.xlu0 %v3464, 32
  %v3467 = vpop.permute.xlu0 %3466
  %v3469 = vadd.f32 %v3459, %v3467
  %v3470 = vtanh.pop %v3469
  %3472 = vrot.lane.b32.xlu0 %v3470, 64
  %v3473 = vpop.permute.xlu0 %3472
  %v3475 = vmul.f32 %v3457, %v3473
  %v3476 = vxor.u32 %v3451, 2147483648
  %v3477 = vmul.f32 %v3476, 1.442695
  %v3478 = vpow.pop %v3477
  %v3479 = vadd.f32 %v3478, 1.0
  %v3480 = vrcp.pop %v3479
  %v3481 = vmul.f32 1.0, %v3480
  %v3482 = vtanh.pop %v3451
  %v3483 = vmul.f32 %v3481, %v3285
  %3485 = vrot.lane.b32.xlu0 %v3482, 64
  %v3486 = vpop.permute.xlu0 %3485
  %v3488 = vmul.f32 %v3481, %v3486
  %3490 = vrot.lane.b32.xlu0 %v3488, 32
  %v3491 = vpop.permute.xlu0 %3490
  %v3493 = vadd.f32 %v3483, %v3491
  %v3494 = vtanh.pop %v3493
  %3496 = vrot.lane.b32.xlu0 %v3494, 64
  %v3497 = vpop.permute.xlu0 %3496
  %v3499 = vmul.f32 %v3481, %v3497
  %3501 = vrot.lane.b32.xlu0 %v3475, 32
  %v3502 = vpop.permute.xlu0 %3501
  %s3504 = scalar_lea.vmem [#allocation4], 40
  %3505 = vst.msk [vmem:[%s3504] sm:$0xff] %vm234, %v3502
  %3507 = vrot.lane.b32.xlu0 %v3499, 32
  %v3508 = vpop.permute.xlu0 %3507
  %s3510 = scalar_lea.vmem [#allocation5], 16
  %3511 = vst.msk [vmem:[%s3510] sm:$0xff] %vm234, %v3508
  %v3512 = vld [vmem:[%s1491] sm:$0xff]
  %v3513 = vsel %vm234, %v3502, 0
  %3515 = vmatprep.subr.mxu0 0.0
  %3516 = vmatpush1.msra.mxu0 %v2260
  %3517 = vmatprep.subr.mxu0 0.0
  %3518 = vmatpush1.msra.mxu0 %v2261
  %3519 = vmatprep.subr.mxu0 0.0
  %3520 = vmatpush1.msra.mxu0 %v2262
  %3521 = vmatprep.subr.mxu0 0.0
  %3522 = vmatpush1.msra.mxu0 %v2263
  %3523 = vmatprep.subr.mxu0 0.0
  %3524 = vmatpush1.msra.mxu0 0.0
  %3525 = vmatprep.subr.mxu0 0.0
  %3526 = vmatpush1.msra.mxu0 0.0
  %3527 = vmatprep.subr.mxu0 0.0
  %3528 = vmatpush1.msra.mxu0 0.0
  %3529 = vmatprep.subr.mxu0 0.0
  %3530 = vmatpush1.msra.mxu0 0.0
  %3531 = vmatprep.subr.mxu0 0.0
  %3532 = vmatpush1.msra.mxu0 0.0
  %3533 = vmatprep.subr.mxu0 0.0
  %3534 = vmatpush1.msra.mxu0 0.0
  %3535 = vmatprep.subr.mxu0 0.0
  %3536 = vmatpush1.msra.mxu0 0.0
  %3537 = vmatprep.subr.mxu0 0.0
  %3538 = vmatpush1.msra.mxu0 0.0
  %3539 = vmatprep.subr.mxu0 0.0
  %3540 = vmatpush1.msra.mxu0 0.0
  %3541 = vmatprep.subr.mxu0 0.0
  %3542 = vmatpush1.msra.mxu0 0.0
  %3543 = vmatprep.subr.mxu0 0.0
  %3544 = vmatpush1.msra.mxu0 0.0
  %3545 = vmatprep.subr.mxu0 0.0
  %3546 = vmatpush1.msra.mxu0 0.0
  %3547 = vmatprep.subr.mxu0 0.0
  %3548 = vmatpush1.msra.mxu0 0.0
  %3549 = vmatprep.subr.mxu0 0.0
  %3550 = vmatpush1.msra.mxu0 0.0
  %3551 = vmatprep.subr.mxu0 0.0
  %3552 = vmatpush1.msra.mxu0 0.0
  %3553 = vmatprep.subr.mxu0 0.0
  %3554 = vmatpush1.msra.mxu0 0.0
  %3555 = vmatprep.subr.mxu0 0.0
  %3556 = vmatpush1.msra.mxu0 0.0
  %3557 = vmatprep.subr.mxu0 0.0
  %3558 = vmatpush1.msra.mxu0 0.0
  %3559 = vmatprep.subr.mxu0 0.0
  %3560 = vmatpush1.msra.mxu0 0.0
  %3561 = vmatprep.subr.mxu0 0.0
  %3562 = vmatpush1.msra.mxu0 0.0
  %3563 = vmatprep.subr.mxu0 0.0
  %3564 = vmatpush1.msra.mxu0 0.0
  %3565 = vmatprep.subr.mxu0 0.0
  %3566 = vmatpush1.msra.mxu0 0.0
  %3567 = vmatprep.subr.mxu0 0.0
  %3568 = vmatpush1.msra.mxu0 0.0
  %3569 = vmatprep.subr.mxu0 0.0
  %3570 = vmatpush1.msra.mxu0 0.0
  %3571 = vmatprep.subr.mxu0 0.0
  %3572 = vmatpush1.msra.mxu0 0.0
  %3573 = vmatprep.subr.mxu0 0.0
  %3574 = vmatpush1.msra.mxu0 0.0
  %3575 = vmatprep.subr.mxu0 0.0
  %3576 = vmatpush1.msra.mxu0 0.0
  %3577 = vmatprep.subr.mxu0 0.0
  %3578 = vmatpush1.msra.mxu0 0.0
  %3579 = vmatprep.mubr.f32.mxu0 0.0
  %3580 = vmatmul.mubr.f32.gmra.mrb[0].mxu0 %v3513
  %v3581 = vpop.f32.mrb[0].mxu0
  %v3582 = vadd.f32 0.0, %v3581
  %v3583 = vpop.f32.mrb[0].mxu0
  %3584 = vdwg.mxu0
  %v3585 = vadd.f32 %v3512, %v3582
  %v3586 = vld [vmem:[%s1566] sm:$0xff]
  %v3587 = vsel %vm234, %v3508, 0
  %3589 = vmatprep.subr.mxu0 0.0
  %3590 = vmatpush1.msra.mxu0 %v2265
  %3591 = vmatprep.subr.mxu0 0.0
  %3592 = vmatpush1.msra.mxu0 %v2266
  %3593 = vmatprep.subr.mxu0 0.0
  %3594 = vmatpush1.msra.mxu0 %v2267
  %3595 = vmatprep.subr.mxu0 0.0
  %3596 = vmatpush1.msra.mxu0 %v2268
  %3597 = vmatprep.subr.mxu0 0.0
  %3598 = vmatpush1.msra.mxu0 0.0
  %3599 = vmatprep.subr.mxu0 0.0
  %3600 = vmatpush1.msra.mxu0 0.0
  %3601 = vmatprep.subr.mxu0 0.0
  %3602 = vmatpush1.msra.mxu0 0.0
  %3603 = vmatprep.subr.mxu0 0.0
  %3604 = vmatpush1.msra.mxu0 0.0
  %3605 = vmatprep.subr.mxu0 0.0
  %3606 = vmatpush1.msra.mxu0 0.0
  %3607 = vmatprep.subr.mxu0 0.0
  %3608 = vmatpush1.msra.mxu0 0.0
  %3609 = vmatprep.subr.mxu0 0.0
  %3610 = vmatpush1.msra.mxu0 0.0
  %3611 = vmatprep.subr.mxu0 0.0
  %3612 = vmatpush1.msra.mxu0 0.0
  %3613 = vmatprep.subr.mxu0 0.0
  %3614 = vmatpush1.msra.mxu0 0.0
  %3615 = vmatprep.subr.mxu0 0.0
  %3616 = vmatpush1.msra.mxu0 0.0
  %3617 = vmatprep.subr.mxu0 0.0
  %3618 = vmatpush1.msra.mxu0 0.0
  %3619 = vmatprep.subr.mxu0 0.0
  %3620 = vmatpush1.msra.mxu0 0.0
  %3621 = vmatprep.subr.mxu0 0.0
  %3622 = vmatpush1.msra.mxu0 0.0
  %3623 = vmatprep.subr.mxu0 0.0
  %3624 = vmatpush1.msra.mxu0 0.0
  %3625 = vmatprep.subr.mxu0 0.0
  %3626 = vmatpush1.msra.mxu0 0.0
  %3627 = vmatprep.subr.mxu0 0.0
  %3628 = vmatpush1.msra.mxu0 0.0
  %3629 = vmatprep.subr.mxu0 0.0
  %3630 = vmatpush1.msra.mxu0 0.0
  %3631 = vmatprep.subr.mxu0 0.0
  %3632 = vmatpush1.msra.mxu0 0.0
  %3633 = vmatprep.subr.mxu0 0.0
  %3634 = vmatpush1.msra.mxu0 0.0
  %3635 = vmatprep.subr.mxu0 0.0
  %3636 = vmatpush1.msra.mxu0 0.0
  %3637 = vmatprep.subr.mxu0 0.0
  %3638 = vmatpush1.msra.mxu0 0.0
  %3639 = vmatprep.subr.mxu0 0.0
  %3640 = vmatpush1.msra.mxu0 0.0
  %3641 = vmatprep.subr.mxu0 0.0
  %3642 = vmatpush1.msra.mxu0 0.0
  %3643 = vmatprep.subr.mxu0 0.0
  %3644 = vmatpush1.msra.mxu0 0.0
  %3645 = vmatprep.subr.mxu0 0.0
  %3646 = vmatpush1.msra.mxu0 0.0
  %3647 = vmatprep.subr.mxu0 0.0
  %3648 = vmatpush1.msra.mxu0 0.0
  %3649 = vmatprep.subr.mxu0 0.0
  %3650 = vmatpush1.msra.mxu0 0.0
  %3651 = vmatprep.subr.mxu0 0.0
  %3652 = vmatpush1.msra.mxu0 0.0
  %3653 = vmatprep.mubr.f32.mxu0 0.0
  %3654 = vmatmul.mubr.f32.gmra.mrb[0].mxu0 %v3587
  %v3655 = vpop.f32.mrb[0].mxu0
  %v3656 = vadd.f32 0.0, %v3655
  %v3657 = vpop.f32.mrb[0].mxu0
  %3658 = vdwg.mxu0
  %v3659 = vadd.f32 %v3586, %v3656
  %v3660 = vxor.u32 %v3585, 2147483648
  %v3661 = vmul.f32 %v3660, 1.442695
  %v3662 = vpow.pop %v3661
  %v3663 = vadd.f32 %v3662, 1.0
  %v3664 = vrcp.pop %v3663
  %v3665 = vmul.f32 1.0, %v3664
  %v3666 = vtanh.pop %v3585
  %v3667 = vmul.f32 %v3665, %v3469
  %3669 = vrot.lane.b32.xlu0 %v3666, 64
  %v3670 = vpop.permute.xlu0 %3669
  %v3672 = vmul.f32 %v3665, %v3670
  %3674 = vrot.lane.b32.xlu0 %v3672, 32
  %v3675 = vpop.permute.xlu0 %3674
  %v3677 = vadd.f32 %v3667, %v3675
  %v3678 = vtanh.pop %v3677
  %3680 = vrot.lane.b32.xlu0 %v3678, 64
  %v3681 = vpop.permute.xlu0 %3680
  %v3683 = vmul.f32 %v3665, %v3681
  %v3684 = vxor.u32 %v3659, 2147483648
  %v3685 = vmul.f32 %v3684, 1.442695
  %v3686 = vpow.pop %v3685
  %v3687 = vadd.f32 %v3686, 1.0
  %v3688 = vrcp.pop %v3687
  %v3689 = vmul.f32 1.0, %v3688
  %v3690 = vtanh.pop %v3659
  %v3691 = vmul.f32 %v3689, %v3493
  %3693 = vrot.lane.b32.xlu0 %v3690, 64
  %v3694 = vpop.permute.xlu0 %3693
  %v3696 = vmul.f32 %v3689, %v3694
  %3698 = vrot.lane.b32.xlu0 %v3696, 32
  %v3699 = vpop.permute.xlu0 %3698
  %v3701 = vadd.f32 %v3691, %v3699
  %v3702 = vtanh.pop %v3701
  %3704 = vrot.lane.b32.xlu0 %v3702, 64
  %v3705 = vpop.permute.xlu0 %3704
  %v3707 = vmul.f32 %v3689, %v3705
  %3709 = vrot.lane.b32.xlu0 %v3683, 32
  %v3710 = vpop.permute.xlu0 %3709
  %s3712 = scalar_lea.vmem [#allocation4], 48
  %3713 = vst.msk [vmem:[%s3712] sm:$0xff] %vm234, %v3710
  %3715 = vrot.lane.b32.xlu0 %v3707, 32
  %v3716 = vpop.permute.xlu0 %3715
  %s3718 = scalar_lea.vmem [#allocation5], 8
  %3719 = vst.msk [vmem:[%s3718] sm:$0xff] %vm234, %v3716
  %v3720 = vld [vmem:[%s1701] sm:$0xff]
  %v3721 = vsel %vm234, %v3710, 0
  %3723 = vmatprep.subr.mxu0 0.0
  %3724 = vmatpush1.msra.mxu0 %v2260
  %3725 = vmatprep.subr.mxu0 0.0
  %3726 = vmatpush1.msra.mxu0 %v2261
  %3727 = vmatprep.subr.mxu0 0.0
  %3728 = vmatpush1.msra.mxu0 %v2262
  %3729 = vmatprep.subr.mxu0 0.0
  %3730 = vmatpush1.msra.mxu0 %v2263
  %3731 = vmatprep.subr.mxu0 0.0
  %3732 = vmatpush1.msra.mxu0 0.0
  %3733 = vmatprep.subr.mxu0 0.0
  %3734 = vmatpush1.msra.mxu0 0.0
  %3735 = vmatprep.subr.mxu0 0.0
  %3736 = vmatpush1.msra.mxu0 0.0
  %3737 = vmatprep.subr.mxu0 0.0
  %3738 = vmatpush1.msra.mxu0 0.0
  %3739 = vmatprep.subr.mxu0 0.0
  %3740 = vmatpush1.msra.mxu0 0.0
  %3741 = vmatprep.subr.mxu0 0.0
  %3742 = vmatpush1.msra.mxu0 0.0
  %3743 = vmatprep.subr.mxu0 0.0
  %3744 = vmatpush1.msra.mxu0 0.0
  %3745 = vmatprep.subr.mxu0 0.0
  %3746 = vmatpush1.msra.mxu0 0.0
  %3747 = vmatprep.subr.mxu0 0.0
  %3748 = vmatpush1.msra.mxu0 0.0
  %3749 = vmatprep.subr.mxu0 0.0
  %3750 = vmatpush1.msra.mxu0 0.0
  %3751 = vmatprep.subr.mxu0 0.0
  %3752 = vmatpush1.msra.mxu0 0.0
  %3753 = vmatprep.subr.mxu0 0.0
  %3754 = vmatpush1.msra.mxu0 0.0
  %3755 = vmatprep.subr.mxu0 0.0
  %3756 = vmatpush1.msra.mxu0 0.0
  %3757 = vmatprep.subr.mxu0 0.0
  %3758 = vmatpush1.msra.mxu0 0.0
  %3759 = vmatprep.subr.mxu0 0.0
  %3760 = vmatpush1.msra.mxu0 0.0
  %3761 = vmatprep.subr.mxu0 0.0
  %3762 = vmatpush1.msra.mxu0 0.0
  %3763 = vmatprep.subr.mxu0 0.0
  %3764 = vmatpush1.msra.mxu0 0.0
  %3765 = vmatprep.subr.mxu0 0.0
  %3766 = vmatpush1.msra.mxu0 0.0
  %3767 = vmatprep.subr.mxu0 0.0
  %3768 = vmatpush1.msra.mxu0 0.0
  %3769 = vmatprep.subr.mxu0 0.0
  %3770 = vmatpush1.msra.mxu0 0.0
  %3771 = vmatprep.subr.mxu0 0.0
  %3772 = vmatpush1.msra.mxu0 0.0
  %3773 = vmatprep.subr.mxu0 0.0
  %3774 = vmatpush1.msra.mxu0 0.0
  %3775 = vmatprep.subr.mxu0 0.0
  %3776 = vmatpush1.msra.mxu0 0.0
  %3777 = vmatprep.subr.mxu0 0.0
  %3778 = vmatpush1.msra.mxu0 0.0
  %3779 = vmatprep.subr.mxu0 0.0
  %3780 = vmatpush1.msra.mxu0 0.0
  %3781 = vmatprep.subr.mxu0 0.0
  %3782 = vmatpush1.msra.mxu0 0.0
  %3783 = vmatprep.subr.mxu0 0.0
  %3784 = vmatpush1.msra.mxu0 0.0
  %3785 = vmatprep.subr.mxu0 0.0
  %3786 = vmatpush1.msra.mxu0 0.0
  %3787 = vmatprep.mubr.f32.mxu0 0.0
  %3788 = vmatmul.mubr.f32.gmra.mrb[0].mxu0 %v3721
  %v3789 = vpop.f32.mrb[0].mxu0
  %v3790 = vadd.f32 0.0, %v3789
  %v3791 = vpop.f32.mrb[0].mxu0
  %3792 = vdwg.mxu0
  %v3793 = vadd.f32 %v3720, %v3790
  %v3794 = vld [vmem:[#allocation3] sm:$0xff]
  %v3795 = vsel %vm234, %v3716, 0
  %3797 = vmatprep.subr.mxu0 0.0
  %3798 = vmatpush1.msra.mxu0 %v2265
  %3799 = vmatprep.subr.mxu0 0.0
  %3800 = vmatpush1.msra.mxu0 %v2266
  %3801 = vmatprep.subr.mxu0 0.0
  %3802 = vmatpush1.msra.mxu0 %v2267
  %3803 = vmatprep.subr.mxu0 0.0
  %3804 = vmatpush1.msra.mxu0 %v2268
  %3805 = vmatprep.subr.mxu0 0.0
  %3806 = vmatpush1.msra.mxu0 0.0
  %3807 = vmatprep.subr.mxu0 0.0
  %3808 = vmatpush1.msra.mxu0 0.0
  %3809 = vmatprep.subr.mxu0 0.0
  %3810 = vmatpush1.msra.mxu0 0.0
  %3811 = vmatprep.subr.mxu0 0.0
  %3812 = vmatpush1.msra.mxu0 0.0
  %3813 = vmatprep.subr.mxu0 0.0
  %3814 = vmatpush1.msra.mxu0 0.0
  %3815 = vmatprep.subr.mxu0 0.0
  %3816 = vmatpush1.msra.mxu0 0.0
  %3817 = vmatprep.subr.mxu0 0.0
  %3818 = vmatpush1.msra.mxu0 0.0
  %3819 = vmatprep.subr.mxu0 0.0
  %3820 = vmatpush1.msra.mxu0 0.0
  %3821 = vmatprep.subr.mxu0 0.0
  %3822 = vmatpush1.msra.mxu0 0.0
  %3823 = vmatprep.subr.mxu0 0.0
  %3824 = vmatpush1.msra.mxu0 0.0
  %3825 = vmatprep.subr.mxu0 0.0
  %3826 = vmatpush1.msra.mxu0 0.0
  %3827 = vmatprep.subr.mxu0 0.0
  %3828 = vmatpush1.msra.mxu0 0.0
  %3829 = vmatprep.subr.mxu0 0.0
  %3830 = vmatpush1.msra.mxu0 0.0
  %3831 = vmatprep.subr.mxu0 0.0
  %3832 = vmatpush1.msra.mxu0 0.0
  %3833 = vmatprep.subr.mxu0 0.0
  %3834 = vmatpush1.msra.mxu0 0.0
  %3835 = vmatprep.subr.mxu0 0.0
  %3836 = vmatpush1.msra.mxu0 0.0
  %3837 = vmatprep.subr.mxu0 0.0
  %3838 = vmatpush1.msra.mxu0 0.0
  %3839 = vmatprep.subr.mxu0 0.0
  %3840 = vmatpush1.msra.mxu0 0.0
  %3841 = vmatprep.subr.mxu0 0.0
  %3842 = vmatpush1.msra.mxu0 0.0
  %3843 = vmatprep.subr.mxu0 0.0
  %3844 = vmatpush1.msra.mxu0 0.0
  %3845 = vmatprep.subr.mxu0 0.0
  %3846 = vmatpush1.msra.mxu0 0.0
  %3847 = vmatprep.subr.mxu0 0.0
  %3848 = vmatpush1.msra.mxu0 0.0
  %3849 = vmatprep.subr.mxu0 0.0
  %3850 = vmatpush1.msra.mxu0 0.0
  %3851 = vmatprep.subr.mxu0 0.0
  %3852 = vmatpush1.msra.mxu0 0.0
  %3853 = vmatprep.subr.mxu0 0.0
  %3854 = vmatpush1.msra.mxu0 0.0
  %3855 = vmatprep.subr.mxu0 0.0
  %3856 = vmatpush1.msra.mxu0 0.0
  %3857 = vmatprep.subr.mxu0 0.0
  %3858 = vmatpush1.msra.mxu0 0.0
  %3859 = vmatprep.subr.mxu0 0.0
  %3860 = vmatpush1.msra.mxu0 0.0
  %3861 = vmatprep.mubr.f32.mxu0 0.0
  %3862 = vmatmul.mubr.f32.gmra.mrb[0].mxu0 %v3795
  %v3863 = vpop.f32.mrb[0].mxu0
  %v3864 = vadd.f32 0.0, %v3863
  %v3865 = vpop.f32.mrb[0].mxu0
  %3866 = vdwg.mxu0
  %v3867 = vadd.f32 %v3794, %v3864
  %v3868 = vxor.u32 %v3793, 2147483648
  %v3869 = vmul.f32 %v3868, 1.442695
  %v3870 = vpow.pop %v3869
  %v3871 = vadd.f32 %v3870, 1.0
  %v3872 = vrcp.pop %v3871
  %v3873 = vmul.f32 1.0, %v3872
  %v3874 = vtanh.pop %v3793
  %v3875 = vmul.f32 %v3873, %v3677
  %3877 = vrot.lane.b32.xlu0 %v3874, 64
  %v3878 = vpop.permute.xlu0 %3877
  %v3880 = vmul.f32 %v3873, %v3878
  %3882 = vrot.lane.b32.xlu0 %v3880, 32
  %v3883 = vpop.permute.xlu0 %3882
  %v3885 = vadd.f32 %v3875, %v3883
  %v3886 = vtanh.pop %v3885
  %3888 = vrot.lane.b32.xlu0 %v3886, 64
  %v3889 = vpop.permute.xlu0 %3888
  %v3891 = vmul.f32 %v3873, %v3889
  %v3892 = vxor.u32 %v3867, 2147483648
  %v3893 = vmul.f32 %v3892, 1.442695
  %v3894 = vpow.pop %v3893
  %v3895 = vadd.f32 %v3894, 1.0
  %v3896 = vrcp.pop %v3895
  %v3897 = vmul.f32 1.0, %v3896
  %v3898 = vtanh.pop %v3867
  %v3899 = vmul.f32 %v3897, %v3701
  %3901 = vrot.lane.b32.xlu0 %v3898, 64
  %v3902 = vpop.permute.xlu0 %3901
  %v3904 = vmul.f32 %v3897, %v3902
  %3906 = vrot.lane.b32.xlu0 %v3904, 32
  %v3907 = vpop.permute.xlu0 %3906
  %v3909 = vadd.f32 %v3899, %v3907
  %v3910 = vtanh.pop %v3909
  %3912 = vrot.lane.b32.xlu0 %v3910, 64
  %v3913 = vpop.permute.xlu0 %3912
  %v3915 = vmul.f32 %v3897, %v3913
  %3917 = vrot.lane.b32.xlu0 %v3891, 32
  %v3918 = vpop.permute.xlu0 %3917
  %s3920 = scalar_lea.vmem [#allocation4], 56
  %3921 = vst.msk [vmem:[%s3920] sm:$0xff] %vm234, %v3918
  %3923 = vrot.lane.b32.xlu0 %v3915, 32
  %v3924 = vpop.permute.xlu0 %3923
  %3926 = vst.msk [vmem:[#allocation5] sm:$0xff] %vm234, %v3924
  %v3927 = vld [vmem:[#allocation4] sm:$0xff]
  %v3928 = vld [vmem:[#allocation4 + $0x8] sm:$0xff]
  %v3929 = vld [vmem:[#allocation4 + $0x10] sm:$0xff]
  %v3930 = vld [vmem:[#allocation4 + $0x18] sm:$0xff]
  %v3931 = vld [vmem:[#allocation4 + $0x20] sm:$0xff]
  %v3932 = vld [vmem:[#allocation4 + $0x28] sm:$0xff]
  %v3933 = vld [vmem:[#allocation4 + $0x30] sm:$0xff]
  %v3934 = vld [vmem:[#allocation4 + $0x38] sm:$0xff]
  %v3935 = vld [vmem:[#allocation5] sm:$0xff]
  %v3936 = vld [vmem:[#allocation5 + $0x8] sm:$0xff]
  %v3937 = vld [vmem:[#allocation5 + $0x10] sm:$0xff]
  %v3938 = vld [vmem:[#allocation5 + $0x18] sm:$0xff]
  %v3939 = vld [vmem:[#allocation5 + $0x20] sm:$0xff]
  %v3940 = vld [vmem:[#allocation5 + $0x28] sm:$0xff]
  %v3941 = vld [vmem:[#allocation5 + $0x30] sm:$0xff]
  %v3942 = vld [vmem:[#allocation5 + $0x38] sm:$0xff]
  %v3943 = vld [vmem:[%s7] sm:$0xff]
  %v3944 = vld [vmem:[%s7 + $0x8] sm:$0xff]
  %v3945 = vld [vmem:[%s7 + $0x10] sm:$0xff]
  %v3946 = vld [vmem:[%s7 + $0x18] sm:$0xff]
  %s3947 = scalar_lea.vmem %s7, 32
  %v3948 = vld [vmem:[%s3947] sm:$0xff]
  %v3949 = vld [vmem:[%s3947 + $0x8] sm:$0xff]
  %v3950 = vld [vmem:[%s3947 + $0x10] sm:$0xff]
  %v3951 = vld [vmem:[%s3947 + $0x18] sm:$0xff]
  %v3953 = vsel %vm234, %v3935, 0
  %v3956 = vsel %vm234, %v3936, 0
  %v3959 = vsel %vm234, %v3937, 0
  %v3962 = vsel %vm234, %v3938, 0
  %v3965 = vsel %vm234, %v3939, 0
  %v3968 = vsel %vm234, %v3940, 0
  %v3971 = vsel %vm234, %v3941, 0
  %v3974 = vsel %vm234, %v3942, 0
  %3976 = vmatprep.subr.mxu0 0.0
  %3977 = vmatpush1.msra.mxu0 %v3948
  %3978 = vmatprep.subr.mxu0 0.0
  %3979 = vmatpush1.msra.mxu0 %v3949
  %3980 = vmatprep.subr.mxu0 0.0
  %3981 = vmatpush1.msra.mxu0 %v3950
  %3982 = vmatprep.subr.mxu0 0.0
  %3983 = vmatpush1.msra.mxu0 %v3951
  %3984 = vmatprep.subr.mxu0 0.0
  %3985 = vmatpush1.msra.mxu0 0.0
  %3986 = vmatprep.subr.mxu0 0.0
  %3987 = vmatpush1.msra.mxu0 0.0
  %3988 = vmatprep.subr.mxu0 0.0
  %3989 = vmatpush1.msra.mxu0 0.0
  %3990 = vmatprep.subr.mxu0 0.0
  %3991 = vmatpush1.msra.mxu0 0.0
  %3992 = vmatprep.subr.mxu0 0.0
  %3993 = vmatpush1.msra.mxu0 0.0
  %3994 = vmatprep.subr.mxu0 0.0
  %3995 = vmatpush1.msra.mxu0 0.0
  %3996 = vmatprep.subr.mxu0 0.0
  %3997 = vmatpush1.msra.mxu0 0.0
  %3998 = vmatprep.subr.mxu0 0.0
  %3999 = vmatpush1.msra.mxu0 0.0
  %4000 = vmatprep.subr.mxu0 0.0
  %4001 = vmatpush1.msra.mxu0 0.0
  %4002 = vmatprep.subr.mxu0 0.0
  %4003 = vmatpush1.msra.mxu0 0.0
  %4004 = vmatprep.subr.mxu0 0.0
  %4005 = vmatpush1.msra.mxu0 0.0
  %4006 = vmatprep.subr.mxu0 0.0
  %4007 = vmatpush1.msra.mxu0 0.0
  %4008 = vmatprep.subr.mxu0 0.0
  %4009 = vmatpush1.msra.mxu0 0.0
  %4010 = vmatprep.subr.mxu0 0.0
  %4011 = vmatpush1.msra.mxu0 0.0
  %4012 = vmatprep.subr.mxu0 0.0
  %4013 = vmatpush1.msra.mxu0 0.0
  %4014 = vmatprep.subr.mxu0 0.0
  %4015 = vmatpush1.msra.mxu0 0.0
  %4016 = vmatprep.subr.mxu0 0.0
  %4017 = vmatpush1.msra.mxu0 0.0
  %4018 = vmatprep.subr.mxu0 0.0
  %4019 = vmatpush1.msra.mxu0 0.0
  %4020 = vmatprep.subr.mxu0 0.0
  %4021 = vmatpush1.msra.mxu0 0.0
  %4022 = vmatprep.subr.mxu0 0.0
  %4023 = vmatpush1.msra.mxu0 0.0
  %4024 = vmatprep.subr.mxu0 0.0
  %4025 = vmatpush1.msra.mxu0 0.0
  %4026 = vmatprep.subr.mxu0 0.0
  %4027 = vmatpush1.msra.mxu0 0.0
  %4028 = vmatprep.subr.mxu0 0.0
  %4029 = vmatpush1.msra.mxu0 0.0
  %4030 = vmatprep.subr.mxu0 0.0
  %4031 = vmatpush1.msra.mxu0 0.0
  %4032 = vmatprep.subr.mxu0 0.0
  %4033 = vmatpush1.msra.mxu0 0.0
  %4034 = vmatprep.subr.mxu0 0.0
  %4035 = vmatpush1.msra.mxu0 0.0
  %4036 = vmatprep.subr.mxu0 0.0
  %4037 = vmatpush1.msra.mxu0 0.0
  %4038 = vmatprep.subr.mxu0 0.0
  %4039 = vmatpush1.msra.mxu0 0.0
  %4040 = vmatprep.mubr.f32.mxu0 0.0
  %4041 = vmatmul.mubr.f32.gmra.mrb[0].mxu0 %v3953
  %v4042 = vpop.f32.mrb[0].mxu0
  %v4043 = vadd.f32 0.0, %v4042
  %v4044 = vpop.f32.mrb[0].mxu0
  %4045 = vmatprep.mubr.f32.mxu0 0.0
  %4046 = vmatmul.mubr.f32.gmra.mrb[0].mxu0 %v3956
  %v4047 = vpop.f32.mrb[0].mxu0
  %v4048 = vadd.f32 0.0, %v4047
  %v4049 = vpop.f32.mrb[0].mxu0
  %4050 = vmatprep.mubr.f32.mxu0 0.0
  %4051 = vmatmul.mubr.f32.gmra.mrb[0].mxu0 %v3959
  %v4052 = vpop.f32.mrb[0].mxu0
  %v4053 = vadd.f32 0.0, %v4052
  %v4054 = vpop.f32.mrb[0].mxu0
  %4055 = vmatprep.mubr.f32.mxu0 0.0
  %4056 = vmatmul.mubr.f32.gmra.mrb[0].mxu0 %v3962
  %v4057 = vpop.f32.mrb[0].mxu0
  %v4058 = vadd.f32 0.0, %v4057
  %v4059 = vpop.f32.mrb[0].mxu0
  %4060 = vmatprep.mubr.f32.mxu0 0.0
  %4061 = vmatmul.mubr.f32.gmra.mrb[0].mxu0 %v3965
  %v4062 = vpop.f32.mrb[0].mxu0
  %v4063 = vadd.f32 0.0, %v4062
  %v4064 = vpop.f32.mrb[0].mxu0
  %4065 = vmatprep.mubr.f32.mxu0 0.0
  %4066 = vmatmul.mubr.f32.gmra.mrb[0].mxu0 %v3968
  %v4067 = vpop.f32.mrb[0].mxu0
  %v4068 = vadd.f32 0.0, %v4067
  %v4069 = vpop.f32.mrb[0].mxu0
  %4070 = vmatprep.mubr.f32.mxu0 0.0
  %4071 = vmatmul.mubr.f32.gmra.mrb[0].mxu0 %v3971
  %v4072 = vpop.f32.mrb[0].mxu0
  %v4073 = vadd.f32 0.0, %v4072
  %v4074 = vpop.f32.mrb[0].mxu0
  %4075 = vmatprep.mubr.f32.mxu0 0.0
  %4076 = vmatmul.mubr.f32.gmra.mrb[0].mxu0 %v3974
  %v4077 = vpop.f32.mrb[0].mxu0
  %v4078 = vadd.f32 0.0, %v4077
  %v4079 = vpop.f32.mrb[0].mxu0
  %4080 = vdwg.mxu0
  %v4082 = vsel %vm234, %v3927, 0
  %v4085 = vsel %vm234, %v3928, 0
  %v4088 = vsel %vm234, %v3929, 0
  %v4091 = vsel %vm234, %v3930, 0
  %v4094 = vsel %vm234, %v3931, 0
  %v4097 = vsel %vm234, %v3932, 0
  %v4100 = vsel %vm234, %v3933, 0
  %v4103 = vsel %vm234, %v3934, 0
  %4105 = vmatprep.subr.mxu0 0.0
  %4106 = vmatpush1.msra.mxu0 %v3943
  %4107 = vmatprep.subr.mxu0 0.0
  %4108 = vmatpush1.msra.mxu0 %v3944
  %4109 = vmatprep.subr.mxu0 0.0
  %4110 = vmatpush1.msra.mxu0 %v3945
  %4111 = vmatprep.subr.mxu0 0.0
  %4112 = vmatpush1.msra.mxu0 %v3946
  %4113 = vmatprep.subr.mxu0 0.0
  %4114 = vmatpush1.msra.mxu0 0.0
  %4115 = vmatprep.subr.mxu0 0.0
  %4116 = vmatpush1.msra.mxu0 0.0
  %4117 = vmatprep.subr.mxu0 0.0
  %4118 = vmatpush1.msra.mxu0 0.0
  %4119 = vmatprep.subr.mxu0 0.0
  %4120 = vmatpush1.msra.mxu0 0.0
  %4121 = vmatprep.subr.mxu0 0.0
  %4122 = vmatpush1.msra.mxu0 0.0
  %4123 = vmatprep.subr.mxu0 0.0
  %4124 = vmatpush1.msra.mxu0 0.0
  %4125 = vmatprep.subr.mxu0 0.0
  %4126 = vmatpush1.msra.mxu0 0.0
  %4127 = vmatprep.subr.mxu0 0.0
  %4128 = vmatpush1.msra.mxu0 0.0
  %4129 = vmatprep.subr.mxu0 0.0
  %4130 = vmatpush1.msra.mxu0 0.0
  %4131 = vmatprep.subr.mxu0 0.0
  %4132 = vmatpush1.msra.mxu0 0.0
  %4133 = vmatprep.subr.mxu0 0.0
  %4134 = vmatpush1.msra.mxu0 0.0
  %4135 = vmatprep.subr.mxu0 0.0
  %4136 = vmatpush1.msra.mxu0 0.0
  %4137 = vmatprep.subr.mxu0 0.0
  %4138 = vmatpush1.msra.mxu0 0.0
  %4139 = vmatprep.subr.mxu0 0.0
  %4140 = vmatpush1.msra.mxu0 0.0
  %4141 = vmatprep.subr.mxu0 0.0
  %4142 = vmatpush1.msra.mxu0 0.0
  %4143 = vmatprep.subr.mxu0 0.0
  %4144 = vmatpush1.msra.mxu0 0.0
  %4145 = vmatprep.subr.mxu0 0.0
  %4146 = vmatpush1.msra.mxu0 0.0
  %4147 = vmatprep.subr.mxu0 0.0
  %4148 = vmatpush1.msra.mxu0 0.0
  %4149 = vmatprep.subr.mxu0 0.0
  %4150 = vmatpush1.msra.mxu0 0.0
  %4151 = vmatprep.subr.mxu0 0.0
  %4152 = vmatpush1.msra.mxu0 0.0
  %4153 = vmatprep.subr.mxu0 0.0
  %4154 = vmatpush1.msra.mxu0 0.0
  %4155 = vmatprep.subr.mxu0 0.0
  %4156 = vmatpush1.msra.mxu0 0.0
  %4157 = vmatprep.subr.mxu0 0.0
  %4158 = vmatpush1.msra.mxu0 0.0
  %4159 = vmatprep.subr.mxu0 0.0
  %4160 = vmatpush1.msra.mxu0 0.0
  %4161 = vmatprep.subr.mxu0 0.0
  %4162 = vmatpush1.msra.mxu0 0.0
  %4163 = vmatprep.subr.mxu0 0.0
  %4164 = vmatpush1.msra.mxu0 0.0
  %4165 = vmatprep.subr.mxu0 0.0
  %4166 = vmatpush1.msra.mxu0 0.0
  %4167 = vmatprep.subr.mxu0 0.0
  %4168 = vmatpush1.msra.mxu0 0.0
  %4169 = vmatprep.mubr.f32.mxu0 0.0
  %4170 = vmatmul.mubr.f32.gmra.mrb[0].mxu0 %v4082
  %v4171 = vpop.f32.mrb[0].mxu0
  %v4172 = vadd.f32 %v4043, %v4171
  %v4173 = vpop.f32.mrb[0].mxu0
  %4174 = vmatprep.mubr.f32.mxu0 0.0
  %4175 = vmatmul.mubr.f32.gmra.mrb[0].mxu0 %v4085
  %v4176 = vpop.f32.mrb[0].mxu0
  %v4177 = vadd.f32 %v4048, %v4176
  %v4178 = vpop.f32.mrb[0].mxu0
  %4179 = vmatprep.mubr.f32.mxu0 0.0
  %4180 = vmatmul.mubr.f32.gmra.mrb[0].mxu0 %v4088
  %v4181 = vpop.f32.mrb[0].mxu0
  %v4182 = vadd.f32 %v4053, %v4181
  %v4183 = vpop.f32.mrb[0].mxu0
  %4184 = vmatprep.mubr.f32.mxu0 0.0
  %4185 = vmatmul.mubr.f32.gmra.mrb[0].mxu0 %v4091
  %v4186 = vpop.f32.mrb[0].mxu0
  %v4187 = vadd.f32 %v4058, %v4186
  %v4188 = vpop.f32.mrb[0].mxu0
  %4189 = vmatprep.mubr.f32.mxu0 0.0
  %4190 = vmatmul.mubr.f32.gmra.mrb[0].mxu0 %v4094
  %v4191 = vpop.f32.mrb[0].mxu0
  %v4192 = vadd.f32 %v4063, %v4191
  %v4193 = vpop.f32.mrb[0].mxu0
  %4194 = vmatprep.mubr.f32.mxu0 0.0
  %4195 = vmatmul.mubr.f32.gmra.mrb[0].mxu0 %v4097
  %v4196 = vpop.f32.mrb[0].mxu0
  %v4197 = vadd.f32 %v4068, %v4196
  %v4198 = vpop.f32.mrb[0].mxu0
  %4199 = vmatprep.mubr.f32.mxu0 0.0
  %4200 = vmatmul.mubr.f32.gmra.mrb[0].mxu0 %v4100
  %v4201 = vpop.f32.mrb[0].mxu0
  %v4202 = vadd.f32 %v4073, %v4201
  %v4203 = vpop.f32.mrb[0].mxu0
  %4204 = vmatprep.mubr.f32.mxu0 0.0
  %4205 = vmatmul.mubr.f32.gmra.mrb[0].mxu0 %v4103
  %v4206 = vpop.f32.mrb[0].mxu0
  %v4207 = vadd.f32 %v4078, %v4206
  %v4208 = vpop.f32.mrb[0].mxu0
  %4209 = vdwg.mxu0
  %v4210 = vld [vmem:[%s8] sm:$0x1]
  %v4212 = vlaneseq
  %v4213 = vshrl.u32 %v4212, 7
  %v4214 = vsub.s32 0, %v4213
  %v4215 = vrot.slane %v4210, %v4214
  %v4217 = vadd.f32 %v4172, %v4215
  %v4218 = vadd.f32 %v4177, %v4215
  %v4219 = vadd.f32 %v4182, %v4215
  %v4220 = vadd.f32 %v4187, %v4215
  %v4221 = vadd.f32 %v4192, %v4215
  %v4222 = vadd.f32 %v4197, %v4215
  %v4223 = vadd.f32 %v4202, %v4215
  %v4224 = vadd.f32 %v4207, %v4215
  %v4225 = vtanh.pop %v4217
  %v4226 = vtanh.pop %v4218
  %v4227 = vtanh.pop %v4219
  %v4228 = vtanh.pop %v4220
  %v4229 = vtanh.pop %v4221
  %v4230 = vtanh.pop %v4222
  %v4231 = vtanh.pop %v4223
  %v4232 = vtanh.pop %v4224
  %v4233 = vld [vmem:[%s9] sm:$0x1]
  %v4235 = vlaneseq
  %v4236 = vshrl.u32 %v4235, 7
  %v4237 = vsub.s32 0, %v4236
  %v4238 = vrot.slane %v4233, %v4237
  %v4240 = vmul.f32 %v4225, %v4238
  %v4241 = vmul.f32 %v4226, %v4238
  %v4242 = vmul.f32 %v4227, %v4238
  %v4243 = vmul.f32 %v4228, %v4238
  %v4244 = vmul.f32 %v4229, %v4238
  %v4245 = vmul.f32 %v4230, %v4238
  %v4246 = vmul.f32 %v4231, %v4238
  %v4247 = vmul.f32 %v4232, %v4238
  %v4248 = vsel %vm234, %v4240, 0.0
  %4249 = vadd.xlane.f32.xlu0 %v4248
  %v4250 = vpop.xlane.xlu0 %4249
  %v4251 = vsel %vm234, %v4241, 0.0
  %4252 = vadd.xlane.f32.xlu0 %v4251
  %v4253 = vpop.xlane.xlu0 %4252
  %v4254 = vsel %vm234, %v4242, 0.0
  %4255 = vadd.xlane.f32.xlu0 %v4254
  %v4256 = vpop.xlane.xlu0 %4255
  %v4257 = vsel %vm234, %v4243, 0.0
  %4258 = vadd.xlane.f32.xlu0 %v4257
  %v4259 = vpop.xlane.xlu0 %4258
  %v4260 = vsel %vm234, %v4244, 0.0
  %4261 = vadd.xlane.f32.xlu0 %v4260
  %v4262 = vpop.xlane.xlu0 %4261
  %v4263 = vsel %vm234, %v4245, 0.0
  %4264 = vadd.xlane.f32.xlu0 %v4263
  %v4265 = vpop.xlane.xlu0 %4264
  %v4266 = vsel %vm234, %v4246, 0.0
  %4267 = vadd.xlane.f32.xlu0 %v4266
  %v4268 = vpop.xlane.xlu0 %4267
  %v4269 = vsel %vm234, %v4247, 0.0
  %4270 = vadd.xlane.f32.xlu0 %v4269
  %v4271 = vpop.xlane.xlu0 %4270
  %v4272 = vld [vmem:[#allocation8] sm:$0x1]
  %v4274 = vlaneseq
  %v4275 = vshrl.u32 %v4274, 7
  %v4276 = vsub.s32 0, %v4275
  %v4277 = vrot.slane %v4272, %v4276
  %v4279 = vadd.f32 %v4250, %v4277
  %v4280 = vadd.f32 %v4253, %v4277
  %v4281 = vadd.f32 %v4256, %v4277
  %v4282 = vadd.f32 %v4259, %v4277
  %v4283 = vadd.f32 %v4262, %v4277
  %v4284 = vadd.f32 %v4265, %v4277
  %v4285 = vadd.f32 %v4268, %v4277
  %v4286 = vadd.f32 %v4271, %v4277
  %vm4287 = vcmask 7168
  %v4288 = vsel %vm4287, %v4279, -inf
  %v4289 = vsel %vm4287, %v4280, -inf
  %v4290 = vsel %vm4287, %v4281, -inf
  %v4291 = vsel %vm4287, %v4282, -inf
  %v4292 = vsel %vm4287, %v4283, -inf
  %v4293 = vmax.f32 %v4288, %v4292
  %v4294 = vsel %vm4287, %v4284, -inf
  %v4295 = vmax.f32 %v4289, %v4294
  %v4296 = vsel %vm4287, %v4285, -inf
  %v4297 = vmax.f32 %v4290, %v4296
  %v4298 = vsel %vm4287, %v4286, -inf
  %v4299 = vmax.f32 %v4291, %v4298
  %v4300 = vmax.f32 %v4293, %v4295
  %v4301 = vmax.f32 %v4297, %v4299
  %v4302 = vmax.f32 %v4300, %v4301
  %v4303 = vsub.f32 %v4279, %v4302
  %v4304 = vsub.f32 %v4280, %v4302
  %v4305 = vsub.f32 %v4281, %v4302
  %v4306 = vsub.f32 %v4282, %v4302
  %v4307 = vsub.f32 %v4283, %v4302
  %v4308 = vsub.f32 %v4284, %v4302
  %v4309 = vsub.f32 %v4285, %v4302
  %v4310 = vsub.f32 %v4286, %v4302
  %v4311 = vmul.f32 %v4303, 1.442695
  %v4312 = vpow.pop %v4311
  %v4313 = vmul.f32 %v4304, 1.442695
  %v4314 = vpow.pop %v4313
  %v4315 = vmul.f32 %v4305, 1.442695
  %v4316 = vpow.pop %v4315
  %v4317 = vmul.f32 %v4306, 1.442695
  %v4318 = vpow.pop %v4317
  %v4319 = vmul.f32 %v4307, 1.442695
  %v4320 = vpow.pop %v4319
  %v4321 = vmul.f32 %v4308, 1.442695
  %v4322 = vpow.pop %v4321
  %v4323 = vmul.f32 %v4309, 1.442695
  %v4324 = vpow.pop %v4323
  %v4325 = vmul.f32 %v4310, 1.442695
  %v4326 = vpow.pop %v4325
  %v4327 = vsel %vm4287, %v4312, 0.0
  %v4328 = vsel %vm4287, %v4314, 0.0
  %v4329 = vadd.f32 %v4327, %v4328
  %v4330 = vsel %vm4287, %v4316, 0.0
  %v4331 = vadd.f32 %v4329, %v4330
  %v4332 = vsel %vm4287, %v4318, 0.0
  %v4333 = vadd.f32 %v4331, %v4332
  %v4334 = vsel %vm4287, %v4320, 0.0
  %v4335 = vadd.f32 %v4333, %v4334
  %v4336 = vsel %vm4287, %v4322, 0.0
  %v4337 = vadd.f32 %v4335, %v4336
  %v4338 = vsel %vm4287, %v4324, 0.0
  %v4339 = vadd.f32 %v4337, %v4338
  %v4340 = vsel %vm4287, %v4326, 0.0
  %v4341 = vadd.f32 %v4339, %v4340
  %v4342 = vrcp.pop %v4341
  %v4343 = vmul.f32 %v4312, %v4342
  %v4344 = vmul.f32 %v4314, %v4342
  %v4345 = vmul.f32 %v4316, %v4342
  %v4346 = vmul.f32 %v4318, %v4342
  %v4347 = vmul.f32 %v4320, %v4342
  %v4348 = vmul.f32 %v4322, %v4342
  %v4349 = vmul.f32 %v4324, %v4342
  %v4350 = vmul.f32 %v4326, %v4342
  %4352 = vset.pattern.permute.xlu0 0
  %4353 = vperm.xlu0 %4352, %v4343
  %v4354 = vpop.permute.xlu0 %4353
  %4357 = vset.pattern.permute.xlu0 0
  %4358 = vperm.xlu0 %4357, %v4344
  %v4359 = vpop.permute.xlu0 %4358
  %4362 = vset.pattern.permute.xlu0 0
  %4363 = vperm.xlu0 %4362, %v4345
  %v4364 = vpop.permute.xlu0 %4363
  %4367 = vset.pattern.permute.xlu0 0
  %4368 = vperm.xlu0 %4367, %v4346
  %v4369 = vpop.permute.xlu0 %4368
  %4372 = vset.pattern.permute.xlu0 0
  %4373 = vperm.xlu0 %4372, %v4347
  %v4374 = vpop.permute.xlu0 %4373
  %4377 = vset.pattern.permute.xlu0 0
  %4378 = vperm.xlu0 %4377, %v4348
  %v4379 = vpop.permute.xlu0 %4378
  %4382 = vset.pattern.permute.xlu0 0
  %4383 = vperm.xlu0 %4382, %v4349
  %v4384 = vpop.permute.xlu0 %4383
  %4387 = vset.pattern.permute.xlu0 0
  %4388 = vperm.xlu0 %4387, %v4350
  %v4389 = vpop.permute.xlu0 %4388
  %v4391 = vmul.f32 %v4354, %v3927
  %v4392 = vmul.f32 %v4359, %v3928
  %v4393 = vmul.f32 %v4364, %v3929
  %v4394 = vmul.f32 %v4369, %v3930
  %v4395 = vmul.f32 %v4374, %v3931
  %v4396 = vmul.f32 %v4379, %v3932
  %v4397 = vmul.f32 %v4384, %v3933
  %v4398 = vmul.f32 %v4389, %v3934
  %v4399 = vsel %vm234, %v4391, 0.0
  %v4400 = vsel %vm234, %v4392, 0.0
  %v4401 = vadd.f32 %v4399, %v4400
  %v4402 = vsel %vm234, %v4393, 0.0
  %v4403 = vadd.f32 %v4401, %v4402
  %v4404 = vsel %vm234, %v4394, 0.0
  %v4405 = vadd.f32 %v4403, %v4404
  %v4406 = vsel %vm234, %v4395, 0.0
  %v4407 = vadd.f32 %v4405, %v4406
  %v4408 = vsel %vm234, %v4396, 0.0
  %v4409 = vadd.f32 %v4407, %v4408
  %v4410 = vsel %vm234, %v4397, 0.0
  %v4411 = vadd.f32 %v4409, %v4410
  %v4412 = vsel %vm234, %v4398, 0.0
  %v4413 = vadd.f32 %v4411, %v4412
  %v4414 = vmul.f32 %v4354, %v3935
  %v4415 = vmul.f32 %v4359, %v3936
  %v4416 = vmul.f32 %v4364, %v3937
  %v4417 = vmul.f32 %v4369, %v3938
  %v4418 = vmul.f32 %v4374, %v3939
  %v4419 = vmul.f32 %v4379, %v3940
  %v4420 = vmul.f32 %v4384, %v3941
  %v4421 = vmul.f32 %v4389, %v3942
  %v4422 = vsel %vm234, %v4414, 0.0
  %v4423 = vsel %vm234, %v4415, 0.0
  %v4424 = vadd.f32 %v4422, %v4423
  %v4425 = vsel %vm234, %v4416, 0.0
  %v4426 = vadd.f32 %v4424, %v4425
  %v4427 = vsel %vm234, %v4417, 0.0
  %v4428 = vadd.f32 %v4426, %v4427
  %v4429 = vsel %vm234, %v4418, 0.0
  %v4430 = vadd.f32 %v4428, %v4429
  %v4431 = vsel %vm234, %v4419, 0.0
  %v4432 = vadd.f32 %v4430, %v4431
  %v4433 = vsel %vm234, %v4420, 0.0
  %v4434 = vadd.f32 %v4432, %v4433
  %v4435 = vsel %vm234, %v4421, 0.0
  %v4436 = vadd.f32 %v4434, %v4435
  %v4437 = vld [vmem:[%s11] sm:$0xff]
  %v4438 = vld [vmem:[%s11 + $0x8] sm:$0xff]
  %v4439 = vld [vmem:[%s11 + $0x10] sm:$0xff]
  %v4440 = vld [vmem:[%s11 + $0x18] sm:$0xff]
  %s4441 = scalar_lea.vmem %s11, 32
  %v4442 = vld [vmem:[%s4441] sm:$0xff]
  %v4443 = vld [vmem:[%s4441 + $0x8] sm:$0xff]
  %v4444 = vld [vmem:[%s4441 + $0x10] sm:$0xff]
  %v4445 = vld [vmem:[%s4441 + $0x18] sm:$0xff]
  %v4447 = vsel %vm234, %v4436, 0
  %4449 = vmatprep.subr.mxu0 0.0
  %4450 = vmatpush1.msra.mxu0 %v4442
  %4451 = vmatprep.subr.mxu0 0.0
  %4452 = vmatpush1.msra.mxu0 %v4443
  %4453 = vmatprep.subr.mxu0 0.0
  %4454 = vmatpush1.msra.mxu0 %v4444
  %4455 = vmatprep.subr.mxu0 0.0
  %4456 = vmatpush1.msra.mxu0 %v4445
  %4457 = vmatprep.subr.mxu0 0.0
  %4458 = vmatpush1.msra.mxu0 0.0
  %4459 = vmatprep.subr.mxu0 0.0
  %4460 = vmatpush1.msra.mxu0 0.0
  %4461 = vmatprep.subr.mxu0 0.0
  %4462 = vmatpush1.msra.mxu0 0.0
  %4463 = vmatprep.subr.mxu0 0.0
  %4464 = vmatpush1.msra.mxu0 0.0
  %4465 = vmatprep.subr.mxu0 0.0
  %4466 = vmatpush1.msra.mxu0 0.0
  %4467 = vmatprep.subr.mxu0 0.0
  %4468 = vmatpush1.msra.mxu0 0.0
  %4469 = vmatprep.subr.mxu0 0.0
  %4470 = vmatpush1.msra.mxu0 0.0
  %4471 = vmatprep.subr.mxu0 0.0
  %4472 = vmatpush1.msra.mxu0 0.0
  %4473 = vmatprep.subr.mxu0 0.0
  %4474 = vmatpush1.msra.mxu0 0.0
  %4475 = vmatprep.subr.mxu0 0.0
  %4476 = vmatpush1.msra.mxu0 0.0
  %4477 = vmatprep.subr.mxu0 0.0
  %4478 = vmatpush1.msra.mxu0 0.0
  %4479 = vmatprep.subr.mxu0 0.0
  %4480 = vmatpush1.msra.mxu0 0.0
  %4481 = vmatprep.subr.mxu0 0.0
  %4482 = vmatpush1.msra.mxu0 0.0
  %4483 = vmatprep.subr.mxu0 0.0
  %4484 = vmatpush1.msra.mxu0 0.0
  %4485 = vmatprep.subr.mxu0 0.0
  %4486 = vmatpush1.msra.mxu0 0.0
  %4487 = vmatprep.subr.mxu0 0.0
  %4488 = vmatpush1.msra.mxu0 0.0
  %4489 = vmatprep.subr.mxu0 0.0
  %4490 = vmatpush1.msra.mxu0 0.0
  %4491 = vmatprep.subr.mxu0 0.0
  %4492 = vmatpush1.msra.mxu0 0.0
  %4493 = vmatprep.subr.mxu0 0.0
  %4494 = vmatpush1.msra.mxu0 0.0
  %4495 = vmatprep.subr.mxu0 0.0
  %4496 = vmatpush1.msra.mxu0 0.0
  %4497 = vmatprep.subr.mxu0 0.0
  %4498 = vmatpush1.msra.mxu0 0.0
  %4499 = vmatprep.subr.mxu0 0.0
  %4500 = vmatpush1.msra.mxu0 0.0
  %4501 = vmatprep.subr.mxu0 0.0
  %4502 = vmatpush1.msra.mxu0 0.0
  %4503 = vmatprep.subr.mxu0 0.0
  %4504 = vmatpush1.msra.mxu0 0.0
  %4505 = vmatprep.subr.mxu0 0.0
  %4506 = vmatpush1.msra.mxu0 0.0
  %4507 = vmatprep.subr.mxu0 0.0
  %4508 = vmatpush1.msra.mxu0 0.0
  %4509 = vmatprep.subr.mxu0 0.0
  %4510 = vmatpush1.msra.mxu0 0.0
  %4511 = vmatprep.subr.mxu0 0.0
  %4512 = vmatpush1.msra.mxu0 0.0
  %4513 = vmatprep.mubr.f32.mxu0 0.0
  %4514 = vmatmul.mubr.f32.gmra.mrb[0].mxu0 %v4447
  %v4515 = vpop.f32.mrb[0].mxu0
  %v4516 = vadd.f32 0.0, %v4515
  %v4517 = vpop.f32.mrb[0].mxu0
  %4518 = vdwg.mxu0
  %v4520 = vsel %vm234, %v4413, 0
  %4522 = vmatprep.subr.mxu0 0.0
  %4523 = vmatpush1.msra.mxu0 %v4437
  %4524 = vmatprep.subr.mxu0 0.0
  %4525 = vmatpush1.msra.mxu0 %v4438
  %4526 = vmatprep.subr.mxu0 0.0
  %4527 = vmatpush1.msra.mxu0 %v4439
  %4528 = vmatprep.subr.mxu0 0.0
  %4529 = vmatpush1.msra.mxu0 %v4440
  %4530 = vmatprep.subr.mxu0 0.0
  %4531 = vmatpush1.msra.mxu0 0.0
  %4532 = vmatprep.subr.mxu0 0.0
  %4533 = vmatpush1.msra.mxu0 0.0
  %4534 = vmatprep.subr.mxu0 0.0
  %4535 = vmatpush1.msra.mxu0 0.0
  %4536 = vmatprep.subr.mxu0 0.0
  %4537 = vmatpush1.msra.mxu0 0.0
  %4538 = vmatprep.subr.mxu0 0.0
  %4539 = vmatpush1.msra.mxu0 0.0
  %4540 = vmatprep.subr.mxu0 0.0
  %4541 = vmatpush1.msra.mxu0 0.0
  %4542 = vmatprep.subr.mxu0 0.0
  %4543 = vmatpush1.msra.mxu0 0.0
  %4544 = vmatprep.subr.mxu0 0.0
  %4545 = vmatpush1.msra.mxu0 0.0
  %4546 = vmatprep.subr.mxu0 0.0
  %4547 = vmatpush1.msra.mxu0 0.0
  %4548 = vmatprep.subr.mxu0 0.0
  %4549 = vmatpush1.msra.mxu0 0.0
  %4550 = vmatprep.subr.mxu0 0.0
  %4551 = vmatpush1.msra.mxu0 0.0
  %4552 = vmatprep.subr.mxu0 0.0
  %4553 = vmatpush1.msra.mxu0 0.0
  %4554 = vmatprep.subr.mxu0 0.0
  %4555 = vmatpush1.msra.mxu0 0.0
  %4556 = vmatprep.subr.mxu0 0.0
  %4557 = vmatpush1.msra.mxu0 0.0
  %4558 = vmatprep.subr.mxu0 0.0
  %4559 = vmatpush1.msra.mxu0 0.0
  %4560 = vmatprep.subr.mxu0 0.0
  %4561 = vmatpush1.msra.mxu0 0.0
  %4562 = vmatprep.subr.mxu0 0.0
  %4563 = vmatpush1.msra.mxu0 0.0
  %4564 = vmatprep.subr.mxu0 0.0
  %4565 = vmatpush1.msra.mxu0 0.0
  %4566 = vmatprep.subr.mxu0 0.0
  %4567 = vmatpush1.msra.mxu0 0.0
  %4568 = vmatprep.subr.mxu0 0.0
  %4569 = vmatpush1.msra.mxu0 0.0
  %4570 = vmatprep.subr.mxu0 0.0
  %4571 = vmatpush1.msra.mxu0 0.0
  %4572 = vmatprep.subr.mxu0 0.0
  %4573 = vmatpush1.msra.mxu0 0.0
  %4574 = vmatprep.subr.mxu0 0.0
  %4575 = vmatpush1.msra.mxu0 0.0
  %4576 = vmatprep.subr.mxu0 0.0
  %4577 = vmatpush1.msra.mxu0 0.0
  %4578 = vmatprep.subr.mxu0 0.0
  %4579 = vmatpush1.msra.mxu0 0.0
  %4580 = vmatprep.subr.mxu0 0.0
  %4581 = vmatpush1.msra.mxu0 0.0
  %4582 = vmatprep.subr.mxu0 0.0
  %4583 = vmatpush1.msra.mxu0 0.0
  %4584 = vmatprep.subr.mxu0 0.0
  %4585 = vmatpush1.msra.mxu0 0.0
  %4586 = vmatprep.mubr.f32.mxu0 0.0
  %4587 = vmatmul.mubr.f32.gmra.mrb[0].mxu0 %v4520
  %v4588 = vpop.f32.mrb[0].mxu0
  %v4589 = vadd.f32 %v4516, %v4588
  %v4590 = vpop.f32.mrb[0].mxu0
  %4591 = vdwg.mxu0
  %v4592 = vld [vmem:[%s12] sm:$0x1]
  %v4594 = vlaneseq
  %v4595 = vshrl.u32 %v4594, 7
  %v4596 = vsub.s32 0, %v4595
  %v4597 = vrot.slane %v4592, %v4596
  %v4599 = vadd.f32 %v4589, %v4597
  %vm4600 = vcmask 31744
  %4601 = vst.msk [vmem:[%s13] sm:$0xff] %vm4600, %v4599
  // Predicated region
  $region54: #{forward.1} parent=0 // pred_check
    _
  $region55: #{forward.1} parent=0 // pred_check_branch
    %4603 = sbr.rel (0) target = $region57
  $region56: #{forward.1} parent=0 // pred_region
    _
  $region57: #{forward.1} parent=0 // pred_fallthru
    _
  // Predicated region
  $region58: #{forward.1} parent=0 // pred_check
    _
  $region59: #{forward.1} parent=0 // pred_check_branch
    %4605 = sbr.rel (0) target = $region61
  $region60: #{forward.1} parent=0 // pred_region
    _
  $region61: #{forward.1} parent=0 // pred_fallthru
    _

</llo_original>
